<compile_context>
chip_gen: v6e
topology: v6e:2x2x1
jax: 0.10.0
libtpu: 0.0.40
codegen_flags: <defaults>
</compile_context>

<pallas_src>
from functools import partial

import jax
import jax.numpy as jnp
from jax.experimental import pallas as pl
from jax.experimental.pallas import tpu as pltpu


def _layer_norm(x, gamma, beta, eps=1e-5):
    mean = jnp.mean(x, axis=-1, keepdims=True)
    var = jnp.mean((x - mean) ** 2, axis=-1, keepdims=True)
    return (x - mean) * jax.lax.rsqrt(var + eps) * gamma + beta


def encoder_layer_kernel(xf_ref, xq_ref,
                         wq_ref, bq_ref, wkv_ref, bkv_ref,
                         wo_ref, bo_ref,
                         w1_ref, b1_ref, w2_ref, b2_ref,
                         g1_ref, be1_ref, g2_ref, be2_ref,
                         out_ref, kv_ref, *, num_heads, approx_recip=True):
    S = xf_ref.shape[1]
    TS, E = xq_ref.shape[1], xq_ref.shape[2]
    H = num_heads
    Dh = E // H
    scale = 1.0 / float(Dh) ** 0.5

    # --- fused K|V projection: once per batch element, cached in persistent VMEM ---
    @pl.when(pl.program_id(1) == 0)
    def _():
        kv = jnp.dot(xf_ref[0], wkv_ref[...],
                     preferred_element_type=jnp.float32) + bkv_ref[...]       # (S, 2E)
        kv_ref[...] = kv.astype(jnp.bfloat16)

    xq = xq_ref[0]                                   # (TS, E) f32: residual / LN path
    xq_bf = xq.astype(jnp.bfloat16)

    # --- Q projection for this tile (one wide MXU push); 1/sqrt(Dh) folded into Q ---
    q = jnp.dot(xq_bf, wq_ref[...], preferred_element_type=jnp.float32) + bq_ref[...]
    q_bf = (q * scale).astype(jnp.bfloat16)          # (TS, E)

    # --- per-head attention; head-merge folded into the output projection ---
    attn = jnp.zeros((TS, E), jnp.float32)
    for h in range(H):
        lo = h * Dh
        q_h = q_bf[:, lo:lo + Dh]                    # (TS, Dh) static lane slice
        k_h = kv_ref[:, lo:lo + Dh]                  # (S,  Dh) bf16 from scratch
        v_h = kv_ref[:, E + lo:E + lo + Dh]          # (S,  Dh)
        s = jnp.einsum('qd,kd->qk', q_h, k_h,
                       preferred_element_type=jnp.float32)                    # (TS, S)
        s = s - jnp.max(s, axis=-1, keepdims=True)
        p = jnp.exp(s)
        l = jnp.sum(p, axis=-1, keepdims=True)                                # (TS, 1)
        o = jnp.dot(p.astype(jnp.bfloat16), v_h,
                    preferred_element_type=jnp.float32)                       # (TS, Dh)
        o = o * pl.reciprocal(l, approx=approx_recip)    # normalize on Dh lanes (EUP)
        attn = attn + jnp.dot(o.astype(jnp.bfloat16), wo_ref[lo:lo + Dh, :],
                              preferred_element_type=jnp.float32)
    attn = attn + bo_ref[...]

    # --- residual + LayerNorm 1 (dropout1 = identity in eval) ---
    h1 = _layer_norm(xq + attn, g1_ref[...], be1_ref[...])

    # --- FFN: linear1 -> exact (erf) GELU -> linear2 (dropout = identity) ---
    ff = jnp.dot(h1.astype(jnp.bfloat16), w1_ref[...],
                 preferred_element_type=jnp.float32) + b1_ref[...]
    ff = 0.5 * ff * (1.0 + jax.lax.erf(ff * (2.0 ** -0.5)))
    ff = jnp.dot(ff.astype(jnp.bfloat16), w2_ref[...],
                 preferred_element_type=jnp.float32) + b2_ref[...]

    # --- residual + LayerNorm 2 (dropout2 = identity) ---
    out_ref[0] = _layer_norm(h1 + ff, g2_ref[...], be2_ref[...]).astype(out_ref.dtype)


def transformer_encoder_layer(src, params, num_heads, *, q_tile=128, approx_recip=True):
    """src: (S, B, E) float32 — PyTorch nn.MultiheadAttention (seq-first) convention."""
    S, B, E = src.shape
    q_tile = min(q_tile, S)
    assert S % q_tile == 0 and E % num_heads == 0
    n_qt = S // q_tile
    H = num_heads
    F_dim = params["w1"].shape[1]

    # TODO(synk): fold this permutation into the BlockSpecs at production sizes.
    x = jnp.transpose(src, (1, 0, 2))               # (B, S, E) f32 : query/residual path
    x_bf = x.astype(jnp.bfloat16)                   # (B, S, E) bf16: K/V source (half DMA)

    weight_keys = ("wq", "bq", "wkv", "bkv", "wo", "bo",
                   "w1", "b1", "w2", "b2", "g1", "be1", "g2", "be2")
    weights = [params[k] for k in weight_keys]

    # Per-generation VMEM limit: headroom below physical (v7x: 64 MiB, v5e/v6e: 128 MiB).
    try:
        vmem_cap = pltpu.get_tpu_info().vmem_capacity_bytes
    except Exception:
        vmem_cap = 64 * 1024 * 1024
    vmem_limit = int(max(32 * 1024 * 1024,
                         min(vmem_cap - 8 * 1024 * 1024, 110 * 1024 * 1024)))

    flops = int(2 * B * (S * E * 2 * E      # fused K|V projection (once per batch elem)
                         + S * E * E        # Q projection
                         + 2 * S * S * E    # QK^T + PV
                         + S * E * E        # output projection
                         + 2 * S * E * F_dim))
    transcendentals = int(B * (H * S * S + S * F_dim + 4 * S))
    bytes_accessed = int(B * S * E * (4 + 2 + 4)
                         + sum(int(w.size) * w.dtype.itemsize for w in weights))

    def build_and_call(single_buffer_weights):
        wkw = {"pipeline_mode": pl.Buffered(1)} if single_buffer_weights else {}
        in_specs = [
            pl.BlockSpec((1, S, E), lambda b, t: (b, 0, 0)),        # bf16 full seq (K/V src)
            pl.BlockSpec((1, q_tile, E), lambda b, t: (b, t, 0)),   # f32 query tile
        ] + [pl.BlockSpec(w.shape, lambda b, t: (0, 0), **wkw) for w in weights]
        return pl.pallas_call(
            partial(encoder_layer_kernel, num_heads=num_heads, approx_recip=approx_recip),
            out_shape=jax.ShapeDtypeStruct((B, S, E), jnp.float32),
            grid=(B, n_qt),
            in_specs=in_specs,
            out_specs=pl.BlockSpec((1, q_tile, E), lambda b, t: (b, t, 0)),
            scratch_shapes=[pltpu.VMEM((S, 2 * E), jnp.bfloat16)],  # cached K|V per batch elem
            compiler_params=pltpu.CompilerParams(
                # B parallel (megacore / 2 TCs on v7x); tile axis must be sequential so
                # the K/V scratch written at t == 0 is valid for every later tile.
                dimension_semantics=("parallel", "arbitrary"),
                vmem_limit_bytes=vmem_limit),
            cost_estimate=pl.CostEstimate(flops=flops,
                                          transcendentals=transcendentals,
                                          bytes_accessed=bytes_accessed),
        )(x_bf, x, *weights)

    try:
        out = build_and_call(True)     # single-buffer the constant-index weight blocks
    except Exception:
        out = build_and_call(False)    # fall back if Buffered(1) is not supported

    return jnp.transpose(out, (1, 0, 2))            # back to (S, B, E)


def init_params(key, d_model, num_heads, dim_feedforward, mm_dtype=jnp.bfloat16):
    assert d_model % num_heads == 0
    E, F = d_model, dim_feedforward
    ks = jax.random.split(key, 8)
    s = 0.1
    # nn.MultiheadAttention: in_proj_weight (3E, E), out_proj (E, E); Linear stores (out, in).
    in_proj_w = s * jax.random.normal(ks[0], (3 * E, E), jnp.float32)
    in_proj_b = s * jax.random.normal(ks[1], (3 * E,), jnp.float32)
    wq, wk, wv = jnp.split(in_proj_w, 3, axis=0)
    bq, bk, bv = jnp.split(in_proj_b, 3, axis=0)
    out_w = s * jax.random.normal(ks[2], (E, E), jnp.float32)
    out_b = s * jax.random.normal(ks[3], (E,), jnp.float32)
    w1 = s * jax.random.normal(ks[4], (F, E), jnp.float32)
    b1 = s * jax.random.normal(ks[5], (F,), jnp.float32)
    w2 = s * jax.random.normal(ks[6], (E, F), jnp.float32)
    b2 = s * jax.random.normal(ks[7], (E,), jnp.float32)

    return {
        # matmul weights pre-transposed (x @ W), stored in bf16 for the MXU;
        # K and V projections fused into a single (E, 2E) weight.
        "wq": wq.T.astype(mm_dtype), "bq": bq[None, :],
        "wkv": jnp.concatenate([wk.T, wv.T], axis=1).astype(mm_dtype),
        "bkv": jnp.concatenate([bk, bv])[None, :],
        "wo": out_w.T.astype(mm_dtype), "bo": out_b[None, :],
        "w1": w1.T.astype(mm_dtype), "b1": b1[None, :],
        "w2": w2.T.astype(mm_dtype), "b2": b2[None, :],
        # LayerNorm default init: gamma=1, beta=0 (f32)
        "g1": jnp.ones((1, E), jnp.float32), "be1": jnp.zeros((1, E), jnp.float32),
        "g2": jnp.ones((1, E), jnp.float32), "be2": jnp.zeros((1, E), jnp.float32),
    }


def reference_forward(src, params, num_heads):
    """Pure-jnp f32 reference (uses the same bf16-rounded weights)."""
    S, B, E = src.shape
    H, Dh = num_heads, E // num_heads
    f = lambda k: params[k].astype(jnp.float32)
    x = jnp.transpose(src, (1, 0, 2))
    q = x @ f("wq") + f("bq")
    kv = x @ f("wkv") + f("bkv")
    k, v = kv[..., :E], kv[..., E:]
    split = lambda t: t.reshape(B, S, H, Dh).transpose(0, 2, 1, 3)
    qh, kh, vh = split(q), split(k), split(v)
    s = jnp.einsum('bhqd,bhkd->bhqk', qh, kh) / (Dh ** 0.5)
    p = jax.nn.softmax(s, axis=-1)
    o = jnp.einsum('bhqk,bhkd->bhqd', p, vh).transpose(0, 2, 1, 3).reshape(B, S, E)
    attn = o @ f("wo") + f("bo")
    h1 = _layer_norm(x + attn, f("g1"), f("be1"))
    ff = h1 @ f("w1") + f("b1")
    ff = 0.5 * ff * (1.0 + jax.lax.erf(ff * (2.0 ** -0.5)))
    ff = ff @ f("w2") + f("b2")
    h2 = _layer_norm(h1 + ff, f("g2"), f("be2"))
    return jnp.transpose(h2, (1, 0, 2))


if __name__ == "__main__":
    # Small but lane-dense shapes: E, F multiples of 128; S a multiple of q_tile.
    S, B, d_model = 128, 2, 128
    num_heads = 4
    dim_feedforward = 256

    key = jax.random.PRNGKey(0)
    k_src, k_par = jax.random.split(key)
    src = jax.random.normal(k_src, (S, B, d_model), jnp.float32)
    params = init_params(k_par, d_model, num_heads, dim_feedforward)

    # q_tile=64 -> 2 query tiles per batch element, exercising the cached-K/V path
    # (grid = (2, 2): B parallel, tile axis sequential).
    out = transformer_encoder_layer(src, params, num_heads, q_tile=64)
    out = jax.block_until_ready(out)
    assert out.shape == (S, B, d_model)
    assert bool(jnp.all(jnp.isfinite(out)))

    ref = reference_forward(src, params, num_heads)
    err = float(jnp.max(jnp.abs(out - ref)))
    assert err < 1e-1, f"max abs err vs reference: {err}"

    print("KERNEL_OK")
</pallas_src>

<mosaic_0001>
module attributes {stable_mosaic.version = 11 : i64} {
  func.func @encoder_layer_kernel(%arg0: i32, %arg1: i32, %arg2: memref<1x128x128xbf16, #tpu.memory_space<vmem>>, %arg3: memref<1x64x128xf32, #tpu.memory_space<vmem>>, %arg4: memref<128x128xbf16, #tpu.memory_space<vmem>>, %arg5: memref<1x128xf32, #tpu.memory_space<vmem>>, %arg6: memref<128x256xbf16, #tpu.memory_space<vmem>>, %arg7: memref<1x256xf32, #tpu.memory_space<vmem>>, %arg8: memref<128x128xbf16, #tpu.memory_space<vmem>>, %arg9: memref<1x128xf32, #tpu.memory_space<vmem>>, %arg10: memref<128x256xbf16, #tpu.memory_space<vmem>>, %arg11: memref<1x256xf32, #tpu.memory_space<vmem>>, %arg12: memref<256x128xbf16, #tpu.memory_space<vmem>>, %arg13: memref<1x128xf32, #tpu.memory_space<vmem>>, %arg14: memref<1x128xf32, #tpu.memory_space<vmem>>, %arg15: memref<1x128xf32, #tpu.memory_space<vmem>>, %arg16: memref<1x128xf32, #tpu.memory_space<vmem>>, %arg17: memref<1x128xf32, #tpu.memory_space<vmem>>, %arg18: memref<1x64x128xf32, #tpu.memory_space<vmem>>, %arg19: memref<128x256xbf16, #tpu.memory_space<vmem>>) attributes {dimension_semantics = [#tpu.dimension_semantics<parallel>, #tpu.dimension_semantics<arbitrary>], iteration_bounds = array<i64: 2, 2>, scalar_prefetch = 0 : i64, scratch_operands = 1 : i64, tpu.core_type = #tpu.core_type<tc>, window_params = [{transform_indices = @transform_0, window_bounds = array<i64: 1, 128, 128>}, {transform_indices = @transform_1, window_bounds = array<i64: 1, 64, 128>}, {pipeline_mode = #tpu.pipeline_mode<synchronous>, transform_indices = @transform_2, window_bounds = array<i64: 128, 128>}, {pipeline_mode = #tpu.pipeline_mode<synchronous>, transform_indices = @transform_3, window_bounds = array<i64: 1, 128>}, {pipeline_mode = #tpu.pipeline_mode<synchronous>, transform_indices = @transform_4, window_bounds = array<i64: 128, 256>}, {pipeline_mode = #tpu.pipeline_mode<synchronous>, transform_indices = @transform_5, window_bounds = array<i64: 1, 256>}, {pipeline_mode = #tpu.pipeline_mode<synchronous>, transform_indices = @transform_6, window_bounds = array<i64: 128, 128>}, {pipeline_mode = #tpu.pipeline_mode<synchronous>, transform_indices = @transform_7, window_bounds = array<i64: 1, 128>}, {pipeline_mode = #tpu.pipeline_mode<synchronous>, transform_indices = @transform_8, window_bounds = array<i64: 128, 256>}, {pipeline_mode = #tpu.pipeline_mode<synchronous>, transform_indices = @transform_9, window_bounds = array<i64: 1, 256>}, {pipeline_mode = #tpu.pipeline_mode<synchronous>, transform_indices = @transform_10, window_bounds = array<i64: 256, 128>}, {pipeline_mode = #tpu.pipeline_mode<synchronous>, transform_indices = @transform_11, window_bounds = array<i64: 1, 128>}, {pipeline_mode = #tpu.pipeline_mode<synchronous>, transform_indices = @transform_12, window_bounds = array<i64: 1, 128>}, {pipeline_mode = #tpu.pipeline_mode<synchronous>, transform_indices = @transform_13, window_bounds = array<i64: 1, 128>}, {pipeline_mode = #tpu.pipeline_mode<synchronous>, transform_indices = @transform_14, window_bounds = array<i64: 1, 128>}, {pipeline_mode = #tpu.pipeline_mode<synchronous>, transform_indices = @transform_15, window_bounds = array<i64: 1, 128>}, {transform_indices = @transform_16, window_bounds = array<i64: 1, 64, 128>}]} {
    %c0_i32 = arith.constant 0 : i32
    %0 = arith.cmpi eq, %arg1, %c0_i32 : i32
    %1 = arith.extui %0 : i1 to i32
    %c0_i32_0 = arith.constant 0 : i32
    %2 = arith.cmpi ne, %1, %c0_i32_0 : i32
    scf.if %2 {
      %c0_82 = arith.constant 0 : index
      %c0_83 = arith.constant 0 : index
      %c0_84 = arith.constant 0 : index
      %171 = vector.load %arg2[%c0_82, %c0_83, %c0_84] : memref<1x128x128xbf16, #tpu.memory_space<vmem>>, vector<1x128x128xbf16>
      %172 = vector.shape_cast %171 : vector<1x128x128xbf16> to vector<128x128xbf16>
      %c0_85 = arith.constant 0 : index
      %c0_86 = arith.constant 0 : index
      %173 = vector.load %arg6[%c0_85, %c0_86] : memref<128x256xbf16, #tpu.memory_space<vmem>>, vector<128x256xbf16>
      %cst_87 = arith.constant dense<0.000000e+00> : vector<128x256xf32>
      %174 = tpu.matmul %172, %173, %cst_87 {dimension_numbers = #tpu.dot_dimension_numbers<[1], [0], [0], [1], [0, 0, 1, 1], [], []>} : vector<128x128xbf16>, vector<128x256xbf16>, vector<128x256xf32> -> vector<128x256xf32>
      %c0_88 = arith.constant 0 : index
      %c0_89 = arith.constant 0 : index
      %175 = vector.load %arg7[%c0_88, %c0_89] : memref<1x256xf32, #tpu.memory_space<vmem>>, vector<1x256xf32>
      %176 = vector.broadcast %175 : vector<1x256xf32> to vector<128x256xf32>
      %177 = arith.addf %174, %176 : vector<128x256xf32>
      %178 = arith.truncf %177 : vector<128x256xf32> to vector<128x256xbf16>
      %c0_90 = arith.constant 0 : index
      %c0_91 = arith.constant 0 : index
      %179 = vector.load %arg19[%c0_90, %c0_91] : memref<128x256xbf16, #tpu.memory_space<vmem>>, vector<128x256xbf16>
      tpu.vector_store %arg19[%c0_90, %c0_91], %178 {strides = array<i32>} : memref<128x256xbf16, #tpu.memory_space<vmem>>, vector<128x256xbf16>,
    } else {
    }
    %c0 = arith.constant 0 : index
    %c0_1 = arith.constant 0 : index
    %c0_2 = arith.constant 0 : index
    %3 = vector.load %arg3[%c0, %c0_1, %c0_2] : memref<1x64x128xf32, #tpu.memory_space<vmem>>, vector<1x64x128xf32>
    %4 = vector.shape_cast %3 : vector<1x64x128xf32> to vector<64x128xf32>
    %5 = arith.truncf %4 : vector<64x128xf32> to vector<64x128xbf16>
    %c0_3 = arith.constant 0 : index
    %c0_4 = arith.constant 0 : index
    %6 = vector.load %arg4[%c0_3, %c0_4] : memref<128x128xbf16, #tpu.memory_space<vmem>>, vector<128x128xbf16>
    %cst = arith.constant dense<0.000000e+00> : vector<64x128xf32>
    %7 = tpu.matmul %5, %6, %cst {dimension_numbers = #tpu.dot_dimension_numbers<[1], [0], [0], [1], [0, 0, 1, 1], [], []>} : vector<64x128xbf16>, vector<128x128xbf16>, vector<64x128xf32> -> vector<64x128xf32>
    %c0_5 = arith.constant 0 : index
    %c0_6 = arith.constant 0 : index
    %8 = vector.load %arg5[%c0_5, %c0_6] : memref<1x128xf32, #tpu.memory_space<vmem>>, vector<1x128xf32>
    %9 = vector.broadcast %8 : vector<1x128xf32> to vector<64x128xf32>
    %10 = arith.addf %7, %9 : vector<64x128xf32>
    %cst_7 = arith.constant 0.176776692 : f32
    %11 = vector.broadcast %cst_7 : f32 to vector<64x128xf32>
    %12 = arith.mulf %10, %11 : vector<64x128xf32>
    %13 = arith.truncf %12 : vector<64x128xf32> to vector<64x128xbf16>
    %cst_8 = arith.constant 0.000000e+00 : f32
    %14 = vector.broadcast %cst_8 : f32 to vector<64x128xf32>
    %15 = vector.extract_strided_slice %13 {offsets = [0, 0], sizes = [64, 32], strides = [1, 1]} : vector<64x128xbf16> to vector<64x32xbf16>
    %c0_9 = arith.constant 0 : index
    %c0_10 = arith.constant 0 : index
    %16 = vector.load %arg19[%c0_9, %c0_10] : memref<128x256xbf16, #tpu.memory_space<vmem>>, vector<128x32xbf16>
    %c0_11 = arith.constant 0 : index
    %c128 = arith.constant 128 : index
    %17 = vector.load %arg19[%c0_11, %c128] : memref<128x256xbf16, #tpu.memory_space<vmem>>, vector<128x32xbf16>
    "tpu.trace_start"() <{level = 10 : i32, message = "qd,kd->qk"}> : () -> ()
    %cst_12 = arith.constant dense<0.000000e+00> : vector<64x128xf32>
    %18 = tpu.matmul %15, %16, %cst_12 {dimension_numbers = #tpu.dot_dimension_numbers<[1], [1], [0], [0], [0, 0, 1, 0], [], []>} : vector<64x32xbf16>, vector<128x32xbf16>, vector<64x128xf32> -> vector<64x128xf32>
    "tpu.trace_stop"() : () -> ()
    %cst_13 = arith.constant dense<0xFF800000> : vector<64xf32>
    %19 = vector.multi_reduction <maximumf>, %18, %cst_13 [1] : vector<64x128xf32> to vector<64xf32>
    %20 = vector.shape_cast %19 : vector<64xf32> to vector<64x1xf32>
    %21 = vector.broadcast %20 : vector<64x1xf32> to vector<64x128xf32>
    %22 = arith.subf %18, %21 : vector<64x128xf32>
    %23 = math.exp %22 : vector<64x128xf32>
    %cst_14 = arith.constant dense<0.000000e+00> : vector<64xf32>
    %24 = vector.multi_reduction <add>, %23, %cst_14 [1] : vector<64x128xf32> to vector<64xf32>
    %25 = vector.shape_cast %24 : vector<64xf32> to vector<64x1xf32>
    %26 = arith.truncf %23 : vector<64x128xf32> to vector<64x128xbf16>
    %cst_15 = arith.constant dense<0.000000e+00> : vector<64x32xf32>
    %27 = tpu.matmul %26, %17, %cst_15 {dimension_numbers = #tpu.dot_dimension_numbers<[1], [0], [0], [1], [0, 0, 1, 1], [], []>} : vector<64x128xbf16>, vector<128x32xbf16>, vector<64x32xf32> -> vector<64x32xf32>
    %28 = tpu.reciprocal %25 {approx = true} : vector<64x1xf32> -> vector<64x1xf32>
    %29 = vector.broadcast %28 : vector<64x1xf32> to vector<64x32xf32>
    %30 = arith.mulf %27, %29 : vector<64x32xf32>
    %31 = arith.truncf %30 : vector<64x32xf32> to vector<64x32xbf16>
    %c0_16 = arith.constant 0 : index
    %c0_17 = arith.constant 0 : index
    %32 = vector.load %arg8[%c0_16, %c0_17] : memref<128x128xbf16, #tpu.memory_space<vmem>>, vector<32x128xbf16>
    %cst_18 = arith.constant dense<0.000000e+00> : vector<64x128xf32>
    %33 = tpu.matmul %31, %32, %cst_18 {dimension_numbers = #tpu.dot_dimension_numbers<[1], [0], [0], [1], [0, 0, 1, 1], [], []>} : vector<64x32xbf16>, vector<32x128xbf16>, vector<64x128xf32> -> vector<64x128xf32>
    %34 = arith.addf %14, %33 : vector<64x128xf32>
    %35 = vector.extract_strided_slice %13 {offsets = [0, 32], sizes = [64, 32], strides = [1, 1]} : vector<64x128xbf16> to vector<64x32xbf16>
    %c0_19 = arith.constant 0 : index
    %c32 = arith.constant 32 : index
    %36 = vector.load %arg19[%c0_19, %c32] : memref<128x256xbf16, #tpu.memory_space<vmem>>, vector<128x32xbf16>
    %c0_20 = arith.constant 0 : index
    %c160 = arith.constant 160 : index
    %37 = vector.load %arg19[%c0_20, %c160] : memref<128x256xbf16, #tpu.memory_space<vmem>>, vector<128x32xbf16>
    "tpu.trace_start"() <{level = 10 : i32, message = "qd,kd->qk"}> : () -> ()
    %cst_21 = arith.constant dense<0.000000e+00> : vector<64x128xf32>
    %38 = tpu.matmul %35, %36, %cst_21 {dimension_numbers = #tpu.dot_dimension_numbers<[1], [1], [0], [0], [0, 0, 1, 0], [], []>} : vector<64x32xbf16>, vector<128x32xbf16>, vector<64x128xf32> -> vector<64x128xf32>
    "tpu.trace_stop"() : () -> ()
    %cst_22 = arith.constant dense<0xFF800000> : vector<64xf32>
    %39 = vector.multi_reduction <maximumf>, %38, %cst_22 [1] : vector<64x128xf32> to vector<64xf32>
    %40 = vector.shape_cast %39 : vector<64xf32> to vector<64x1xf32>
    %41 = vector.broadcast %40 : vector<64x1xf32> to vector<64x128xf32>
    %42 = arith.subf %38, %41 : vector<64x128xf32>
    %43 = math.exp %42 : vector<64x128xf32>
    %cst_23 = arith.constant dense<0.000000e+00> : vector<64xf32>
    %44 = vector.multi_reduction <add>, %43, %cst_23 [1] : vector<64x128xf32> to vector<64xf32>
    %45 = vector.shape_cast %44 : vector<64xf32> to vector<64x1xf32>
    %46 = arith.truncf %43 : vector<64x128xf32> to vector<64x128xbf16>
    %cst_24 = arith.constant dense<0.000000e+00> : vector<64x32xf32>
    %47 = tpu.matmul %46, %37, %cst_24 {dimension_numbers = #tpu.dot_dimension_numbers<[1], [0], [0], [1], [0, 0, 1, 1], [], []>} : vector<64x128xbf16>, vector<128x32xbf16>, vector<64x32xf32> -> vector<64x32xf32>
    %48 = tpu.reciprocal %45 {approx = true} : vector<64x1xf32> -> vector<64x1xf32>
    %49 = vector.broadcast %48 : vector<64x1xf32> to vector<64x32xf32>
    %50 = arith.mulf %47, %49 : vector<64x32xf32>
    %51 = arith.truncf %50 : vector<64x32xf32> to vector<64x32xbf16>
    %c32_25 = arith.constant 32 : index
    %c0_26 = arith.constant 0 : index
    %52 = vector.load %arg8[%c32_25, %c0_26] : memref<128x128xbf16, #tpu.memory_space<vmem>>, vector<32x128xbf16>
    %cst_27 = arith.constant dense<0.000000e+00> : vector<64x128xf32>
    %53 = tpu.matmul %51, %52, %cst_27 {dimension_numbers = #tpu.dot_dimension_numbers<[1], [0], [0], [1], [0, 0, 1, 1], [], []>} : vector<64x32xbf16>, vector<32x128xbf16>, vector<64x128xf32> -> vector<64x128xf32>
    %54 = arith.addf %34, %53 : vector<64x128xf32>
    %55 = vector.extract_strided_slice %13 {offsets = [0, 64], sizes = [64, 32], strides = [1, 1]} : vector<64x128xbf16> to vector<64x32xbf16>
    %c0_28 = arith.constant 0 : index
    %c64 = arith.constant 64 : index
    %56 = vector.load %arg19[%c0_28, %c64] : memref<128x256xbf16, #tpu.memory_space<vmem>>, vector<128x32xbf16>
    %c0_29 = arith.constant 0 : index
    %c192 = arith.constant 192 : index
    %57 = vector.load %arg19[%c0_29, %c192] : memref<128x256xbf16, #tpu.memory_space<vmem>>, vector<128x32xbf16>
    "tpu.trace_start"() <{level = 10 : i32, message = "qd,kd->qk"}> : () -> ()
    %cst_30 = arith.constant dense<0.000000e+00> : vector<64x128xf32>
    %58 = tpu.matmul %55, %56, %cst_30 {dimension_numbers = #tpu.dot_dimension_numbers<[1], [1], [0], [0], [0, 0, 1, 0], [], []>} : vector<64x32xbf16>, vector<128x32xbf16>, vector<64x128xf32> -> vector<64x128xf32>
    "tpu.trace_stop"() : () -> ()
    %cst_31 = arith.constant dense<0xFF800000> : vector<64xf32>
    %59 = vector.multi_reduction <maximumf>, %58, %cst_31 [1] : vector<64x128xf32> to vector<64xf32>
    %60 = vector.shape_cast %59 : vector<64xf32> to vector<64x1xf32>
    %61 = vector.broadcast %60 : vector<64x1xf32> to vector<64x128xf32>
    %62 = arith.subf %58, %61 : vector<64x128xf32>
    %63 = math.exp %62 : vector<64x128xf32>
    %cst_32 = arith.constant dense<0.000000e+00> : vector<64xf32>
    %64 = vector.multi_reduction <add>, %63, %cst_32 [1] : vector<64x128xf32> to vector<64xf32>
    %65 = vector.shape_cast %64 : vector<64xf32> to vector<64x1xf32>
    %66 = arith.truncf %63 : vector<64x128xf32> to vector<64x128xbf16>
    %cst_33 = arith.constant dense<0.000000e+00> : vector<64x32xf32>
    %67 = tpu.matmul %66, %57, %cst_33 {dimension_numbers = #tpu.dot_dimension_numbers<[1], [0], [0], [1], [0, 0, 1, 1], [], []>} : vector<64x128xbf16>, vector<128x32xbf16>, vector<64x32xf32> -> vector<64x32xf32>
    %68 = tpu.reciprocal %65 {approx = true} : vector<64x1xf32> -> vector<64x1xf32>
    %69 = vector.broadcast %68 : vector<64x1xf32> to vector<64x32xf32>
    %70 = arith.mulf %67, %69 : vector<64x32xf32>
    %71 = arith.truncf %70 : vector<64x32xf32> to vector<64x32xbf16>
    %c64_34 = arith.constant 64 : index
    %c0_35 = arith.constant 0 : index
    %72 = vector.load %arg8[%c64_34, %c0_35] : memref<128x128xbf16, #tpu.memory_space<vmem>>, vector<32x128xbf16>
    %cst_36 = arith.constant dense<0.000000e+00> : vector<64x128xf32>
    %73 = tpu.matmul %71, %72, %cst_36 {dimension_numbers = #tpu.dot_dimension_numbers<[1], [0], [0], [1], [0, 0, 1, 1], [], []>} : vector<64x32xbf16>, vector<32x128xbf16>, vector<64x128xf32> -> vector<64x128xf32>
    %74 = arith.addf %54, %73 : vector<64x128xf32>
    %75 = vector.extract_strided_slice %13 {offsets = [0, 96], sizes = [64, 32], strides = [1, 1]} : vector<64x128xbf16> to vector<64x32xbf16>
    %c0_37 = arith.constant 0 : index
    %c96 = arith.constant 96 : index
    %76 = vector.load %arg19[%c0_37, %c96] : memref<128x256xbf16, #tpu.memory_space<vmem>>, vector<128x32xbf16>
    %c0_38 = arith.constant 0 : index
    %c224 = arith.constant 224 : index
    %77 = vector.load %arg19[%c0_38, %c224] : memref<128x256xbf16, #tpu.memory_space<vmem>>, vector<128x32xbf16>
    "tpu.trace_start"() <{level = 10 : i32, message = "qd,kd->qk"}> : () -> ()
    %cst_39 = arith.constant dense<0.000000e+00> : vector<64x128xf32>
    %78 = tpu.matmul %75, %76, %cst_39 {dimension_numbers = #tpu.dot_dimension_numbers<[1], [1], [0], [0], [0, 0, 1, 0], [], []>} : vector<64x32xbf16>, vector<128x32xbf16>, vector<64x128xf32> -> vector<64x128xf32>
    "tpu.trace_stop"() : () -> ()
    %cst_40 = arith.constant dense<0xFF800000> : vector<64xf32>
    %79 = vector.multi_reduction <maximumf>, %78, %cst_40 [1] : vector<64x128xf32> to vector<64xf32>
    %80 = vector.shape_cast %79 : vector<64xf32> to vector<64x1xf32>
    %81 = vector.broadcast %80 : vector<64x1xf32> to vector<64x128xf32>
    %82 = arith.subf %78, %81 : vector<64x128xf32>
    %83 = math.exp %82 : vector<64x128xf32>
    %cst_41 = arith.constant dense<0.000000e+00> : vector<64xf32>
    %84 = vector.multi_reduction <add>, %83, %cst_41 [1] : vector<64x128xf32> to vector<64xf32>
    %85 = vector.shape_cast %84 : vector<64xf32> to vector<64x1xf32>
    %86 = arith.truncf %83 : vector<64x128xf32> to vector<64x128xbf16>
    %cst_42 = arith.constant dense<0.000000e+00> : vector<64x32xf32>
    %87 = tpu.matmul %86, %77, %cst_42 {dimension_numbers = #tpu.dot_dimension_numbers<[1], [0], [0], [1], [0, 0, 1, 1], [], []>} : vector<64x128xbf16>, vector<128x32xbf16>, vector<64x32xf32> -> vector<64x32xf32>
    %88 = tpu.reciprocal %85 {approx = true} : vector<64x1xf32> -> vector<64x1xf32>
    %89 = vector.broadcast %88 : vector<64x1xf32> to vector<64x32xf32>
    %90 = arith.mulf %87, %89 : vector<64x32xf32>
    %91 = arith.truncf %90 : vector<64x32xf32> to vector<64x32xbf16>
    %c96_43 = arith.constant 96 : index
    %c0_44 = arith.constant 0 : index
    %92 = vector.load %arg8[%c96_43, %c0_44] : memref<128x128xbf16, #tpu.memory_space<vmem>>, vector<32x128xbf16>
    %cst_45 = arith.constant dense<0.000000e+00> : vector<64x128xf32>
    %93 = tpu.matmul %91, %92, %cst_45 {dimension_numbers = #tpu.dot_dimension_numbers<[1], [0], [0], [1], [0, 0, 1, 1], [], []>} : vector<64x32xbf16>, vector<32x128xbf16>, vector<64x128xf32> -> vector<64x128xf32>
    %94 = arith.addf %74, %93 : vector<64x128xf32>
    %c0_46 = arith.constant 0 : index
    %c0_47 = arith.constant 0 : index
    %95 = vector.load %arg9[%c0_46, %c0_47] : memref<1x128xf32, #tpu.memory_space<vmem>>, vector<1x128xf32>
    %96 = vector.broadcast %95 : vector<1x128xf32> to vector<64x128xf32>
    %97 = arith.addf %94, %96 : vector<64x128xf32>
    %98 = arith.addf %4, %97 : vector<64x128xf32>
    %c0_48 = arith.constant 0 : index
    %c0_49 = arith.constant 0 : index
    %99 = vector.load %arg14[%c0_48, %c0_49] : memref<1x128xf32, #tpu.memory_space<vmem>>, vector<1x128xf32>
    %c0_50 = arith.constant 0 : index
    %c0_51 = arith.constant 0 : index
    %100 = vector.load %arg15[%c0_50, %c0_51] : memref<1x128xf32, #tpu.memory_space<vmem>>, vector<1x128xf32>
    %cst_52 = arith.constant dense<0.000000e+00> : vector<64xf32>
    %101 = vector.multi_reduction <add>, %98, %cst_52 [1] : vector<64x128xf32> to vector<64xf32>
    %102 = vector.shape_cast %101 : vector<64xf32> to vector<64x1xf32>
    %cst_53 = arith.constant 1.280000e+02 : f32
    %103 = vector.broadcast %cst_53 : f32 to vector<64x1xf32>
    %104 = arith.divf %102, %103 : vector<64x1xf32>
    %105 = vector.broadcast %104 : vector<64x1xf32> to vector<64x128xf32>
    %106 = arith.subf %98, %105 : vector<64x128xf32>
    %107 = arith.mulf %106, %106 : vector<64x128xf32>
    %cst_54 = arith.constant dense<0.000000e+00> : vector<64xf32>
    %108 = vector.multi_reduction <add>, %107, %cst_54 [1] : vector<64x128xf32> to vector<64xf32>
    %109 = vector.shape_cast %108 : vector<64xf32> to vector<64x1xf32>
    %cst_55 = arith.constant 1.280000e+02 : f32
    %110 = vector.broadcast %cst_55 : f32 to vector<64x1xf32>
    %111 = arith.divf %109, %110 : vector<64x1xf32>
    %112 = vector.broadcast %104 : vector<64x1xf32> to vector<64x128xf32>
    %113 = arith.subf %98, %112 : vector<64x128xf32>
    %cst_56 = arith.constant 9.99999974E-6 : f32
    %114 = vector.broadcast %cst_56 : f32 to vector<64x1xf32>
    %115 = arith.addf %111, %114 : vector<64x1xf32>
    %116 = math.rsqrt %115 : vector<64x1xf32>
    %117 = vector.broadcast %116 : vector<64x1xf32> to vector<64x128xf32>
    %118 = arith.mulf %113, %117 : vector<64x128xf32>
    %119 = vector.broadcast %99 : vector<1x128xf32> to vector<64x128xf32>
    %120 = arith.mulf %118, %119 : vector<64x128xf32>
    %121 = vector.broadcast %100 : vector<1x128xf32> to vector<64x128xf32>
    %122 = arith.addf %120, %121 : vector<64x128xf32>
    %123 = arith.truncf %122 : vector<64x128xf32> to vector<64x128xbf16>
    %c0_57 = arith.constant 0 : index
    %c0_58 = arith.constant 0 : index
    %124 = vector.load %arg10[%c0_57, %c0_58] : memref<128x256xbf16, #tpu.memory_space<vmem>>, vector<128x256xbf16>
    %cst_59 = arith.constant dense<0.000000e+00> : vector<64x256xf32>
    %125 = tpu.matmul %123, %124, %cst_59 {dimension_numbers = #tpu.dot_dimension_numbers<[1], [0], [0], [1], [0, 0, 1, 1], [], []>} : vector<64x128xbf16>, vector<128x256xbf16>, vector<64x256xf32> -> vector<64x256xf32>
    %c0_60 = arith.constant 0 : index
    %c0_61 = arith.constant 0 : index
    %126 = vector.load %arg11[%c0_60, %c0_61] : memref<1x256xf32, #tpu.memory_space<vmem>>, vector<1x256xf32>
    %127 = vector.broadcast %126 : vector<1x256xf32> to vector<64x256xf32>
    %128 = arith.addf %125, %127 : vector<64x256xf32>
    %cst_62 = arith.constant 5.000000e-01 : f32
    %129 = vector.broadcast %cst_62 : f32 to vector<64x256xf32>
    %130 = arith.mulf %129, %128 : vector<64x256xf32>
    %cst_63 = arith.constant 0.707106769 : f32
    %131 = vector.broadcast %cst_63 : f32 to vector<64x256xf32>
    %132 = arith.mulf %128, %131 : vector<64x256xf32>
    %133 = math.erf %132 : vector<64x256xf32>
    %cst_64 = arith.constant 1.000000e+00 : f32
    %134 = vector.broadcast %cst_64 : f32 to vector<64x256xf32>
    %135 = arith.addf %134, %133 : vector<64x256xf32>
    %136 = arith.mulf %130, %135 : vector<64x256xf32>
    %137 = arith.truncf %136 : vector<64x256xf32> to vector<64x256xbf16>
    %c0_65 = arith.constant 0 : index
    %c0_66 = arith.constant 0 : index
    %138 = vector.load %arg12[%c0_65, %c0_66] : memref<256x128xbf16, #tpu.memory_space<vmem>>, vector<256x128xbf16>
    %cst_67 = arith.constant dense<0.000000e+00> : vector<64x128xf32>
    %139 = tpu.matmul %137, %138, %cst_67 {dimension_numbers = #tpu.dot_dimension_numbers<[1], [0], [0], [1], [0, 0, 1, 1], [], []>} : vector<64x256xbf16>, vector<256x128xbf16>, vector<64x128xf32> -> vector<64x128xf32>
    %c0_68 = arith.constant 0 : index
    %c0_69 = arith.constant 0 : index
    %140 = vector.load %arg13[%c0_68, %c0_69] : memref<1x128xf32, #tpu.memory_space<vmem>>, vector<1x128xf32>
    %141 = vector.broadcast %140 : vector<1x128xf32> to vector<64x128xf32>
    %142 = arith.addf %139, %141 : vector<64x128xf32>
    %143 = arith.addf %122, %142 : vector<64x128xf32>
    %c0_70 = arith.constant 0 : index
    %c0_71 = arith.constant 0 : index
    %144 = vector.load %arg16[%c0_70, %c0_71] : memref<1x128xf32, #tpu.memory_space<vmem>>, vector<1x128xf32>
    %c0_72 = arith.constant 0 : index
    %c0_73 = arith.constant 0 : index
    %145 = vector.load %arg17[%c0_72, %c0_73] : memref<1x128xf32, #tpu.memory_space<vmem>>, vector<1x128xf32>
    %cst_74 = arith.constant dense<0.000000e+00> : vector<64xf32>
    %146 = vector.multi_reduction <add>, %143, %cst_74 [1] : vector<64x128xf32> to vector<64xf32>
    %147 = vector.shape_cast %146 : vector<64xf32> to vector<64x1xf32>
    %cst_75 = arith.constant 1.280000e+02 : f32
    %148 = vector.broadcast %cst_75 : f32 to vector<64x1xf32>
    %149 = arith.divf %147, %148 : vector<64x1xf32>
    %150 = vector.broadcast %149 : vector<64x1xf32> to vector<64x128xf32>
    %151 = arith.subf %143, %150 : vector<64x128xf32>
    %152 = arith.mulf %151, %151 : vector<64x128xf32>
    %cst_76 = arith.constant dense<0.000000e+00> : vector<64xf32>
    %153 = vector.multi_reduction <add>, %152, %cst_76 [1] : vector<64x128xf32> to vector<64xf32>
    %154 = vector.shape_cast %153 : vector<64xf32> to vector<64x1xf32>
    %cst_77 = arith.constant 1.280000e+02 : f32
    %155 = vector.broadcast %cst_77 : f32 to vector<64x1xf32>
    %156 = arith.divf %154, %155 : vector<64x1xf32>
    %157 = vector.broadcast %149 : vector<64x1xf32> to vector<64x128xf32>
    %158 = arith.subf %143, %157 : vector<64x128xf32>
    %cst_78 = arith.constant 9.99999974E-6 : f32
    %159 = vector.broadcast %cst_78 : f32 to vector<64x1xf32>
    %160 = arith.addf %156, %159 : vector<64x1xf32>
    %161 = math.rsqrt %160 : vector<64x1xf32>
    %162 = vector.broadcast %161 : vector<64x1xf32> to vector<64x128xf32>
    %163 = arith.mulf %158, %162 : vector<64x128xf32>
    %164 = vector.broadcast %144 : vector<1x128xf32> to vector<64x128xf32>
    %165 = arith.mulf %163, %164 : vector<64x128xf32>
    %166 = vector.broadcast %145 : vector<1x128xf32> to vector<64x128xf32>
    %167 = arith.addf %165, %166 : vector<64x128xf32>
    %c0_79 = arith.constant 0 : index
    %c0_80 = arith.constant 0 : index
    %c0_81 = arith.constant 0 : index
    %168 = vector.load %arg18[%c0_79, %c0_80, %c0_81] : memref<1x64x128xf32, #tpu.memory_space<vmem>>, vector<1x64x128xf32>
    %169 = vector.shape_cast %168 : vector<1x64x128xf32> to vector<64x128xf32>
    %170 = vector.shape_cast %167 : vector<64x128xf32> to vector<1x64x128xf32>
    tpu.vector_store %arg18[%c0_79, %c0_80, %c0_81], %170 {strides = array<i32>} : memref<1x64x128xf32, #tpu.memory_space<vmem>>, vector<1x64x128xf32>,
    return
  }
  func.func @transform_0(%arg0: i32, %arg1: i32) -> (i32, i32, i32) {
    %c0_i32 = arith.constant 0 : i32
    %c0_i32_0 = arith.constant 0 : i32
    %c0_i32_1 = arith.constant 0 : i32
    return %arg0, %c0_i32, %c0_i32_0 : i32, i32, i32
  }
  func.func @transform_1(%arg0: i32, %arg1: i32) -> (i32, i32, i32) {
    %c0_i32 = arith.constant 0 : i32
    %c0_i32_0 = arith.constant 0 : i32
    return %arg0, %arg1, %c0_i32 : i32, i32, i32
  }
  func.func @transform_2(%arg0: i32, %arg1: i32) -> (i32, i32) {
    %c0_i32 = arith.constant 0 : i32
    %c0_i32_0 = arith.constant 0 : i32
    %c0_i32_1 = arith.constant 0 : i32
    return %c0_i32, %c0_i32_0 : i32, i32
  }
  func.func @transform_3(%arg0: i32, %arg1: i32) -> (i32, i32) {
    %c0_i32 = arith.constant 0 : i32
    %c0_i32_0 = arith.constant 0 : i32
    %c0_i32_1 = arith.constant 0 : i32
    return %c0_i32, %c0_i32_0 : i32, i32
  }
  func.func @transform_4(%arg0: i32, %arg1: i32) -> (i32, i32) {
    %c0_i32 = arith.constant 0 : i32
    %c0_i32_0 = arith.constant 0 : i32
    %c0_i32_1 = arith.constant 0 : i32
    return %c0_i32, %c0_i32_0 : i32, i32
  }
  func.func @transform_5(%arg0: i32, %arg1: i32) -> (i32, i32) {
    %c0_i32 = arith.constant 0 : i32
    %c0_i32_0 = arith.constant 0 : i32
    %c0_i32_1 = arith.constant 0 : i32
    return %c0_i32, %c0_i32_0 : i32, i32
  }
  func.func @transform_6(%arg0: i32, %arg1: i32) -> (i32, i32) {
    %c0_i32 = arith.constant 0 : i32
    %c0_i32_0 = arith.constant 0 : i32
    %c0_i32_1 = arith.constant 0 : i32
    return %c0_i32, %c0_i32_0 : i32, i32
  }
  func.func @transform_7(%arg0: i32, %arg1: i32) -> (i32, i32) {
    %c0_i32 = arith.constant 0 : i32
    %c0_i32_0 = arith.constant 0 : i32
    %c0_i32_1 = arith.constant 0 : i32
    return %c0_i32, %c0_i32_0 : i32, i32
  }
  func.func @transform_8(%arg0: i32, %arg1: i32) -> (i32, i32) {
    %c0_i32 = arith.constant 0 : i32
    %c0_i32_0 = arith.constant 0 : i32
    %c0_i32_1 = arith.constant 0 : i32
    return %c0_i32, %c0_i32_0 : i32, i32
  }
  func.func @transform_9(%arg0: i32, %arg1: i32) -> (i32, i32) {
    %c0_i32 = arith.constant 0 : i32
    %c0_i32_0 = arith.constant 0 : i32
    %c0_i32_1 = arith.constant 0 : i32
    return %c0_i32, %c0_i32_0 : i32, i32
  }
  func.func @transform_10(%arg0: i32, %arg1: i32) -> (i32, i32) {
    %c0_i32 = arith.constant 0 : i32
    %c0_i32_0 = arith.constant 0 : i32
    %c0_i32_1 = arith.constant 0 : i32
    return %c0_i32, %c0_i32_0 : i32, i32
  }
  func.func @transform_11(%arg0: i32, %arg1: i32) -> (i32, i32) {
    %c0_i32 = arith.constant 0 : i32
    %c0_i32_0 = arith.constant 0 : i32
    %c0_i32_1 = arith.constant 0 : i32
    return %c0_i32, %c0_i32_0 : i32, i32
  }
  func.func @transform_12(%arg0: i32, %arg1: i32) -> (i32, i32) {
    %c0_i32 = arith.constant 0 : i32
    %c0_i32_0 = arith.constant 0 : i32
    %c0_i32_1 = arith.constant 0 : i32
    return %c0_i32, %c0_i32_0 : i32, i32
  }
  func.func @transform_13(%arg0: i32, %arg1: i32) -> (i32, i32) {
    %c0_i32 = arith.constant 0 : i32
    %c0_i32_0 = arith.constant 0 : i32
    %c0_i32_1 = arith.constant 0 : i32
    return %c0_i32, %c0_i32_0 : i32, i32
  }
  func.func @transform_14(%arg0: i32, %arg1: i32) -> (i32, i32) {
    %c0_i32 = arith.constant 0 : i32
    %c0_i32_0 = arith.constant 0 : i32
    %c0_i32_1 = arith.constant 0 : i32
    return %c0_i32, %c0_i32_0 : i32, i32
  }
  func.func @transform_15(%arg0: i32, %arg1: i32) -> (i32, i32) {
    %c0_i32 = arith.constant 0 : i32
    %c0_i32_0 = arith.constant 0 : i32
    %c0_i32_1 = arith.constant 0 : i32
    return %c0_i32, %c0_i32_0 : i32, i32
  }
  func.func @transform_16(%arg0: i32, %arg1: i32) -> (i32, i32, i32) {
    %c0_i32 = arith.constant 0 : i32
    %c0_i32_0 = arith.constant 0 : i32
    return %arg0, %arg1, %c0_i32 : i32, i32, i32
  }
}

module attributes {stable_mosaic.version = 11 : i64} {
  func.func @encoder_layer_kernel(%arg0: i32, %arg1: i32, %arg2: memref<1x128x128xbf16, #tpu.memory_space<vmem>>, %arg3: memref<1x64x128xf32, #tpu.memory_space<vmem>>, %arg4: memref<128x128xbf16, #tpu.memory_space<vmem>>, %arg5: memref<1x128xf32, #tpu.memory_space<vmem>>, %arg6: memref<128x256xbf16, #tpu.memory_space<vmem>>, %arg7: memref<1x256xf32, #tpu.memory_space<vmem>>, %arg8: memref<128x128xbf16, #tpu.memory_space<vmem>>, %arg9: memref<1x128xf32, #tpu.memory_space<vmem>>, %arg10: memref<128x256xbf16, #tpu.memory_space<vmem>>, %arg11: memref<1x256xf32, #tpu.memory_space<vmem>>, %arg12: memref<256x128xbf16, #tpu.memory_space<vmem>>, %arg13: memref<1x128xf32, #tpu.memory_space<vmem>>, %arg14: memref<1x128xf32, #tpu.memory_space<vmem>>, %arg15: memref<1x128xf32, #tpu.memory_space<vmem>>, %arg16: memref<1x128xf32, #tpu.memory_space<vmem>>, %arg17: memref<1x128xf32, #tpu.memory_space<vmem>>, %arg18: memref<1x64x128xf32, #tpu.memory_space<vmem>>, %arg19: memref<128x256xbf16, #tpu.memory_space<vmem>>) attributes {dimension_semantics = [#tpu.dimension_semantics<parallel>, #tpu.dimension_semantics<arbitrary>], iteration_bounds = array<i64: 2, 2>, scalar_prefetch = 0 : i64, scratch_operands = 1 : i64, tpu.core_type = #tpu.core_type<tc>, window_params = [{transform_indices = @transform_0, window_bounds = array<i64: 1, 128, 128>}, {transform_indices = @transform_1, window_bounds = array<i64: 1, 64, 128>}, {pipeline_mode = #tpu.pipeline_mode<synchronous>, transform_indices = @transform_2, window_bounds = array<i64: 128, 128>}, {pipeline_mode = #tpu.pipeline_mode<synchronous>, transform_indices = @transform_3, window_bounds = array<i64: 1, 128>}, {pipeline_mode = #tpu.pipeline_mode<synchronous>, transform_indices = @transform_4, window_bounds = array<i64: 128, 256>}, {pipeline_mode = #tpu.pipeline_mode<synchronous>, transform_indices = @transform_5, window_bounds = array<i64: 1, 256>}, {pipeline_mode = #tpu.pipeline_mode<synchronous>, transform_indices = @transform_6, window_bounds = array<i64: 128, 128>}, {pipeline_mode = #tpu.pipeline_mode<synchronous>, transform_indices = @transform_7, window_bounds = array<i64: 1, 128>}, {pipeline_mode = #tpu.pipeline_mode<synchronous>, transform_indices = @transform_8, window_bounds = array<i64: 128, 256>}, {pipeline_mode = #tpu.pipeline_mode<synchronous>, transform_indices = @transform_9, window_bounds = array<i64: 1, 256>}, {pipeline_mode = #tpu.pipeline_mode<synchronous>, transform_indices = @transform_10, window_bounds = array<i64: 256, 128>}, {pipeline_mode = #tpu.pipeline_mode<synchronous>, transform_indices = @transform_11, window_bounds = array<i64: 1, 128>}, {pipeline_mode = #tpu.pipeline_mode<synchronous>, transform_indices = @transform_12, window_bounds = array<i64: 1, 128>}, {pipeline_mode = #tpu.pipeline_mode<synchronous>, transform_indices = @transform_13, window_bounds = array<i64: 1, 128>}, {pipeline_mode = #tpu.pipeline_mode<synchronous>, transform_indices = @transform_14, window_bounds = array<i64: 1, 128>}, {pipeline_mode = #tpu.pipeline_mode<synchronous>, transform_indices = @transform_15, window_bounds = array<i64: 1, 128>}, {transform_indices = @transform_16, window_bounds = array<i64: 1, 64, 128>}]} {
    %c0_i32 = arith.constant 0 : i32
    %0 = arith.cmpi eq, %arg1, %c0_i32 : i32
    %1 = arith.extui %0 : i1 to i32
    %c0_i32_0 = arith.constant 0 : i32
    %2 = arith.cmpi ne, %1, %c0_i32_0 : i32
    scf.if %2 {
      %c0_82 = arith.constant 0 : index
      %c0_83 = arith.constant 0 : index
      %c0_84 = arith.constant 0 : index
      %171 = vector.load %arg2[%c0_82, %c0_83, %c0_84] : memref<1x128x128xbf16, #tpu.memory_space<vmem>>, vector<1x128x128xbf16>
      %172 = vector.shape_cast %171 : vector<1x128x128xbf16> to vector<128x128xbf16>
      %c0_85 = arith.constant 0 : index
      %c0_86 = arith.constant 0 : index
      %173 = vector.load %arg6[%c0_85, %c0_86] : memref<128x256xbf16, #tpu.memory_space<vmem>>, vector<128x256xbf16>
      %cst_87 = arith.constant dense<0.000000e+00> : vector<128x256xf32>
      %174 = tpu.matmul %172, %173, %cst_87 {dimension_numbers = #tpu.dot_dimension_numbers<[1], [0], [0], [1], [0, 0, 1, 1], [], []>} : vector<128x128xbf16>, vector<128x256xbf16>, vector<128x256xf32> -> vector<128x256xf32>
      %c0_88 = arith.constant 0 : index
      %c0_89 = arith.constant 0 : index
      %175 = vector.load %arg7[%c0_88, %c0_89] : memref<1x256xf32, #tpu.memory_space<vmem>>, vector<1x256xf32>
      %176 = vector.broadcast %175 : vector<1x256xf32> to vector<128x256xf32>
      %177 = arith.addf %174, %176 : vector<128x256xf32>
      %178 = arith.truncf %177 : vector<128x256xf32> to vector<128x256xbf16>
      %c0_90 = arith.constant 0 : index
      %c0_91 = arith.constant 0 : index
      %179 = vector.load %arg19[%c0_90, %c0_91] : memref<128x256xbf16, #tpu.memory_space<vmem>>, vector<128x256xbf16>
      tpu.vector_store %arg19[%c0_90, %c0_91], %178 {strides = array<i32>} : memref<128x256xbf16, #tpu.memory_space<vmem>>, vector<128x256xbf16>,
    } else {
    }
    %c0 = arith.constant 0 : index
    %c0_1 = arith.constant 0 : index
    %c0_2 = arith.constant 0 : index
    %3 = vector.load %arg3[%c0, %c0_1, %c0_2] : memref<1x64x128xf32, #tpu.memory_space<vmem>>, vector<1x64x128xf32>
    %4 = vector.shape_cast %3 : vector<1x64x128xf32> to vector<64x128xf32>
    %5 = arith.truncf %4 : vector<64x128xf32> to vector<64x128xbf16>
    %c0_3 = arith.constant 0 : index
    %c0_4 = arith.constant 0 : index
    %6 = vector.load %arg4[%c0_3, %c0_4] : memref<128x128xbf16, #tpu.memory_space<vmem>>, vector<128x128xbf16>
    %cst = arith.constant dense<0.000000e+00> : vector<64x128xf32>
    %7 = tpu.matmul %5, %6, %cst {dimension_numbers = #tpu.dot_dimension_numbers<[1], [0], [0], [1], [0, 0, 1, 1], [], []>} : vector<64x128xbf16>, vector<128x128xbf16>, vector<64x128xf32> -> vector<64x128xf32>
    %c0_5 = arith.constant 0 : index
    %c0_6 = arith.constant 0 : index
    %8 = vector.load %arg5[%c0_5, %c0_6] : memref<1x128xf32, #tpu.memory_space<vmem>>, vector<1x128xf32>
    %9 = vector.broadcast %8 : vector<1x128xf32> to vector<64x128xf32>
    %10 = arith.addf %7, %9 : vector<64x128xf32>
    %cst_7 = arith.constant 0.176776692 : f32
    %11 = vector.broadcast %cst_7 : f32 to vector<64x128xf32>
    %12 = arith.mulf %10, %11 : vector<64x128xf32>
    %13 = arith.truncf %12 : vector<64x128xf32> to vector<64x128xbf16>
    %cst_8 = arith.constant 0.000000e+00 : f32
    %14 = vector.broadcast %cst_8 : f32 to vector<64x128xf32>
    %15 = vector.extract_strided_slice %13 {offsets = [0, 0], sizes = [64, 32], strides = [1, 1]} : vector<64x128xbf16> to vector<64x32xbf16>
    %c0_9 = arith.constant 0 : index
    %c0_10 = arith.constant 0 : index
    %16 = vector.load %arg19[%c0_9, %c0_10] : memref<128x256xbf16, #tpu.memory_space<vmem>>, vector<128x32xbf16>
    %c0_11 = arith.constant 0 : index
    %c128 = arith.constant 128 : index
    %17 = vector.load %arg19[%c0_11, %c128] : memref<128x256xbf16, #tpu.memory_space<vmem>>, vector<128x32xbf16>
    "tpu.trace_start"() <{level = 10 : i32, message = "qd,kd->qk"}> : () -> ()
    %cst_12 = arith.constant dense<0.000000e+00> : vector<64x128xf32>
    %18 = tpu.matmul %15, %16, %cst_12 {dimension_numbers = #tpu.dot_dimension_numbers<[1], [1], [0], [0], [0, 0, 1, 0], [], []>} : vector<64x32xbf16>, vector<128x32xbf16>, vector<64x128xf32> -> vector<64x128xf32>
    "tpu.trace_stop"() : () -> ()
    %cst_13 = arith.constant dense<0xFF800000> : vector<64xf32>
    %19 = vector.multi_reduction <maximumf>, %18, %cst_13 [1] : vector<64x128xf32> to vector<64xf32>
    %20 = vector.shape_cast %19 : vector<64xf32> to vector<64x1xf32>
    %21 = vector.broadcast %20 : vector<64x1xf32> to vector<64x128xf32>
    %22 = arith.subf %18, %21 : vector<64x128xf32>
    %23 = math.exp %22 : vector<64x128xf32>
    %cst_14 = arith.constant dense<0.000000e+00> : vector<64xf32>
    %24 = vector.multi_reduction <add>, %23, %cst_14 [1] : vector<64x128xf32> to vector<64xf32>
    %25 = vector.shape_cast %24 : vector<64xf32> to vector<64x1xf32>
    %26 = arith.truncf %23 : vector<64x128xf32> to vector<64x128xbf16>
    %cst_15 = arith.constant dense<0.000000e+00> : vector<64x32xf32>
    %27 = tpu.matmul %26, %17, %cst_15 {dimension_numbers = #tpu.dot_dimension_numbers<[1], [0], [0], [1], [0, 0, 1, 1], [], []>} : vector<64x128xbf16>, vector<128x32xbf16>, vector<64x32xf32> -> vector<64x32xf32>
    %28 = tpu.reciprocal %25 {approx = true} : vector<64x1xf32> -> vector<64x1xf32>
    %29 = vector.broadcast %28 : vector<64x1xf32> to vector<64x32xf32>
    %30 = arith.mulf %27, %29 : vector<64x32xf32>
    %31 = arith.truncf %30 : vector<64x32xf32> to vector<64x32xbf16>
    %c0_16 = arith.constant 0 : index
    %c0_17 = arith.constant 0 : index
    %32 = vector.load %arg8[%c0_16, %c0_17] : memref<128x128xbf16, #tpu.memory_space<vmem>>, vector<32x128xbf16>
    %cst_18 = arith.constant dense<0.000000e+00> : vector<64x128xf32>
    %33 = tpu.matmul %31, %32, %cst_18 {dimension_numbers = #tpu.dot_dimension_numbers<[1], [0], [0], [1], [0, 0, 1, 1], [], []>} : vector<64x32xbf16>, vector<32x128xbf16>, vector<64x128xf32> -> vector<64x128xf32>
    %34 = arith.addf %14, %33 : vector<64x128xf32>
    %35 = vector.extract_strided_slice %13 {offsets = [0, 32], sizes = [64, 32], strides = [1, 1]} : vector<64x128xbf16> to vector<64x32xbf16>
    %c0_19 = arith.constant 0 : index
    %c32 = arith.constant 32 : index
    %36 = vector.load %arg19[%c0_19, %c32] : memref<128x256xbf16, #tpu.memory_space<vmem>>, vector<128x32xbf16>
    %c0_20 = arith.constant 0 : index
    %c160 = arith.constant 160 : index
    %37 = vector.load %arg19[%c0_20, %c160] : memref<128x256xbf16, #tpu.memory_space<vmem>>, vector<128x32xbf16>
    "tpu.trace_start"() <{level = 10 : i32, message = "qd,kd->qk"}> : () -> ()
    %cst_21 = arith.constant dense<0.000000e+00> : vector<64x128xf32>
    %38 = tpu.matmul %35, %36, %cst_21 {dimension_numbers = #tpu.dot_dimension_numbers<[1], [1], [0], [0], [0, 0, 1, 0], [], []>} : vector<64x32xbf16>, vector<128x32xbf16>, vector<64x128xf32> -> vector<64x128xf32>
    "tpu.trace_stop"() : () -> ()
    %cst_22 = arith.constant dense<0xFF800000> : vector<64xf32>
    %39 = vector.multi_reduction <maximumf>, %38, %cst_22 [1] : vector<64x128xf32> to vector<64xf32>
    %40 = vector.shape_cast %39 : vector<64xf32> to vector<64x1xf32>
    %41 = vector.broadcast %40 : vector<64x1xf32> to vector<64x128xf32>
    %42 = arith.subf %38, %41 : vector<64x128xf32>
    %43 = math.exp %42 : vector<64x128xf32>
    %cst_23 = arith.constant dense<0.000000e+00> : vector<64xf32>
    %44 = vector.multi_reduction <add>, %43, %cst_23 [1] : vector<64x128xf32> to vector<64xf32>
    %45 = vector.shape_cast %44 : vector<64xf32> to vector<64x1xf32>
    %46 = arith.truncf %43 : vector<64x128xf32> to vector<64x128xbf16>
    %cst_24 = arith.constant dense<0.000000e+00> : vector<64x32xf32>
    %47 = tpu.matmul %46, %37, %cst_24 {dimension_numbers = #tpu.dot_dimension_numbers<[1], [0], [0], [1], [0, 0, 1, 1], [], []>} : vector<64x128xbf16>, vector<128x32xbf16>, vector<64x32xf32> -> vector<64x32xf32>
    %48 = tpu.reciprocal %45 {approx = true} : vector<64x1xf32> -> vector<64x1xf32>
    %49 = vector.broadcast %48 : vector<64x1xf32> to vector<64x32xf32>
    %50 = arith.mulf %47, %49 : vector<64x32xf32>
    %51 = arith.truncf %50 : vector<64x32xf32> to vector<64x32xbf16>
    %c32_25 = arith.constant 32 : index
    %c0_26 = arith.constant 0 : index
    %52 = vector.load %arg8[%c32_25, %c0_26] : memref<128x128xbf16, #tpu.memory_space<vmem>>, vector<32x128xbf16>
    %cst_27 = arith.constant dense<0.000000e+00> : vector<64x128xf32>
    %53 = tpu.matmul %51, %52, %cst_27 {dimension_numbers = #tpu.dot_dimension_numbers<[1], [0], [0], [1], [0, 0, 1, 1], [], []>} : vector<64x32xbf16>, vector<32x128xbf16>, vector<64x128xf32> -> vector<64x128xf32>
    %54 = arith.addf %34, %53 : vector<64x128xf32>
    %55 = vector.extract_strided_slice %13 {offsets = [0, 64], sizes = [64, 32], strides = [1, 1]} : vector<64x128xbf16> to vector<64x32xbf16>
    %c0_28 = arith.constant 0 : index
    %c64 = arith.constant 64 : index
    %56 = vector.load %arg19[%c0_28, %c64] : memref<128x256xbf16, #tpu.memory_space<vmem>>, vector<128x32xbf16>
    %c0_29 = arith.constant 0 : index
    %c192 = arith.constant 192 : index
    %57 = vector.load %arg19[%c0_29, %c192] : memref<128x256xbf16, #tpu.memory_space<vmem>>, vector<128x32xbf16>
    "tpu.trace_start"() <{level = 10 : i32, message = "qd,kd->qk"}> : () -> ()
    %cst_30 = arith.constant dense<0.000000e+00> : vector<64x128xf32>
    %58 = tpu.matmul %55, %56, %cst_30 {dimension_numbers = #tpu.dot_dimension_numbers<[1], [1], [0], [0], [0, 0, 1, 0], [], []>} : vector<64x32xbf16>, vector<128x32xbf16>, vector<64x128xf32> -> vector<64x128xf32>
    "tpu.trace_stop"() : () -> ()
    %cst_31 = arith.constant dense<0xFF800000> : vector<64xf32>
    %59 = vector.multi_reduction <maximumf>, %58, %cst_31 [1] : vector<64x128xf32> to vector<64xf32>
    %60 = vector.shape_cast %59 : vector<64xf32> to vector<64x1xf32>
    %61 = vector.broadcast %60 : vector<64x1xf32> to vector<64x128xf32>
    %62 = arith.subf %58, %61 : vector<64x128xf32>
    %63 = math.exp %62 : vector<64x128xf32>
    %cst_32 = arith.constant dense<0.000000e+00> : vector<64xf32>
    %64 = vector.multi_reduction <add>, %63, %cst_32 [1] : vector<64x128xf32> to vector<64xf32>
    %65 = vector.shape_cast %64 : vector<64xf32> to vector<64x1xf32>
    %66 = arith.truncf %63 : vector<64x128xf32> to vector<64x128xbf16>
    %cst_33 = arith.constant dense<0.000000e+00> : vector<64x32xf32>
    %67 = tpu.matmul %66, %57, %cst_33 {dimension_numbers = #tpu.dot_dimension_numbers<[1], [0], [0], [1], [0, 0, 1, 1], [], []>} : vector<64x128xbf16>, vector<128x32xbf16>, vector<64x32xf32> -> vector<64x32xf32>
    %68 = tpu.reciprocal %65 {approx = true} : vector<64x1xf32> -> vector<64x1xf32>
    %69 = vector.broadcast %68 : vector<64x1xf32> to vector<64x32xf32>
    %70 = arith.mulf %67, %69 : vector<64x32xf32>
    %71 = arith.truncf %70 : vector<64x32xf32> to vector<64x32xbf16>
    %c64_34 = arith.constant 64 : index
    %c0_35 = arith.constant 0 : index
    %72 = vector.load %arg8[%c64_34, %c0_35] : memref<128x128xbf16, #tpu.memory_space<vmem>>, vector<32x128xbf16>
    %cst_36 = arith.constant dense<0.000000e+00> : vector<64x128xf32>
    %73 = tpu.matmul %71, %72, %cst_36 {dimension_numbers = #tpu.dot_dimension_numbers<[1], [0], [0], [1], [0, 0, 1, 1], [], []>} : vector<64x32xbf16>, vector<32x128xbf16>, vector<64x128xf32> -> vector<64x128xf32>
    %74 = arith.addf %54, %73 : vector<64x128xf32>
    %75 = vector.extract_strided_slice %13 {offsets = [0, 96], sizes = [64, 32], strides = [1, 1]} : vector<64x128xbf16> to vector<64x32xbf16>
    %c0_37 = arith.constant 0 : index
    %c96 = arith.constant 96 : index
    %76 = vector.load %arg19[%c0_37, %c96] : memref<128x256xbf16, #tpu.memory_space<vmem>>, vector<128x32xbf16>
    %c0_38 = arith.constant 0 : index
    %c224 = arith.constant 224 : index
    %77 = vector.load %arg19[%c0_38, %c224] : memref<128x256xbf16, #tpu.memory_space<vmem>>, vector<128x32xbf16>
    "tpu.trace_start"() <{level = 10 : i32, message = "qd,kd->qk"}> : () -> ()
    %cst_39 = arith.constant dense<0.000000e+00> : vector<64x128xf32>
    %78 = tpu.matmul %75, %76, %cst_39 {dimension_numbers = #tpu.dot_dimension_numbers<[1], [1], [0], [0], [0, 0, 1, 0], [], []>} : vector<64x32xbf16>, vector<128x32xbf16>, vector<64x128xf32> -> vector<64x128xf32>
    "tpu.trace_stop"() : () -> ()
    %cst_40 = arith.constant dense<0xFF800000> : vector<64xf32>
    %79 = vector.multi_reduction <maximumf>, %78, %cst_40 [1] : vector<64x128xf32> to vector<64xf32>
    %80 = vector.shape_cast %79 : vector<64xf32> to vector<64x1xf32>
    %81 = vector.broadcast %80 : vector<64x1xf32> to vector<64x128xf32>
    %82 = arith.subf %78, %81 : vector<64x128xf32>
    %83 = math.exp %82 : vector<64x128xf32>
    %cst_41 = arith.constant dense<0.000000e+00> : vector<64xf32>
    %84 = vector.multi_reduction <add>, %83, %cst_41 [1] : vector<64x128xf32> to vector<64xf32>
    %85 = vector.shape_cast %84 : vector<64xf32> to vector<64x1xf32>
    %86 = arith.truncf %83 : vector<64x128xf32> to vector<64x128xbf16>
    %cst_42 = arith.constant dense<0.000000e+00> : vector<64x32xf32>
    %87 = tpu.matmul %86, %77, %cst_42 {dimension_numbers = #tpu.dot_dimension_numbers<[1], [0], [0], [1], [0, 0, 1, 1], [], []>} : vector<64x128xbf16>, vector<128x32xbf16>, vector<64x32xf32> -> vector<64x32xf32>
    %88 = tpu.reciprocal %85 {approx = true} : vector<64x1xf32> -> vector<64x1xf32>
    %89 = vector.broadcast %88 : vector<64x1xf32> to vector<64x32xf32>
    %90 = arith.mulf %87, %89 : vector<64x32xf32>
    %91 = arith.truncf %90 : vector<64x32xf32> to vector<64x32xbf16>
    %c96_43 = arith.constant 96 : index
    %c0_44 = arith.constant 0 : index
    %92 = vector.load %arg8[%c96_43, %c0_44] : memref<128x128xbf16, #tpu.memory_space<vmem>>, vector<32x128xbf16>
    %cst_45 = arith.constant dense<0.000000e+00> : vector<64x128xf32>
    %93 = tpu.matmul %91, %92, %cst_45 {dimension_numbers = #tpu.dot_dimension_numbers<[1], [0], [0], [1], [0, 0, 1, 1], [], []>} : vector<64x32xbf16>, vector<32x128xbf16>, vector<64x128xf32> -> vector<64x128xf32>
    %94 = arith.addf %74, %93 : vector<64x128xf32>
    %c0_46 = arith.constant 0 : index
    %c0_47 = arith.constant 0 : index
    %95 = vector.load %arg9[%c0_46, %c0_47] : memref<1x128xf32, #tpu.memory_space<vmem>>, vector<1x128xf32>
    %96 = vector.broadcast %95 : vector<1x128xf32> to vector<64x128xf32>
    %97 = arith.addf %94, %96 : vector<64x128xf32>
    %98 = arith.addf %4, %97 : vector<64x128xf32>
    %c0_48 = arith.constant 0 : index
    %c0_49 = arith.constant 0 : index
    %99 = vector.load %arg14[%c0_48, %c0_49] : memref<1x128xf32, #tpu.memory_space<vmem>>, vector<1x128xf32>
    %c0_50 = arith.constant 0 : index
    %c0_51 = arith.constant 0 : index
    %100 = vector.load %arg15[%c0_50, %c0_51] : memref<1x128xf32, #tpu.memory_space<vmem>>, vector<1x128xf32>
    %cst_52 = arith.constant dense<0.000000e+00> : vector<64xf32>
    %101 = vector.multi_reduction <add>, %98, %cst_52 [1] : vector<64x128xf32> to vector<64xf32>
    %102 = vector.shape_cast %101 : vector<64xf32> to vector<64x1xf32>
    %cst_53 = arith.constant 1.280000e+02 : f32
    %103 = vector.broadcast %cst_53 : f32 to vector<64x1xf32>
    %104 = arith.divf %102, %103 : vector<64x1xf32>
    %105 = vector.broadcast %104 : vector<64x1xf32> to vector<64x128xf32>
    %106 = arith.subf %98, %105 : vector<64x128xf32>
    %107 = arith.mulf %106, %106 : vector<64x128xf32>
    %cst_54 = arith.constant dense<0.000000e+00> : vector<64xf32>
    %108 = vector.multi_reduction <add>, %107, %cst_54 [1] : vector<64x128xf32> to vector<64xf32>
    %109 = vector.shape_cast %108 : vector<64xf32> to vector<64x1xf32>
    %cst_55 = arith.constant 1.280000e+02 : f32
    %110 = vector.broadcast %cst_55 : f32 to vector<64x1xf32>
    %111 = arith.divf %109, %110 : vector<64x1xf32>
    %112 = vector.broadcast %104 : vector<64x1xf32> to vector<64x128xf32>
    %113 = arith.subf %98, %112 : vector<64x128xf32>
    %cst_56 = arith.constant 9.99999974E-6 : f32
    %114 = vector.broadcast %cst_56 : f32 to vector<64x1xf32>
    %115 = arith.addf %111, %114 : vector<64x1xf32>
    %116 = math.rsqrt %115 : vector<64x1xf32>
    %117 = vector.broadcast %116 : vector<64x1xf32> to vector<64x128xf32>
    %118 = arith.mulf %113, %117 : vector<64x128xf32>
    %119 = vector.broadcast %99 : vector<1x128xf32> to vector<64x128xf32>
    %120 = arith.mulf %118, %119 : vector<64x128xf32>
    %121 = vector.broadcast %100 : vector<1x128xf32> to vector<64x128xf32>
    %122 = arith.addf %120, %121 : vector<64x128xf32>
    %123 = arith.truncf %122 : vector<64x128xf32> to vector<64x128xbf16>
    %c0_57 = arith.constant 0 : index
    %c0_58 = arith.constant 0 : index
    %124 = vector.load %arg10[%c0_57, %c0_58] : memref<128x256xbf16, #tpu.memory_space<vmem>>, vector<128x256xbf16>
    %cst_59 = arith.constant dense<0.000000e+00> : vector<64x256xf32>
    %125 = tpu.matmul %123, %124, %cst_59 {dimension_numbers = #tpu.dot_dimension_numbers<[1], [0], [0], [1], [0, 0, 1, 1], [], []>} : vector<64x128xbf16>, vector<128x256xbf16>, vector<64x256xf32> -> vector<64x256xf32>
    %c0_60 = arith.constant 0 : index
    %c0_61 = arith.constant 0 : index
    %126 = vector.load %arg11[%c0_60, %c0_61] : memref<1x256xf32, #tpu.memory_space<vmem>>, vector<1x256xf32>
    %127 = vector.broadcast %126 : vector<1x256xf32> to vector<64x256xf32>
    %128 = arith.addf %125, %127 : vector<64x256xf32>
    %cst_62 = arith.constant 5.000000e-01 : f32
    %129 = vector.broadcast %cst_62 : f32 to vector<64x256xf32>
    %130 = arith.mulf %129, %128 : vector<64x256xf32>
    %cst_63 = arith.constant 0.707106769 : f32
    %131 = vector.broadcast %cst_63 : f32 to vector<64x256xf32>
    %132 = arith.mulf %128, %131 : vector<64x256xf32>
    %133 = math.erf %132 : vector<64x256xf32>
    %cst_64 = arith.constant 1.000000e+00 : f32
    %134 = vector.broadcast %cst_64 : f32 to vector<64x256xf32>
    %135 = arith.addf %134, %133 : vector<64x256xf32>
    %136 = arith.mulf %130, %135 : vector<64x256xf32>
    %137 = arith.truncf %136 : vector<64x256xf32> to vector<64x256xbf16>
    %c0_65 = arith.constant 0 : index
    %c0_66 = arith.constant 0 : index
    %138 = vector.load %arg12[%c0_65, %c0_66] : memref<256x128xbf16, #tpu.memory_space<vmem>>, vector<256x128xbf16>
    %cst_67 = arith.constant dense<0.000000e+00> : vector<64x128xf32>
    %139 = tpu.matmul %137, %138, %cst_67 {dimension_numbers = #tpu.dot_dimension_numbers<[1], [0], [0], [1], [0, 0, 1, 1], [], []>} : vector<64x256xbf16>, vector<256x128xbf16>, vector<64x128xf32> -> vector<64x128xf32>
    %c0_68 = arith.constant 0 : index
    %c0_69 = arith.constant 0 : index
    %140 = vector.load %arg13[%c0_68, %c0_69] : memref<1x128xf32, #tpu.memory_space<vmem>>, vector<1x128xf32>
    %141 = vector.broadcast %140 : vector<1x128xf32> to vector<64x128xf32>
    %142 = arith.addf %139, %141 : vector<64x128xf32>
    %143 = arith.addf %122, %142 : vector<64x128xf32>
    %c0_70 = arith.constant 0 : index
    %c0_71 = arith.constant 0 : index
    %144 = vector.load %arg16[%c0_70, %c0_71] : memref<1x128xf32, #tpu.memory_space<vmem>>, vector<1x128xf32>
    %c0_72 = arith.constant 0 : index
    %c0_73 = arith.constant 0 : index
    %145 = vector.load %arg17[%c0_72, %c0_73] : memref<1x128xf32, #tpu.memory_space<vmem>>, vector<1x128xf32>
    %cst_74 = arith.constant dense<0.000000e+00> : vector<64xf32>
    %146 = vector.multi_reduction <add>, %143, %cst_74 [1] : vector<64x128xf32> to vector<64xf32>
    %147 = vector.shape_cast %146 : vector<64xf32> to vector<64x1xf32>
    %cst_75 = arith.constant 1.280000e+02 : f32
    %148 = vector.broadcast %cst_75 : f32 to vector<64x1xf32>
    %149 = arith.divf %147, %148 : vector<64x1xf32>
    %150 = vector.broadcast %149 : vector<64x1xf32> to vector<64x128xf32>
    %151 = arith.subf %143, %150 : vector<64x128xf32>
    %152 = arith.mulf %151, %151 : vector<64x128xf32>
    %cst_76 = arith.constant dense<0.000000e+00> : vector<64xf32>
    %153 = vector.multi_reduction <add>, %152, %cst_76 [1] : vector<64x128xf32> to vector<64xf32>
    %154 = vector.shape_cast %153 : vector<64xf32> to vector<64x1xf32>
    %cst_77 = arith.constant 1.280000e+02 : f32
    %155 = vector.broadcast %cst_77 : f32 to vector<64x1xf32>
    %156 = arith.divf %154, %155 : vector<64x1xf32>
    %157 = vector.broadcast %149 : vector<64x1xf32> to vector<64x128xf32>
    %158 = arith.subf %143, %157 : vector<64x128xf32>
    %cst_78 = arith.constant 9.99999974E-6 : f32
    %159 = vector.broadcast %cst_78 : f32 to vector<64x1xf32>
    %160 = arith.addf %156, %159 : vector<64x1xf32>
    %161 = math.rsqrt %160 : vector<64x1xf32>
    %162 = vector.broadcast %161 : vector<64x1xf32> to vector<64x128xf32>
    %163 = arith.mulf %158, %162 : vector<64x128xf32>
    %164 = vector.broadcast %144 : vector<1x128xf32> to vector<64x128xf32>
    %165 = arith.mulf %163, %164 : vector<64x128xf32>
    %166 = vector.broadcast %145 : vector<1x128xf32> to vector<64x128xf32>
    %167 = arith.addf %165, %166 : vector<64x128xf32>
    %c0_79 = arith.constant 0 : index
    %c0_80 = arith.constant 0 : index
    %c0_81 = arith.constant 0 : index
    %168 = vector.load %arg18[%c0_79, %c0_80, %c0_81] : memref<1x64x128xf32, #tpu.memory_space<vmem>>, vector<1x64x128xf32>
    %169 = vector.shape_cast %168 : vector<1x64x128xf32> to vector<64x128xf32>
    %170 = vector.shape_cast %167 : vector<64x128xf32> to vector<1x64x128xf32>
    tpu.vector_store %arg18[%c0_79, %c0_80, %c0_81], %170 {strides = array<i32>} : memref<1x64x128xf32, #tpu.memory_space<vmem>>, vector<1x64x128xf32>,
    return
  }
  func.func @transform_0(%arg0: i32, %arg1: i32) -> (i32, i32, i32) {
    %c0_i32 = arith.constant 0 : i32
    %c0_i32_0 = arith.constant 0 : i32
    %c0_i32_1 = arith.constant 0 : i32
    return %arg0, %c0_i32, %c0_i32_0 : i32, i32, i32
  }
  func.func @transform_1(%arg0: i32, %arg1: i32) -> (i32, i32, i32) {
    %c0_i32 = arith.constant 0 : i32
    %c0_i32_0 = arith.constant 0 : i32
    return %arg0, %arg1, %c0_i32 : i32, i32, i32
  }
  func.func @transform_2(%arg0: i32, %arg1: i32) -> (i32, i32) {
    %c0_i32 = arith.constant 0 : i32
    %c0_i32_0 = arith.constant 0 : i32
    %c0_i32_1 = arith.constant 0 : i32
    return %c0_i32, %c0_i32_0 : i32, i32
  }
  func.func @transform_3(%arg0: i32, %arg1: i32) -> (i32, i32) {
    %c0_i32 = arith.constant 0 : i32
    %c0_i32_0 = arith.constant 0 : i32
    %c0_i32_1 = arith.constant 0 : i32
    return %c0_i32, %c0_i32_0 : i32, i32
  }
  func.func @transform_4(%arg0: i32, %arg1: i32) -> (i32, i32) {
    %c0_i32 = arith.constant 0 : i32
    %c0_i32_0 = arith.constant 0 : i32
    %c0_i32_1 = arith.constant 0 : i32
    return %c0_i32, %c0_i32_0 : i32, i32
  }
  func.func @transform_5(%arg0: i32, %arg1: i32) -> (i32, i32) {
    %c0_i32 = arith.constant 0 : i32
    %c0_i32_0 = arith.constant 0 : i32
    %c0_i32_1 = arith.constant 0 : i32
    return %c0_i32, %c0_i32_0 : i32, i32
  }
  func.func @transform_6(%arg0: i32, %arg1: i32) -> (i32, i32) {
    %c0_i32 = arith.constant 0 : i32
    %c0_i32_0 = arith.constant 0 : i32
    %c0_i32_1 = arith.constant 0 : i32
    return %c0_i32, %c0_i32_0 : i32, i32
  }
  func.func @transform_7(%arg0: i32, %arg1: i32) -> (i32, i32) {
    %c0_i32 = arith.constant 0 : i32
    %c0_i32_0 = arith.constant 0 : i32
    %c0_i32_1 = arith.constant 0 : i32
    return %c0_i32, %c0_i32_0 : i32, i32
  }
  func.func @transform_8(%arg0: i32, %arg1: i32) -> (i32, i32) {
    %c0_i32 = arith.constant 0 : i32
    %c0_i32_0 = arith.constant 0 : i32
    %c0_i32_1 = arith.constant 0 : i32
    return %c0_i32, %c0_i32_0 : i32, i32
  }
  func.func @transform_9(%arg0: i32, %arg1: i32) -> (i32, i32) {
    %c0_i32 = arith.constant 0 : i32
    %c0_i32_0 = arith.constant 0 : i32
    %c0_i32_1 = arith.constant 0 : i32
    return %c0_i32, %c0_i32_0 : i32, i32
  }
  func.func @transform_10(%arg0: i32, %arg1: i32) -> (i32, i32) {
    %c0_i32 = arith.constant 0 : i32
    %c0_i32_0 = arith.constant 0 : i32
    %c0_i32_1 = arith.constant 0 : i32
    return %c0_i32, %c0_i32_0 : i32, i32
  }
  func.func @transform_11(%arg0: i32, %arg1: i32) -> (i32, i32) {
    %c0_i32 = arith.constant 0 : i32
    %c0_i32_0 = arith.constant 0 : i32
    %c0_i32_1 = arith.constant 0 : i32
    return %c0_i32, %c0_i32_0 : i32, i32
  }
  func.func @transform_12(%arg0: i32, %arg1: i32) -> (i32, i32) {
    %c0_i32 = arith.constant 0 : i32
    %c0_i32_0 = arith.constant 0 : i32
    %c0_i32_1 = arith.constant 0 : i32
    return %c0_i32, %c0_i32_0 : i32, i32
  }
  func.func @transform_13(%arg0: i32, %arg1: i32) -> (i32, i32) {
    %c0_i32 = arith.constant 0 : i32
    %c0_i32_0 = arith.constant 0 : i32
    %c0_i32_1 = arith.constant 0 : i32
    return %c0_i32, %c0_i32_0 : i32, i32
  }
  func.func @transform_14(%arg0: i32, %arg1: i32) -> (i32, i32) {
    %c0_i32 = arith.constant 0 : i32
    %c0_i32_0 = arith.constant 0 : i32
    %c0_i32_1 = arith.constant 0 : i32
    return %c0_i32, %c0_i32_0 : i32, i32
  }
  func.func @transform_15(%arg0: i32, %arg1: i32) -> (i32, i32) {
    %c0_i32 = arith.constant 0 : i32
    %c0_i32_0 = arith.constant 0 : i32
    %c0_i32_1 = arith.constant 0 : i32
    return %c0_i32, %c0_i32_0 : i32, i32
  }
  func.func @transform_16(%arg0: i32, %arg1: i32) -> (i32, i32, i32) {
    %c0_i32 = arith.constant 0 : i32
    %c0_i32_0 = arith.constant 0 : i32
    return %arg0, %arg1, %c0_i32 : i32, i32, i32
  }
}

</mosaic_0001>

<llo_original>
// kernel: tpu_custom_call.1
$region0: #{tpu_custom_call.1}
  #allocation0 [shape = 'u32[]', space=smem, size = 0x4, offset = 0x4, fixed_abs, tag = 'smem constant byte address 0x4 - core index']
  #allocation1 [shape = 'u32[144,128]{1,0:T(1,128)}', space=vmem, size = 0x12000, scoped, tag = 'internal scratch']
  #allocation2 [shape = 'bf16[128,256]{1,0:T(8,128)(2,1)}', space=vmem, size = 0x10000, scoped, tag = 'scratch operand']
  %s0 = inlined_call_operand.hbm [shape: bf16[2,128,128], index: 0, kind: input, shape index: {}]
  %s1 = inlined_call_operand.hbm [shape: f32[2,128,128], index: 1, kind: input, shape index: {}]
  %s2 = inlined_call_operand.hbm [shape: bf16[128,128], index: 2, kind: input, shape index: {}]
  %s3 = inlined_call_operand.vmem [shape: f32[1,128], index: 3, kind: input, shape index: {}]
  %s4 = inlined_call_operand.hbm [shape: bf16[128,256], index: 4, kind: input, shape index: {}]
  %s5 = inlined_call_operand.vmem [shape: f32[1,256], index: 5, kind: input, shape index: {}]
  %s6 = inlined_call_operand.hbm [shape: bf16[128,128], index: 6, kind: input, shape index: {}]
  %s7 = inlined_call_operand.vmem [shape: f32[1,128], index: 7, kind: input, shape index: {}]
  %s8 = inlined_call_operand.hbm [shape: bf16[128,256], index: 8, kind: input, shape index: {}]
  %s9 = inlined_call_operand.vmem [shape: f32[1,256], index: 9, kind: input, shape index: {}]
  %s10 = inlined_call_operand.hbm [shape: bf16[256,128], index: 10, kind: input, shape index: {}]
  %s11 = inlined_call_operand.vmem [shape: f32[1,128], index: 11, kind: input, shape index: {}]
  %s12 = inlined_call_operand.vmem [shape: f32[1,128], index: 12, kind: input, shape index: {}]
  %s13 = inlined_call_operand.vmem [shape: f32[1,128], index: 13, kind: input, shape index: {}]
  %s14 = inlined_call_operand.vmem [shape: f32[1,128], index: 14, kind: input, shape index: {}]
  %s15 = inlined_call_operand.vmem [shape: f32[1,128], index: 15, kind: input, shape index: {}]
  %s16 = inlined_call_operand.hbm [shape: f32[2,128,128], index: 16, kind: output, shape index: {}]
  %s17 = sld [smem:[#allocation0]]
  $region129: #{tpu_custom_call.1} parent=0
    _
  %s19 = ssub.s32 1, %s17
  %s20 = scalar_select 0, %s19, %s17
  $region1: #{tpu_custom_call.1} parent=0
    #allocation3 [shape = 'u8[65536]{0}', space=vmem, size = 0x10000, scoped, tag = 'input window, operand 0']
    #allocation4 [shape = 's32[2]{0}', space=sflag, size = 0x8, scoped, tag = 'scoped memory for tpu_custom_call.1']
    #allocation5 [shape = 's32[2]{0}', space=sflag, size = 0x8, scoped, tag = 'scoped memory for tpu_custom_call.1']
    #allocation6 [shape = 'u8[65536]{0}', space=vmem, size = 0x10000, scoped, tag = 'input window, operand 1']
    #allocation7 [shape = 's32[2]{0}', space=sflag, size = 0x8, scoped, tag = 'scoped memory for tpu_custom_call.1']
    #allocation8 [shape = 'u8[32768]{0}', space=vmem, size = 0x8000, scoped, tag = 'input window, operand 2, single buffered']
    #allocation9 [shape = 'u8[65536]{0}', space=vmem, size = 0x10000, scoped, tag = 'input window, operand 4, single buffered']
    #allocation10 [shape = 's32[1]{0}', space=sflag, size = 0x4, scoped, tag = 'scoped memory for tpu_custom_call.1']
    #allocation11 [shape = 'u8[32768]{0}', space=vmem, size = 0x8000, scoped, tag = 'input window, operand 6, single buffered']
    #allocation12 [shape = 'u8[65536]{0}', space=vmem, size = 0x10000, scoped, tag = 'input window, operand 8, single buffered']
    #allocation13 [shape = 's32[1]{0}', space=sflag, size = 0x4, scoped, tag = 'scoped memory for tpu_custom_call.1']
    #allocation14 [shape = 'u8[65536]{0}', space=vmem, size = 0x10000, scoped, tag = 'input window, operand 10, single buffered']
    #allocation15 [shape = 'u8[65536]{0}', space=vmem, size = 0x10000, scoped, tag = 'output window, operand 0']
    %21 = vsyncpa [#allocation4], 0
    %s22 = scalar_lea.sflag [#allocation4], 1
    %23 = vsyncpa %s22, 0
    %24 = vsyncpa [#allocation7], 0
    %s25 = scalar_lea.sflag [#allocation7], 1
    %26 = vsyncpa %s25, 0
    %27 = vsyncpa [#allocation10], 0
    %28 = vsyncpa [#allocation13], 0
    %29 = vsyncpa [#allocation5], 0
    %s30 = scalar_lea.sflag [#allocation5], 1
    %31 = vsyncpa %s30, 0
    loop: start=0, step=1, limit=6
    $region2: #{tpu_custom_call.1} parent=1 // loop_pre_header
      _
    $region3: #{tpu_custom_call.1} parent=1 // loop_header
      %s33 = sphi 0, %s37
      %p34 = scmp.ge.s32.totalorder %s33, 6
      %s40 = sphi 0, %s52
      %s41 = sphi 0, %s48
      %s42 = sphi 0, %s40
      %s43 = sphi 0, %s41
      %s44 = sphi 0, %s42
      %s45 = sphi 0, %s43
      %s55 = sphi 0, %s57
      %s58 = sphi 0, %s55
      %s59 = sphi 0, %s58
      %s75 = sphi 0, %s59
      %s83 = sphi 0, %s85
      %s86 = sphi 0, %s83
      %s87 = sphi 0, %s86
      %s103 = sphi 0, %s87
      %s107 = sphi 0, %s107
      %s109 = sphi 0, %s107
      %s110 = sphi 0, %s109
      %s124 = sphi 0, %s110
      %s128 = sphi 0, %s128
      %s130 = sphi 0, %s128
      %s131 = sphi 0, %s130
      %s145 = sphi 0, %s131
      %s149 = sphi 0, %s149
      %s151 = sphi 0, %s149
      %s152 = sphi 0, %s151
      %s166 = sphi 0, %s152
      %s170 = sphi 0, %s170
      %s172 = sphi 0, %s170
      %s173 = sphi 0, %s172
      %s187 = sphi 0, %s173
      %s191 = sphi 0, %s191
      %s193 = sphi 0, %s191
      %s194 = sphi 0, %s193
      %s208 = sphi 0, %s194
      %s212 = sphi 0, %s212
      %s214 = sphi 0, %s212
      %s215 = sphi 0, %s214
      %s229 = sphi 0, %s215
      %s233 = sphi 0, %s233
      %s235 = sphi 0, %s233
      %s236 = sphi 0, %s235
      %s250 = sphi 0, %s236
      %s254 = sphi 0, %s254
      %s256 = sphi 0, %s254
      %s257 = sphi 0, %s256
      %s271 = sphi 0, %s257
      %s275 = sphi 0, %s275
      %s277 = sphi 0, %s275
      %s278 = sphi 0, %s277
      %s292 = sphi 0, %s278
      %s296 = sphi 0, %s296
      %s298 = sphi 0, %s296
      %s299 = sphi 0, %s298
      %s313 = sphi 0, %s299
      %s317 = sphi 0, %s317
      %s319 = sphi 0, %s317
      %s320 = sphi 0, %s319
      %s334 = sphi 0, %s320
      %s338 = sphi 0, %s338
      %s340 = sphi 0, %s338
      %s341 = sphi 0, %s340
      %s355 = sphi 0, %s341
      %s359 = sphi 0, %s359
      %s361 = sphi 0, %s359
      %s362 = sphi 0, %s361
      %s376 = sphi 0, %s362
      %s380 = sphi 0, %s380
      %s382 = sphi 0, %s380
      %s383 = sphi 0, %s382
      %s397 = sphi 0, %s383
      %s405 = sphi 0, %s407
      %s408 = sphi 0, %s405
      %s409 = sphi 0, %s408
      %s425 = sphi 0, %s409
    $region4: #{tpu_custom_call.1} parent=1 // loop_header_branch
      %36 = sbr.rel (%p34) target = $region8
    $region5: #{tpu_custom_call.1} parent=1 // loop_body
      %s38 = ssub.s32 %s33, 1
      %s39 = ssub.s32 %s33, 2
      %s46 = sadd.s32 1, %s41
      %p47 = scmp.ge.s32.totalorder %s46, 2
      %s48 = scalar_select %p47, 0, %s46
      %s49 = sadd.s32 1, %s40
      %s50 = scalar_select %p47, %s49, %s40
      %p51 = scmp.ge.s32.totalorder %s50, 2
      %s52 = scalar_select %p51, 0, %s50
      %s53 = ssub.s32 %s40, %s52
      %p54 = scmp.eq.s32.totalorder %s53, 0
      %s56 = sadd.s32 %s55, 1
      %s57 = scalar_select %p54, %s55, %s56
      %p60 = pneg %p54
      %p61 = scmp.eq.s32.totalorder %s33, 3
      %p62 = por %p60, %p61
      %p63 = scmp.ne.s32.totalorder %s55, %s58
      %p64 = scmp.eq.s32.totalorder %s33, 0
      %p65 = por %p63, %p64
      %p66 = scmp.ne.s32.totalorder %s55, %s58
      %p67 = scmp.eq.s32.totalorder %s38, 3
      %p68 = por %p66, %p67
      %p69 = scmp.ne.s32.totalorder %s58, %s59
      %p70 = scmp.eq.s32.totalorder %s38, 0
      %p71 = por %p69, %p70
      %p72 = scmp.ne.s32.totalorder %s58, %s59
      %p73 = scmp.eq.s32.totalorder %s39, 3
      %p74 = por %p72, %p73
      %p76 = scmp.ne.s32.totalorder %s59, %s75
      %p77 = scmp.eq.s32.totalorder %s39, 0
      %p78 = por %p76, %p77
      %s79 = ssub.s32 %s40, %s52
      %s80 = ssub.s32 %s41, %s48
      %s81 = sor.u32 %s79, %s80
      %p82 = scmp.eq.s32.totalorder %s81, 0
      %s84 = sadd.s32 %s83, 1
      %s85 = scalar_select %p82, %s83, %s84
      %p88 = pneg %p82
      %p89 = scmp.eq.s32.totalorder %s33, 3
      %p90 = por %p88, %p89
      %p91 = scmp.ne.s32.totalorder %s83, %s86
      %p92 = scmp.eq.s32.totalorder %s33, 0
      %p93 = por %p91, %p92
      %p94 = scmp.ne.s32.totalorder %s83, %s86
      %p95 = scmp.eq.s32.totalorder %s38, 3
      %p96 = por %p94, %p95
      %p97 = scmp.ne.s32.totalorder %s86, %s87
      %p98 = scmp.eq.s32.totalorder %s38, 0
      %p99 = por %p97, %p98
      %p100 = scmp.ne.s32.totalorder %s86, %s87
      %p101 = scmp.eq.s32.totalorder %s39, 3
      %p102 = por %p100, %p101
      %p104 = scmp.ne.s32.totalorder %s87, %s103
      %p105 = scmp.eq.s32.totalorder %s39, 0
      %p106 = por %p104, %p105
      %s108 = sadd.s32 %s107, 1
      %p111 = scmp.eq.s32.totalorder %s33, 3
      %p112 = scmp.ne.s32.totalorder %s107, %s109
      %p113 = scmp.eq.s32.totalorder %s33, 0
      %p114 = por %p112, %p113
      %p115 = scmp.ne.s32.totalorder %s107, %s109
      %p116 = scmp.eq.s32.totalorder %s38, 3
      %p117 = por %p115, %p116
      %p118 = scmp.ne.s32.totalorder %s109, %s110
      %p119 = scmp.eq.s32.totalorder %s38, 0
      %p120 = por %p118, %p119
      %p121 = scmp.ne.s32.totalorder %s109, %s110
      %p122 = scmp.eq.s32.totalorder %s39, 3
      %p123 = por %p121, %p122
      %p125 = scmp.ne.s32.totalorder %s110, %s124
      %p126 = scmp.eq.s32.totalorder %s39, 0
      %p127 = por %p125, %p126
      %s129 = sadd.s32 %s128, 1
      %p132 = scmp.eq.s32.totalorder %s33, 3
      %p133 = scmp.ne.s32.totalorder %s128, %s130
      %p134 = scmp.eq.s32.totalorder %s33, 0
      %p135 = por %p133, %p134
      %p136 = scmp.ne.s32.totalorder %s128, %s130
      %p137 = scmp.eq.s32.totalorder %s38, 3
      %p138 = por %p136, %p137
      %p139 = scmp.ne.s32.totalorder %s130, %s131
      %p140 = scmp.eq.s32.totalorder %s38, 0
      %p141 = por %p139, %p140
      %p142 = scmp.ne.s32.totalorder %s130, %s131
      %p143 = scmp.eq.s32.totalorder %s39, 3
      %p144 = por %p142, %p143
      %p146 = scmp.ne.s32.totalorder %s131, %s145
      %p147 = scmp.eq.s32.totalorder %s39, 0
      %p148 = por %p146, %p147
      %s150 = sadd.s32 %s149, 1
      %p153 = scmp.eq.s32.totalorder %s33, 3
      %p154 = scmp.ne.s32.totalorder %s149, %s151
      %p155 = scmp.eq.s32.totalorder %s33, 0
      %p156 = por %p154, %p155
      %p157 = scmp.ne.s32.totalorder %s149, %s151
      %p158 = scmp.eq.s32.totalorder %s38, 3
      %p159 = por %p157, %p158
      %p160 = scmp.ne.s32.totalorder %s151, %s152
      %p161 = scmp.eq.s32.totalorder %s38, 0
      %p162 = por %p160, %p161
      %p163 = scmp.ne.s32.totalorder %s151, %s152
      %p164 = scmp.eq.s32.totalorder %s39, 3
      %p165 = por %p163, %p164
      %p167 = scmp.ne.s32.totalorder %s152, %s166
      %p168 = scmp.eq.s32.totalorder %s39, 0
      %p169 = por %p167, %p168
      %s171 = sadd.s32 %s170, 1
      %p174 = scmp.eq.s32.totalorder %s33, 3
      %p175 = scmp.ne.s32.totalorder %s170, %s172
      %p176 = scmp.eq.s32.totalorder %s33, 0
      %p177 = por %p175, %p176
      %p178 = scmp.ne.s32.totalorder %s170, %s172
      %p179 = scmp.eq.s32.totalorder %s38, 3
      %p180 = por %p178, %p179
      %p181 = scmp.ne.s32.totalorder %s172, %s173
      %p182 = scmp.eq.s32.totalorder %s38, 0
      %p183 = por %p181, %p182
      %p184 = scmp.ne.s32.totalorder %s172, %s173
      %p185 = scmp.eq.s32.totalorder %s39, 3
      %p186 = por %p184, %p185
      %p188 = scmp.ne.s32.totalorder %s173, %s187
      %p189 = scmp.eq.s32.totalorder %s39, 0
      %p190 = por %p188, %p189
      %s192 = sadd.s32 %s191, 1
      %p195 = scmp.eq.s32.totalorder %s33, 3
      %p196 = scmp.ne.s32.totalorder %s191, %s193
      %p197 = scmp.eq.s32.totalorder %s33, 0
      %p198 = por %p196, %p197
      %p199 = scmp.ne.s32.totalorder %s191, %s193
      %p200 = scmp.eq.s32.totalorder %s38, 3
      %p201 = por %p199, %p200
      %p202 = scmp.ne.s32.totalorder %s193, %s194
      %p203 = scmp.eq.s32.totalorder %s38, 0
      %p204 = por %p202, %p203
      %p205 = scmp.ne.s32.totalorder %s193, %s194
      %p206 = scmp.eq.s32.totalorder %s39, 3
      %p207 = por %p205, %p206
      %p209 = scmp.ne.s32.totalorder %s194, %s208
      %p210 = scmp.eq.s32.totalorder %s39, 0
      %p211 = por %p209, %p210
      %s213 = sadd.s32 %s212, 1
      %p216 = scmp.eq.s32.totalorder %s33, 3
      %p217 = scmp.ne.s32.totalorder %s212, %s214
      %p218 = scmp.eq.s32.totalorder %s33, 0
      %p219 = por %p217, %p218
      %p220 = scmp.ne.s32.totalorder %s212, %s214
      %p221 = scmp.eq.s32.totalorder %s38, 3
      %p222 = por %p220, %p221
      %p223 = scmp.ne.s32.totalorder %s214, %s215
      %p224 = scmp.eq.s32.totalorder %s38, 0
      %p225 = por %p223, %p224
      %p226 = scmp.ne.s32.totalorder %s214, %s215
      %p227 = scmp.eq.s32.totalorder %s39, 3
      %p228 = por %p226, %p227
      %p230 = scmp.ne.s32.totalorder %s215, %s229
      %p231 = scmp.eq.s32.totalorder %s39, 0
      %p232 = por %p230, %p231
      %s234 = sadd.s32 %s233, 1
      %p237 = scmp.eq.s32.totalorder %s33, 3
      %p238 = scmp.ne.s32.totalorder %s233, %s235
      %p239 = scmp.eq.s32.totalorder %s33, 0
      %p240 = por %p238, %p239
      %p241 = scmp.ne.s32.totalorder %s233, %s235
      %p242 = scmp.eq.s32.totalorder %s38, 3
      %p243 = por %p241, %p242
      %p244 = scmp.ne.s32.totalorder %s235, %s236
      %p245 = scmp.eq.s32.totalorder %s38, 0
      %p246 = por %p244, %p245
      %p247 = scmp.ne.s32.totalorder %s235, %s236
      %p248 = scmp.eq.s32.totalorder %s39, 3
      %p249 = por %p247, %p248
      %p251 = scmp.ne.s32.totalorder %s236, %s250
      %p252 = scmp.eq.s32.totalorder %s39, 0
      %p253 = por %p251, %p252
      %s255 = sadd.s32 %s254, 1
      %p258 = scmp.eq.s32.totalorder %s33, 3
      %p259 = scmp.ne.s32.totalorder %s254, %s256
      %p260 = scmp.eq.s32.totalorder %s33, 0
      %p261 = por %p259, %p260
      %p262 = scmp.ne.s32.totalorder %s254, %s256
      %p263 = scmp.eq.s32.totalorder %s38, 3
      %p264 = por %p262, %p263
      %p265 = scmp.ne.s32.totalorder %s256, %s257
      %p266 = scmp.eq.s32.totalorder %s38, 0
      %p267 = por %p265, %p266
      %p268 = scmp.ne.s32.totalorder %s256, %s257
      %p269 = scmp.eq.s32.totalorder %s39, 3
      %p270 = por %p268, %p269
      %p272 = scmp.ne.s32.totalorder %s257, %s271
      %p273 = scmp.eq.s32.totalorder %s39, 0
      %p274 = por %p272, %p273
      %s276 = sadd.s32 %s275, 1
      %p279 = scmp.eq.s32.totalorder %s33, 3
      %p280 = scmp.ne.s32.totalorder %s275, %s277
      %p281 = scmp.eq.s32.totalorder %s33, 0
      %p282 = por %p280, %p281
      %p283 = scmp.ne.s32.totalorder %s275, %s277
      %p284 = scmp.eq.s32.totalorder %s38, 3
      %p285 = por %p283, %p284
      %p286 = scmp.ne.s32.totalorder %s277, %s278
      %p287 = scmp.eq.s32.totalorder %s38, 0
      %p288 = por %p286, %p287
      %p289 = scmp.ne.s32.totalorder %s277, %s278
      %p290 = scmp.eq.s32.totalorder %s39, 3
      %p291 = por %p289, %p290
      %p293 = scmp.ne.s32.totalorder %s278, %s292
      %p294 = scmp.eq.s32.totalorder %s39, 0
      %p295 = por %p293, %p294
      %s297 = sadd.s32 %s296, 1
      %p300 = scmp.eq.s32.totalorder %s33, 3
      %p301 = scmp.ne.s32.totalorder %s296, %s298
      %p302 = scmp.eq.s32.totalorder %s33, 0
      %p303 = por %p301, %p302
      %p304 = scmp.ne.s32.totalorder %s296, %s298
      %p305 = scmp.eq.s32.totalorder %s38, 3
      %p306 = por %p304, %p305
      %p307 = scmp.ne.s32.totalorder %s298, %s299
      %p308 = scmp.eq.s32.totalorder %s38, 0
      %p309 = por %p307, %p308
      %p310 = scmp.ne.s32.totalorder %s298, %s299
      %p311 = scmp.eq.s32.totalorder %s39, 3
      %p312 = por %p310, %p311
      %p314 = scmp.ne.s32.totalorder %s299, %s313
      %p315 = scmp.eq.s32.totalorder %s39, 0
      %p316 = por %p314, %p315
      %s318 = sadd.s32 %s317, 1
      %p321 = scmp.eq.s32.totalorder %s33, 3
      %p322 = scmp.ne.s32.totalorder %s317, %s319
      %p323 = scmp.eq.s32.totalorder %s33, 0
      %p324 = por %p322, %p323
      %p325 = scmp.ne.s32.totalorder %s317, %s319
      %p326 = scmp.eq.s32.totalorder %s38, 3
      %p327 = por %p325, %p326
      %p328 = scmp.ne.s32.totalorder %s319, %s320
      %p329 = scmp.eq.s32.totalorder %s38, 0
      %p330 = por %p328, %p329
      %p331 = scmp.ne.s32.totalorder %s319, %s320
      %p332 = scmp.eq.s32.totalorder %s39, 3
      %p333 = por %p331, %p332
      %p335 = scmp.ne.s32.totalorder %s320, %s334
      %p336 = scmp.eq.s32.totalorder %s39, 0
      %p337 = por %p335, %p336
      %s339 = sadd.s32 %s338, 1
      %p342 = scmp.eq.s32.totalorder %s33, 3
      %p343 = scmp.ne.s32.totalorder %s338, %s340
      %p344 = scmp.eq.s32.totalorder %s33, 0
      %p345 = por %p343, %p344
      %p346 = scmp.ne.s32.totalorder %s338, %s340
      %p347 = scmp.eq.s32.totalorder %s38, 3
      %p348 = por %p346, %p347
      %p349 = scmp.ne.s32.totalorder %s340, %s341
      %p350 = scmp.eq.s32.totalorder %s38, 0
      %p351 = por %p349, %p350
      %p352 = scmp.ne.s32.totalorder %s340, %s341
      %p353 = scmp.eq.s32.totalorder %s39, 3
      %p354 = por %p352, %p353
      %p356 = scmp.ne.s32.totalorder %s341, %s355
      %p357 = scmp.eq.s32.totalorder %s39, 0
      %p358 = por %p356, %p357
      %s360 = sadd.s32 %s359, 1
      %p363 = scmp.eq.s32.totalorder %s33, 3
      %p364 = scmp.ne.s32.totalorder %s359, %s361
      %p365 = scmp.eq.s32.totalorder %s33, 0
      %p366 = por %p364, %p365
      %p367 = scmp.ne.s32.totalorder %s359, %s361
      %p368 = scmp.eq.s32.totalorder %s38, 3
      %p369 = por %p367, %p368
      %p370 = scmp.ne.s32.totalorder %s361, %s362
      %p371 = scmp.eq.s32.totalorder %s38, 0
      %p372 = por %p370, %p371
      %p373 = scmp.ne.s32.totalorder %s361, %s362
      %p374 = scmp.eq.s32.totalorder %s39, 3
      %p375 = por %p373, %p374
      %p377 = scmp.ne.s32.totalorder %s362, %s376
      %p378 = scmp.eq.s32.totalorder %s39, 0
      %p379 = por %p377, %p378
      %s381 = sadd.s32 %s380, 1
      %p384 = scmp.eq.s32.totalorder %s33, 3
      %p385 = scmp.ne.s32.totalorder %s380, %s382
      %p386 = scmp.eq.s32.totalorder %s33, 0
      %p387 = por %p385, %p386
      %p388 = scmp.ne.s32.totalorder %s380, %s382
      %p389 = scmp.eq.s32.totalorder %s38, 3
      %p390 = por %p388, %p389
      %p391 = scmp.ne.s32.totalorder %s382, %s383
      %p392 = scmp.eq.s32.totalorder %s38, 0
      %p393 = por %p391, %p392
      %p394 = scmp.ne.s32.totalorder %s382, %s383
      %p395 = scmp.eq.s32.totalorder %s39, 3
      %p396 = por %p394, %p395
      %p398 = scmp.ne.s32.totalorder %s383, %s397
      %p399 = scmp.eq.s32.totalorder %s39, 0
      %p400 = por %p398, %p399
      %s401 = ssub.s32 %s40, %s52
      %s402 = ssub.s32 %s41, %s48
      %s403 = sor.u32 %s401, %s402
      %p404 = scmp.eq.s32.totalorder %s403, 0
      %s406 = sadd.s32 %s405, 1
      %s407 = scalar_select %p404, %s405, %s406
      %p410 = pneg %p404
      %p411 = scmp.eq.s32.totalorder %s33, 3
      %p412 = por %p410, %p411
      %p413 = scmp.ne.s32.totalorder %s405, %s408
      %p414 = scmp.eq.s32.totalorder %s33, 0
      %p415 = por %p413, %p414
      %p416 = scmp.ne.s32.totalorder %s405, %s408
      %p417 = scmp.eq.s32.totalorder %s38, 3
      %p418 = por %p416, %p417
      %p419 = scmp.ne.s32.totalorder %s408, %s409
      %p420 = scmp.eq.s32.totalorder %s38, 0
      %p421 = por %p419, %p420
      %p422 = scmp.ne.s32.totalorder %s408, %s409
      %p423 = scmp.eq.s32.totalorder %s39, 3
      %p424 = por %p422, %p423
      %p426 = scmp.ne.s32.totalorder %s409, %s425
      %p427 = scmp.eq.s32.totalorder %s39, 0
      %p428 = por %p426, %p427
      %p429 = scmp.le.s32.totalorder 1, %s33
      %p430 = scmp.lt.s32.totalorder %s33, 5
      %p431 = pnand %p429, %p430
      %p432 = pneg %p431
      // Predicated region
      $region9: #{tpu_custom_call.1} parent=5 // pred_check
        _
      $region10: #{tpu_custom_call.1} parent=5 // pred_check_branch
        %434 = sbr.rel (%p431) target = $region12
      $region11: #{tpu_custom_call.1} parent=5 // pred_region
        %s435 = ssub.s32 %s33, 1
        // Predicated region
        $region13: #{tpu_custom_call.1} parent=11 // pred_check
          %p436 = pneg %p120
        $region14: #{tpu_custom_call.1} parent=11 // pred_check_branch
          %438 = sbr.rel (%p436) target = $region16
        $region15: #{tpu_custom_call.1} parent=11 // pred_region
          %s440 = ssub.s32 1024, 1024
          %441 = vsyncadd [#allocation7], %s440
          %s442 = sshll.u32 [#allocation8], 4
          %s443 = int_to_ptr.vmem [resolvable:$true] %s442
          %448 = dma.hbm_to_vmem [thread:$0]  %s2, 1024, %s443, [#allocation7], 64, 64, 4
        $region16: #{tpu_custom_call.1} parent=11 // pred_fallthru
          _
        // Predicated region
        $region17: #{tpu_custom_call.1} parent=11 // pred_check
          %p449 = pneg %p141
        $region18: #{tpu_custom_call.1} parent=11 // pred_check_branch
          %451 = sbr.rel (%p449) target = $region20
        $region19: #{tpu_custom_call.1} parent=11 // pred_region
          _
        $region20: #{tpu_custom_call.1} parent=11 // pred_fallthru
          _
        // Predicated region
        $region21: #{tpu_custom_call.1} parent=11 // pred_check
          %p452 = pneg %p162
        $region22: #{tpu_custom_call.1} parent=11 // pred_check_branch
          %454 = sbr.rel (%p452) target = $region24
        $region23: #{tpu_custom_call.1} parent=11 // pred_region
          %s456 = ssub.s32 2048, 2048
          %457 = vsyncadd [#allocation10], %s456
          %s458 = sshll.u32 [#allocation9], 4
          %s459 = int_to_ptr.vmem [resolvable:$true] %s458
          %464 = dma.hbm_to_vmem [thread:$0]  %s4, 2048, %s459, [#allocation10], 128, 128, 8
        $region24: #{tpu_custom_call.1} parent=11 // pred_fallthru
          _
        // Predicated region
        $region25: #{tpu_custom_call.1} parent=11 // pred_check
          %p465 = pneg %p183
        $region26: #{tpu_custom_call.1} parent=11 // pred_check_branch
          %467 = sbr.rel (%p465) target = $region28
        $region27: #{tpu_custom_call.1} parent=11 // pred_region
          _
        $region28: #{tpu_custom_call.1} parent=11 // pred_fallthru
          _
        // Predicated region
        $region29: #{tpu_custom_call.1} parent=11 // pred_check
          %p468 = pneg %p204
        $region30: #{tpu_custom_call.1} parent=11 // pred_check_branch
          %470 = sbr.rel (%p468) target = $region32
        $region31: #{tpu_custom_call.1} parent=11 // pred_region
          %s472 = ssub.s32 1024, 1024
          %473 = vsyncadd [#allocation10], %s472
          %s474 = sshll.u32 [#allocation11], 4
          %s475 = int_to_ptr.vmem [resolvable:$true] %s474
          %480 = dma.hbm_to_vmem [thread:$0]  %s6, 1024, %s475, [#allocation10], 64, 64, 4
        $region32: #{tpu_custom_call.1} parent=11 // pred_fallthru
          _
        // Predicated region
        $region33: #{tpu_custom_call.1} parent=11 // pred_check
          %p481 = pneg %p225
        $region34: #{tpu_custom_call.1} parent=11 // pred_check_branch
          %483 = sbr.rel (%p481) target = $region36
        $region35: #{tpu_custom_call.1} parent=11 // pred_region
          _
        $region36: #{tpu_custom_call.1} parent=11 // pred_fallthru
          _
        // Predicated region
        $region37: #{tpu_custom_call.1} parent=11 // pred_check
          %p484 = pneg %p246
        $region38: #{tpu_custom_call.1} parent=11 // pred_check_branch
          %486 = sbr.rel (%p484) target = $region40
        $region39: #{tpu_custom_call.1} parent=11 // pred_region
          %s488 = ssub.s32 2048, 2048
          %489 = vsyncadd [#allocation13], %s488
          %s490 = sshll.u32 [#allocation12], 4
          %s491 = int_to_ptr.vmem [resolvable:$true] %s490
          %496 = dma.hbm_to_vmem [thread:$0]  %s8, 2048, %s491, [#allocation13], 128, 128, 8
        $region40: #{tpu_custom_call.1} parent=11 // pred_fallthru
          _
        // Predicated region
        $region41: #{tpu_custom_call.1} parent=11 // pred_check
          %p497 = pneg %p267
        $region42: #{tpu_custom_call.1} parent=11 // pred_check_branch
          %499 = sbr.rel (%p497) target = $region44
        $region43: #{tpu_custom_call.1} parent=11 // pred_region
          _
        $region44: #{tpu_custom_call.1} parent=11 // pred_fallthru
          _
        // Predicated region
        $region45: #{tpu_custom_call.1} parent=11 // pred_check
          %p500 = pneg %p288
        $region46: #{tpu_custom_call.1} parent=11 // pred_check_branch
          %502 = sbr.rel (%p500) target = $region48
        $region47: #{tpu_custom_call.1} parent=11 // pred_region
          %s504 = ssub.s32 2048, 2048
          %505 = vsyncadd [#allocation13], %s504
          %s506 = sshll.u32 [#allocation14], 4
          %s507 = int_to_ptr.vmem [resolvable:$true] %s506
          %512 = dma.hbm_to_vmem [thread:$0]  %s10, 2048, %s507, [#allocation13], 64, 64, 4
        $region48: #{tpu_custom_call.1} parent=11 // pred_fallthru
          _
        // Predicated region
        $region49: #{tpu_custom_call.1} parent=11 // pred_check
          %p513 = pneg %p309
        $region50: #{tpu_custom_call.1} parent=11 // pred_check_branch
          %515 = sbr.rel (%p513) target = $region52
        $region51: #{tpu_custom_call.1} parent=11 // pred_region
          _
        $region52: #{tpu_custom_call.1} parent=11 // pred_fallthru
          _
        // Predicated region
        $region53: #{tpu_custom_call.1} parent=11 // pred_check
          %p516 = pneg %p330
        $region54: #{tpu_custom_call.1} parent=11 // pred_check_branch
          %518 = sbr.rel (%p516) target = $region56
        $region55: #{tpu_custom_call.1} parent=11 // pred_region
          _
        $region56: #{tpu_custom_call.1} parent=11 // pred_fallthru
          _
        // Predicated region
        $region57: #{tpu_custom_call.1} parent=11 // pred_check
          %p519 = pneg %p351
        $region58: #{tpu_custom_call.1} parent=11 // pred_check_branch
          %521 = sbr.rel (%p519) target = $region60
        $region59: #{tpu_custom_call.1} parent=11 // pred_region
          _
        $region60: #{tpu_custom_call.1} parent=11 // pred_fallthru
          _
        // Predicated region
        $region61: #{tpu_custom_call.1} parent=11 // pred_check
          %p522 = pneg %p372
        $region62: #{tpu_custom_call.1} parent=11 // pred_check_branch
          %524 = sbr.rel (%p522) target = $region64
        $region63: #{tpu_custom_call.1} parent=11 // pred_region
          _
        $region64: #{tpu_custom_call.1} parent=11 // pred_fallthru
          _
        // Predicated region
        $region65: #{tpu_custom_call.1} parent=11 // pred_check
          %p525 = pneg %p393
        $region66: #{tpu_custom_call.1} parent=11 // pred_check_branch
          %527 = sbr.rel (%p525) target = $region68
        $region67: #{tpu_custom_call.1} parent=11 // pred_region
          _
        $region68: #{tpu_custom_call.1} parent=11 // pred_fallthru
          _
      $region12: #{tpu_custom_call.1} parent=5 // pred_fallthru
        _
      %p528 = scmp.lt.s32.totalorder %s33, 4
      // Predicated region
      $region69: #{tpu_custom_call.1} parent=5 // pred_check
        %p529 = pneg %p528
      $region70: #{tpu_custom_call.1} parent=5 // pred_check_branch
        %531 = sbr.rel (%p529) target = $region72
      $region71: #{tpu_custom_call.1} parent=5 // pred_region
        // Predicated region
        $region73: #{tpu_custom_call.1} parent=71 // pred_check
          %p532 = pneg %p65
        $region74: #{tpu_custom_call.1} parent=71 // pred_check_branch
          %534 = sbr.rel (%p532) target = $region76
        $region75: #{tpu_custom_call.1} parent=71 // pred_region
          %s535 = sand.u32 %s55, 1
          %s536 = scalar_lea.sflag [#allocation4], %s535
          %s537 = sand.u32 %s55, 1
          %s538 = smul.addr %s537, 64
          %s539 = scalar_lea.vmem [#allocation3], %s538
          %s541 = ssub.s32 1024, 1024
          %542 = vsyncadd %s536, %s541
          %s543 = smul.addr %s40, 16
          %s544 = smul.addr %s543, 64
          %s545 = scalar_lea.hbm %s0, %s544
          %s546 = sshll.u32 %s539, 4
          %s547 = int_to_ptr.vmem [resolvable:$true] %s546
          %552 = dma.hbm_to_vmem [thread:$0]  %s545, 1024, %s547, %s536, 64, 64, 4
        $region76: #{tpu_custom_call.1} parent=71 // pred_fallthru
          _
        // Predicated region
        $region77: #{tpu_custom_call.1} parent=71 // pred_check
          %p553 = pneg %p93
        $region78: #{tpu_custom_call.1} parent=71 // pred_check_branch
          %555 = sbr.rel (%p553) target = $region80
        $region79: #{tpu_custom_call.1} parent=71 // pred_region
          %s556 = sand.u32 %s33, 1
          %s557 = scalar_lea.sflag [#allocation7], %s556
          %s558 = sand.u32 %s83, 1
          %s559 = smul.addr %s558, 64
          %s560 = scalar_lea.vmem [#allocation6], %s559
          %s561 = smul.u32 8, %s41
          %s563 = ssub.s32 1024, 1024
          %564 = vsyncadd %s557, %s563
          %s565 = smul.addr %s40, 16
          %s566 = sadd.s32 %s561, %s565
          %s567 = smul.addr %s566, 128
          %s568 = scalar_lea.hbm %s1, %s567
          %s569 = sshll.u32 %s560, 4
          %s570 = int_to_ptr.vmem [resolvable:$true] %s569
          %575 = dma.hbm_to_vmem [thread:$0]  %s568, 1024, %s570, %s557, 128, 128, 8
        $region80: #{tpu_custom_call.1} parent=71 // pred_fallthru
          _
      $region72: #{tpu_custom_call.1} parent=5 // pred_fallthru
        _
      %p576 = scmp.le.s32.totalorder 1, %s33
      %p577 = scmp.lt.s32.totalorder %s33, 5
      %p578 = pnand %p576, %p577
      %p579 = pneg %p578
      // Predicated region
      $region81: #{tpu_custom_call.1} parent=5 // pred_check
        _
      $region82: #{tpu_custom_call.1} parent=5 // pred_check_branch
        %581 = sbr.rel (%p578) target = $region84
      $region83: #{tpu_custom_call.1} parent=5 // pred_region
        %s582 = ssub.s32 %s33, 1
        %s583 = sand.u32 %s58, 1
        %s584 = scalar_lea.sflag [#allocation4], %s583
        %s585 = sand.u32 %s58, 1
        %s586 = smul.addr %s585, 64
        %s587 = scalar_lea.vmem [#allocation3], %s586
        // Predicated region
        $region85: #{tpu_custom_call.1} parent=83 // pred_check
          %p588 = pneg %p71
        $region86: #{tpu_custom_call.1} parent=83 // pred_check_branch
          %590 = sbr.rel (%p588) target = $region88
        $region87: #{tpu_custom_call.1} parent=83 // pred_region
          %591 = dma.done %s584, 1024
        $region88: #{tpu_custom_call.1} parent=83 // pred_fallthru
          _
        %s592 = sand.u32 %s38, 1
        %s593 = scalar_lea.sflag [#allocation7], %s592
        %s594 = sand.u32 %s86, 1
        %s595 = smul.addr %s594, 64
        %s596 = scalar_lea.vmem [#allocation6], %s595
        // Predicated region
        $region89: #{tpu_custom_call.1} parent=83 // pred_check
          %p597 = pneg %p99
        $region90: #{tpu_custom_call.1} parent=83 // pred_check_branch
          %599 = sbr.rel (%p597) target = $region92
        $region91: #{tpu_custom_call.1} parent=83 // pred_region
          %600 = dma.done %s593, 1024
        $region92: #{tpu_custom_call.1} parent=83 // pred_fallthru
          _
        // Predicated region
        $region93: #{tpu_custom_call.1} parent=83 // pred_check
          %p601 = pneg %p120
        $region94: #{tpu_custom_call.1} parent=83 // pred_check_branch
          %603 = sbr.rel (%p601) target = $region96
        $region95: #{tpu_custom_call.1} parent=83 // pred_region
          %604 = dma.done [#allocation7], 1024
        $region96: #{tpu_custom_call.1} parent=83 // pred_fallthru
          _
        // Predicated region
        $region97: #{tpu_custom_call.1} parent=83 // pred_check
          %p605 = pneg %p162
        $region98: #{tpu_custom_call.1} parent=83 // pred_check_branch
          %607 = sbr.rel (%p605) target = $region100
        $region99: #{tpu_custom_call.1} parent=83 // pred_region
          %608 = dma.done [#allocation10], 2048
        $region100: #{tpu_custom_call.1} parent=83 // pred_fallthru
          _
        // Predicated region
        $region101: #{tpu_custom_call.1} parent=83 // pred_check
          %p609 = pneg %p204
        $region102: #{tpu_custom_call.1} parent=83 // pred_check_branch
          %611 = sbr.rel (%p609) target = $region104
        $region103: #{tpu_custom_call.1} parent=83 // pred_region
          %612 = dma.done [#allocation10], 1024
        $region104: #{tpu_custom_call.1} parent=83 // pred_fallthru
          _
        // Predicated region
        $region105: #{tpu_custom_call.1} parent=83 // pred_check
          %p613 = pneg %p246
        $region106: #{tpu_custom_call.1} parent=83 // pred_check_branch
          %615 = sbr.rel (%p613) target = $region108
        $region107: #{tpu_custom_call.1} parent=83 // pred_region
          %616 = dma.done [#allocation13], 2048
        $region108: #{tpu_custom_call.1} parent=83 // pred_fallthru
          _
        // Predicated region
        $region109: #{tpu_custom_call.1} parent=83 // pred_check
          %p617 = pneg %p288
        $region110: #{tpu_custom_call.1} parent=83 // pred_check_branch
          %619 = sbr.rel (%p617) target = $region112
        $region111: #{tpu_custom_call.1} parent=83 // pred_region
          %620 = dma.done [#allocation13], 2048
        $region112: #{tpu_custom_call.1} parent=83 // pred_fallthru
          _
        %s621 = sand.u32 %s58, 1
        %s622 = scalar_lea.sflag [#allocation4], %s621
        %s623 = sand.u32 %s58, 1
        %s624 = smul.addr %s623, 64
        %s625 = scalar_lea.vmem [#allocation3], %s624
        %p626 = pneg %p71
        %p627 = pneg %p68
        %s628 = sand.u32 %s38, 1
        %s629 = scalar_lea.sflag [#allocation7], %s628
        %s630 = sand.u32 %s86, 1
        %s631 = smul.addr %s630, 64
        %s632 = scalar_lea.vmem [#allocation6], %s631
        %p633 = pneg %p99
        %p634 = pneg %p96
        %p635 = pneg %p120
        %p636 = pneg %p117
        %p637 = pneg %p141
        %p638 = pneg %p138
        %p639 = pneg %p162
        %p640 = pneg %p159
        %p641 = pneg %p183
        %p642 = pneg %p180
        %p643 = pneg %p204
        %p644 = pneg %p201
        %p645 = pneg %p225
        %p646 = pneg %p222
        %p647 = pneg %p246
        %p648 = pneg %p243
        %p649 = pneg %p267
        %p650 = pneg %p264
        %p651 = pneg %p288
        %p652 = pneg %p285
        %p653 = pneg %p309
        %p654 = pneg %p306
        %p655 = pneg %p330
        %p656 = pneg %p327
        %p657 = pneg %p351
        %p658 = pneg %p348
        %p659 = pneg %p372
        %p660 = pneg %p369
        %p661 = pneg %p393
        %p662 = pneg %p390
        %p663 = pneg %p421
        %p664 = pneg %p418
        %s665 = sand.u32 %s408, 1
        %s666 = scalar_lea.sflag [#allocation5], %s665
        %s667 = sand.u32 %s408, 1
        %s668 = smul.addr %s667, 64
        %s669 = scalar_lea.vmem [#allocation15], %s668
        %s670 = smul.u32 8, %s43
        %s671 = smul.u32 8, %s43
        %p673 = scmp.eq.s32.totalorder %s43, 0
        // Predicated region
        $region113: #{tpu_custom_call.1} parent=83 // pred_check
          %p674 = pneg %p673
        $region114: #{tpu_custom_call.1} parent=83 // pred_check_branch
          %676 = sbr.rel (%p674) target = $region116
        $region115: #{tpu_custom_call.1} parent=83 // pred_region
          %v677 = vld [vmem:[%s587] sm:$0xf]
          %v678 = vld [vmem:[%s587 + $0x4] sm:$0xf]
          %v679 = vld [vmem:[%s587 + $0x8] sm:$0xf]
          %v680 = vld [vmem:[%s587 + $0xc] sm:$0xf]
          %v681 = vld [vmem:[%s587 + $0x10] sm:$0xf]
          %v682 = vld [vmem:[%s587 + $0x14] sm:$0xf]
          %v683 = vld [vmem:[%s587 + $0x18] sm:$0xf]
          %v684 = vld [vmem:[%s587 + $0x1c] sm:$0xf]
          %v685 = vld [vmem:[%s587 + $0x20] sm:$0xf]
          %v686 = vld [vmem:[%s587 + $0x24] sm:$0xf]
          %v687 = vld [vmem:[%s587 + $0x28] sm:$0xf]
          %v688 = vld [vmem:[%s587 + $0x2c] sm:$0xf]
          %v689 = vld [vmem:[%s587 + $0x30] sm:$0xf]
          %v690 = vld [vmem:[%s587 + $0x34] sm:$0xf]
          %v691 = vld [vmem:[%s587 + $0x38] sm:$0xf]
          %v692 = vld [vmem:[%s587 + $0x3c] sm:$0xf]
          %v693 = vld [vmem:[#allocation9] sm:$0xff]
          %v694 = vld [vmem:[#allocation9 + $0x8] sm:$0xff]
          %v695 = vld [vmem:[#allocation9 + $0x10] sm:$0xff]
          %v696 = vld [vmem:[#allocation9 + $0x18] sm:$0xff]
          %v697 = vld [vmem:[#allocation9 + $0x20] sm:$0xff]
          %v698 = vld [vmem:[#allocation9 + $0x28] sm:$0xff]
          %v699 = vld [vmem:[#allocation9 + $0x30] sm:$0xff]
          %v700 = vld [vmem:[#allocation9 + $0x38] sm:$0xff]
          %v701 = vld [vmem:[#allocation9 + $0x40] sm:$0xff]
          %v702 = vld [vmem:[#allocation9 + $0x48] sm:$0xff]
          %v703 = vld [vmem:[#allocation9 + $0x50] sm:$0xff]
          %v704 = vld [vmem:[#allocation9 + $0x58] sm:$0xff]
          %v705 = vld [vmem:[#allocation9 + $0x60] sm:$0xff]
          %v706 = vld [vmem:[#allocation9 + $0x68] sm:$0xff]
          %v707 = vld [vmem:[#allocation9 + $0x70] sm:$0xff]
          %v708 = vld [vmem:[#allocation9 + $0x78] sm:$0xff]
          %v709 = vld [vmem:[%s5] sm:$0x3]
          %v711 = vlaneseq
          %v712 = vshrl.u32 %v711, 7
          %v713 = vsub.s32 0, %v712
          %v714 = vrot.slane %v709, %v713
          %v715 = vlaneseq
          %v716 = vshrl.u32 %v715, 7
          %v717 = vsub.s32 1, %v716
          %v718 = vrot.slane %v709, %v717
          %v737 = vunpack.c.l.b16 %v677
          %v738 = vunpack.c.l.b16 %v678
          %v739 = vunpack.c.l.b16 %v679
          %v740 = vunpack.c.l.b16 %v680
          %v741 = vunpack.c.l.b16 %v681
          %v742 = vunpack.c.l.b16 %v682
          %v743 = vunpack.c.l.b16 %v683
          %v744 = vunpack.c.l.b16 %v684
          %v745 = vunpack.c.l.b16 %v685
          %v746 = vunpack.c.l.b16 %v686
          %v747 = vunpack.c.l.b16 %v687
          %v748 = vunpack.c.l.b16 %v688
          %v749 = vunpack.c.l.b16 %v689
          %v750 = vunpack.c.l.b16 %v690
          %v751 = vunpack.c.l.b16 %v691
          %v752 = vunpack.c.l.b16 %v692
          %v753 = vpack.c.b16 %v738, %v737
          %v754 = vpack.c.b16 %v740, %v739
          %v755 = vpack.c.b16 %v742, %v741
          %v756 = vpack.c.b16 %v744, %v743
          %v757 = vpack.c.b16 %v746, %v745
          %v758 = vpack.c.b16 %v748, %v747
          %v759 = vpack.c.b16 %v750, %v749
          %v760 = vpack.c.b16 %v752, %v751
          %v785 = vunpack.c.l.b16 %v693
          %v786 = vunpack.c.h.b16 %v693
          %v787 = vunpack.c.l.b16 %v694
          %v788 = vunpack.c.h.b16 %v694
          %v789 = vunpack.c.l.b16 %v695
          %v790 = vunpack.c.h.b16 %v695
          %v791 = vunpack.c.l.b16 %v696
          %v792 = vunpack.c.h.b16 %v696
          %v793 = vunpack.c.l.b16 %v697
          %v794 = vunpack.c.h.b16 %v697
          %v795 = vunpack.c.l.b16 %v698
          %v796 = vunpack.c.h.b16 %v698
          %v797 = vunpack.c.l.b16 %v699
          %v798 = vunpack.c.h.b16 %v699
          %v799 = vunpack.c.l.b16 %v700
          %v800 = vunpack.c.h.b16 %v700
          %v801 = vunpack.c.l.b16 %v701
          %v802 = vunpack.c.h.b16 %v701
          %v803 = vunpack.c.l.b16 %v702
          %v804 = vunpack.c.h.b16 %v702
          %v805 = vunpack.c.l.b16 %v703
          %v806 = vunpack.c.h.b16 %v703
          %v807 = vunpack.c.l.b16 %v704
          %v808 = vunpack.c.h.b16 %v704
          %v809 = vunpack.c.l.b16 %v705
          %v810 = vunpack.c.h.b16 %v705
          %v811 = vunpack.c.l.b16 %v706
          %v812 = vunpack.c.h.b16 %v706
          %v813 = vunpack.c.l.b16 %v707
          %v814 = vunpack.c.h.b16 %v707
          %v815 = vunpack.c.l.b16 %v708
          %v816 = vunpack.c.h.b16 %v708
          %v817 = vpack.c.b16 %v787, %v785
          %v818 = vpack.c.b16 %v788, %v786
          %v819 = vpack.c.b16 %v791, %v789
          %v820 = vpack.c.b16 %v792, %v790
          %v821 = vpack.c.b16 %v795, %v793
          %v822 = vpack.c.b16 %v796, %v794
          %v823 = vpack.c.b16 %v799, %v797
          %v824 = vpack.c.b16 %v800, %v798
          %v825 = vpack.c.b16 %v803, %v801
          %v826 = vpack.c.b16 %v804, %v802
          %v827 = vpack.c.b16 %v807, %v805
          %v828 = vpack.c.b16 %v808, %v806
          %v829 = vpack.c.b16 %v811, %v809
          %v830 = vpack.c.b16 %v812, %v810
          %v831 = vpack.c.b16 %v815, %v813
          %v832 = vpack.c.b16 %v816, %v814
          %849 = vmatprep.subr.bf16.mxu0 %v832
          %850 = vmatpush1.bf16.msra.mxu0 %v831
          %851 = vmatprep.subr.bf16.mxu0 %v830
          %852 = vmatpush1.bf16.msra.mxu0 %v829
          %853 = vmatprep.subr.bf16.mxu0 %v828
          %854 = vmatpush1.bf16.msra.mxu0 %v827
          %855 = vmatprep.subr.bf16.mxu0 %v826
          %856 = vmatpush1.bf16.msra.mxu0 %v825
          %857 = vmatprep.subr.bf16.mxu0 %v824
          %858 = vmatpush1.bf16.msra.mxu0 %v823
          %859 = vmatprep.subr.bf16.mxu0 %v822
          %860 = vmatpush1.bf16.msra.mxu0 %v821
          %861 = vmatprep.subr.bf16.mxu0 %v820
          %862 = vmatpush1.bf16.msra.mxu0 %v819
          %863 = vmatprep.subr.bf16.mxu0 %v818
          %864 = vmatpush1.bf16.msra.mxu0 %v817
          %865 = vmatprep.subr.bf16.mxu0 0
          %866 = vmatpush2.bf16.msra.mxu0 0
          %867 = vmatprep.subr.bf16.mxu0 0
          %868 = vmatpush2.bf16.msra.mxu0 0
          %869 = vmatprep.subr.bf16.mxu0 0
          %870 = vmatpush2.bf16.msra.mxu0 0
          %871 = vmatprep.subr.bf16.mxu0 0
          %872 = vmatpush2.bf16.msra.mxu0 0
          %873 = vmatprep.subr.bf16.mxu0 0
          %874 = vmatpush2.bf16.msra.mxu0 0
          %875 = vmatprep.subr.bf16.mxu0 0
          %876 = vmatpush2.bf16.msra.mxu0 0
          %877 = vmatprep.subr.bf16.mxu0 0
          %878 = vmatpush2.bf16.msra.mxu0 0
          %879 = vmatprep.subr.bf16.mxu0 0
          %880 = vmatpush2.bf16.msra.mxu0 0
          %881 = vmatprep.mubr.bf16.mxu0 0
          %882 = vmatmul.mubr.bf16.gmra.mxu0 %v753
          %v883 = vpop.f32.mrf.mxu0
          %v884 = vadd.f32 %v714, %v883
          %v885 = vpop.f32.mrf.mxu0
          %v886 = vadd.f32 %v718, %v885
          %v887 = vpop.f32.mrf.mxu0
          %v888 = vadd.f32 %v714, %v887
          %v889 = vpop.f32.mrf.mxu0
          %v890 = vadd.f32 %v718, %v889
          %891 = vmatprep.mubr.bf16.mxu0 0
          %892 = vmatmul.mubr.bf16.gmra.mxu0 %v754
          %v893 = vpop.f32.mrf.mxu0
          %v894 = vadd.f32 %v714, %v893
          %v895 = vpop.f32.mrf.mxu0
          %v896 = vadd.f32 %v718, %v895
          %v897 = vpop.f32.mrf.mxu0
          %v898 = vadd.f32 %v714, %v897
          %v899 = vpop.f32.mrf.mxu0
          %v900 = vadd.f32 %v718, %v899
          %901 = vmatprep.mubr.bf16.mxu0 0
          %902 = vmatmul.mubr.bf16.gmra.mxu0 %v755
          %v903 = vpop.f32.mrf.mxu0
          %v904 = vadd.f32 %v714, %v903
          %v905 = vpop.f32.mrf.mxu0
          %v906 = vadd.f32 %v718, %v905
          %v907 = vpop.f32.mrf.mxu0
          %v908 = vadd.f32 %v714, %v907
          %v909 = vpop.f32.mrf.mxu0
          %v910 = vadd.f32 %v718, %v909
          %911 = vmatprep.mubr.bf16.mxu0 0
          %912 = vmatmul.mubr.bf16.gmra.mxu0 %v756
          %v913 = vpop.f32.mrf.mxu0
          %v914 = vadd.f32 %v714, %v913
          %v915 = vpop.f32.mrf.mxu0
          %v916 = vadd.f32 %v718, %v915
          %v917 = vpop.f32.mrf.mxu0
          %v918 = vadd.f32 %v714, %v917
          %v919 = vpop.f32.mrf.mxu0
          %v920 = vadd.f32 %v718, %v919
          %921 = vmatprep.mubr.bf16.mxu0 0
          %922 = vmatmul.mubr.bf16.gmra.mxu0 %v757
          %v923 = vpop.f32.mrf.mxu0
          %v924 = vadd.f32 %v714, %v923
          %v925 = vpop.f32.mrf.mxu0
          %v926 = vadd.f32 %v718, %v925
          %v927 = vpop.f32.mrf.mxu0
          %v928 = vadd.f32 %v714, %v927
          %v929 = vpop.f32.mrf.mxu0
          %v930 = vadd.f32 %v718, %v929
          %931 = vmatprep.mubr.bf16.mxu0 0
          %932 = vmatmul.mubr.bf16.gmra.mxu0 %v758
          %v933 = vpop.f32.mrf.mxu0
          %v934 = vadd.f32 %v714, %v933
          %v935 = vpop.f32.mrf.mxu0
          %v936 = vadd.f32 %v718, %v935
          %v937 = vpop.f32.mrf.mxu0
          %v938 = vadd.f32 %v714, %v937
          %v939 = vpop.f32.mrf.mxu0
          %v940 = vadd.f32 %v718, %v939
          %941 = vmatprep.mubr.bf16.mxu0 0
          %942 = vmatmul.mubr.bf16.gmra.mxu0 %v759
          %v943 = vpop.f32.mrf.mxu0
          %v944 = vadd.f32 %v714, %v943
          %v945 = vpop.f32.mrf.mxu0
          %v946 = vadd.f32 %v718, %v945
          %v947 = vpop.f32.mrf.mxu0
          %v948 = vadd.f32 %v714, %v947
          %v949 = vpop.f32.mrf.mxu0
          %v950 = vadd.f32 %v718, %v949
          %951 = vmatprep.mubr.bf16.mxu0 0
          %952 = vmatmul.mubr.bf16.gmra.mxu0 %v760
          %v953 = vpop.f32.mrf.mxu0
          %v954 = vadd.f32 %v714, %v953
          %v955 = vpop.f32.mrf.mxu0
          %v956 = vadd.f32 %v718, %v955
          %v957 = vpop.f32.mrf.mxu0
          %v958 = vadd.f32 %v714, %v957
          %v959 = vpop.f32.mrf.mxu0
          %v960 = vadd.f32 %v718, %v959
          %961 = vdwg.mxu0
          %v962 = vpack.c.bf16 %v888, %v884
          %v963 = vpack.c.bf16 %v890, %v886
          %v964 = vpack.c.bf16 %v898, %v894
          %v965 = vpack.c.bf16 %v900, %v896
          %v966 = vpack.c.bf16 %v908, %v904
          %v967 = vpack.c.bf16 %v910, %v906
          %v968 = vpack.c.bf16 %v918, %v914
          %v969 = vpack.c.bf16 %v920, %v916
          %v970 = vpack.c.bf16 %v928, %v924
          %v971 = vpack.c.bf16 %v930, %v926
          %v972 = vpack.c.bf16 %v938, %v934
          %v973 = vpack.c.bf16 %v940, %v936
          %v974 = vpack.c.bf16 %v948, %v944
          %v975 = vpack.c.bf16 %v950, %v946
          %v976 = vpack.c.bf16 %v958, %v954
          %v977 = vpack.c.bf16 %v960, %v956
          %v994 = vunpack.c.l.b16 %v962
          %v995 = vunpack.c.l.b16 %v963
          %v996 = vunpack.c.h.b16 %v962
          %v997 = vunpack.c.h.b16 %v963
          %v998 = vunpack.c.l.b16 %v964
          %v999 = vunpack.c.l.b16 %v965
          %v1000 = vunpack.c.h.b16 %v964
          %v1001 = vunpack.c.h.b16 %v965
          %v1002 = vunpack.c.l.b16 %v966
          %v1003 = vunpack.c.l.b16 %v967
          %v1004 = vunpack.c.h.b16 %v966
          %v1005 = vunpack.c.h.b16 %v967
          %v1006 = vunpack.c.l.b16 %v968
          %v1007 = vunpack.c.l.b16 %v969
          %v1008 = vunpack.c.h.b16 %v968
          %v1009 = vunpack.c.h.b16 %v969
          %v1010 = vunpack.c.l.b16 %v970
          %v1011 = vunpack.c.l.b16 %v971
          %v1012 = vunpack.c.h.b16 %v970
          %v1013 = vunpack.c.h.b16 %v971
          %v1014 = vunpack.c.l.b16 %v972
          %v1015 = vunpack.c.l.b16 %v973
          %v1016 = vunpack.c.h.b16 %v972
          %v1017 = vunpack.c.h.b16 %v973
          %v1018 = vunpack.c.l.b16 %v974
          %v1019 = vunpack.c.l.b16 %v975
          %v1020 = vunpack.c.h.b16 %v974
          %v1021 = vunpack.c.h.b16 %v975
          %v1022 = vunpack.c.l.b16 %v976
          %v1023 = vunpack.c.l.b16 %v977
          %v1024 = vunpack.c.h.b16 %v976
          %v1025 = vunpack.c.h.b16 %v977
          %v1026 = vpack.c.b16 %v995, %v994
          %v1027 = vpack.c.b16 %v997, %v996
          %v1028 = vpack.c.b16 %v999, %v998
          %v1029 = vpack.c.b16 %v1001, %v1000
          %v1030 = vpack.c.b16 %v1003, %v1002
          %v1031 = vpack.c.b16 %v1005, %v1004
          %v1032 = vpack.c.b16 %v1007, %v1006
          %v1033 = vpack.c.b16 %v1009, %v1008
          %v1034 = vpack.c.b16 %v1011, %v1010
          %v1035 = vpack.c.b16 %v1013, %v1012
          %v1036 = vpack.c.b16 %v1015, %v1014
          %v1037 = vpack.c.b16 %v1017, %v1016
          %v1038 = vpack.c.b16 %v1019, %v1018
          %v1039 = vpack.c.b16 %v1021, %v1020
          %v1040 = vpack.c.b16 %v1023, %v1022
          %v1041 = vpack.c.b16 %v1025, %v1024
          %1058 = vst [vmem:[#allocation2] sm:$0xff] %v1026
          %1059 = vst [vmem:[#allocation2 + $0x8] sm:$0xff] %v1027
          %1060 = vst [vmem:[#allocation2 + $0x10] sm:$0xff] %v1028
          %1061 = vst [vmem:[#allocation2 + $0x18] sm:$0xff] %v1029
          %1062 = vst [vmem:[#allocation2 + $0x20] sm:$0xff] %v1030
          %1063 = vst [vmem:[#allocation2 + $0x28] sm:$0xff] %v1031
          %1064 = vst [vmem:[#allocation2 + $0x30] sm:$0xff] %v1032
          %1065 = vst [vmem:[#allocation2 + $0x38] sm:$0xff] %v1033
          %1066 = vst [vmem:[#allocation2 + $0x40] sm:$0xff] %v1034
          %1067 = vst [vmem:[#allocation2 + $0x48] sm:$0xff] %v1035
          %1068 = vst [vmem:[#allocation2 + $0x50] sm:$0xff] %v1036
          %1069 = vst [vmem:[#allocation2 + $0x58] sm:$0xff] %v1037
          %1070 = vst [vmem:[#allocation2 + $0x60] sm:$0xff] %v1038
          %1071 = vst [vmem:[#allocation2 + $0x68] sm:$0xff] %v1039
          %1072 = vst [vmem:[#allocation2 + $0x70] sm:$0xff] %v1040
          %1073 = vst [vmem:[#allocation2 + $0x78] sm:$0xff] %v1041
        $region116: #{tpu_custom_call.1} parent=83 // pred_fallthru
          _
        %v1074 = vld [vmem:[%s596] sm:$0xff]
        %v1075 = vld [vmem:[%s596 + $0x8] sm:$0xff]
        %v1076 = vld [vmem:[%s596 + $0x10] sm:$0xff]
        %v1077 = vld [vmem:[%s596 + $0x18] sm:$0xff]
        %v1078 = vld [vmem:[%s596 + $0x20] sm:$0xff]
        %v1079 = vld [vmem:[%s596 + $0x28] sm:$0xff]
        %v1080 = vld [vmem:[%s596 + $0x30] sm:$0xff]
        %v1081 = vld [vmem:[%s596 + $0x38] sm:$0xff]
        %v1082 = vpack.c.bf16 %v1075, %v1074
        %v1083 = vpack.c.bf16 %v1077, %v1076
        %v1084 = vpack.c.bf16 %v1079, %v1078
        %v1085 = vpack.c.bf16 %v1081, %v1080
        %v1086 = vld [vmem:[#allocation8] sm:$0xf]
        %v1087 = vld [vmem:[#allocation8 + $0x4] sm:$0xf]
        %v1088 = vld [vmem:[#allocation8 + $0x8] sm:$0xf]
        %v1089 = vld [vmem:[#allocation8 + $0xc] sm:$0xf]
        %v1090 = vld [vmem:[#allocation8 + $0x10] sm:$0xf]
        %v1091 = vld [vmem:[#allocation8 + $0x14] sm:$0xf]
        %v1092 = vld [vmem:[#allocation8 + $0x18] sm:$0xf]
        %v1093 = vld [vmem:[#allocation8 + $0x1c] sm:$0xf]
        %v1094 = vld [vmem:[#allocation8 + $0x20] sm:$0xf]
        %v1095 = vld [vmem:[#allocation8 + $0x24] sm:$0xf]
        %v1096 = vld [vmem:[#allocation8 + $0x28] sm:$0xf]
        %v1097 = vld [vmem:[#allocation8 + $0x2c] sm:$0xf]
        %v1098 = vld [vmem:[#allocation8 + $0x30] sm:$0xf]
        %v1099 = vld [vmem:[#allocation8 + $0x34] sm:$0xf]
        %v1100 = vld [vmem:[#allocation8 + $0x38] sm:$0xf]
        %v1101 = vld [vmem:[#allocation8 + $0x3c] sm:$0xf]
        %v1102 = vld [vmem:[%s3] sm:$0x1]
        %v1104 = vlaneseq
        %v1105 = vshrl.u32 %v1104, 7
        %v1106 = vsub.s32 0, %v1105
        %v1107 = vrot.slane %v1102, %v1106
        %v1125 = vunpack.c.l.b16 %v1086
        %v1126 = vunpack.c.l.b16 %v1087
        %v1127 = vunpack.c.l.b16 %v1088
        %v1128 = vunpack.c.l.b16 %v1089
        %v1129 = vunpack.c.l.b16 %v1090
        %v1130 = vunpack.c.l.b16 %v1091
        %v1131 = vunpack.c.l.b16 %v1092
        %v1132 = vunpack.c.l.b16 %v1093
        %v1133 = vunpack.c.l.b16 %v1094
        %v1134 = vunpack.c.l.b16 %v1095
        %v1135 = vunpack.c.l.b16 %v1096
        %v1136 = vunpack.c.l.b16 %v1097
        %v1137 = vunpack.c.l.b16 %v1098
        %v1138 = vunpack.c.l.b16 %v1099
        %v1139 = vunpack.c.l.b16 %v1100
        %v1140 = vunpack.c.l.b16 %v1101
        %v1141 = vpack.c.b16 %v1126, %v1125
        %v1142 = vpack.c.b16 %v1128, %v1127
        %v1143 = vpack.c.b16 %v1130, %v1129
        %v1144 = vpack.c.b16 %v1132, %v1131
        %v1145 = vpack.c.b16 %v1134, %v1133
        %v1146 = vpack.c.b16 %v1136, %v1135
        %v1147 = vpack.c.b16 %v1138, %v1137
        %v1148 = vpack.c.b16 %v1140, %v1139
        %1157 = vmatprep.subr.bf16.mxu0 0
        %1158 = vmatpush1.bf16.msra.mxu0 %v1148
        %1159 = vmatprep.subr.bf16.mxu0 0
        %1160 = vmatpush1.bf16.msra.mxu0 %v1147
        %1161 = vmatprep.subr.bf16.mxu0 0
        %1162 = vmatpush1.bf16.msra.mxu0 %v1146
        %1163 = vmatprep.subr.bf16.mxu0 0
        %1164 = vmatpush1.bf16.msra.mxu0 %v1145
        %1165 = vmatprep.subr.bf16.mxu0 0
        %1166 = vmatpush1.bf16.msra.mxu0 %v1144
        %1167 = vmatprep.subr.bf16.mxu0 0
        %1168 = vmatpush1.bf16.msra.mxu0 %v1143
        %1169 = vmatprep.subr.bf16.mxu0 0
        %1170 = vmatpush1.bf16.msra.mxu0 %v1142
        %1171 = vmatprep.subr.bf16.mxu0 0
        %1172 = vmatpush1.bf16.msra.mxu0 %v1141
        %1173 = vmatprep.subr.bf16.mxu0 0
        %1174 = vmatpush2.bf16.msra.mxu0 0
        %1175 = vmatprep.subr.bf16.mxu0 0
        %1176 = vmatpush2.bf16.msra.mxu0 0
        %1177 = vmatprep.subr.bf16.mxu0 0
        %1178 = vmatpush2.bf16.msra.mxu0 0
        %1179 = vmatprep.subr.bf16.mxu0 0
        %1180 = vmatpush2.bf16.msra.mxu0 0
        %1181 = vmatprep.subr.bf16.mxu0 0
        %1182 = vmatpush2.bf16.msra.mxu0 0
        %1183 = vmatprep.subr.bf16.mxu0 0
        %1184 = vmatpush2.bf16.msra.mxu0 0
        %1185 = vmatprep.subr.bf16.mxu0 0
        %1186 = vmatpush2.bf16.msra.mxu0 0
        %1187 = vmatprep.subr.bf16.mxu0 0
        %1188 = vmatpush2.bf16.msra.mxu0 0
        %1189 = vmatprep.mubr.bf16.mxu0 0
        %1190 = vmatmul.mubr.bf16.gmra.mxu0 %v1082
        %v1191 = vpop.f32.mrf.mxu0
        %v1192 = vadd.f32 %v1107, %v1191
        %v1193 = vpop.f32.mrf.mxu0
        %v1194 = vpop.f32.mrf.mxu0
        %v1195 = vadd.f32 %v1107, %v1194
        %v1196 = vpop.f32.mrf.mxu0
        %1197 = vmatprep.mubr.bf16.mxu0 0
        %1198 = vmatmul.mubr.bf16.gmra.mxu0 %v1083
        %v1199 = vpop.f32.mrf.mxu0
        %v1200 = vadd.f32 %v1107, %v1199
        %v1201 = vpop.f32.mrf.mxu0
        %v1202 = vpop.f32.mrf.mxu0
        %v1203 = vadd.f32 %v1107, %v1202
        %v1204 = vpop.f32.mrf.mxu0
        %1205 = vmatprep.mubr.bf16.mxu0 0
        %1206 = vmatmul.mubr.bf16.gmra.mxu0 %v1084
        %v1207 = vpop.f32.mrf.mxu0
        %v1208 = vadd.f32 %v1107, %v1207
        %v1209 = vpop.f32.mrf.mxu0
        %v1210 = vpop.f32.mrf.mxu0
        %v1211 = vadd.f32 %v1107, %v1210
        %v1212 = vpop.f32.mrf.mxu0
        %1213 = vmatprep.mubr.bf16.mxu0 0
        %1214 = vmatmul.mubr.bf16.gmra.mxu0 %v1085
        %v1215 = vpop.f32.mrf.mxu0
        %v1216 = vadd.f32 %v1107, %v1215
        %v1217 = vpop.f32.mrf.mxu0
        %v1218 = vpop.f32.mrf.mxu0
        %v1219 = vadd.f32 %v1107, %v1218
        %v1220 = vpop.f32.mrf.mxu0
        %1221 = vdwg.mxu0
        %v1222 = vmul.f32 %v1192, 0.17677669
        %v1223 = vmul.f32 %v1195, 0.17677669
        %v1224 = vmul.f32 %v1200, 0.17677669
        %v1225 = vmul.f32 %v1203, 0.17677669
        %v1226 = vmul.f32 %v1208, 0.17677669
        %v1227 = vmul.f32 %v1211, 0.17677669
        %v1228 = vmul.f32 %v1216, 0.17677669
        %v1229 = vmul.f32 %v1219, 0.17677669
        %v1230 = vpack.c.bf16 %v1223, %v1222
        %v1231 = vpack.c.bf16 %v1225, %v1224
        %v1232 = vpack.c.bf16 %v1227, %v1226
        %v1233 = vpack.c.bf16 %v1229, %v1228
        %v1234 = vld [vmem:[#allocation2] sm:$0xf]
        %v1235 = vld [vmem:[#allocation2 + $0x8] sm:$0xf]
        %v1236 = vld [vmem:[#allocation2 + $0x10] sm:$0xf]
        %v1237 = vld [vmem:[#allocation2 + $0x18] sm:$0xf]
        %v1238 = vld [vmem:[#allocation2 + $0x20] sm:$0xf]
        %v1239 = vld [vmem:[#allocation2 + $0x28] sm:$0xf]
        %v1240 = vld [vmem:[#allocation2 + $0x30] sm:$0xf]
        %v1241 = vld [vmem:[#allocation2 + $0x38] sm:$0xf]
        %v1242 = vld [vmem:[#allocation2 + $0x40] sm:$0xf]
        %v1243 = vld [vmem:[#allocation2 + $0x48] sm:$0xf]
        %v1244 = vld [vmem:[#allocation2 + $0x50] sm:$0xf]
        %v1245 = vld [vmem:[#allocation2 + $0x58] sm:$0xf]
        %v1246 = vld [vmem:[#allocation2 + $0x60] sm:$0xf]
        %v1247 = vld [vmem:[#allocation2 + $0x68] sm:$0xf]
        %v1248 = vld [vmem:[#allocation2 + $0x70] sm:$0xf]
        %v1249 = vld [vmem:[#allocation2 + $0x78] sm:$0xf]
        %v1250 = vld [vmem:[#allocation2 + $0x4] sm:$0xf]
        %v1251 = vld [vmem:[#allocation2 + $0xc] sm:$0xf]
        %v1252 = vld [vmem:[#allocation2 + $0x14] sm:$0xf]
        %v1253 = vld [vmem:[#allocation2 + $0x1c] sm:$0xf]
        %v1254 = vld [vmem:[#allocation2 + $0x24] sm:$0xf]
        %v1255 = vld [vmem:[#allocation2 + $0x2c] sm:$0xf]
        %v1256 = vld [vmem:[#allocation2 + $0x34] sm:$0xf]
        %v1257 = vld [vmem:[#allocation2 + $0x3c] sm:$0xf]
        %v1258 = vld [vmem:[#allocation2 + $0x44] sm:$0xf]
        %v1259 = vld [vmem:[#allocation2 + $0x4c] sm:$0xf]
        %v1260 = vld [vmem:[#allocation2 + $0x54] sm:$0xf]
        %v1261 = vld [vmem:[#allocation2 + $0x5c] sm:$0xf]
        %v1262 = vld [vmem:[#allocation2 + $0x64] sm:$0xf]
        %v1263 = vld [vmem:[#allocation2 + $0x6c] sm:$0xf]
        %v1264 = vld [vmem:[#allocation2 + $0x74] sm:$0xf]
        %v1265 = vld [vmem:[#allocation2 + $0x7c] sm:$0xf]
        %v1282 = vunpack.c.l.b16 %v1234
        %v1283 = vunpack.c.l.b16 %v1235
        %v1284 = vunpack.c.l.b16 %v1236
        %v1285 = vunpack.c.l.b16 %v1237
        %v1286 = vunpack.c.l.b16 %v1238
        %v1287 = vunpack.c.l.b16 %v1239
        %v1288 = vunpack.c.l.b16 %v1240
        %v1289 = vunpack.c.l.b16 %v1241
        %v1290 = vunpack.c.l.b16 %v1242
        %v1291 = vunpack.c.l.b16 %v1243
        %v1292 = vunpack.c.l.b16 %v1244
        %v1293 = vunpack.c.l.b16 %v1245
        %v1294 = vunpack.c.l.b16 %v1246
        %v1295 = vunpack.c.l.b16 %v1247
        %v1296 = vunpack.c.l.b16 %v1248
        %v1297 = vunpack.c.l.b16 %v1249
        %v1298 = vpack.c.b16 %v1283, %v1282
        %v1299 = vpack.c.b16 %v1285, %v1284
        %v1300 = vpack.c.b16 %v1287, %v1286
        %v1301 = vpack.c.b16 %v1289, %v1288
        %v1302 = vpack.c.b16 %v1291, %v1290
        %v1303 = vpack.c.b16 %v1293, %v1292
        %v1304 = vpack.c.b16 %v1295, %v1294
        %v1305 = vpack.c.b16 %v1297, %v1296
        %vm1306 = vcmask 261120
        %v1308 = vsel %vm1306, %v1230, 0
        %v1311 = vsel %vm1306, %v1231, 0
        %v1314 = vsel %vm1306, %v1232, 0
        %v1317 = vsel %vm1306, %v1233, 0
        %v1320 = vsel %vm1306, %v1298, 0
        %v1323 = vsel %vm1306, %v1299, 0
        %v1326 = vsel %vm1306, %v1300, 0
        %v1329 = vsel %vm1306, %v1301, 0
        %v1332 = vsel %vm1306, %v1302, 0
        %v1335 = vsel %vm1306, %v1303, 0
        %v1338 = vsel %vm1306, %v1304, 0
        %v1341 = vsel %vm1306, %v1305, 0
        %1343 = vmatprep.subr.bf16.mxu0 0
        %1344 = vmatpush1.bf16.xpose.msra.mxu0 %v1341
        %1345 = vmatprep.subr.bf16.mxu0 0
        %1346 = vmatpush1.bf16.xpose.msra.mxu0 %v1338
        %1347 = vmatprep.subr.bf16.mxu0 0
        %1348 = vmatpush1.bf16.xpose.msra.mxu0 %v1335
        %1349 = vmatprep.subr.bf16.mxu0 0
        %1350 = vmatpush1.bf16.xpose.msra.mxu0 %v1332
        %1351 = vmatprep.subr.bf16.mxu0 0
        %1352 = vmatpush1.bf16.xpose.msra.mxu0 %v1329
        %1353 = vmatprep.subr.bf16.mxu0 0
        %1354 = vmatpush1.bf16.xpose.msra.mxu0 %v1326
        %1355 = vmatprep.subr.bf16.mxu0 0
        %1356 = vmatpush1.bf16.xpose.msra.mxu0 %v1323
        %1357 = vmatprep.subr.bf16.mxu0 0
        %1358 = vmatpush1.bf16.xpose.msra.mxu0 %v1320
        %1359 = vmatprep.subr.bf16.mxu0 0
        %1360 = vmatpush2.bf16.xpose.msra.mxu0 0
        %1361 = vmatprep.subr.bf16.mxu0 0
        %1362 = vmatpush2.bf16.xpose.msra.mxu0 0
        %1363 = vmatprep.subr.bf16.mxu0 0
        %1364 = vmatpush2.bf16.xpose.msra.mxu0 0
        %1365 = vmatprep.subr.bf16.mxu0 0
        %1366 = vmatpush2.bf16.xpose.msra.mxu0 0
        %1367 = vmatprep.subr.bf16.mxu0 0
        %1368 = vmatpush2.bf16.xpose.msra.mxu0 0
        %1369 = vmatprep.subr.bf16.mxu0 0
        %1370 = vmatpush2.bf16.xpose.msra.mxu0 0
        %1371 = vmatprep.subr.bf16.mxu0 0
        %1372 = vmatpush2.bf16.xpose.msra.mxu0 0
        %1373 = vmatprep.subr.bf16.mxu0 0
        %1374 = vmatpush2.bf16.xpose.msra.mxu0 0
        %1375 = vmatprep.mubr.bf16.mxu0 0
        %1376 = vmatmul.mubr.bf16.gmra.mxu0 %v1308
        %v1377 = vpop.f32.mrf.mxu0
        %v1378 = vadd.f32 0.0, %v1377
        %v1379 = vpop.f32.mrf.mxu0
        %v1380 = vpop.f32.mrf.mxu0
        %v1381 = vadd.f32 0.0, %v1380
        %v1382 = vpop.f32.mrf.mxu0
        %1383 = vmatprep.mubr.bf16.mxu0 0
        %1384 = vmatmul.mubr.bf16.gmra.mxu0 %v1311
        %v1385 = vpop.f32.mrf.mxu0
        %v1386 = vadd.f32 0.0, %v1385
        %v1387 = vpop.f32.mrf.mxu0
        %v1388 = vpop.f32.mrf.mxu0
        %v1389 = vadd.f32 0.0, %v1388
        %v1390 = vpop.f32.mrf.mxu0
        %1391 = vmatprep.mubr.bf16.mxu0 0
        %1392 = vmatmul.mubr.bf16.gmra.mxu0 %v1314
        %v1393 = vpop.f32.mrf.mxu0
        %v1394 = vadd.f32 0.0, %v1393
        %v1395 = vpop.f32.mrf.mxu0
        %v1396 = vpop.f32.mrf.mxu0
        %v1397 = vadd.f32 0.0, %v1396
        %v1398 = vpop.f32.mrf.mxu0
        %1399 = vmatprep.mubr.bf16.mxu0 0
        %1400 = vmatmul.mubr.bf16.gmra.mxu0 %v1317
        %v1401 = vpop.f32.mrf.mxu0
        %v1402 = vadd.f32 0.0, %v1401
        %v1403 = vpop.f32.mrf.mxu0
        %v1404 = vpop.f32.mrf.mxu0
        %v1405 = vadd.f32 0.0, %v1404
        %v1406 = vpop.f32.mrf.mxu0
        %1407 = vdwg.mxu0
        %1408 = vmax.xlane.f32.xlu0 %v1378
        %v1409 = vpop.xlane.xlu0 %1408
        %1410 = vmax.xlane.f32.xlu0 %v1381
        %v1411 = vpop.xlane.xlu0 %1410
        %1412 = vmax.xlane.f32.xlu0 %v1386
        %v1413 = vpop.xlane.xlu0 %1412
        %1414 = vmax.xlane.f32.xlu0 %v1389
        %v1415 = vpop.xlane.xlu0 %1414
        %1416 = vmax.xlane.f32.xlu0 %v1394
        %v1417 = vpop.xlane.xlu0 %1416
        %1418 = vmax.xlane.f32.xlu0 %v1397
        %v1419 = vpop.xlane.xlu0 %1418
        %1420 = vmax.xlane.f32.xlu0 %v1402
        %v1421 = vpop.xlane.xlu0 %1420
        %1422 = vmax.xlane.f32.xlu0 %v1405
        %v1423 = vpop.xlane.xlu0 %1422
        %v1424 = vsub.f32 %v1378, %v1409
        %v1425 = vsub.f32 %v1381, %v1411
        %v1426 = vsub.f32 %v1386, %v1413
        %v1427 = vsub.f32 %v1389, %v1415
        %v1428 = vsub.f32 %v1394, %v1417
        %v1429 = vsub.f32 %v1397, %v1419
        %v1430 = vsub.f32 %v1402, %v1421
        %v1431 = vsub.f32 %v1405, %v1423
        %v1432 = vmul.f32 %v1424, 1.442695
        %v1433 = vpow.pop %v1432
        %v1434 = vmul.f32 %v1425, 1.442695
        %v1435 = vpow.pop %v1434
        %v1436 = vmul.f32 %v1426, 1.442695
        %v1437 = vpow.pop %v1436
        %v1438 = vmul.f32 %v1427, 1.442695
        %v1439 = vpow.pop %v1438
        %v1440 = vmul.f32 %v1428, 1.442695
        %v1441 = vpow.pop %v1440
        %v1442 = vmul.f32 %v1429, 1.442695
        %v1443 = vpow.pop %v1442
        %v1444 = vmul.f32 %v1430, 1.442695
        %v1445 = vpow.pop %v1444
        %v1446 = vmul.f32 %v1431, 1.442695
        %v1447 = vpow.pop %v1446
        %1448 = vadd.xlane.f32.xlu0 %v1433
        %v1449 = vpop.xlane.xlu0 %1448
        %1450 = vadd.xlane.f32.xlu0 %v1435
        %v1451 = vpop.xlane.xlu0 %1450
        %1452 = vadd.xlane.f32.xlu0 %v1437
        %v1453 = vpop.xlane.xlu0 %1452
        %1454 = vadd.xlane.f32.xlu0 %v1439
        %v1455 = vpop.xlane.xlu0 %1454
        %1456 = vadd.xlane.f32.xlu0 %v1441
        %v1457 = vpop.xlane.xlu0 %1456
        %1458 = vadd.xlane.f32.xlu0 %v1443
        %v1459 = vpop.xlane.xlu0 %1458
        %1460 = vadd.xlane.f32.xlu0 %v1445
        %v1461 = vpop.xlane.xlu0 %1460
        %1462 = vadd.xlane.f32.xlu0 %v1447
        %v1463 = vpop.xlane.xlu0 %1462
        %v1464 = vpack.c.bf16 %v1435, %v1433
        %v1465 = vpack.c.bf16 %v1439, %v1437
        %v1466 = vpack.c.bf16 %v1443, %v1441
        %v1467 = vpack.c.bf16 %v1447, %v1445
        %v1484 = vunpack.c.l.b16 %v1250
        %v1485 = vunpack.c.l.b16 %v1251
        %v1486 = vunpack.c.l.b16 %v1252
        %v1487 = vunpack.c.l.b16 %v1253
        %v1488 = vunpack.c.l.b16 %v1254
        %v1489 = vunpack.c.l.b16 %v1255
        %v1490 = vunpack.c.l.b16 %v1256
        %v1491 = vunpack.c.l.b16 %v1257
        %v1492 = vunpack.c.l.b16 %v1258
        %v1493 = vunpack.c.l.b16 %v1259
        %v1494 = vunpack.c.l.b16 %v1260
        %v1495 = vunpack.c.l.b16 %v1261
        %v1496 = vunpack.c.l.b16 %v1262
        %v1497 = vunpack.c.l.b16 %v1263
        %v1498 = vunpack.c.l.b16 %v1264
        %v1499 = vunpack.c.l.b16 %v1265
        %v1500 = vpack.c.b16 %v1485, %v1484
        %v1501 = vpack.c.b16 %v1487, %v1486
        %v1502 = vpack.c.b16 %v1489, %v1488
        %v1503 = vpack.c.b16 %v1491, %v1490
        %v1504 = vpack.c.b16 %v1493, %v1492
        %v1505 = vpack.c.b16 %v1495, %v1494
        %v1506 = vpack.c.b16 %v1497, %v1496
        %v1507 = vpack.c.b16 %v1499, %v1498
        %1516 = vmatprep.subr.bf16.mxu0 0
        %1517 = vmatpush1.bf16.msra.mxu0 %v1507
        %1518 = vmatprep.subr.bf16.mxu0 0
        %1519 = vmatpush1.bf16.msra.mxu0 %v1506
        %1520 = vmatprep.subr.bf16.mxu0 0
        %1521 = vmatpush1.bf16.msra.mxu0 %v1505
        %1522 = vmatprep.subr.bf16.mxu0 0
        %1523 = vmatpush1.bf16.msra.mxu0 %v1504
        %1524 = vmatprep.subr.bf16.mxu0 0
        %1525 = vmatpush1.bf16.msra.mxu0 %v1503
        %1526 = vmatprep.subr.bf16.mxu0 0
        %1527 = vmatpush1.bf16.msra.mxu0 %v1502
        %1528 = vmatprep.subr.bf16.mxu0 0
        %1529 = vmatpush1.bf16.msra.mxu0 %v1501
        %1530 = vmatprep.subr.bf16.mxu0 0
        %1531 = vmatpush1.bf16.msra.mxu0 %v1500
        %1532 = vmatprep.subr.bf16.mxu0 0
        %1533 = vmatpush2.bf16.msra.mxu0 0
        %1534 = vmatprep.subr.bf16.mxu0 0
        %1535 = vmatpush2.bf16.msra.mxu0 0
        %1536 = vmatprep.subr.bf16.mxu0 0
        %1537 = vmatpush2.bf16.msra.mxu0 0
        %1538 = vmatprep.subr.bf16.mxu0 0
        %1539 = vmatpush2.bf16.msra.mxu0 0
        %1540 = vmatprep.subr.bf16.mxu0 0
        %1541 = vmatpush2.bf16.msra.mxu0 0
        %1542 = vmatprep.subr.bf16.mxu0 0
        %1543 = vmatpush2.bf16.msra.mxu0 0
        %1544 = vmatprep.subr.bf16.mxu0 0
        %1545 = vmatpush2.bf16.msra.mxu0 0
        %1546 = vmatprep.subr.bf16.mxu0 0
        %1547 = vmatpush2.bf16.msra.mxu0 0
        %1548 = vmatprep.mubr.bf16.mxu0 0
        %1549 = vmatmul.mubr.bf16.gmra.mxu0 %v1464
        %v1550 = vpop.f32.mrf.mxu0
        %v1551 = vadd.f32 0.0, %v1550
        %v1552 = vpop.f32.mrf.mxu0
        %v1553 = vpop.f32.mrf.mxu0
        %v1554 = vadd.f32 0.0, %v1553
        %v1555 = vpop.f32.mrf.mxu0
        %1556 = vmatprep.mubr.bf16.mxu0 0
        %1557 = vmatmul.mubr.bf16.gmra.mxu0 %v1465
        %v1558 = vpop.f32.mrf.mxu0
        %v1559 = vadd.f32 0.0, %v1558
        %v1560 = vpop.f32.mrf.mxu0
        %v1561 = vpop.f32.mrf.mxu0
        %v1562 = vadd.f32 0.0, %v1561
        %v1563 = vpop.f32.mrf.mxu0
        %1564 = vmatprep.mubr.bf16.mxu0 0
        %1565 = vmatmul.mubr.bf16.gmra.mxu0 %v1466
        %v1566 = vpop.f32.mrf.mxu0
        %v1567 = vadd.f32 0.0, %v1566
        %v1568 = vpop.f32.mrf.mxu0
        %v1569 = vpop.f32.mrf.mxu0
        %v1570 = vadd.f32 0.0, %v1569
        %v1571 = vpop.f32.mrf.mxu0
        %1572 = vmatprep.mubr.bf16.mxu0 0
        %1573 = vmatmul.mubr.bf16.gmra.mxu0 %v1467
        %v1574 = vpop.f32.mrf.mxu0
        %v1575 = vadd.f32 0.0, %v1574
        %v1576 = vpop.f32.mrf.mxu0
        %v1577 = vpop.f32.mrf.mxu0
        %v1578 = vadd.f32 0.0, %v1577
        %v1579 = vpop.f32.mrf.mxu0
        %1580 = vdwg.mxu0
        %v1581 = vrcp.pop %v1449
        %v1582 = vrcp.pop %v1451
        %v1583 = vrcp.pop %v1453
        %v1584 = vrcp.pop %v1455
        %v1585 = vrcp.pop %v1457
        %v1586 = vrcp.pop %v1459
        %v1587 = vrcp.pop %v1461
        %v1588 = vrcp.pop %v1463
        %v1589 = vmul.f32 %v1551, %v1581
        %v1590 = vmul.f32 %v1554, %v1582
        %v1591 = vmul.f32 %v1559, %v1583
        %v1592 = vmul.f32 %v1562, %v1584
        %v1593 = vmul.f32 %v1567, %v1585
        %v1594 = vmul.f32 %v1570, %v1586
        %v1595 = vmul.f32 %v1575, %v1587
        %v1596 = vmul.f32 %v1578, %v1588
        %v1597 = vpack.c.bf16 %v1590, %v1589
        %v1598 = vpack.c.bf16 %v1592, %v1591
        %v1599 = vpack.c.bf16 %v1594, %v1593
        %v1600 = vpack.c.bf16 %v1596, %v1595
        %v1601 = vld [vmem:[#allocation11] sm:$0xf]
        %v1602 = vld [vmem:[#allocation11 + $0x4] sm:$0xf]
        %v1603 = vld [vmem:[#allocation11 + $0x8] sm:$0xf]
        %v1604 = vld [vmem:[#allocation11 + $0xc] sm:$0xf]
        %v1605 = vld [vmem:[#allocation2] sm:$0xf]
        %v1606 = vld [vmem:[#allocation2 + $0x8] sm:$0xf]
        %v1607 = vld [vmem:[#allocation2 + $0x10] sm:$0xf]
        %v1608 = vld [vmem:[#allocation2 + $0x18] sm:$0xf]
        %v1609 = vld [vmem:[#allocation2 + $0x20] sm:$0xf]
        %v1610 = vld [vmem:[#allocation2 + $0x28] sm:$0xf]
        %v1611 = vld [vmem:[#allocation2 + $0x30] sm:$0xf]
        %v1612 = vld [vmem:[#allocation2 + $0x38] sm:$0xf]
        %v1613 = vld [vmem:[#allocation2 + $0x40] sm:$0xf]
        %v1614 = vld [vmem:[#allocation2 + $0x48] sm:$0xf]
        %v1615 = vld [vmem:[#allocation2 + $0x50] sm:$0xf]
        %v1616 = vld [vmem:[#allocation2 + $0x58] sm:$0xf]
        %v1617 = vld [vmem:[#allocation2 + $0x60] sm:$0xf]
        %v1618 = vld [vmem:[#allocation2 + $0x68] sm:$0xf]
        %v1619 = vld [vmem:[#allocation2 + $0x70] sm:$0xf]
        %v1620 = vld [vmem:[#allocation2 + $0x78] sm:$0xf]
        %v1621 = vld [vmem:[#allocation2 + $0x4] sm:$0xf]
        %v1622 = vld [vmem:[#allocation2 + $0xc] sm:$0xf]
        %v1623 = vld [vmem:[#allocation2 + $0x14] sm:$0xf]
        %v1624 = vld [vmem:[#allocation2 + $0x1c] sm:$0xf]
        %v1625 = vld [vmem:[#allocation2 + $0x24] sm:$0xf]
        %v1626 = vld [vmem:[#allocation2 + $0x2c] sm:$0xf]
        %v1627 = vld [vmem:[#allocation2 + $0x34] sm:$0xf]
        %v1628 = vld [vmem:[#allocation2 + $0x3c] sm:$0xf]
        %v1629 = vld [vmem:[#allocation2 + $0x44] sm:$0xf]
        %v1630 = vld [vmem:[#allocation2 + $0x4c] sm:$0xf]
        %v1631 = vld [vmem:[#allocation2 + $0x54] sm:$0xf]
        %v1632 = vld [vmem:[#allocation2 + $0x5c] sm:$0xf]
        %v1633 = vld [vmem:[#allocation2 + $0x64] sm:$0xf]
        %v1634 = vld [vmem:[#allocation2 + $0x6c] sm:$0xf]
        %v1635 = vld [vmem:[#allocation2 + $0x74] sm:$0xf]
        %v1636 = vld [vmem:[#allocation2 + $0x7c] sm:$0xf]
        %1641 = vrot.lane.b32.xlu0 %v1230, 96
        %v1642 = vpop.permute.xlu0 %1641
        %1643 = vrot.lane.b32.xlu0 %v1231, 96
        %v1644 = vpop.permute.xlu0 %1643
        %1645 = vrot.lane.b32.xlu0 %v1232, 96
        %v1646 = vpop.permute.xlu0 %1645
        %1647 = vrot.lane.b32.xlu0 %v1233, 96
        %v1648 = vpop.permute.xlu0 %1647
        %v1665 = vunpack.c.l.b16 %v1605
        %v1666 = vunpack.c.l.b16 %v1606
        %v1667 = vunpack.c.l.b16 %v1607
        %v1668 = vunpack.c.l.b16 %v1608
        %v1669 = vunpack.c.l.b16 %v1609
        %v1670 = vunpack.c.l.b16 %v1610
        %v1671 = vunpack.c.l.b16 %v1611
        %v1672 = vunpack.c.l.b16 %v1612
        %v1673 = vunpack.c.l.b16 %v1613
        %v1674 = vunpack.c.l.b16 %v1614
        %v1675 = vunpack.c.l.b16 %v1615
        %v1676 = vunpack.c.l.b16 %v1616
        %v1677 = vunpack.c.l.b16 %v1617
        %v1678 = vunpack.c.l.b16 %v1618
        %v1679 = vunpack.c.l.b16 %v1619
        %v1680 = vunpack.c.l.b16 %v1620
        %v1681 = vpack.c.b16 %v1666, %v1665
        %v1682 = vpack.c.b16 %v1668, %v1667
        %v1683 = vpack.c.b16 %v1670, %v1669
        %v1684 = vpack.c.b16 %v1672, %v1671
        %v1685 = vpack.c.b16 %v1674, %v1673
        %v1686 = vpack.c.b16 %v1676, %v1675
        %v1687 = vpack.c.b16 %v1678, %v1677
        %v1688 = vpack.c.b16 %v1680, %v1679
        %1689 = vrot.lane.b32.xlu0 %v1681, 96
        %v1690 = vpop.permute.xlu0 %1689
        %1691 = vrot.lane.b32.xlu0 %v1682, 96
        %v1692 = vpop.permute.xlu0 %1691
        %1693 = vrot.lane.b32.xlu0 %v1683, 96
        %v1694 = vpop.permute.xlu0 %1693
        %1695 = vrot.lane.b32.xlu0 %v1684, 96
        %v1696 = vpop.permute.xlu0 %1695
        %1697 = vrot.lane.b32.xlu0 %v1685, 96
        %v1698 = vpop.permute.xlu0 %1697
        %1699 = vrot.lane.b32.xlu0 %v1686, 96
        %v1700 = vpop.permute.xlu0 %1699
        %1701 = vrot.lane.b32.xlu0 %v1687, 96
        %v1702 = vpop.permute.xlu0 %1701
        %1703 = vrot.lane.b32.xlu0 %v1688, 96
        %v1704 = vpop.permute.xlu0 %1703
        %v1706 = vsel %vm1306, %v1642, 0
        %v1709 = vsel %vm1306, %v1644, 0
        %v1712 = vsel %vm1306, %v1646, 0
        %v1715 = vsel %vm1306, %v1648, 0
        %v1718 = vsel %vm1306, %v1690, 0
        %v1721 = vsel %vm1306, %v1692, 0
        %v1724 = vsel %vm1306, %v1694, 0
        %v1727 = vsel %vm1306, %v1696, 0
        %v1730 = vsel %vm1306, %v1698, 0
        %v1733 = vsel %vm1306, %v1700, 0
        %v1736 = vsel %vm1306, %v1702, 0
        %v1739 = vsel %vm1306, %v1704, 0
        %1741 = vmatprep.subr.bf16.mxu0 0
        %1742 = vmatpush1.bf16.xpose.msra.mxu0 %v1739
        %1743 = vmatprep.subr.bf16.mxu0 0
        %1744 = vmatpush1.bf16.xpose.msra.mxu0 %v1736
        %1745 = vmatprep.subr.bf16.mxu0 0
        %1746 = vmatpush1.bf16.xpose.msra.mxu0 %v1733
        %1747 = vmatprep.subr.bf16.mxu0 0
        %1748 = vmatpush1.bf16.xpose.msra.mxu0 %v1730
        %1749 = vmatprep.subr.bf16.mxu0 0
        %1750 = vmatpush1.bf16.xpose.msra.mxu0 %v1727
        %1751 = vmatprep.subr.bf16.mxu0 0
        %1752 = vmatpush1.bf16.xpose.msra.mxu0 %v1724
        %1753 = vmatprep.subr.bf16.mxu0 0
        %1754 = vmatpush1.bf16.xpose.msra.mxu0 %v1721
        %1755 = vmatprep.subr.bf16.mxu0 0
        %1756 = vmatpush1.bf16.xpose.msra.mxu0 %v1718
        %1757 = vmatprep.subr.bf16.mxu0 0
        %1758 = vmatpush2.bf16.xpose.msra.mxu0 0
        %1759 = vmatprep.subr.bf16.mxu0 0
        %1760 = vmatpush2.bf16.xpose.msra.mxu0 0
        %1761 = vmatprep.subr.bf16.mxu0 0
        %1762 = vmatpush2.bf16.xpose.msra.mxu0 0
        %1763 = vmatprep.subr.bf16.mxu0 0
        %1764 = vmatpush2.bf16.xpose.msra.mxu0 0
        %1765 = vmatprep.subr.bf16.mxu0 0
        %1766 = vmatpush2.bf16.xpose.msra.mxu0 0
        %1767 = vmatprep.subr.bf16.mxu0 0
        %1768 = vmatpush2.bf16.xpose.msra.mxu0 0
        %1769 = vmatprep.subr.bf16.mxu0 0
        %1770 = vmatpush2.bf16.xpose.msra.mxu0 0
        %1771 = vmatprep.subr.bf16.mxu0 0
        %1772 = vmatpush2.bf16.xpose.msra.mxu0 0
        %1773 = vmatprep.mubr.bf16.mxu0 0
        %1774 = vmatmul.mubr.bf16.gmra.mxu0 %v1706
        %v1775 = vpop.f32.mrf.mxu0
        %v1776 = vadd.f32 0.0, %v1775
        %v1777 = vpop.f32.mrf.mxu0
        %v1778 = vpop.f32.mrf.mxu0
        %v1779 = vadd.f32 0.0, %v1778
        %v1780 = vpop.f32.mrf.mxu0
        %1781 = vmatprep.mubr.bf16.mxu0 0
        %1782 = vmatmul.mubr.bf16.gmra.mxu0 %v1709
        %v1783 = vpop.f32.mrf.mxu0
        %v1784 = vadd.f32 0.0, %v1783
        %v1785 = vpop.f32.mrf.mxu0
        %v1786 = vpop.f32.mrf.mxu0
        %v1787 = vadd.f32 0.0, %v1786
        %v1788 = vpop.f32.mrf.mxu0
        %1789 = vmatprep.mubr.bf16.mxu0 0
        %1790 = vmatmul.mubr.bf16.gmra.mxu0 %v1712
        %v1791 = vpop.f32.mrf.mxu0
        %v1792 = vadd.f32 0.0, %v1791
        %v1793 = vpop.f32.mrf.mxu0
        %v1794 = vpop.f32.mrf.mxu0
        %v1795 = vadd.f32 0.0, %v1794
        %v1796 = vpop.f32.mrf.mxu0
        %1797 = vmatprep.mubr.bf16.mxu0 0
        %1798 = vmatmul.mubr.bf16.gmra.mxu0 %v1715
        %v1799 = vpop.f32.mrf.mxu0
        %v1800 = vadd.f32 0.0, %v1799
        %v1801 = vpop.f32.mrf.mxu0
        %v1802 = vpop.f32.mrf.mxu0
        %v1803 = vadd.f32 0.0, %v1802
        %v1804 = vpop.f32.mrf.mxu0
        %1805 = vdwg.mxu0
        %1806 = vmax.xlane.f32.xlu0 %v1776
        %v1807 = vpop.xlane.xlu0 %1806
        %1808 = vmax.xlane.f32.xlu0 %v1779
        %v1809 = vpop.xlane.xlu0 %1808
        %1810 = vmax.xlane.f32.xlu0 %v1784
        %v1811 = vpop.xlane.xlu0 %1810
        %1812 = vmax.xlane.f32.xlu0 %v1787
        %v1813 = vpop.xlane.xlu0 %1812
        %1814 = vmax.xlane.f32.xlu0 %v1792
        %v1815 = vpop.xlane.xlu0 %1814
        %1816 = vmax.xlane.f32.xlu0 %v1795
        %v1817 = vpop.xlane.xlu0 %1816
        %1818 = vmax.xlane.f32.xlu0 %v1800
        %v1819 = vpop.xlane.xlu0 %1818
        %1820 = vmax.xlane.f32.xlu0 %v1803
        %v1821 = vpop.xlane.xlu0 %1820
        %v1822 = vsub.f32 %v1776, %v1807
        %v1823 = vsub.f32 %v1779, %v1809
        %v1824 = vsub.f32 %v1784, %v1811
        %v1825 = vsub.f32 %v1787, %v1813
        %v1826 = vsub.f32 %v1792, %v1815
        %v1827 = vsub.f32 %v1795, %v1817
        %v1828 = vsub.f32 %v1800, %v1819
        %v1829 = vsub.f32 %v1803, %v1821
        %v1830 = vmul.f32 %v1822, 1.442695
        %v1831 = vpow.pop %v1830
        %v1832 = vmul.f32 %v1823, 1.442695
        %v1833 = vpow.pop %v1832
        %v1834 = vmul.f32 %v1824, 1.442695
        %v1835 = vpow.pop %v1834
        %v1836 = vmul.f32 %v1825, 1.442695
        %v1837 = vpow.pop %v1836
        %v1838 = vmul.f32 %v1826, 1.442695
        %v1839 = vpow.pop %v1838
        %v1840 = vmul.f32 %v1827, 1.442695
        %v1841 = vpow.pop %v1840
        %v1842 = vmul.f32 %v1828, 1.442695
        %v1843 = vpow.pop %v1842
        %v1844 = vmul.f32 %v1829, 1.442695
        %v1845 = vpow.pop %v1844
        %1846 = vadd.xlane.f32.xlu0 %v1831
        %v1847 = vpop.xlane.xlu0 %1846
        %1848 = vadd.xlane.f32.xlu0 %v1833
        %v1849 = vpop.xlane.xlu0 %1848
        %1850 = vadd.xlane.f32.xlu0 %v1835
        %v1851 = vpop.xlane.xlu0 %1850
        %1852 = vadd.xlane.f32.xlu0 %v1837
        %v1853 = vpop.xlane.xlu0 %1852
        %1854 = vadd.xlane.f32.xlu0 %v1839
        %v1855 = vpop.xlane.xlu0 %1854
        %1856 = vadd.xlane.f32.xlu0 %v1841
        %v1857 = vpop.xlane.xlu0 %1856
        %1858 = vadd.xlane.f32.xlu0 %v1843
        %v1859 = vpop.xlane.xlu0 %1858
        %1860 = vadd.xlane.f32.xlu0 %v1845
        %v1861 = vpop.xlane.xlu0 %1860
        %v1862 = vpack.c.bf16 %v1833, %v1831
        %v1863 = vpack.c.bf16 %v1837, %v1835
        %v1864 = vpack.c.bf16 %v1841, %v1839
        %v1865 = vpack.c.bf16 %v1845, %v1843
        %v1882 = vunpack.c.l.b16 %v1621
        %v1883 = vunpack.c.l.b16 %v1622
        %v1884 = vunpack.c.l.b16 %v1623
        %v1885 = vunpack.c.l.b16 %v1624
        %v1886 = vunpack.c.l.b16 %v1625
        %v1887 = vunpack.c.l.b16 %v1626
        %v1888 = vunpack.c.l.b16 %v1627
        %v1889 = vunpack.c.l.b16 %v1628
        %v1890 = vunpack.c.l.b16 %v1629
        %v1891 = vunpack.c.l.b16 %v1630
        %v1892 = vunpack.c.l.b16 %v1631
        %v1893 = vunpack.c.l.b16 %v1632
        %v1894 = vunpack.c.l.b16 %v1633
        %v1895 = vunpack.c.l.b16 %v1634
        %v1896 = vunpack.c.l.b16 %v1635
        %v1897 = vunpack.c.l.b16 %v1636
        %v1898 = vpack.c.b16 %v1883, %v1882
        %v1899 = vpack.c.b16 %v1885, %v1884
        %v1900 = vpack.c.b16 %v1887, %v1886
        %v1901 = vpack.c.b16 %v1889, %v1888
        %v1902 = vpack.c.b16 %v1891, %v1890
        %v1903 = vpack.c.b16 %v1893, %v1892
        %v1904 = vpack.c.b16 %v1895, %v1894
        %v1905 = vpack.c.b16 %v1897, %v1896
        %1906 = vrot.lane.b32.xlu0 %v1898, 96
        %v1907 = vpop.permute.xlu0 %1906
        %1908 = vrot.lane.b32.xlu0 %v1899, 96
        %v1909 = vpop.permute.xlu0 %1908
        %1910 = vrot.lane.b32.xlu0 %v1900, 96
        %v1911 = vpop.permute.xlu0 %1910
        %1912 = vrot.lane.b32.xlu0 %v1901, 96
        %v1913 = vpop.permute.xlu0 %1912
        %1914 = vrot.lane.b32.xlu0 %v1902, 96
        %v1915 = vpop.permute.xlu0 %1914
        %1916 = vrot.lane.b32.xlu0 %v1903, 96
        %v1917 = vpop.permute.xlu0 %1916
        %1918 = vrot.lane.b32.xlu0 %v1904, 96
        %v1919 = vpop.permute.xlu0 %1918
        %1920 = vrot.lane.b32.xlu0 %v1905, 96
        %v1921 = vpop.permute.xlu0 %1920
        %1930 = vmatprep.subr.bf16.mxu0 0
        %1931 = vmatpush1.bf16.msra.mxu0 %v1921
        %1932 = vmatprep.subr.bf16.mxu0 0
        %1933 = vmatpush1.bf16.msra.mxu0 %v1919
        %1934 = vmatprep.subr.bf16.mxu0 0
        %1935 = vmatpush1.bf16.msra.mxu0 %v1917
        %1936 = vmatprep.subr.bf16.mxu0 0
        %1937 = vmatpush1.bf16.msra.mxu0 %v1915
        %1938 = vmatprep.subr.bf16.mxu0 0
        %1939 = vmatpush1.bf16.msra.mxu0 %v1913
        %1940 = vmatprep.subr.bf16.mxu0 0
        %1941 = vmatpush1.bf16.msra.mxu0 %v1911
        %1942 = vmatprep.subr.bf16.mxu0 0
        %1943 = vmatpush1.bf16.msra.mxu0 %v1909
        %1944 = vmatprep.subr.bf16.mxu0 0
        %1945 = vmatpush1.bf16.msra.mxu0 %v1907
        %1946 = vmatprep.subr.bf16.mxu0 0
        %1947 = vmatpush2.bf16.msra.mxu0 0
        %1948 = vmatprep.subr.bf16.mxu0 0
        %1949 = vmatpush2.bf16.msra.mxu0 0
        %1950 = vmatprep.subr.bf16.mxu0 0
        %1951 = vmatpush2.bf16.msra.mxu0 0
        %1952 = vmatprep.subr.bf16.mxu0 0
        %1953 = vmatpush2.bf16.msra.mxu0 0
        %1954 = vmatprep.subr.bf16.mxu0 0
        %1955 = vmatpush2.bf16.msra.mxu0 0
        %1956 = vmatprep.subr.bf16.mxu0 0
        %1957 = vmatpush2.bf16.msra.mxu0 0
        %1958 = vmatprep.subr.bf16.mxu0 0
        %1959 = vmatpush2.bf16.msra.mxu0 0
        %1960 = vmatprep.subr.bf16.mxu0 0
        %1961 = vmatpush2.bf16.msra.mxu0 0
        %1962 = vmatprep.mubr.bf16.mxu0 0
        %1963 = vmatmul.mubr.bf16.gmra.mxu0 %v1862
        %v1964 = vpop.f32.mrf.mxu0
        %v1965 = vadd.f32 0.0, %v1964
        %v1966 = vpop.f32.mrf.mxu0
        %v1967 = vpop.f32.mrf.mxu0
        %v1968 = vadd.f32 0.0, %v1967
        %v1969 = vpop.f32.mrf.mxu0
        %1970 = vmatprep.mubr.bf16.mxu0 0
        %1971 = vmatmul.mubr.bf16.gmra.mxu0 %v1863
        %v1972 = vpop.f32.mrf.mxu0
        %v1973 = vadd.f32 0.0, %v1972
        %v1974 = vpop.f32.mrf.mxu0
        %v1975 = vpop.f32.mrf.mxu0
        %v1976 = vadd.f32 0.0, %v1975
        %v1977 = vpop.f32.mrf.mxu0
        %1978 = vmatprep.mubr.bf16.mxu0 0
        %1979 = vmatmul.mubr.bf16.gmra.mxu0 %v1864
        %v1980 = vpop.f32.mrf.mxu0
        %v1981 = vadd.f32 0.0, %v1980
        %v1982 = vpop.f32.mrf.mxu0
        %v1983 = vpop.f32.mrf.mxu0
        %v1984 = vadd.f32 0.0, %v1983
        %v1985 = vpop.f32.mrf.mxu0
        %1986 = vmatprep.mubr.bf16.mxu0 0
        %1987 = vmatmul.mubr.bf16.gmra.mxu0 %v1865
        %v1988 = vpop.f32.mrf.mxu0
        %v1989 = vadd.f32 0.0, %v1988
        %v1990 = vpop.f32.mrf.mxu0
        %v1991 = vpop.f32.mrf.mxu0
        %v1992 = vadd.f32 0.0, %v1991
        %v1993 = vpop.f32.mrf.mxu0
        %1994 = vdwg.mxu0
        %v1995 = vrcp.pop %v1847
        %v1996 = vrcp.pop %v1849
        %v1997 = vrcp.pop %v1851
        %v1998 = vrcp.pop %v1853
        %v1999 = vrcp.pop %v1855
        %v2000 = vrcp.pop %v1857
        %v2001 = vrcp.pop %v1859
        %v2002 = vrcp.pop %v1861
        %v2003 = vmul.f32 %v1965, %v1995
        %v2004 = vmul.f32 %v1968, %v1996
        %v2005 = vmul.f32 %v1973, %v1997
        %v2006 = vmul.f32 %v1976, %v1998
        %v2007 = vmul.f32 %v1981, %v1999
        %v2008 = vmul.f32 %v1984, %v2000
        %v2009 = vmul.f32 %v1989, %v2001
        %v2010 = vmul.f32 %v1992, %v2002
        %v2011 = vpack.c.bf16 %v2004, %v2003
        %v2012 = vpack.c.bf16 %v2006, %v2005
        %v2013 = vpack.c.bf16 %v2008, %v2007
        %v2014 = vpack.c.bf16 %v2010, %v2009
        %v2015 = vld [vmem:[#allocation11 + $0x10] sm:$0xf]
        %v2016 = vld [vmem:[#allocation11 + $0x14] sm:$0xf]
        %v2017 = vld [vmem:[#allocation11 + $0x18] sm:$0xf]
        %v2018 = vld [vmem:[#allocation11 + $0x1c] sm:$0xf]
        %v2023 = vunpack.c.l.b16 %v2015
        %v2024 = vunpack.c.l.b16 %v2016
        %v2025 = vunpack.c.l.b16 %v2017
        %v2026 = vunpack.c.l.b16 %v2018
        %v2027 = vpack.c.b16 %v2024, %v2023
        %v2028 = vpack.c.b16 %v2026, %v2025
        %v2032 = vsel %vm1306, %v2011, 0
        %v2035 = vsel %vm1306, %v2012, 0
        %v2038 = vsel %vm1306, %v2013, 0
        %v2041 = vsel %vm1306, %v2014, 0
        %2043 = vmatprep.subr.bf16.mxu0 0
        %2044 = vmatpush1.bf16.msra.mxu0 0
        %2045 = vmatprep.subr.bf16.mxu0 0
        %2046 = vmatpush1.bf16.msra.mxu0 0
        %2047 = vmatprep.subr.bf16.mxu0 0
        %2048 = vmatpush1.bf16.msra.mxu0 0
        %2049 = vmatprep.subr.bf16.mxu0 0
        %2050 = vmatpush1.bf16.msra.mxu0 0
        %2051 = vmatprep.subr.bf16.mxu0 0
        %2052 = vmatpush1.bf16.msra.mxu0 0
        %2053 = vmatprep.subr.bf16.mxu0 0
        %2054 = vmatpush1.bf16.msra.mxu0 0
        %2055 = vmatprep.subr.bf16.mxu0 0
        %2056 = vmatpush1.bf16.msra.mxu0 %v2028
        %2057 = vmatprep.subr.bf16.mxu0 0
        %2058 = vmatpush1.bf16.msra.mxu0 %v2027
        %2059 = vmatprep.subr.bf16.mxu0 0
        %2060 = vmatpush2.bf16.msra.mxu0 0
        %2061 = vmatprep.subr.bf16.mxu0 0
        %2062 = vmatpush2.bf16.msra.mxu0 0
        %2063 = vmatprep.subr.bf16.mxu0 0
        %2064 = vmatpush2.bf16.msra.mxu0 0
        %2065 = vmatprep.subr.bf16.mxu0 0
        %2066 = vmatpush2.bf16.msra.mxu0 0
        %2067 = vmatprep.subr.bf16.mxu0 0
        %2068 = vmatpush2.bf16.msra.mxu0 0
        %2069 = vmatprep.subr.bf16.mxu0 0
        %2070 = vmatpush2.bf16.msra.mxu0 0
        %2071 = vmatprep.subr.bf16.mxu0 0
        %2072 = vmatpush2.bf16.msra.mxu0 0
        %2073 = vmatprep.subr.bf16.mxu0 0
        %2074 = vmatpush2.bf16.msra.mxu0 0
        %2075 = vmatprep.mubr.bf16.mxu0 0
        %2076 = vmatmul.mubr.bf16.gmra.mxu0 %v2032
        %v2077 = vpop.f32.mrf.mxu0
        %v2078 = vadd.f32 0.0, %v2077
        %v2079 = vpop.f32.mrf.mxu0
        %v2080 = vpop.f32.mrf.mxu0
        %v2081 = vadd.f32 0.0, %v2080
        %v2082 = vpop.f32.mrf.mxu0
        %2083 = vmatprep.mubr.bf16.mxu0 0
        %2084 = vmatmul.mubr.bf16.gmra.mxu0 %v2035
        %v2085 = vpop.f32.mrf.mxu0
        %v2086 = vadd.f32 0.0, %v2085
        %v2087 = vpop.f32.mrf.mxu0
        %v2088 = vpop.f32.mrf.mxu0
        %v2089 = vadd.f32 0.0, %v2088
        %v2090 = vpop.f32.mrf.mxu0
        %2091 = vmatprep.mubr.bf16.mxu0 0
        %2092 = vmatmul.mubr.bf16.gmra.mxu0 %v2038
        %v2093 = vpop.f32.mrf.mxu0
        %v2094 = vadd.f32 0.0, %v2093
        %v2095 = vpop.f32.mrf.mxu0
        %v2096 = vpop.f32.mrf.mxu0
        %v2097 = vadd.f32 0.0, %v2096
        %v2098 = vpop.f32.mrf.mxu0
        %2099 = vmatprep.mubr.bf16.mxu0 0
        %2100 = vmatmul.mubr.bf16.gmra.mxu0 %v2041
        %v2101 = vpop.f32.mrf.mxu0
        %v2102 = vadd.f32 0.0, %v2101
        %v2103 = vpop.f32.mrf.mxu0
        %v2104 = vpop.f32.mrf.mxu0
        %v2105 = vadd.f32 0.0, %v2104
        %v2106 = vpop.f32.mrf.mxu0
        %2107 = vdwg.mxu0
        %v2112 = vunpack.c.l.b16 %v1601
        %v2113 = vunpack.c.l.b16 %v1602
        %v2114 = vunpack.c.l.b16 %v1603
        %v2115 = vunpack.c.l.b16 %v1604
        %v2116 = vpack.c.b16 %v2113, %v2112
        %v2117 = vpack.c.b16 %v2115, %v2114
        %v2121 = vsel %vm1306, %v1597, 0
        %v2124 = vsel %vm1306, %v1598, 0
        %v2127 = vsel %vm1306, %v1599, 0
        %v2130 = vsel %vm1306, %v1600, 0
        %2132 = vmatprep.subr.bf16.mxu0 0
        %2133 = vmatpush1.bf16.msra.mxu0 0
        %2134 = vmatprep.subr.bf16.mxu0 0
        %2135 = vmatpush1.bf16.msra.mxu0 0
        %2136 = vmatprep.subr.bf16.mxu0 0
        %2137 = vmatpush1.bf16.msra.mxu0 0
        %2138 = vmatprep.subr.bf16.mxu0 0
        %2139 = vmatpush1.bf16.msra.mxu0 0
        %2140 = vmatprep.subr.bf16.mxu0 0
        %2141 = vmatpush1.bf16.msra.mxu0 0
        %2142 = vmatprep.subr.bf16.mxu0 0
        %2143 = vmatpush1.bf16.msra.mxu0 0
        %2144 = vmatprep.subr.bf16.mxu0 0
        %2145 = vmatpush1.bf16.msra.mxu0 %v2117
        %2146 = vmatprep.subr.bf16.mxu0 0
        %2147 = vmatpush1.bf16.msra.mxu0 %v2116
        %2148 = vmatprep.subr.bf16.mxu0 0
        %2149 = vmatpush2.bf16.msra.mxu0 0
        %2150 = vmatprep.subr.bf16.mxu0 0
        %2151 = vmatpush2.bf16.msra.mxu0 0
        %2152 = vmatprep.subr.bf16.mxu0 0
        %2153 = vmatpush2.bf16.msra.mxu0 0
        %2154 = vmatprep.subr.bf16.mxu0 0
        %2155 = vmatpush2.bf16.msra.mxu0 0
        %2156 = vmatprep.subr.bf16.mxu0 0
        %2157 = vmatpush2.bf16.msra.mxu0 0
        %2158 = vmatprep.subr.bf16.mxu0 0
        %2159 = vmatpush2.bf16.msra.mxu0 0
        %2160 = vmatprep.subr.bf16.mxu0 0
        %2161 = vmatpush2.bf16.msra.mxu0 0
        %2162 = vmatprep.subr.bf16.mxu0 0
        %2163 = vmatpush2.bf16.msra.mxu0 0
        %2164 = vmatprep.mubr.bf16.mxu0 0
        %2165 = vmatmul.mubr.bf16.gmra.mxu0 %v2121
        %v2166 = vpop.f32.mrf.mxu0
        %v2167 = vadd.f32 %v2078, %v2166
        %v2168 = vpop.f32.mrf.mxu0
        %v2169 = vpop.f32.mrf.mxu0
        %v2170 = vadd.f32 %v2081, %v2169
        %v2171 = vpop.f32.mrf.mxu0
        %2172 = vmatprep.mubr.bf16.mxu0 0
        %2173 = vmatmul.mubr.bf16.gmra.mxu0 %v2124
        %v2174 = vpop.f32.mrf.mxu0
        %v2175 = vadd.f32 %v2086, %v2174
        %v2176 = vpop.f32.mrf.mxu0
        %v2177 = vpop.f32.mrf.mxu0
        %v2178 = vadd.f32 %v2089, %v2177
        %v2179 = vpop.f32.mrf.mxu0
        %2180 = vmatprep.mubr.bf16.mxu0 0
        %2181 = vmatmul.mubr.bf16.gmra.mxu0 %v2127
        %v2182 = vpop.f32.mrf.mxu0
        %v2183 = vadd.f32 %v2094, %v2182
        %v2184 = vpop.f32.mrf.mxu0
        %v2185 = vpop.f32.mrf.mxu0
        %v2186 = vadd.f32 %v2097, %v2185
        %v2187 = vpop.f32.mrf.mxu0
        %2188 = vmatprep.mubr.bf16.mxu0 0
        %2189 = vmatmul.mubr.bf16.gmra.mxu0 %v2130
        %v2190 = vpop.f32.mrf.mxu0
        %v2191 = vadd.f32 %v2102, %v2190
        %v2192 = vpop.f32.mrf.mxu0
        %v2193 = vpop.f32.mrf.mxu0
        %v2194 = vadd.f32 %v2105, %v2193
        %v2195 = vpop.f32.mrf.mxu0
        %2196 = vdwg.mxu0
        %v2197 = vld [vmem:[#allocation2] sm:$0xf]
        %v2198 = vld [vmem:[#allocation2 + $0x8] sm:$0xf]
        %v2199 = vld [vmem:[#allocation2 + $0x10] sm:$0xf]
        %v2200 = vld [vmem:[#allocation2 + $0x18] sm:$0xf]
        %v2201 = vld [vmem:[#allocation2 + $0x20] sm:$0xf]
        %v2202 = vld [vmem:[#allocation2 + $0x28] sm:$0xf]
        %v2203 = vld [vmem:[#allocation2 + $0x30] sm:$0xf]
        %v2204 = vld [vmem:[#allocation2 + $0x38] sm:$0xf]
        %v2205 = vld [vmem:[#allocation2 + $0x40] sm:$0xf]
        %v2206 = vld [vmem:[#allocation2 + $0x48] sm:$0xf]
        %v2207 = vld [vmem:[#allocation2 + $0x50] sm:$0xf]
        %v2208 = vld [vmem:[#allocation2 + $0x58] sm:$0xf]
        %v2209 = vld [vmem:[#allocation2 + $0x60] sm:$0xf]
        %v2210 = vld [vmem:[#allocation2 + $0x68] sm:$0xf]
        %v2211 = vld [vmem:[#allocation2 + $0x70] sm:$0xf]
        %v2212 = vld [vmem:[#allocation2 + $0x78] sm:$0xf]
        %v2213 = vld [vmem:[#allocation2 + $0x4] sm:$0xf]
        %v2214 = vld [vmem:[#allocation2 + $0xc] sm:$0xf]
        %v2215 = vld [vmem:[#allocation2 + $0x14] sm:$0xf]
        %v2216 = vld [vmem:[#allocation2 + $0x1c] sm:$0xf]
        %v2217 = vld [vmem:[#allocation2 + $0x24] sm:$0xf]
        %v2218 = vld [vmem:[#allocation2 + $0x2c] sm:$0xf]
        %v2219 = vld [vmem:[#allocation2 + $0x34] sm:$0xf]
        %v2220 = vld [vmem:[#allocation2 + $0x3c] sm:$0xf]
        %v2221 = vld [vmem:[#allocation2 + $0x44] sm:$0xf]
        %v2222 = vld [vmem:[#allocation2 + $0x4c] sm:$0xf]
        %v2223 = vld [vmem:[#allocation2 + $0x54] sm:$0xf]
        %v2224 = vld [vmem:[#allocation2 + $0x5c] sm:$0xf]
        %v2225 = vld [vmem:[#allocation2 + $0x64] sm:$0xf]
        %v2226 = vld [vmem:[#allocation2 + $0x6c] sm:$0xf]
        %v2227 = vld [vmem:[#allocation2 + $0x74] sm:$0xf]
        %v2228 = vld [vmem:[#allocation2 + $0x7c] sm:$0xf]
        %2229 = vrot.lane.b32.xlu0 %v1230, 64
        %v2230 = vpop.permute.xlu0 %2229
        %2231 = vrot.lane.b32.xlu0 %v1231, 64
        %v2232 = vpop.permute.xlu0 %2231
        %2233 = vrot.lane.b32.xlu0 %v1232, 64
        %v2234 = vpop.permute.xlu0 %2233
        %2235 = vrot.lane.b32.xlu0 %v1233, 64
        %v2236 = vpop.permute.xlu0 %2235
        %v2253 = vunpack.c.l.b16 %v2197
        %v2254 = vunpack.c.l.b16 %v2198
        %v2255 = vunpack.c.l.b16 %v2199
        %v2256 = vunpack.c.l.b16 %v2200
        %v2257 = vunpack.c.l.b16 %v2201
        %v2258 = vunpack.c.l.b16 %v2202
        %v2259 = vunpack.c.l.b16 %v2203
        %v2260 = vunpack.c.l.b16 %v2204
        %v2261 = vunpack.c.l.b16 %v2205
        %v2262 = vunpack.c.l.b16 %v2206
        %v2263 = vunpack.c.l.b16 %v2207
        %v2264 = vunpack.c.l.b16 %v2208
        %v2265 = vunpack.c.l.b16 %v2209
        %v2266 = vunpack.c.l.b16 %v2210
        %v2267 = vunpack.c.l.b16 %v2211
        %v2268 = vunpack.c.l.b16 %v2212
        %v2269 = vpack.c.b16 %v2254, %v2253
        %v2270 = vpack.c.b16 %v2256, %v2255
        %v2271 = vpack.c.b16 %v2258, %v2257
        %v2272 = vpack.c.b16 %v2260, %v2259
        %v2273 = vpack.c.b16 %v2262, %v2261
        %v2274 = vpack.c.b16 %v2264, %v2263
        %v2275 = vpack.c.b16 %v2266, %v2265
        %v2276 = vpack.c.b16 %v2268, %v2267
        %2277 = vrot.lane.b32.xlu0 %v2269, 64
        %v2278 = vpop.permute.xlu0 %2277
        %2279 = vrot.lane.b32.xlu0 %v2270, 64
        %v2280 = vpop.permute.xlu0 %2279
        %2281 = vrot.lane.b32.xlu0 %v2271, 64
        %v2282 = vpop.permute.xlu0 %2281
        %2283 = vrot.lane.b32.xlu0 %v2272, 64
        %v2284 = vpop.permute.xlu0 %2283
        %2285 = vrot.lane.b32.xlu0 %v2273, 64
        %v2286 = vpop.permute.xlu0 %2285
        %2287 = vrot.lane.b32.xlu0 %v2274, 64
        %v2288 = vpop.permute.xlu0 %2287
        %2289 = vrot.lane.b32.xlu0 %v2275, 64
        %v2290 = vpop.permute.xlu0 %2289
        %2291 = vrot.lane.b32.xlu0 %v2276, 64
        %v2292 = vpop.permute.xlu0 %2291
        %v2294 = vsel %vm1306, %v2230, 0
        %v2297 = vsel %vm1306, %v2232, 0
        %v2300 = vsel %vm1306, %v2234, 0
        %v2303 = vsel %vm1306, %v2236, 0
        %v2306 = vsel %vm1306, %v2278, 0
        %v2309 = vsel %vm1306, %v2280, 0
        %v2312 = vsel %vm1306, %v2282, 0
        %v2315 = vsel %vm1306, %v2284, 0
        %v2318 = vsel %vm1306, %v2286, 0
        %v2321 = vsel %vm1306, %v2288, 0
        %v2324 = vsel %vm1306, %v2290, 0
        %v2327 = vsel %vm1306, %v2292, 0
        %2329 = vmatprep.subr.bf16.mxu0 0
        %2330 = vmatpush1.bf16.xpose.msra.mxu0 %v2327
        %2331 = vmatprep.subr.bf16.mxu0 0
        %2332 = vmatpush1.bf16.xpose.msra.mxu0 %v2324
        %2333 = vmatprep.subr.bf16.mxu0 0
        %2334 = vmatpush1.bf16.xpose.msra.mxu0 %v2321
        %2335 = vmatprep.subr.bf16.mxu0 0
        %2336 = vmatpush1.bf16.xpose.msra.mxu0 %v2318
        %2337 = vmatprep.subr.bf16.mxu0 0
        %2338 = vmatpush1.bf16.xpose.msra.mxu0 %v2315
        %2339 = vmatprep.subr.bf16.mxu0 0
        %2340 = vmatpush1.bf16.xpose.msra.mxu0 %v2312
        %2341 = vmatprep.subr.bf16.mxu0 0
        %2342 = vmatpush1.bf16.xpose.msra.mxu0 %v2309
        %2343 = vmatprep.subr.bf16.mxu0 0
        %2344 = vmatpush1.bf16.xpose.msra.mxu0 %v2306
        %2345 = vmatprep.subr.bf16.mxu0 0
        %2346 = vmatpush2.bf16.xpose.msra.mxu0 0
        %2347 = vmatprep.subr.bf16.mxu0 0
        %2348 = vmatpush2.bf16.xpose.msra.mxu0 0
        %2349 = vmatprep.subr.bf16.mxu0 0
        %2350 = vmatpush2.bf16.xpose.msra.mxu0 0
        %2351 = vmatprep.subr.bf16.mxu0 0
        %2352 = vmatpush2.bf16.xpose.msra.mxu0 0
        %2353 = vmatprep.subr.bf16.mxu0 0
        %2354 = vmatpush2.bf16.xpose.msra.mxu0 0
        %2355 = vmatprep.subr.bf16.mxu0 0
        %2356 = vmatpush2.bf16.xpose.msra.mxu0 0
        %2357 = vmatprep.subr.bf16.mxu0 0
        %2358 = vmatpush2.bf16.xpose.msra.mxu0 0
        %2359 = vmatprep.subr.bf16.mxu0 0
        %2360 = vmatpush2.bf16.xpose.msra.mxu0 0
        %2361 = vmatprep.mubr.bf16.mxu0 0
        %2362 = vmatmul.mubr.bf16.gmra.mxu0 %v2294
        %v2363 = vpop.f32.mrf.mxu0
        %v2364 = vadd.f32 0.0, %v2363
        %v2365 = vpop.f32.mrf.mxu0
        %v2366 = vpop.f32.mrf.mxu0
        %v2367 = vadd.f32 0.0, %v2366
        %v2368 = vpop.f32.mrf.mxu0
        %2369 = vmatprep.mubr.bf16.mxu0 0
        %2370 = vmatmul.mubr.bf16.gmra.mxu0 %v2297
        %v2371 = vpop.f32.mrf.mxu0
        %v2372 = vadd.f32 0.0, %v2371
        %v2373 = vpop.f32.mrf.mxu0
        %v2374 = vpop.f32.mrf.mxu0
        %v2375 = vadd.f32 0.0, %v2374
        %v2376 = vpop.f32.mrf.mxu0
        %2377 = vmatprep.mubr.bf16.mxu0 0
        %2378 = vmatmul.mubr.bf16.gmra.mxu0 %v2300
        %v2379 = vpop.f32.mrf.mxu0
        %v2380 = vadd.f32 0.0, %v2379
        %v2381 = vpop.f32.mrf.mxu0
        %v2382 = vpop.f32.mrf.mxu0
        %v2383 = vadd.f32 0.0, %v2382
        %v2384 = vpop.f32.mrf.mxu0
        %2385 = vmatprep.mubr.bf16.mxu0 0
        %2386 = vmatmul.mubr.bf16.gmra.mxu0 %v2303
        %v2387 = vpop.f32.mrf.mxu0
        %v2388 = vadd.f32 0.0, %v2387
        %v2389 = vpop.f32.mrf.mxu0
        %v2390 = vpop.f32.mrf.mxu0
        %v2391 = vadd.f32 0.0, %v2390
        %v2392 = vpop.f32.mrf.mxu0
        %2393 = vdwg.mxu0
        %2394 = vmax.xlane.f32.xlu0 %v2364
        %v2395 = vpop.xlane.xlu0 %2394
        %2396 = vmax.xlane.f32.xlu0 %v2367
        %v2397 = vpop.xlane.xlu0 %2396
        %2398 = vmax.xlane.f32.xlu0 %v2372
        %v2399 = vpop.xlane.xlu0 %2398
        %2400 = vmax.xlane.f32.xlu0 %v2375
        %v2401 = vpop.xlane.xlu0 %2400
        %2402 = vmax.xlane.f32.xlu0 %v2380
        %v2403 = vpop.xlane.xlu0 %2402
        %2404 = vmax.xlane.f32.xlu0 %v2383
        %v2405 = vpop.xlane.xlu0 %2404
        %2406 = vmax.xlane.f32.xlu0 %v2388
        %v2407 = vpop.xlane.xlu0 %2406
        %2408 = vmax.xlane.f32.xlu0 %v2391
        %v2409 = vpop.xlane.xlu0 %2408
        %v2410 = vsub.f32 %v2364, %v2395
        %v2411 = vsub.f32 %v2367, %v2397
        %v2412 = vsub.f32 %v2372, %v2399
        %v2413 = vsub.f32 %v2375, %v2401
        %v2414 = vsub.f32 %v2380, %v2403
        %v2415 = vsub.f32 %v2383, %v2405
        %v2416 = vsub.f32 %v2388, %v2407
        %v2417 = vsub.f32 %v2391, %v2409
        %v2418 = vmul.f32 %v2410, 1.442695
        %v2419 = vpow.pop %v2418
        %v2420 = vmul.f32 %v2411, 1.442695
        %v2421 = vpow.pop %v2420
        %v2422 = vmul.f32 %v2412, 1.442695
        %v2423 = vpow.pop %v2422
        %v2424 = vmul.f32 %v2413, 1.442695
        %v2425 = vpow.pop %v2424
        %v2426 = vmul.f32 %v2414, 1.442695
        %v2427 = vpow.pop %v2426
        %v2428 = vmul.f32 %v2415, 1.442695
        %v2429 = vpow.pop %v2428
        %v2430 = vmul.f32 %v2416, 1.442695
        %v2431 = vpow.pop %v2430
        %v2432 = vmul.f32 %v2417, 1.442695
        %v2433 = vpow.pop %v2432
        %2434 = vadd.xlane.f32.xlu0 %v2419
        %v2435 = vpop.xlane.xlu0 %2434
        %2436 = vadd.xlane.f32.xlu0 %v2421
        %v2437 = vpop.xlane.xlu0 %2436
        %2438 = vadd.xlane.f32.xlu0 %v2423
        %v2439 = vpop.xlane.xlu0 %2438
        %2440 = vadd.xlane.f32.xlu0 %v2425
        %v2441 = vpop.xlane.xlu0 %2440
        %2442 = vadd.xlane.f32.xlu0 %v2427
        %v2443 = vpop.xlane.xlu0 %2442
        %2444 = vadd.xlane.f32.xlu0 %v2429
        %v2445 = vpop.xlane.xlu0 %2444
        %2446 = vadd.xlane.f32.xlu0 %v2431
        %v2447 = vpop.xlane.xlu0 %2446
        %2448 = vadd.xlane.f32.xlu0 %v2433
        %v2449 = vpop.xlane.xlu0 %2448
        %v2450 = vpack.c.bf16 %v2421, %v2419
        %v2451 = vpack.c.bf16 %v2425, %v2423
        %v2452 = vpack.c.bf16 %v2429, %v2427
        %v2453 = vpack.c.bf16 %v2433, %v2431
        %v2470 = vunpack.c.l.b16 %v2213
        %v2471 = vunpack.c.l.b16 %v2214
        %v2472 = vunpack.c.l.b16 %v2215
        %v2473 = vunpack.c.l.b16 %v2216
        %v2474 = vunpack.c.l.b16 %v2217
        %v2475 = vunpack.c.l.b16 %v2218
        %v2476 = vunpack.c.l.b16 %v2219
        %v2477 = vunpack.c.l.b16 %v2220
        %v2478 = vunpack.c.l.b16 %v2221
        %v2479 = vunpack.c.l.b16 %v2222
        %v2480 = vunpack.c.l.b16 %v2223
        %v2481 = vunpack.c.l.b16 %v2224
        %v2482 = vunpack.c.l.b16 %v2225
        %v2483 = vunpack.c.l.b16 %v2226
        %v2484 = vunpack.c.l.b16 %v2227
        %v2485 = vunpack.c.l.b16 %v2228
        %v2486 = vpack.c.b16 %v2471, %v2470
        %v2487 = vpack.c.b16 %v2473, %v2472
        %v2488 = vpack.c.b16 %v2475, %v2474
        %v2489 = vpack.c.b16 %v2477, %v2476
        %v2490 = vpack.c.b16 %v2479, %v2478
        %v2491 = vpack.c.b16 %v2481, %v2480
        %v2492 = vpack.c.b16 %v2483, %v2482
        %v2493 = vpack.c.b16 %v2485, %v2484
        %2494 = vrot.lane.b32.xlu0 %v2486, 64
        %v2495 = vpop.permute.xlu0 %2494
        %2496 = vrot.lane.b32.xlu0 %v2487, 64
        %v2497 = vpop.permute.xlu0 %2496
        %2498 = vrot.lane.b32.xlu0 %v2488, 64
        %v2499 = vpop.permute.xlu0 %2498
        %2500 = vrot.lane.b32.xlu0 %v2489, 64
        %v2501 = vpop.permute.xlu0 %2500
        %2502 = vrot.lane.b32.xlu0 %v2490, 64
        %v2503 = vpop.permute.xlu0 %2502
        %2504 = vrot.lane.b32.xlu0 %v2491, 64
        %v2505 = vpop.permute.xlu0 %2504
        %2506 = vrot.lane.b32.xlu0 %v2492, 64
        %v2507 = vpop.permute.xlu0 %2506
        %2508 = vrot.lane.b32.xlu0 %v2493, 64
        %v2509 = vpop.permute.xlu0 %2508
        %2518 = vmatprep.subr.bf16.mxu0 0
        %2519 = vmatpush1.bf16.msra.mxu0 %v2509
        %2520 = vmatprep.subr.bf16.mxu0 0
        %2521 = vmatpush1.bf16.msra.mxu0 %v2507
        %2522 = vmatprep.subr.bf16.mxu0 0
        %2523 = vmatpush1.bf16.msra.mxu0 %v2505
        %2524 = vmatprep.subr.bf16.mxu0 0
        %2525 = vmatpush1.bf16.msra.mxu0 %v2503
        %2526 = vmatprep.subr.bf16.mxu0 0
        %2527 = vmatpush1.bf16.msra.mxu0 %v2501
        %2528 = vmatprep.subr.bf16.mxu0 0
        %2529 = vmatpush1.bf16.msra.mxu0 %v2499
        %2530 = vmatprep.subr.bf16.mxu0 0
        %2531 = vmatpush1.bf16.msra.mxu0 %v2497
        %2532 = vmatprep.subr.bf16.mxu0 0
        %2533 = vmatpush1.bf16.msra.mxu0 %v2495
        %2534 = vmatprep.subr.bf16.mxu0 0
        %2535 = vmatpush2.bf16.msra.mxu0 0
        %2536 = vmatprep.subr.bf16.mxu0 0
        %2537 = vmatpush2.bf16.msra.mxu0 0
        %2538 = vmatprep.subr.bf16.mxu0 0
        %2539 = vmatpush2.bf16.msra.mxu0 0
        %2540 = vmatprep.subr.bf16.mxu0 0
        %2541 = vmatpush2.bf16.msra.mxu0 0
        %2542 = vmatprep.subr.bf16.mxu0 0
        %2543 = vmatpush2.bf16.msra.mxu0 0
        %2544 = vmatprep.subr.bf16.mxu0 0
        %2545 = vmatpush2.bf16.msra.mxu0 0
        %2546 = vmatprep.subr.bf16.mxu0 0
        %2547 = vmatpush2.bf16.msra.mxu0 0
        %2548 = vmatprep.subr.bf16.mxu0 0
        %2549 = vmatpush2.bf16.msra.mxu0 0
        %2550 = vmatprep.mubr.bf16.mxu0 0
        %2551 = vmatmul.mubr.bf16.gmra.mxu0 %v2450
        %v2552 = vpop.f32.mrf.mxu0
        %v2553 = vadd.f32 0.0, %v2552
        %v2554 = vpop.f32.mrf.mxu0
        %v2555 = vpop.f32.mrf.mxu0
        %v2556 = vadd.f32 0.0, %v2555
        %v2557 = vpop.f32.mrf.mxu0
        %2558 = vmatprep.mubr.bf16.mxu0 0
        %2559 = vmatmul.mubr.bf16.gmra.mxu0 %v2451
        %v2560 = vpop.f32.mrf.mxu0
        %v2561 = vadd.f32 0.0, %v2560
        %v2562 = vpop.f32.mrf.mxu0
        %v2563 = vpop.f32.mrf.mxu0
        %v2564 = vadd.f32 0.0, %v2563
        %v2565 = vpop.f32.mrf.mxu0
        %2566 = vmatprep.mubr.bf16.mxu0 0
        %2567 = vmatmul.mubr.bf16.gmra.mxu0 %v2452
        %v2568 = vpop.f32.mrf.mxu0
        %v2569 = vadd.f32 0.0, %v2568
        %v2570 = vpop.f32.mrf.mxu0
        %v2571 = vpop.f32.mrf.mxu0
        %v2572 = vadd.f32 0.0, %v2571
        %v2573 = vpop.f32.mrf.mxu0
        %2574 = vmatprep.mubr.bf16.mxu0 0
        %2575 = vmatmul.mubr.bf16.gmra.mxu0 %v2453
        %v2576 = vpop.f32.mrf.mxu0
        %v2577 = vadd.f32 0.0, %v2576
        %v2578 = vpop.f32.mrf.mxu0
        %v2579 = vpop.f32.mrf.mxu0
        %v2580 = vadd.f32 0.0, %v2579
        %v2581 = vpop.f32.mrf.mxu0
        %2582 = vdwg.mxu0
        %v2583 = vrcp.pop %v2435
        %v2584 = vrcp.pop %v2437
        %v2585 = vrcp.pop %v2439
        %v2586 = vrcp.pop %v2441
        %v2587 = vrcp.pop %v2443
        %v2588 = vrcp.pop %v2445
        %v2589 = vrcp.pop %v2447
        %v2590 = vrcp.pop %v2449
        %v2591 = vmul.f32 %v2553, %v2583
        %v2592 = vmul.f32 %v2556, %v2584
        %v2593 = vmul.f32 %v2561, %v2585
        %v2594 = vmul.f32 %v2564, %v2586
        %v2595 = vmul.f32 %v2569, %v2587
        %v2596 = vmul.f32 %v2572, %v2588
        %v2597 = vmul.f32 %v2577, %v2589
        %v2598 = vmul.f32 %v2580, %v2590
        %v2599 = vpack.c.bf16 %v2592, %v2591
        %v2600 = vpack.c.bf16 %v2594, %v2593
        %v2601 = vpack.c.bf16 %v2596, %v2595
        %v2602 = vpack.c.bf16 %v2598, %v2597
        %v2603 = vld [vmem:[#allocation11 + $0x20] sm:$0xf]
        %v2604 = vld [vmem:[#allocation11 + $0x24] sm:$0xf]
        %v2605 = vld [vmem:[#allocation11 + $0x28] sm:$0xf]
        %v2606 = vld [vmem:[#allocation11 + $0x2c] sm:$0xf]
        %v2611 = vunpack.c.l.b16 %v2603
        %v2612 = vunpack.c.l.b16 %v2604
        %v2613 = vunpack.c.l.b16 %v2605
        %v2614 = vunpack.c.l.b16 %v2606
        %v2615 = vpack.c.b16 %v2612, %v2611
        %v2616 = vpack.c.b16 %v2614, %v2613
        %v2620 = vsel %vm1306, %v2599, 0
        %v2623 = vsel %vm1306, %v2600, 0
        %v2626 = vsel %vm1306, %v2601, 0
        %v2629 = vsel %vm1306, %v2602, 0
        %2631 = vmatprep.subr.bf16.mxu0 0
        %2632 = vmatpush1.bf16.msra.mxu0 0
        %2633 = vmatprep.subr.bf16.mxu0 0
        %2634 = vmatpush1.bf16.msra.mxu0 0
        %2635 = vmatprep.subr.bf16.mxu0 0
        %2636 = vmatpush1.bf16.msra.mxu0 0
        %2637 = vmatprep.subr.bf16.mxu0 0
        %2638 = vmatpush1.bf16.msra.mxu0 0
        %2639 = vmatprep.subr.bf16.mxu0 0
        %2640 = vmatpush1.bf16.msra.mxu0 0
        %2641 = vmatprep.subr.bf16.mxu0 0
        %2642 = vmatpush1.bf16.msra.mxu0 0
        %2643 = vmatprep.subr.bf16.mxu0 0
        %2644 = vmatpush1.bf16.msra.mxu0 %v2616
        %2645 = vmatprep.subr.bf16.mxu0 0
        %2646 = vmatpush1.bf16.msra.mxu0 %v2615
        %2647 = vmatprep.subr.bf16.mxu0 0
        %2648 = vmatpush2.bf16.msra.mxu0 0
        %2649 = vmatprep.subr.bf16.mxu0 0
        %2650 = vmatpush2.bf16.msra.mxu0 0
        %2651 = vmatprep.subr.bf16.mxu0 0
        %2652 = vmatpush2.bf16.msra.mxu0 0
        %2653 = vmatprep.subr.bf16.mxu0 0
        %2654 = vmatpush2.bf16.msra.mxu0 0
        %2655 = vmatprep.subr.bf16.mxu0 0
        %2656 = vmatpush2.bf16.msra.mxu0 0
        %2657 = vmatprep.subr.bf16.mxu0 0
        %2658 = vmatpush2.bf16.msra.mxu0 0
        %2659 = vmatprep.subr.bf16.mxu0 0
        %2660 = vmatpush2.bf16.msra.mxu0 0
        %2661 = vmatprep.subr.bf16.mxu0 0
        %2662 = vmatpush2.bf16.msra.mxu0 0
        %2663 = vmatprep.mubr.bf16.mxu0 0
        %2664 = vmatmul.mubr.bf16.gmra.mxu0 %v2620
        %v2665 = vpop.f32.mrf.mxu0
        %v2666 = vadd.f32 0.0, %v2665
        %v2667 = vpop.f32.mrf.mxu0
        %v2668 = vpop.f32.mrf.mxu0
        %v2669 = vadd.f32 0.0, %v2668
        %v2670 = vpop.f32.mrf.mxu0
        %2671 = vmatprep.mubr.bf16.mxu0 0
        %2672 = vmatmul.mubr.bf16.gmra.mxu0 %v2623
        %v2673 = vpop.f32.mrf.mxu0
        %v2674 = vadd.f32 0.0, %v2673
        %v2675 = vpop.f32.mrf.mxu0
        %v2676 = vpop.f32.mrf.mxu0
        %v2677 = vadd.f32 0.0, %v2676
        %v2678 = vpop.f32.mrf.mxu0
        %2679 = vmatprep.mubr.bf16.mxu0 0
        %2680 = vmatmul.mubr.bf16.gmra.mxu0 %v2626
        %v2681 = vpop.f32.mrf.mxu0
        %v2682 = vadd.f32 0.0, %v2681
        %v2683 = vpop.f32.mrf.mxu0
        %v2684 = vpop.f32.mrf.mxu0
        %v2685 = vadd.f32 0.0, %v2684
        %v2686 = vpop.f32.mrf.mxu0
        %2687 = vmatprep.mubr.bf16.mxu0 0
        %2688 = vmatmul.mubr.bf16.gmra.mxu0 %v2629
        %v2689 = vpop.f32.mrf.mxu0
        %v2690 = vadd.f32 0.0, %v2689
        %v2691 = vpop.f32.mrf.mxu0
        %v2692 = vpop.f32.mrf.mxu0
        %v2693 = vadd.f32 0.0, %v2692
        %v2694 = vpop.f32.mrf.mxu0
        %2695 = vdwg.mxu0
        %v2696 = vadd.f32 %v2167, %v2666
        %v2697 = vadd.f32 %v2170, %v2669
        %v2698 = vadd.f32 %v2175, %v2674
        %v2699 = vadd.f32 %v2178, %v2677
        %v2700 = vadd.f32 %v2183, %v2682
        %v2701 = vadd.f32 %v2186, %v2685
        %v2702 = vadd.f32 %v2191, %v2690
        %v2703 = vadd.f32 %v2194, %v2693
        %v2704 = vld [vmem:[#allocation2] sm:$0xf]
        %v2705 = vld [vmem:[#allocation2 + $0x8] sm:$0xf]
        %v2706 = vld [vmem:[#allocation2 + $0x10] sm:$0xf]
        %v2707 = vld [vmem:[#allocation2 + $0x18] sm:$0xf]
        %v2708 = vld [vmem:[#allocation2 + $0x20] sm:$0xf]
        %v2709 = vld [vmem:[#allocation2 + $0x28] sm:$0xf]
        %v2710 = vld [vmem:[#allocation2 + $0x30] sm:$0xf]
        %v2711 = vld [vmem:[#allocation2 + $0x38] sm:$0xf]
        %v2712 = vld [vmem:[#allocation2 + $0x40] sm:$0xf]
        %v2713 = vld [vmem:[#allocation2 + $0x48] sm:$0xf]
        %v2714 = vld [vmem:[#allocation2 + $0x50] sm:$0xf]
        %v2715 = vld [vmem:[#allocation2 + $0x58] sm:$0xf]
        %v2716 = vld [vmem:[#allocation2 + $0x60] sm:$0xf]
        %v2717 = vld [vmem:[#allocation2 + $0x68] sm:$0xf]
        %v2718 = vld [vmem:[#allocation2 + $0x70] sm:$0xf]
        %v2719 = vld [vmem:[#allocation2 + $0x78] sm:$0xf]
        %v2720 = vld [vmem:[#allocation2 + $0x4] sm:$0xf]
        %v2721 = vld [vmem:[#allocation2 + $0xc] sm:$0xf]
        %v2722 = vld [vmem:[#allocation2 + $0x14] sm:$0xf]
        %v2723 = vld [vmem:[#allocation2 + $0x1c] sm:$0xf]
        %v2724 = vld [vmem:[#allocation2 + $0x24] sm:$0xf]
        %v2725 = vld [vmem:[#allocation2 + $0x2c] sm:$0xf]
        %v2726 = vld [vmem:[#allocation2 + $0x34] sm:$0xf]
        %v2727 = vld [vmem:[#allocation2 + $0x3c] sm:$0xf]
        %v2728 = vld [vmem:[#allocation2 + $0x44] sm:$0xf]
        %v2729 = vld [vmem:[#allocation2 + $0x4c] sm:$0xf]
        %v2730 = vld [vmem:[#allocation2 + $0x54] sm:$0xf]
        %v2731 = vld [vmem:[#allocation2 + $0x5c] sm:$0xf]
        %v2732 = vld [vmem:[#allocation2 + $0x64] sm:$0xf]
        %v2733 = vld [vmem:[#allocation2 + $0x6c] sm:$0xf]
        %v2734 = vld [vmem:[#allocation2 + $0x74] sm:$0xf]
        %v2735 = vld [vmem:[#allocation2 + $0x7c] sm:$0xf]
        %2736 = vrot.lane.b32.xlu0 %v1230, 32
        %v2737 = vpop.permute.xlu0 %2736
        %2738 = vrot.lane.b32.xlu0 %v1231, 32
        %v2739 = vpop.permute.xlu0 %2738
        %2740 = vrot.lane.b32.xlu0 %v1232, 32
        %v2741 = vpop.permute.xlu0 %2740
        %2742 = vrot.lane.b32.xlu0 %v1233, 32
        %v2743 = vpop.permute.xlu0 %2742
        %v2760 = vunpack.c.l.b16 %v2704
        %v2761 = vunpack.c.l.b16 %v2705
        %v2762 = vunpack.c.l.b16 %v2706
        %v2763 = vunpack.c.l.b16 %v2707
        %v2764 = vunpack.c.l.b16 %v2708
        %v2765 = vunpack.c.l.b16 %v2709
        %v2766 = vunpack.c.l.b16 %v2710
        %v2767 = vunpack.c.l.b16 %v2711
        %v2768 = vunpack.c.l.b16 %v2712
        %v2769 = vunpack.c.l.b16 %v2713
        %v2770 = vunpack.c.l.b16 %v2714
        %v2771 = vunpack.c.l.b16 %v2715
        %v2772 = vunpack.c.l.b16 %v2716
        %v2773 = vunpack.c.l.b16 %v2717
        %v2774 = vunpack.c.l.b16 %v2718
        %v2775 = vunpack.c.l.b16 %v2719
        %v2776 = vpack.c.b16 %v2761, %v2760
        %v2777 = vpack.c.b16 %v2763, %v2762
        %v2778 = vpack.c.b16 %v2765, %v2764
        %v2779 = vpack.c.b16 %v2767, %v2766
        %v2780 = vpack.c.b16 %v2769, %v2768
        %v2781 = vpack.c.b16 %v2771, %v2770
        %v2782 = vpack.c.b16 %v2773, %v2772
        %v2783 = vpack.c.b16 %v2775, %v2774
        %2784 = vrot.lane.b32.xlu0 %v2776, 32
        %v2785 = vpop.permute.xlu0 %2784
        %2786 = vrot.lane.b32.xlu0 %v2777, 32
        %v2787 = vpop.permute.xlu0 %2786
        %2788 = vrot.lane.b32.xlu0 %v2778, 32
        %v2789 = vpop.permute.xlu0 %2788
        %2790 = vrot.lane.b32.xlu0 %v2779, 32
        %v2791 = vpop.permute.xlu0 %2790
        %2792 = vrot.lane.b32.xlu0 %v2780, 32
        %v2793 = vpop.permute.xlu0 %2792
        %2794 = vrot.lane.b32.xlu0 %v2781, 32
        %v2795 = vpop.permute.xlu0 %2794
        %2796 = vrot.lane.b32.xlu0 %v2782, 32
        %v2797 = vpop.permute.xlu0 %2796
        %2798 = vrot.lane.b32.xlu0 %v2783, 32
        %v2799 = vpop.permute.xlu0 %2798
        %v2801 = vsel %vm1306, %v2737, 0
        %v2804 = vsel %vm1306, %v2739, 0
        %v2807 = vsel %vm1306, %v2741, 0
        %v2810 = vsel %vm1306, %v2743, 0
        %v2813 = vsel %vm1306, %v2785, 0
        %v2816 = vsel %vm1306, %v2787, 0
        %v2819 = vsel %vm1306, %v2789, 0
        %v2822 = vsel %vm1306, %v2791, 0
        %v2825 = vsel %vm1306, %v2793, 0
        %v2828 = vsel %vm1306, %v2795, 0
        %v2831 = vsel %vm1306, %v2797, 0
        %v2834 = vsel %vm1306, %v2799, 0
        %2836 = vmatprep.subr.bf16.mxu0 0
        %2837 = vmatpush1.bf16.xpose.msra.mxu0 %v2834
        %2838 = vmatprep.subr.bf16.mxu0 0
        %2839 = vmatpush1.bf16.xpose.msra.mxu0 %v2831
        %2840 = vmatprep.subr.bf16.mxu0 0
        %2841 = vmatpush1.bf16.xpose.msra.mxu0 %v2828
        %2842 = vmatprep.subr.bf16.mxu0 0
        %2843 = vmatpush1.bf16.xpose.msra.mxu0 %v2825
        %2844 = vmatprep.subr.bf16.mxu0 0
        %2845 = vmatpush1.bf16.xpose.msra.mxu0 %v2822
        %2846 = vmatprep.subr.bf16.mxu0 0
        %2847 = vmatpush1.bf16.xpose.msra.mxu0 %v2819
        %2848 = vmatprep.subr.bf16.mxu0 0
        %2849 = vmatpush1.bf16.xpose.msra.mxu0 %v2816
        %2850 = vmatprep.subr.bf16.mxu0 0
        %2851 = vmatpush1.bf16.xpose.msra.mxu0 %v2813
        %2852 = vmatprep.subr.bf16.mxu0 0
        %2853 = vmatpush2.bf16.xpose.msra.mxu0 0
        %2854 = vmatprep.subr.bf16.mxu0 0
        %2855 = vmatpush2.bf16.xpose.msra.mxu0 0
        %2856 = vmatprep.subr.bf16.mxu0 0
        %2857 = vmatpush2.bf16.xpose.msra.mxu0 0
        %2858 = vmatprep.subr.bf16.mxu0 0
        %2859 = vmatpush2.bf16.xpose.msra.mxu0 0
        %2860 = vmatprep.subr.bf16.mxu0 0
        %2861 = vmatpush2.bf16.xpose.msra.mxu0 0
        %2862 = vmatprep.subr.bf16.mxu0 0
        %2863 = vmatpush2.bf16.xpose.msra.mxu0 0
        %2864 = vmatprep.subr.bf16.mxu0 0
        %2865 = vmatpush2.bf16.xpose.msra.mxu0 0
        %2866 = vmatprep.subr.bf16.mxu0 0
        %2867 = vmatpush2.bf16.xpose.msra.mxu0 0
        %2868 = vmatprep.mubr.bf16.mxu0 0
        %2869 = vmatmul.mubr.bf16.gmra.mxu0 %v2801
        %v2870 = vpop.f32.mrf.mxu0
        %v2871 = vadd.f32 0.0, %v2870
        %v2872 = vpop.f32.mrf.mxu0
        %v2873 = vpop.f32.mrf.mxu0
        %v2874 = vadd.f32 0.0, %v2873
        %v2875 = vpop.f32.mrf.mxu0
        %2876 = vmatprep.mubr.bf16.mxu0 0
        %2877 = vmatmul.mubr.bf16.gmra.mxu0 %v2804
        %v2878 = vpop.f32.mrf.mxu0
        %v2879 = vadd.f32 0.0, %v2878
        %v2880 = vpop.f32.mrf.mxu0
        %v2881 = vpop.f32.mrf.mxu0
        %v2882 = vadd.f32 0.0, %v2881
        %v2883 = vpop.f32.mrf.mxu0
        %2884 = vmatprep.mubr.bf16.mxu0 0
        %2885 = vmatmul.mubr.bf16.gmra.mxu0 %v2807
        %v2886 = vpop.f32.mrf.mxu0
        %v2887 = vadd.f32 0.0, %v2886
        %v2888 = vpop.f32.mrf.mxu0
        %v2889 = vpop.f32.mrf.mxu0
        %v2890 = vadd.f32 0.0, %v2889
        %v2891 = vpop.f32.mrf.mxu0
        %2892 = vmatprep.mubr.bf16.mxu0 0
        %2893 = vmatmul.mubr.bf16.gmra.mxu0 %v2810
        %v2894 = vpop.f32.mrf.mxu0
        %v2895 = vadd.f32 0.0, %v2894
        %v2896 = vpop.f32.mrf.mxu0
        %v2897 = vpop.f32.mrf.mxu0
        %v2898 = vadd.f32 0.0, %v2897
        %v2899 = vpop.f32.mrf.mxu0
        %2900 = vdwg.mxu0
        %2901 = vmax.xlane.f32.xlu0 %v2871
        %v2902 = vpop.xlane.xlu0 %2901
        %2903 = vmax.xlane.f32.xlu0 %v2874
        %v2904 = vpop.xlane.xlu0 %2903
        %2905 = vmax.xlane.f32.xlu0 %v2879
        %v2906 = vpop.xlane.xlu0 %2905
        %2907 = vmax.xlane.f32.xlu0 %v2882
        %v2908 = vpop.xlane.xlu0 %2907
        %2909 = vmax.xlane.f32.xlu0 %v2887
        %v2910 = vpop.xlane.xlu0 %2909
        %2911 = vmax.xlane.f32.xlu0 %v2890
        %v2912 = vpop.xlane.xlu0 %2911
        %2913 = vmax.xlane.f32.xlu0 %v2895
        %v2914 = vpop.xlane.xlu0 %2913
        %2915 = vmax.xlane.f32.xlu0 %v2898
        %v2916 = vpop.xlane.xlu0 %2915
        %v2917 = vsub.f32 %v2871, %v2902
        %v2918 = vsub.f32 %v2874, %v2904
        %v2919 = vsub.f32 %v2879, %v2906
        %v2920 = vsub.f32 %v2882, %v2908
        %v2921 = vsub.f32 %v2887, %v2910
        %v2922 = vsub.f32 %v2890, %v2912
        %v2923 = vsub.f32 %v2895, %v2914
        %v2924 = vsub.f32 %v2898, %v2916
        %v2925 = vmul.f32 %v2917, 1.442695
        %v2926 = vpow.pop %v2925
        %v2927 = vmul.f32 %v2918, 1.442695
        %v2928 = vpow.pop %v2927
        %v2929 = vmul.f32 %v2919, 1.442695
        %v2930 = vpow.pop %v2929
        %v2931 = vmul.f32 %v2920, 1.442695
        %v2932 = vpow.pop %v2931
        %v2933 = vmul.f32 %v2921, 1.442695
        %v2934 = vpow.pop %v2933
        %v2935 = vmul.f32 %v2922, 1.442695
        %v2936 = vpow.pop %v2935
        %v2937 = vmul.f32 %v2923, 1.442695
        %v2938 = vpow.pop %v2937
        %v2939 = vmul.f32 %v2924, 1.442695
        %v2940 = vpow.pop %v2939
        %2941 = vadd.xlane.f32.xlu0 %v2926
        %v2942 = vpop.xlane.xlu0 %2941
        %2943 = vadd.xlane.f32.xlu0 %v2928
        %v2944 = vpop.xlane.xlu0 %2943
        %2945 = vadd.xlane.f32.xlu0 %v2930
        %v2946 = vpop.xlane.xlu0 %2945
        %2947 = vadd.xlane.f32.xlu0 %v2932
        %v2948 = vpop.xlane.xlu0 %2947
        %2949 = vadd.xlane.f32.xlu0 %v2934
        %v2950 = vpop.xlane.xlu0 %2949
        %2951 = vadd.xlane.f32.xlu0 %v2936
        %v2952 = vpop.xlane.xlu0 %2951
        %2953 = vadd.xlane.f32.xlu0 %v2938
        %v2954 = vpop.xlane.xlu0 %2953
        %2955 = vadd.xlane.f32.xlu0 %v2940
        %v2956 = vpop.xlane.xlu0 %2955
        %v2957 = vpack.c.bf16 %v2928, %v2926
        %v2958 = vpack.c.bf16 %v2932, %v2930
        %v2959 = vpack.c.bf16 %v2936, %v2934
        %v2960 = vpack.c.bf16 %v2940, %v2938
        %v2977 = vunpack.c.l.b16 %v2720
        %v2978 = vunpack.c.l.b16 %v2721
        %v2979 = vunpack.c.l.b16 %v2722
        %v2980 = vunpack.c.l.b16 %v2723
        %v2981 = vunpack.c.l.b16 %v2724
        %v2982 = vunpack.c.l.b16 %v2725
        %v2983 = vunpack.c.l.b16 %v2726
        %v2984 = vunpack.c.l.b16 %v2727
        %v2985 = vunpack.c.l.b16 %v2728
        %v2986 = vunpack.c.l.b16 %v2729
        %v2987 = vunpack.c.l.b16 %v2730
        %v2988 = vunpack.c.l.b16 %v2731
        %v2989 = vunpack.c.l.b16 %v2732
        %v2990 = vunpack.c.l.b16 %v2733
        %v2991 = vunpack.c.l.b16 %v2734
        %v2992 = vunpack.c.l.b16 %v2735
        %v2993 = vpack.c.b16 %v2978, %v2977
        %v2994 = vpack.c.b16 %v2980, %v2979
        %v2995 = vpack.c.b16 %v2982, %v2981
        %v2996 = vpack.c.b16 %v2984, %v2983
        %v2997 = vpack.c.b16 %v2986, %v2985
        %v2998 = vpack.c.b16 %v2988, %v2987
        %v2999 = vpack.c.b16 %v2990, %v2989
        %v3000 = vpack.c.b16 %v2992, %v2991
        %3001 = vrot.lane.b32.xlu0 %v2993, 32
        %v3002 = vpop.permute.xlu0 %3001
        %3003 = vrot.lane.b32.xlu0 %v2994, 32
        %v3004 = vpop.permute.xlu0 %3003
        %3005 = vrot.lane.b32.xlu0 %v2995, 32
        %v3006 = vpop.permute.xlu0 %3005
        %3007 = vrot.lane.b32.xlu0 %v2996, 32
        %v3008 = vpop.permute.xlu0 %3007
        %3009 = vrot.lane.b32.xlu0 %v2997, 32
        %v3010 = vpop.permute.xlu0 %3009
        %3011 = vrot.lane.b32.xlu0 %v2998, 32
        %v3012 = vpop.permute.xlu0 %3011
        %3013 = vrot.lane.b32.xlu0 %v2999, 32
        %v3014 = vpop.permute.xlu0 %3013
        %3015 = vrot.lane.b32.xlu0 %v3000, 32
        %v3016 = vpop.permute.xlu0 %3015
        %3025 = vmatprep.subr.bf16.mxu0 0
        %3026 = vmatpush1.bf16.msra.mxu0 %v3016
        %3027 = vmatprep.subr.bf16.mxu0 0
        %3028 = vmatpush1.bf16.msra.mxu0 %v3014
        %3029 = vmatprep.subr.bf16.mxu0 0
        %3030 = vmatpush1.bf16.msra.mxu0 %v3012
        %3031 = vmatprep.subr.bf16.mxu0 0
        %3032 = vmatpush1.bf16.msra.mxu0 %v3010
        %3033 = vmatprep.subr.bf16.mxu0 0
        %3034 = vmatpush1.bf16.msra.mxu0 %v3008
        %3035 = vmatprep.subr.bf16.mxu0 0
        %3036 = vmatpush1.bf16.msra.mxu0 %v3006
        %3037 = vmatprep.subr.bf16.mxu0 0
        %3038 = vmatpush1.bf16.msra.mxu0 %v3004
        %3039 = vmatprep.subr.bf16.mxu0 0
        %3040 = vmatpush1.bf16.msra.mxu0 %v3002
        %3041 = vmatprep.subr.bf16.mxu0 0
        %3042 = vmatpush2.bf16.msra.mxu0 0
        %3043 = vmatprep.subr.bf16.mxu0 0
        %3044 = vmatpush2.bf16.msra.mxu0 0
        %3045 = vmatprep.subr.bf16.mxu0 0
        %3046 = vmatpush2.bf16.msra.mxu0 0
        %3047 = vmatprep.subr.bf16.mxu0 0
        %3048 = vmatpush2.bf16.msra.mxu0 0
        %3049 = vmatprep.subr.bf16.mxu0 0
        %3050 = vmatpush2.bf16.msra.mxu0 0
        %3051 = vmatprep.subr.bf16.mxu0 0
        %3052 = vmatpush2.bf16.msra.mxu0 0
        %3053 = vmatprep.subr.bf16.mxu0 0
        %3054 = vmatpush2.bf16.msra.mxu0 0
        %3055 = vmatprep.subr.bf16.mxu0 0
        %3056 = vmatpush2.bf16.msra.mxu0 0
        %3057 = vmatprep.mubr.bf16.mxu0 0
        %3058 = vmatmul.mubr.bf16.gmra.mxu0 %v2957
        %v3059 = vpop.f32.mrf.mxu0
        %v3060 = vadd.f32 0.0, %v3059
        %v3061 = vpop.f32.mrf.mxu0
        %v3062 = vpop.f32.mrf.mxu0
        %v3063 = vadd.f32 0.0, %v3062
        %v3064 = vpop.f32.mrf.mxu0
        %3065 = vmatprep.mubr.bf16.mxu0 0
        %3066 = vmatmul.mubr.bf16.gmra.mxu0 %v2958
        %v3067 = vpop.f32.mrf.mxu0
        %v3068 = vadd.f32 0.0, %v3067
        %v3069 = vpop.f32.mrf.mxu0
        %v3070 = vpop.f32.mrf.mxu0
        %v3071 = vadd.f32 0.0, %v3070
        %v3072 = vpop.f32.mrf.mxu0
        %3073 = vmatprep.mubr.bf16.mxu0 0
        %3074 = vmatmul.mubr.bf16.gmra.mxu0 %v2959
        %v3075 = vpop.f32.mrf.mxu0
        %v3076 = vadd.f32 0.0, %v3075
        %v3077 = vpop.f32.mrf.mxu0
        %v3078 = vpop.f32.mrf.mxu0
        %v3079 = vadd.f32 0.0, %v3078
        %v3080 = vpop.f32.mrf.mxu0
        %3081 = vmatprep.mubr.bf16.mxu0 0
        %3082 = vmatmul.mubr.bf16.gmra.mxu0 %v2960
        %v3083 = vpop.f32.mrf.mxu0
        %v3084 = vadd.f32 0.0, %v3083
        %v3085 = vpop.f32.mrf.mxu0
        %v3086 = vpop.f32.mrf.mxu0
        %v3087 = vadd.f32 0.0, %v3086
        %v3088 = vpop.f32.mrf.mxu0
        %3089 = vdwg.mxu0
        %v3090 = vrcp.pop %v2942
        %v3091 = vrcp.pop %v2944
        %v3092 = vrcp.pop %v2946
        %v3093 = vrcp.pop %v2948
        %v3094 = vrcp.pop %v2950
        %v3095 = vrcp.pop %v2952
        %v3096 = vrcp.pop %v2954
        %v3097 = vrcp.pop %v2956
        %v3098 = vmul.f32 %v3060, %v3090
        %v3099 = vmul.f32 %v3063, %v3091
        %v3100 = vmul.f32 %v3068, %v3092
        %v3101 = vmul.f32 %v3071, %v3093
        %v3102 = vmul.f32 %v3076, %v3094
        %v3103 = vmul.f32 %v3079, %v3095
        %v3104 = vmul.f32 %v3084, %v3096
        %v3105 = vmul.f32 %v3087, %v3097
        %v3106 = vpack.c.bf16 %v3099, %v3098
        %v3107 = vpack.c.bf16 %v3101, %v3100
        %v3108 = vpack.c.bf16 %v3103, %v3102
        %v3109 = vpack.c.bf16 %v3105, %v3104
        %v3110 = vld [vmem:[#allocation11 + $0x30] sm:$0xf]
        %v3111 = vld [vmem:[#allocation11 + $0x34] sm:$0xf]
        %v3112 = vld [vmem:[#allocation11 + $0x38] sm:$0xf]
        %v3113 = vld [vmem:[#allocation11 + $0x3c] sm:$0xf]
        %v3118 = vunpack.c.l.b16 %v3110
        %v3119 = vunpack.c.l.b16 %v3111
        %v3120 = vunpack.c.l.b16 %v3112
        %v3121 = vunpack.c.l.b16 %v3113
        %v3122 = vpack.c.b16 %v3119, %v3118
        %v3123 = vpack.c.b16 %v3121, %v3120
        %v3127 = vsel %vm1306, %v3106, 0
        %v3130 = vsel %vm1306, %v3107, 0
        %v3133 = vsel %vm1306, %v3108, 0
        %v3136 = vsel %vm1306, %v3109, 0
        %3138 = vmatprep.subr.bf16.mxu0 0
        %3139 = vmatpush1.bf16.msra.mxu0 0
        %3140 = vmatprep.subr.bf16.mxu0 0
        %3141 = vmatpush1.bf16.msra.mxu0 0
        %3142 = vmatprep.subr.bf16.mxu0 0
        %3143 = vmatpush1.bf16.msra.mxu0 0
        %3144 = vmatprep.subr.bf16.mxu0 0
        %3145 = vmatpush1.bf16.msra.mxu0 0
        %3146 = vmatprep.subr.bf16.mxu0 0
        %3147 = vmatpush1.bf16.msra.mxu0 0
        %3148 = vmatprep.subr.bf16.mxu0 0
        %3149 = vmatpush1.bf16.msra.mxu0 0
        %3150 = vmatprep.subr.bf16.mxu0 0
        %3151 = vmatpush1.bf16.msra.mxu0 %v3123
        %3152 = vmatprep.subr.bf16.mxu0 0
        %3153 = vmatpush1.bf16.msra.mxu0 %v3122
        %3154 = vmatprep.subr.bf16.mxu0 0
        %3155 = vmatpush2.bf16.msra.mxu0 0
        %3156 = vmatprep.subr.bf16.mxu0 0
        %3157 = vmatpush2.bf16.msra.mxu0 0
        %3158 = vmatprep.subr.bf16.mxu0 0
        %3159 = vmatpush2.bf16.msra.mxu0 0
        %3160 = vmatprep.subr.bf16.mxu0 0
        %3161 = vmatpush2.bf16.msra.mxu0 0
        %3162 = vmatprep.subr.bf16.mxu0 0
        %3163 = vmatpush2.bf16.msra.mxu0 0
        %3164 = vmatprep.subr.bf16.mxu0 0
        %3165 = vmatpush2.bf16.msra.mxu0 0
        %3166 = vmatprep.subr.bf16.mxu0 0
        %3167 = vmatpush2.bf16.msra.mxu0 0
        %3168 = vmatprep.subr.bf16.mxu0 0
        %3169 = vmatpush2.bf16.msra.mxu0 0
        %3170 = vmatprep.mubr.bf16.mxu0 0
        %3171 = vmatmul.mubr.bf16.gmra.mxu0 %v3127
        %v3172 = vpop.f32.mrf.mxu0
        %v3173 = vadd.f32 0.0, %v3172
        %v3174 = vpop.f32.mrf.mxu0
        %v3175 = vpop.f32.mrf.mxu0
        %v3176 = vadd.f32 0.0, %v3175
        %v3177 = vpop.f32.mrf.mxu0
        %3178 = vmatprep.mubr.bf16.mxu0 0
        %3179 = vmatmul.mubr.bf16.gmra.mxu0 %v3130
        %v3180 = vpop.f32.mrf.mxu0
        %v3181 = vadd.f32 0.0, %v3180
        %v3182 = vpop.f32.mrf.mxu0
        %v3183 = vpop.f32.mrf.mxu0
        %v3184 = vadd.f32 0.0, %v3183
        %v3185 = vpop.f32.mrf.mxu0
        %3186 = vmatprep.mubr.bf16.mxu0 0
        %3187 = vmatmul.mubr.bf16.gmra.mxu0 %v3133
        %v3188 = vpop.f32.mrf.mxu0
        %v3189 = vadd.f32 0.0, %v3188
        %v3190 = vpop.f32.mrf.mxu0
        %v3191 = vpop.f32.mrf.mxu0
        %v3192 = vadd.f32 0.0, %v3191
        %v3193 = vpop.f32.mrf.mxu0
        %3194 = vmatprep.mubr.bf16.mxu0 0
        %3195 = vmatmul.mubr.bf16.gmra.mxu0 %v3136
        %v3196 = vpop.f32.mrf.mxu0
        %v3197 = vadd.f32 0.0, %v3196
        %v3198 = vpop.f32.mrf.mxu0
        %v3199 = vpop.f32.mrf.mxu0
        %v3200 = vadd.f32 0.0, %v3199
        %v3201 = vpop.f32.mrf.mxu0
        %3202 = vdwg.mxu0
        %v3203 = vadd.f32 %v2696, %v3173
        %v3204 = vadd.f32 %v2697, %v3176
        %v3205 = vadd.f32 %v2698, %v3181
        %v3206 = vadd.f32 %v2699, %v3184
        %v3207 = vadd.f32 %v2700, %v3189
        %v3208 = vadd.f32 %v2701, %v3192
        %v3209 = vadd.f32 %v2702, %v3197
        %v3210 = vadd.f32 %v2703, %v3200
        %v3211 = vld [vmem:[%s7] sm:$0x1]
        %v3213 = vlaneseq
        %v3214 = vshrl.u32 %v3213, 7
        %v3215 = vsub.s32 0, %v3214
        %v3216 = vrot.slane %v3211, %v3215
        %v3218 = vadd.f32 %v3203, %v3216
        %v3219 = vadd.f32 %v3204, %v3216
        %v3220 = vadd.f32 %v3205, %v3216
        %v3221 = vadd.f32 %v3206, %v3216
        %v3222 = vadd.f32 %v3207, %v3216
        %v3223 = vadd.f32 %v3208, %v3216
        %v3224 = vadd.f32 %v3209, %v3216
        %v3225 = vadd.f32 %v3210, %v3216
        %v3226 = vadd.f32 %v1074, %v3218
        %v3227 = vadd.f32 %v1075, %v3219
        %v3228 = vadd.f32 %v1076, %v3220
        %v3229 = vadd.f32 %v1077, %v3221
        %v3230 = vadd.f32 %v1078, %v3222
        %v3231 = vadd.f32 %v1079, %v3223
        %v3232 = vadd.f32 %v1080, %v3224
        %v3233 = vadd.f32 %v1081, %v3225
        %v3234 = vld [vmem:[%s12] sm:$0x1]
        %v3235 = vld [vmem:[%s13] sm:$0x1]
        %3236 = vadd.xlane.f32.xlu0 %v3226
        %v3237 = vpop.xlane.xlu0 %3236
        %3238 = vadd.xlane.f32.xlu0 %v3227
        %v3239 = vpop.xlane.xlu0 %3238
        %3240 = vadd.xlane.f32.xlu0 %v3228
        %v3241 = vpop.xlane.xlu0 %3240
        %3242 = vadd.xlane.f32.xlu0 %v3229
        %v3243 = vpop.xlane.xlu0 %3242
        %3244 = vadd.xlane.f32.xlu0 %v3230
        %v3245 = vpop.xlane.xlu0 %3244
        %3246 = vadd.xlane.f32.xlu0 %v3231
        %v3247 = vpop.xlane.xlu0 %3246
        %3248 = vadd.xlane.f32.xlu0 %v3232
        %v3249 = vpop.xlane.xlu0 %3248
        %3250 = vadd.xlane.f32.xlu0 %v3233
        %v3251 = vpop.xlane.xlu0 %3250
        %v3252 = vrcp.pop 128.0
        %v3253 = vmul.f32 %v3237, %v3252
        %v3254 = vmul.f32 %v3239, %v3252
        %v3255 = vmul.f32 %v3241, %v3252
        %v3256 = vmul.f32 %v3243, %v3252
        %v3257 = vmul.f32 %v3245, %v3252
        %v3258 = vmul.f32 %v3247, %v3252
        %v3259 = vmul.f32 %v3249, %v3252
        %v3260 = vmul.f32 %v3251, %v3252
        %v3261 = vsub.f32 %v3226, %v3253
        %v3262 = vsub.f32 %v3227, %v3254
        %v3263 = vsub.f32 %v3228, %v3255
        %v3264 = vsub.f32 %v3229, %v3256
        %v3265 = vsub.f32 %v3230, %v3257
        %v3266 = vsub.f32 %v3231, %v3258
        %v3267 = vsub.f32 %v3232, %v3259
        %v3268 = vsub.f32 %v3233, %v3260
        %v3269 = vmul.f32 %v3261, %v3261
        %v3270 = vmul.f32 %v3262, %v3262
        %v3271 = vmul.f32 %v3263, %v3263
        %v3272 = vmul.f32 %v3264, %v3264
        %v3273 = vmul.f32 %v3265, %v3265
        %v3274 = vmul.f32 %v3266, %v3266
        %v3275 = vmul.f32 %v3267, %v3267
        %v3276 = vmul.f32 %v3268, %v3268
        %3277 = vadd.xlane.f32.xlu0 %v3269
        %v3278 = vpop.xlane.xlu0 %3277
        %3279 = vadd.xlane.f32.xlu0 %v3270
        %v3280 = vpop.xlane.xlu0 %3279
        %3281 = vadd.xlane.f32.xlu0 %v3271
        %v3282 = vpop.xlane.xlu0 %3281
        %3283 = vadd.xlane.f32.xlu0 %v3272
        %v3284 = vpop.xlane.xlu0 %3283
        %3285 = vadd.xlane.f32.xlu0 %v3273
        %v3286 = vpop.xlane.xlu0 %3285
        %3287 = vadd.xlane.f32.xlu0 %v3274
        %v3288 = vpop.xlane.xlu0 %3287
        %3289 = vadd.xlane.f32.xlu0 %v3275
        %v3290 = vpop.xlane.xlu0 %3289
        %3291 = vadd.xlane.f32.xlu0 %v3276
        %v3292 = vpop.xlane.xlu0 %3291
        %v3293 = vmul.f32 %v3278, %v3252
        %v3294 = vmul.f32 %v3280, %v3252
        %v3295 = vmul.f32 %v3282, %v3252
        %v3296 = vmul.f32 %v3284, %v3252
        %v3297 = vmul.f32 %v3286, %v3252
        %v3298 = vmul.f32 %v3288, %v3252
        %v3299 = vmul.f32 %v3290, %v3252
        %v3300 = vmul.f32 %v3292, %v3252
        %v3301 = vadd.f32 %v3293, 1e-05
        %v3302 = vadd.f32 %v3294, 1e-05
        %v3303 = vadd.f32 %v3295, 1e-05
        %v3304 = vadd.f32 %v3296, 1e-05
        %v3305 = vadd.f32 %v3297, 1e-05
        %v3306 = vadd.f32 %v3298, 1e-05
        %v3307 = vadd.f32 %v3299, 1e-05
        %v3308 = vadd.f32 %v3300, 1e-05
        %v3309 = vrsqrt.pop %v3301
        %v3310 = vrsqrt.pop %v3302
        %v3311 = vrsqrt.pop %v3303
        %v3312 = vrsqrt.pop %v3304
        %v3313 = vrsqrt.pop %v3305
        %v3314 = vrsqrt.pop %v3306
        %v3315 = vrsqrt.pop %v3307
        %v3316 = vrsqrt.pop %v3308
        %v3317 = vmul.f32 %v3261, %v3309
        %v3318 = vmul.f32 %v3262, %v3310
        %v3319 = vmul.f32 %v3263, %v3311
        %v3320 = vmul.f32 %v3264, %v3312
        %v3321 = vmul.f32 %v3265, %v3313
        %v3322 = vmul.f32 %v3266, %v3314
        %v3323 = vmul.f32 %v3267, %v3315
        %v3324 = vmul.f32 %v3268, %v3316
        %v3326 = vlaneseq
        %v3327 = vshrl.u32 %v3326, 7
        %v3328 = vsub.s32 0, %v3327
        %v3329 = vrot.slane %v3234, %v3328
        %v3331 = vmul.f32 %v3317, %v3329
        %v3332 = vmul.f32 %v3318, %v3329
        %v3333 = vmul.f32 %v3319, %v3329
        %v3334 = vmul.f32 %v3320, %v3329
        %v3335 = vmul.f32 %v3321, %v3329
        %v3336 = vmul.f32 %v3322, %v3329
        %v3337 = vmul.f32 %v3323, %v3329
        %v3338 = vmul.f32 %v3324, %v3329
        %v3340 = vlaneseq
        %v3341 = vshrl.u32 %v3340, 7
        %v3342 = vsub.s32 0, %v3341
        %v3343 = vrot.slane %v3235, %v3342
        %v3345 = vadd.f32 %v3331, %v3343
        %v3346 = vadd.f32 %v3332, %v3343
        %v3347 = vadd.f32 %v3333, %v3343
        %v3348 = vadd.f32 %v3334, %v3343
        %v3349 = vadd.f32 %v3335, %v3343
        %v3350 = vadd.f32 %v3336, %v3343
        %v3351 = vadd.f32 %v3337, %v3343
        %v3352 = vadd.f32 %v3338, %v3343
        %v3353 = vpack.c.bf16 %v3346, %v3345
        %v3354 = vpack.c.bf16 %v3348, %v3347
        %v3355 = vpack.c.bf16 %v3350, %v3349
        %v3356 = vpack.c.bf16 %v3352, %v3351
        %v3357 = vld [vmem:[#allocation12] sm:$0xff]
        %v3358 = vld [vmem:[#allocation12 + $0x8] sm:$0xff]
        %v3359 = vld [vmem:[#allocation12 + $0x10] sm:$0xff]
        %v3360 = vld [vmem:[#allocation12 + $0x18] sm:$0xff]
        %v3361 = vld [vmem:[#allocation12 + $0x20] sm:$0xff]
        %v3362 = vld [vmem:[#allocation12 + $0x28] sm:$0xff]
        %v3363 = vld [vmem:[#allocation12 + $0x30] sm:$0xff]
        %v3364 = vld [vmem:[#allocation12 + $0x38] sm:$0xff]
        %v3365 = vld [vmem:[#allocation12 + $0x40] sm:$0xff]
        %v3366 = vld [vmem:[#allocation12 + $0x48] sm:$0xff]
        %v3367 = vld [vmem:[#allocation12 + $0x50] sm:$0xff]
        %v3368 = vld [vmem:[#allocation12 + $0x58] sm:$0xff]
        %v3369 = vld [vmem:[#allocation12 + $0x60] sm:$0xff]
        %v3370 = vld [vmem:[#allocation12 + $0x68] sm:$0xff]
        %v3371 = vld [vmem:[#allocation12 + $0x70] sm:$0xff]
        %v3372 = vld [vmem:[#allocation12 + $0x78] sm:$0xff]
        %v3373 = vld [vmem:[%s9] sm:$0x3]
        %v3375 = vlaneseq
        %v3376 = vshrl.u32 %v3375, 7
        %v3377 = vsub.s32 0, %v3376
        %v3378 = vrot.slane %v3373, %v3377
        %v3379 = vlaneseq
        %v3380 = vshrl.u32 %v3379, 7
        %v3381 = vsub.s32 1, %v3380
        %v3382 = vrot.slane %v3373, %v3381
        %v3401 = vunpack.c.l.b16 %v3357
        %v3402 = vunpack.c.h.b16 %v3357
        %v3403 = vunpack.c.l.b16 %v3358
        %v3404 = vunpack.c.h.b16 %v3358
        %v3405 = vunpack.c.l.b16 %v3359
        %v3406 = vunpack.c.h.b16 %v3359
        %v3407 = vunpack.c.l.b16 %v3360
        %v3408 = vunpack.c.h.b16 %v3360
        %v3409 = vunpack.c.l.b16 %v3361
        %v3410 = vunpack.c.h.b16 %v3361
        %v3411 = vunpack.c.l.b16 %v3362
        %v3412 = vunpack.c.h.b16 %v3362
        %v3413 = vunpack.c.l.b16 %v3363
        %v3414 = vunpack.c.h.b16 %v3363
        %v3415 = vunpack.c.l.b16 %v3364
        %v3416 = vunpack.c.h.b16 %v3364
        %v3417 = vunpack.c.l.b16 %v3365
        %v3418 = vunpack.c.h.b16 %v3365
        %v3419 = vunpack.c.l.b16 %v3366
        %v3420 = vunpack.c.h.b16 %v3366
        %v3421 = vunpack.c.l.b16 %v3367
        %v3422 = vunpack.c.h.b16 %v3367
        %v3423 = vunpack.c.l.b16 %v3368
        %v3424 = vunpack.c.h.b16 %v3368
        %v3425 = vunpack.c.l.b16 %v3369
        %v3426 = vunpack.c.h.b16 %v3369
        %v3427 = vunpack.c.l.b16 %v3370
        %v3428 = vunpack.c.h.b16 %v3370
        %v3429 = vunpack.c.l.b16 %v3371
        %v3430 = vunpack.c.h.b16 %v3371
        %v3431 = vunpack.c.l.b16 %v3372
        %v3432 = vunpack.c.h.b16 %v3372
        %v3433 = vpack.c.b16 %v3403, %v3401
        %v3434 = vpack.c.b16 %v3404, %v3402
        %v3435 = vpack.c.b16 %v3407, %v3405
        %v3436 = vpack.c.b16 %v3408, %v3406
        %v3437 = vpack.c.b16 %v3411, %v3409
        %v3438 = vpack.c.b16 %v3412, %v3410
        %v3439 = vpack.c.b16 %v3415, %v3413
        %v3440 = vpack.c.b16 %v3416, %v3414
        %v3441 = vpack.c.b16 %v3419, %v3417
        %v3442 = vpack.c.b16 %v3420, %v3418
        %v3443 = vpack.c.b16 %v3423, %v3421
        %v3444 = vpack.c.b16 %v3424, %v3422
        %v3445 = vpack.c.b16 %v3427, %v3425
        %v3446 = vpack.c.b16 %v3428, %v3426
        %v3447 = vpack.c.b16 %v3431, %v3429
        %v3448 = vpack.c.b16 %v3432, %v3430
        %3465 = vmatprep.subr.bf16.mxu0 %v3448
        %3466 = vmatpush1.bf16.msra.mxu0 %v3447
        %3467 = vmatprep.subr.bf16.mxu0 %v3446
        %3468 = vmatpush1.bf16.msra.mxu0 %v3445
        %3469 = vmatprep.subr.bf16.mxu0 %v3444
        %3470 = vmatpush1.bf16.msra.mxu0 %v3443
        %3471 = vmatprep.subr.bf16.mxu0 %v3442
        %3472 = vmatpush1.bf16.msra.mxu0 %v3441
        %3473 = vmatprep.subr.bf16.mxu0 %v3440
        %3474 = vmatpush1.bf16.msra.mxu0 %v3439
        %3475 = vmatprep.subr.bf16.mxu0 %v3438
        %3476 = vmatpush1.bf16.msra.mxu0 %v3437
        %3477 = vmatprep.subr.bf16.mxu0 %v3436
        %3478 = vmatpush1.bf16.msra.mxu0 %v3435
        %3479 = vmatprep.subr.bf16.mxu0 %v3434
        %3480 = vmatpush1.bf16.msra.mxu0 %v3433
        %3481 = vmatprep.subr.bf16.mxu0 0
        %3482 = vmatpush2.bf16.msra.mxu0 0
        %3483 = vmatprep.subr.bf16.mxu0 0
        %3484 = vmatpush2.bf16.msra.mxu0 0
        %3485 = vmatprep.subr.bf16.mxu0 0
        %3486 = vmatpush2.bf16.msra.mxu0 0
        %3487 = vmatprep.subr.bf16.mxu0 0
        %3488 = vmatpush2.bf16.msra.mxu0 0
        %3489 = vmatprep.subr.bf16.mxu0 0
        %3490 = vmatpush2.bf16.msra.mxu0 0
        %3491 = vmatprep.subr.bf16.mxu0 0
        %3492 = vmatpush2.bf16.msra.mxu0 0
        %3493 = vmatprep.subr.bf16.mxu0 0
        %3494 = vmatpush2.bf16.msra.mxu0 0
        %3495 = vmatprep.subr.bf16.mxu0 0
        %3496 = vmatpush2.bf16.msra.mxu0 0
        %3497 = vmatprep.mubr.bf16.mxu0 0
        %3498 = vmatmul.mubr.bf16.gmra.mxu0 %v3353
        %v3499 = vpop.f32.mrf.mxu0
        %v3500 = vadd.f32 %v3378, %v3499
        %v3501 = vpop.f32.mrf.mxu0
        %v3502 = vadd.f32 %v3382, %v3501
        %v3503 = vpop.f32.mrf.mxu0
        %v3504 = vadd.f32 %v3378, %v3503
        %v3505 = vpop.f32.mrf.mxu0
        %v3506 = vadd.f32 %v3382, %v3505
        %3507 = vmatprep.mubr.bf16.mxu0 0
        %3508 = vmatmul.mubr.bf16.gmra.mxu0 %v3354
        %v3509 = vpop.f32.mrf.mxu0
        %v3510 = vadd.f32 %v3378, %v3509
        %v3511 = vpop.f32.mrf.mxu0
        %v3512 = vadd.f32 %v3382, %v3511
        %v3513 = vpop.f32.mrf.mxu0
        %v3514 = vadd.f32 %v3378, %v3513
        %v3515 = vpop.f32.mrf.mxu0
        %v3516 = vadd.f32 %v3382, %v3515
        %3517 = vmatprep.mubr.bf16.mxu0 0
        %3518 = vmatmul.mubr.bf16.gmra.mxu0 %v3355
        %v3519 = vpop.f32.mrf.mxu0
        %v3520 = vadd.f32 %v3378, %v3519
        %v3521 = vpop.f32.mrf.mxu0
        %v3522 = vadd.f32 %v3382, %v3521
        %v3523 = vpop.f32.mrf.mxu0
        %v3524 = vadd.f32 %v3378, %v3523
        %v3525 = vpop.f32.mrf.mxu0
        %v3526 = vadd.f32 %v3382, %v3525
        %3527 = vmatprep.mubr.bf16.mxu0 0
        %3528 = vmatmul.mubr.bf16.gmra.mxu0 %v3356
        %v3529 = vpop.f32.mrf.mxu0
        %v3530 = vadd.f32 %v3378, %v3529
        %v3531 = vpop.f32.mrf.mxu0
        %v3532 = vadd.f32 %v3382, %v3531
        %v3533 = vpop.f32.mrf.mxu0
        %v3534 = vadd.f32 %v3378, %v3533
        %v3535 = vpop.f32.mrf.mxu0
        %v3536 = vadd.f32 %v3382, %v3535
        %3537 = vdwg.mxu0
        %v3538 = vmul.f32 %v3500, 0.5
        %v3539 = vmul.f32 %v3502, 0.5
        %v3540 = vmul.f32 %v3504, 0.5
        %v3541 = vmul.f32 %v3506, 0.5
        %v3542 = vmul.f32 %v3510, 0.5
        %v3543 = vmul.f32 %v3512, 0.5
        %v3544 = vmul.f32 %v3514, 0.5
        %v3545 = vmul.f32 %v3516, 0.5
        %v3546 = vmul.f32 %v3520, 0.5
        %v3547 = vmul.f32 %v3522, 0.5
        %v3548 = vmul.f32 %v3524, 0.5
        %v3549 = vmul.f32 %v3526, 0.5
        %v3550 = vmul.f32 %v3530, 0.5
        %v3551 = vmul.f32 %v3532, 0.5
        %v3552 = vmul.f32 %v3534, 0.5
        %v3553 = vmul.f32 %v3536, 0.5
        %v3554 = vmul.f32 %v3500, 0.70710677
        %v3555 = vmul.f32 %v3502, 0.70710677
        %v3556 = vmul.f32 %v3504, 0.70710677
        %v3557 = vmul.f32 %v3506, 0.70710677
        %v3558 = vmul.f32 %v3510, 0.70710677
        %v3559 = vmul.f32 %v3512, 0.70710677
        %v3560 = vmul.f32 %v3514, 0.70710677
        %v3561 = vmul.f32 %v3516, 0.70710677
        %v3562 = vmul.f32 %v3520, 0.70710677
        %v3563 = vmul.f32 %v3522, 0.70710677
        %v3564 = vmul.f32 %v3524, 0.70710677
        %v3565 = vmul.f32 %v3526, 0.70710677
        %v3566 = vmul.f32 %v3530, 0.70710677
        %v3567 = vmul.f32 %v3532, 0.70710677
        %v3568 = vmul.f32 %v3534, 0.70710677
        %v3569 = vmul.f32 %v3536, 0.70710677
        %v3570 = verf.f32.pop %v3554
        %v3571 = verf.f32.pop %v3555
        %v3572 = verf.f32.pop %v3556
        %v3573 = verf.f32.pop %v3557
        %v3574 = verf.f32.pop %v3558
        %v3575 = verf.f32.pop %v3559
        %v3576 = verf.f32.pop %v3560
        %v3577 = verf.f32.pop %v3561
        %v3578 = verf.f32.pop %v3562
        %v3579 = verf.f32.pop %v3563
        %v3580 = verf.f32.pop %v3564
        %v3581 = verf.f32.pop %v3565
        %v3582 = verf.f32.pop %v3566
        %v3583 = verf.f32.pop %v3567
        %v3584 = verf.f32.pop %v3568
        %v3585 = verf.f32.pop %v3569
        %v3586 = vadd.f32 %v3570, 1.0
        %v3587 = vadd.f32 %v3571, 1.0
        %v3588 = vadd.f32 %v3572, 1.0
        %v3589 = vadd.f32 %v3573, 1.0
        %v3590 = vadd.f32 %v3574, 1.0
        %v3591 = vadd.f32 %v3575, 1.0
        %v3592 = vadd.f32 %v3576, 1.0
        %v3593 = vadd.f32 %v3577, 1.0
        %v3594 = vadd.f32 %v3578, 1.0
        %v3595 = vadd.f32 %v3579, 1.0
        %v3596 = vadd.f32 %v3580, 1.0
        %v3597 = vadd.f32 %v3581, 1.0
        %v3598 = vadd.f32 %v3582, 1.0
        %v3599 = vadd.f32 %v3583, 1.0
        %v3600 = vadd.f32 %v3584, 1.0
        %v3601 = vadd.f32 %v3585, 1.0
        %v3602 = vmul.f32 %v3538, %v3586
        %v3603 = vmul.f32 %v3539, %v3587
        %v3604 = vmul.f32 %v3540, %v3588
        %v3605 = vmul.f32 %v3541, %v3589
        %v3606 = vmul.f32 %v3542, %v3590
        %v3607 = vmul.f32 %v3543, %v3591
        %v3608 = vmul.f32 %v3544, %v3592
        %v3609 = vmul.f32 %v3545, %v3593
        %v3610 = vmul.f32 %v3546, %v3594
        %v3611 = vmul.f32 %v3547, %v3595
        %v3612 = vmul.f32 %v3548, %v3596
        %v3613 = vmul.f32 %v3549, %v3597
        %v3614 = vmul.f32 %v3550, %v3598
        %v3615 = vmul.f32 %v3551, %v3599
        %v3616 = vmul.f32 %v3552, %v3600
        %v3617 = vmul.f32 %v3553, %v3601
        %v3618 = vpack.c.bf16 %v3604, %v3602
        %v3619 = vpack.c.bf16 %v3605, %v3603
        %v3620 = vpack.c.bf16 %v3608, %v3606
        %v3621 = vpack.c.bf16 %v3609, %v3607
        %v3622 = vpack.c.bf16 %v3612, %v3610
        %v3623 = vpack.c.bf16 %v3613, %v3611
        %v3624 = vpack.c.bf16 %v3616, %v3614
        %v3625 = vpack.c.bf16 %v3617, %v3615
        %v3626 = vld [vmem:[#allocation14] sm:$0xf]
        %v3627 = vld [vmem:[#allocation14 + $0x4] sm:$0xf]
        %v3628 = vld [vmem:[#allocation14 + $0x8] sm:$0xf]
        %v3629 = vld [vmem:[#allocation14 + $0xc] sm:$0xf]
        %v3630 = vld [vmem:[#allocation14 + $0x10] sm:$0xf]
        %v3631 = vld [vmem:[#allocation14 + $0x14] sm:$0xf]
        %v3632 = vld [vmem:[#allocation14 + $0x18] sm:$0xf]
        %v3633 = vld [vmem:[#allocation14 + $0x1c] sm:$0xf]
        %v3634 = vld [vmem:[#allocation14 + $0x20] sm:$0xf]
        %v3635 = vld [vmem:[#allocation14 + $0x24] sm:$0xf]
        %v3636 = vld [vmem:[#allocation14 + $0x28] sm:$0xf]
        %v3637 = vld [vmem:[#allocation14 + $0x2c] sm:$0xf]
        %v3638 = vld [vmem:[#allocation14 + $0x30] sm:$0xf]
        %v3639 = vld [vmem:[#allocation14 + $0x34] sm:$0xf]
        %v3640 = vld [vmem:[#allocation14 + $0x38] sm:$0xf]
        %v3641 = vld [vmem:[#allocation14 + $0x3c] sm:$0xf]
        %v3642 = vld [vmem:[#allocation14 + $0x40] sm:$0xf]
        %v3643 = vld [vmem:[#allocation14 + $0x44] sm:$0xf]
        %v3644 = vld [vmem:[#allocation14 + $0x48] sm:$0xf]
        %v3645 = vld [vmem:[#allocation14 + $0x4c] sm:$0xf]
        %v3646 = vld [vmem:[#allocation14 + $0x50] sm:$0xf]
        %v3647 = vld [vmem:[#allocation14 + $0x54] sm:$0xf]
        %v3648 = vld [vmem:[#allocation14 + $0x58] sm:$0xf]
        %v3649 = vld [vmem:[#allocation14 + $0x5c] sm:$0xf]
        %v3650 = vld [vmem:[#allocation14 + $0x60] sm:$0xf]
        %v3651 = vld [vmem:[#allocation14 + $0x64] sm:$0xf]
        %v3652 = vld [vmem:[#allocation14 + $0x68] sm:$0xf]
        %v3653 = vld [vmem:[#allocation14 + $0x6c] sm:$0xf]
        %v3654 = vld [vmem:[#allocation14 + $0x70] sm:$0xf]
        %v3655 = vld [vmem:[#allocation14 + $0x74] sm:$0xf]
        %v3656 = vld [vmem:[#allocation14 + $0x78] sm:$0xf]
        %v3657 = vld [vmem:[#allocation14 + $0x7c] sm:$0xf]
        %v3658 = vld [vmem:[%s11] sm:$0x1]
        %v3660 = vlaneseq
        %v3661 = vshrl.u32 %v3660, 7
        %v3662 = vsub.s32 0, %v3661
        %v3663 = vrot.slane %v3658, %v3662
        %v3697 = vunpack.c.l.b16 %v3626
        %v3698 = vunpack.c.l.b16 %v3627
        %v3699 = vunpack.c.l.b16 %v3628
        %v3700 = vunpack.c.l.b16 %v3629
        %v3701 = vunpack.c.l.b16 %v3630
        %v3702 = vunpack.c.l.b16 %v3631
        %v3703 = vunpack.c.l.b16 %v3632
        %v3704 = vunpack.c.l.b16 %v3633
        %v3705 = vunpack.c.l.b16 %v3634
        %v3706 = vunpack.c.l.b16 %v3635
        %v3707 = vunpack.c.l.b16 %v3636
        %v3708 = vunpack.c.l.b16 %v3637
        %v3709 = vunpack.c.l.b16 %v3638
        %v3710 = vunpack.c.l.b16 %v3639
        %v3711 = vunpack.c.l.b16 %v3640
        %v3712 = vunpack.c.l.b16 %v3641
        %v3713 = vunpack.c.l.b16 %v3642
        %v3714 = vunpack.c.l.b16 %v3643
        %v3715 = vunpack.c.l.b16 %v3644
        %v3716 = vunpack.c.l.b16 %v3645
        %v3717 = vunpack.c.l.b16 %v3646
        %v3718 = vunpack.c.l.b16 %v3647
        %v3719 = vunpack.c.l.b16 %v3648
        %v3720 = vunpack.c.l.b16 %v3649
        %v3721 = vunpack.c.l.b16 %v3650
        %v3722 = vunpack.c.l.b16 %v3651
        %v3723 = vunpack.c.l.b16 %v3652
        %v3724 = vunpack.c.l.b16 %v3653
        %v3725 = vunpack.c.l.b16 %v3654
        %v3726 = vunpack.c.l.b16 %v3655
        %v3727 = vunpack.c.l.b16 %v3656
        %v3728 = vunpack.c.l.b16 %v3657
        %v3729 = vpack.c.b16 %v3698, %v3697
        %v3730 = vpack.c.b16 %v3700, %v3699
        %v3731 = vpack.c.b16 %v3702, %v3701
        %v3732 = vpack.c.b16 %v3704, %v3703
        %v3733 = vpack.c.b16 %v3706, %v3705
        %v3734 = vpack.c.b16 %v3708, %v3707
        %v3735 = vpack.c.b16 %v3710, %v3709
        %v3736 = vpack.c.b16 %v3712, %v3711
        %v3737 = vpack.c.b16 %v3714, %v3713
        %v3738 = vpack.c.b16 %v3716, %v3715
        %v3739 = vpack.c.b16 %v3718, %v3717
        %v3740 = vpack.c.b16 %v3720, %v3719
        %v3741 = vpack.c.b16 %v3722, %v3721
        %v3742 = vpack.c.b16 %v3724, %v3723
        %v3743 = vpack.c.b16 %v3726, %v3725
        %v3744 = vpack.c.b16 %v3728, %v3727
        %3761 = vmatprep.subr.bf16.mxu0 0
        %3762 = vmatpush1.bf16.msra.mxu0 %v3736
        %3763 = vmatprep.subr.bf16.mxu0 0
        %3764 = vmatpush1.bf16.msra.mxu0 %v3735
        %3765 = vmatprep.subr.bf16.mxu0 0
        %3766 = vmatpush1.bf16.msra.mxu0 %v3734
        %3767 = vmatprep.subr.bf16.mxu0 0
        %3768 = vmatpush1.bf16.msra.mxu0 %v3733
        %3769 = vmatprep.subr.bf16.mxu0 0
        %3770 = vmatpush1.bf16.msra.mxu0 %v3732
        %3771 = vmatprep.subr.bf16.mxu0 0
        %3772 = vmatpush1.bf16.msra.mxu0 %v3731
        %3773 = vmatprep.subr.bf16.mxu0 0
        %3774 = vmatpush1.bf16.msra.mxu0 %v3730
        %3775 = vmatprep.subr.bf16.mxu0 0
        %3776 = vmatpush1.bf16.msra.mxu0 %v3729
        %3777 = vmatprep.subr.bf16.mxu0 0
        %3778 = vmatpush2.bf16.msra.mxu0 %v3744
        %3779 = vmatprep.subr.bf16.mxu0 0
        %3780 = vmatpush2.bf16.msra.mxu0 %v3743
        %3781 = vmatprep.subr.bf16.mxu0 0
        %3782 = vmatpush2.bf16.msra.mxu0 %v3742
        %3783 = vmatprep.subr.bf16.mxu0 0
        %3784 = vmatpush2.bf16.msra.mxu0 %v3741
        %3785 = vmatprep.subr.bf16.mxu0 0
        %3786 = vmatpush2.bf16.msra.mxu0 %v3740
        %3787 = vmatprep.subr.bf16.mxu0 0
        %3788 = vmatpush2.bf16.msra.mxu0 %v3739
        %3789 = vmatprep.subr.bf16.mxu0 0
        %3790 = vmatpush2.bf16.msra.mxu0 %v3738
        %3791 = vmatprep.subr.bf16.mxu0 0
        %3792 = vmatpush2.bf16.msra.mxu0 %v3737
        %3793 = vmatprep.mubr.bf16.mxu0 %v3619
        %3794 = vmatmul.mubr.bf16.gmra.mxu0 %v3618
        %v3795 = vpop.f32.mrf.mxu0
        %v3796 = vadd.f32 %v3663, %v3795
        %v3797 = vpop.f32.mrf.mxu0
        %v3798 = vpop.f32.mrf.mxu0
        %v3799 = vadd.f32 %v3663, %v3798
        %v3800 = vpop.f32.mrf.mxu0
        %3801 = vmatprep.mubr.bf16.mxu0 %v3621
        %3802 = vmatmul.mubr.bf16.gmra.mxu0 %v3620
        %v3803 = vpop.f32.mrf.mxu0
        %v3804 = vadd.f32 %v3663, %v3803
        %v3805 = vpop.f32.mrf.mxu0
        %v3806 = vpop.f32.mrf.mxu0
        %v3807 = vadd.f32 %v3663, %v3806
        %v3808 = vpop.f32.mrf.mxu0
        %3809 = vmatprep.mubr.bf16.mxu0 %v3623
        %3810 = vmatmul.mubr.bf16.gmra.mxu0 %v3622
        %v3811 = vpop.f32.mrf.mxu0
        %v3812 = vadd.f32 %v3663, %v3811
        %v3813 = vpop.f32.mrf.mxu0
        %v3814 = vpop.f32.mrf.mxu0
        %v3815 = vadd.f32 %v3663, %v3814
        %v3816 = vpop.f32.mrf.mxu0
        %3817 = vmatprep.mubr.bf16.mxu0 %v3625
        %3818 = vmatmul.mubr.bf16.gmra.mxu0 %v3624
        %v3819 = vpop.f32.mrf.mxu0
        %v3820 = vadd.f32 %v3663, %v3819
        %v3821 = vpop.f32.mrf.mxu0
        %v3822 = vpop.f32.mrf.mxu0
        %v3823 = vadd.f32 %v3663, %v3822
        %v3824 = vpop.f32.mrf.mxu0
        %3825 = vdwg.mxu0
        %v3826 = vadd.f32 %v3345, %v3796
        %v3827 = vadd.f32 %v3346, %v3799
        %v3828 = vadd.f32 %v3347, %v3804
        %v3829 = vadd.f32 %v3348, %v3807
        %v3830 = vadd.f32 %v3349, %v3812
        %v3831 = vadd.f32 %v3350, %v3815
        %v3832 = vadd.f32 %v3351, %v3820
        %v3833 = vadd.f32 %v3352, %v3823
        %v3834 = vld [vmem:[%s14] sm:$0x1]
        %v3835 = vld [vmem:[%s15] sm:$0x1]
        %3836 = vadd.xlane.f32.xlu0 %v3826
        %v3837 = vpop.xlane.xlu0 %3836
        %3838 = vadd.xlane.f32.xlu0 %v3827
        %v3839 = vpop.xlane.xlu0 %3838
        %3840 = vadd.xlane.f32.xlu0 %v3828
        %v3841 = vpop.xlane.xlu0 %3840
        %3842 = vadd.xlane.f32.xlu0 %v3829
        %v3843 = vpop.xlane.xlu0 %3842
        %3844 = vadd.xlane.f32.xlu0 %v3830
        %v3845 = vpop.xlane.xlu0 %3844
        %3846 = vadd.xlane.f32.xlu0 %v3831
        %v3847 = vpop.xlane.xlu0 %3846
        %3848 = vadd.xlane.f32.xlu0 %v3832
        %v3849 = vpop.xlane.xlu0 %3848
        %3850 = vadd.xlane.f32.xlu0 %v3833
        %v3851 = vpop.xlane.xlu0 %3850
        %v3852 = vmul.f32 %v3837, %v3252
        %v3853 = vmul.f32 %v3839, %v3252
        %v3854 = vmul.f32 %v3841, %v3252
        %v3855 = vmul.f32 %v3843, %v3252
        %v3856 = vmul.f32 %v3845, %v3252
        %v3857 = vmul.f32 %v3847, %v3252
        %v3858 = vmul.f32 %v3849, %v3252
        %v3859 = vmul.f32 %v3851, %v3252
        %v3860 = vsub.f32 %v3826, %v3852
        %v3861 = vsub.f32 %v3827, %v3853
        %v3862 = vsub.f32 %v3828, %v3854
        %v3863 = vsub.f32 %v3829, %v3855
        %v3864 = vsub.f32 %v3830, %v3856
        %v3865 = vsub.f32 %v3831, %v3857
        %v3866 = vsub.f32 %v3832, %v3858
        %v3867 = vsub.f32 %v3833, %v3859
        %v3868 = vmul.f32 %v3860, %v3860
        %v3869 = vmul.f32 %v3861, %v3861
        %v3870 = vmul.f32 %v3862, %v3862
        %v3871 = vmul.f32 %v3863, %v3863
        %v3872 = vmul.f32 %v3864, %v3864
        %v3873 = vmul.f32 %v3865, %v3865
        %v3874 = vmul.f32 %v3866, %v3866
        %v3875 = vmul.f32 %v3867, %v3867
        %3876 = vadd.xlane.f32.xlu0 %v3868
        %v3877 = vpop.xlane.xlu0 %3876
        %3878 = vadd.xlane.f32.xlu0 %v3869
        %v3879 = vpop.xlane.xlu0 %3878
        %3880 = vadd.xlane.f32.xlu0 %v3870
        %v3881 = vpop.xlane.xlu0 %3880
        %3882 = vadd.xlane.f32.xlu0 %v3871
        %v3883 = vpop.xlane.xlu0 %3882
        %3884 = vadd.xlane.f32.xlu0 %v3872
        %v3885 = vpop.xlane.xlu0 %3884
        %3886 = vadd.xlane.f32.xlu0 %v3873
        %v3887 = vpop.xlane.xlu0 %3886
        %3888 = vadd.xlane.f32.xlu0 %v3874
        %v3889 = vpop.xlane.xlu0 %3888
        %3890 = vadd.xlane.f32.xlu0 %v3875
        %v3891 = vpop.xlane.xlu0 %3890
        %v3892 = vmul.f32 %v3877, %v3252
        %v3893 = vmul.f32 %v3879, %v3252
        %v3894 = vmul.f32 %v3881, %v3252
        %v3895 = vmul.f32 %v3883, %v3252
        %v3896 = vmul.f32 %v3885, %v3252
        %v3897 = vmul.f32 %v3887, %v3252
        %v3898 = vmul.f32 %v3889, %v3252
        %v3899 = vmul.f32 %v3891, %v3252
        %v3900 = vadd.f32 %v3892, 1e-05
        %v3901 = vadd.f32 %v3893, 1e-05
        %v3902 = vadd.f32 %v3894, 1e-05
        %v3903 = vadd.f32 %v3895, 1e-05
        %v3904 = vadd.f32 %v3896, 1e-05
        %v3905 = vadd.f32 %v3897, 1e-05
        %v3906 = vadd.f32 %v3898, 1e-05
        %v3907 = vadd.f32 %v3899, 1e-05
        %v3908 = vrsqrt.pop %v3900
        %v3909 = vrsqrt.pop %v3901
        %v3910 = vrsqrt.pop %v3902
        %v3911 = vrsqrt.pop %v3903
        %v3912 = vrsqrt.pop %v3904
        %v3913 = vrsqrt.pop %v3905
        %v3914 = vrsqrt.pop %v3906
        %v3915 = vrsqrt.pop %v3907
        %v3916 = vmul.f32 %v3860, %v3908
        %v3917 = vmul.f32 %v3861, %v3909
        %v3918 = vmul.f32 %v3862, %v3910
        %v3919 = vmul.f32 %v3863, %v3911
        %v3920 = vmul.f32 %v3864, %v3912
        %v3921 = vmul.f32 %v3865, %v3913
        %v3922 = vmul.f32 %v3866, %v3914
        %v3923 = vmul.f32 %v3867, %v3915
        %v3925 = vlaneseq
        %v3926 = vshrl.u32 %v3925, 7
        %v3927 = vsub.s32 0, %v3926
        %v3928 = vrot.slane %v3834, %v3927
        %v3930 = vmul.f32 %v3916, %v3928
        %v3931 = vmul.f32 %v3917, %v3928
        %v3932 = vmul.f32 %v3918, %v3928
        %v3933 = vmul.f32 %v3919, %v3928
        %v3934 = vmul.f32 %v3920, %v3928
        %v3935 = vmul.f32 %v3921, %v3928
        %v3936 = vmul.f32 %v3922, %v3928
        %v3937 = vmul.f32 %v3923, %v3928
        %v3939 = vlaneseq
        %v3940 = vshrl.u32 %v3939, 7
        %v3941 = vsub.s32 0, %v3940
        %v3942 = vrot.slane %v3835, %v3941
        %v3944 = vadd.f32 %v3930, %v3942
        %v3945 = vadd.f32 %v3931, %v3942
        %v3946 = vadd.f32 %v3932, %v3942
        %v3947 = vadd.f32 %v3933, %v3942
        %v3948 = vadd.f32 %v3934, %v3942
        %v3949 = vadd.f32 %v3935, %v3942
        %v3950 = vadd.f32 %v3936, %v3942
        %v3951 = vadd.f32 %v3937, %v3942
        %3952 = vst [vmem:[%s669] sm:$0xff] %v3944
        %3953 = vst [vmem:[%s669 + $0x8] sm:$0xff] %v3945
        %3954 = vst [vmem:[%s669 + $0x10] sm:$0xff] %v3946
        %3955 = vst [vmem:[%s669 + $0x18] sm:$0xff] %v3947
        %3956 = vst [vmem:[%s669 + $0x20] sm:$0xff] %v3948
        %3957 = vst [vmem:[%s669 + $0x28] sm:$0xff] %v3949
        %3958 = vst [vmem:[%s669 + $0x30] sm:$0xff] %v3950
        %3959 = vst [vmem:[%s669 + $0x38] sm:$0xff] %v3951
        %s3960 = sand.u32 %s408, 1
        %s3961 = scalar_lea.sflag [#allocation5], %s3960
        %s3962 = sand.u32 %s408, 1
        %s3963 = smul.addr %s3962, 64
        %s3964 = scalar_lea.vmem [#allocation15], %s3963
        // Predicated region
        $region117: #{tpu_custom_call.1} parent=83 // pred_check
          %p3965 = pneg %p418
        $region118: #{tpu_custom_call.1} parent=83 // pred_check_branch
          %3967 = sbr.rel (%p3965) target = $region120
        $region119: #{tpu_custom_call.1} parent=83 // pred_region
          %s3968 = smul.u32 8, %s43
          %s3970 = ssub.s32 1024, 1024
          %3971 = vsyncadd %s3961, %s3970
          %s3972 = smul.addr %s42, 16
          %s3973 = sadd.s32 %s3968, %s3972
          %s3974 = smul.addr %s3973, 128
          %s3975 = scalar_lea.hbm %s16, %s3974
          %s3976 = sshll.u32 %s3964, 4
          %s3977 = int_to_ptr.vmem [resolvable:$true] %s3976
          %3982 = dma.vmem_to_hbm [thread:$0]  %s3977, 1024, %s3975, %s3961, 128, 128, 8
        $region120: #{tpu_custom_call.1} parent=83 // pred_fallthru
          _
      $region84: #{tpu_custom_call.1} parent=5 // pred_fallthru
        _
      %p3983 = scmp.le.s32.totalorder 2, %s33
      // Predicated region
      $region121: #{tpu_custom_call.1} parent=5 // pred_check
        %p3984 = pneg %p3983
      $region122: #{tpu_custom_call.1} parent=5 // pred_check_branch
        %3986 = sbr.rel (%p3984) target = $region124
      $region123: #{tpu_custom_call.1} parent=5 // pred_region
        %s3987 = ssub.s32 %s33, 2
        // Predicated region
        $region125: #{tpu_custom_call.1} parent=123 // pred_check
          %p3988 = pneg %p424
        $region126: #{tpu_custom_call.1} parent=123 // pred_check_branch
          %3990 = sbr.rel (%p3988) target = $region128
        $region127: #{tpu_custom_call.1} parent=123 // pred_region
          %s3991 = sand.u32 %s409, 1
          %s3992 = scalar_lea.sflag [#allocation5], %s3991
          %s3993 = sand.u32 %s409, 1
          %s3994 = smul.addr %s3993, 64
          %s3995 = scalar_lea.vmem [#allocation15], %s3994
          %3996 = dma.done %s3992, 1024
        $region128: #{tpu_custom_call.1} parent=123 // pred_fallthru
          _
      $region124: #{tpu_custom_call.1} parent=5 // pred_fallthru
        _
    $region6: #{tpu_custom_call.1} parent=1 // loop_footer
      %s37 = sadd.s32 1, %s33
    $region7: #{tpu_custom_call.1} parent=1 // loop_footer_branch
      %32 = sbr.rel target = $region3
    $region8: #{tpu_custom_call.1} parent=1 // loop_exit
      _
    %3997 = vsyncpa [#allocation4], 1
    %s3998 = scalar_lea.sflag [#allocation4], 1
    %3999 = vsyncpa %s3998, 1
    %4000 = vsyncpa [#allocation7], 1
    %s4001 = scalar_lea.sflag [#allocation7], 1
    %4002 = vsyncpa %s4001, 1
    %4003 = vsyncpa [#allocation10], 1
    %4004 = vsyncpa [#allocation13], 1
    %4005 = vsyncpa [#allocation5], 1
    %s4006 = scalar_lea.sflag [#allocation5], 1
    %4007 = vsyncpa %s4006, 1

// kernel: tpu_custom_call.1
$region0: #{tpu_custom_call.1}
  #allocation0 [shape = 'u32[]', space=smem, size = 0x4, offset = 0x4, fixed_abs, tag = 'smem constant byte address 0x4 - core index']
  #allocation1 [shape = 'u32[144,128]{1,0:T(1,128)}', space=vmem, size = 0x12000, scoped, tag = 'internal scratch']
  #allocation2 [shape = 'bf16[128,256]{1,0:T(8,128)(2,1)}', space=vmem, size = 0x10000, scoped, tag = 'scratch operand']
  %s0 = inlined_call_operand.hbm [shape: bf16[2,128,128], index: 0, kind: input, shape index: {}]
  %s1 = inlined_call_operand.hbm [shape: f32[2,128,128], index: 1, kind: input, shape index: {}]
  %s2 = inlined_call_operand.hbm [shape: bf16[128,128], index: 2, kind: input, shape index: {}]
  %s3 = inlined_call_operand.vmem [shape: f32[1,128], index: 3, kind: input, shape index: {}]
  %s4 = inlined_call_operand.hbm [shape: bf16[128,256], index: 4, kind: input, shape index: {}]
  %s5 = inlined_call_operand.vmem [shape: f32[1,256], index: 5, kind: input, shape index: {}]
  %s6 = inlined_call_operand.hbm [shape: bf16[128,128], index: 6, kind: input, shape index: {}]
  %s7 = inlined_call_operand.vmem [shape: f32[1,128], index: 7, kind: input, shape index: {}]
  %s8 = inlined_call_operand.hbm [shape: bf16[128,256], index: 8, kind: input, shape index: {}]
  %s9 = inlined_call_operand.vmem [shape: f32[1,256], index: 9, kind: input, shape index: {}]
  %s10 = inlined_call_operand.hbm [shape: bf16[256,128], index: 10, kind: input, shape index: {}]
  %s11 = inlined_call_operand.vmem [shape: f32[1,128], index: 11, kind: input, shape index: {}]
  %s12 = inlined_call_operand.vmem [shape: f32[1,128], index: 12, kind: input, shape index: {}]
  %s13 = inlined_call_operand.vmem [shape: f32[1,128], index: 13, kind: input, shape index: {}]
  %s14 = inlined_call_operand.vmem [shape: f32[1,128], index: 14, kind: input, shape index: {}]
  %s15 = inlined_call_operand.vmem [shape: f32[1,128], index: 15, kind: input, shape index: {}]
  %s16 = inlined_call_operand.hbm [shape: f32[2,128,128], index: 16, kind: output, shape index: {}]
  %s17 = sld [smem:[#allocation0]]
  $region129: #{tpu_custom_call.1} parent=0
    _
  %s19 = ssub.s32 1, %s17
  %s20 = scalar_select 0, %s19, %s17
  $region1: #{tpu_custom_call.1} parent=0
    #allocation3 [shape = 'u8[65536]{0}', space=vmem, size = 0x10000, scoped, tag = 'input window, operand 0']
    #allocation4 [shape = 's32[2]{0}', space=sflag, size = 0x8, scoped, tag = 'scoped memory for tpu_custom_call.1']
    #allocation5 [shape = 's32[2]{0}', space=sflag, size = 0x8, scoped, tag = 'scoped memory for tpu_custom_call.1']
    #allocation6 [shape = 'u8[65536]{0}', space=vmem, size = 0x10000, scoped, tag = 'input window, operand 1']
    #allocation7 [shape = 's32[2]{0}', space=sflag, size = 0x8, scoped, tag = 'scoped memory for tpu_custom_call.1']
    #allocation8 [shape = 'u8[32768]{0}', space=vmem, size = 0x8000, scoped, tag = 'input window, operand 2, single buffered']
    #allocation9 [shape = 'u8[65536]{0}', space=vmem, size = 0x10000, scoped, tag = 'input window, operand 4, single buffered']
    #allocation10 [shape = 's32[1]{0}', space=sflag, size = 0x4, scoped, tag = 'scoped memory for tpu_custom_call.1']
    #allocation11 [shape = 'u8[32768]{0}', space=vmem, size = 0x8000, scoped, tag = 'input window, operand 6, single buffered']
    #allocation12 [shape = 'u8[65536]{0}', space=vmem, size = 0x10000, scoped, tag = 'input window, operand 8, single buffered']
    #allocation13 [shape = 's32[1]{0}', space=sflag, size = 0x4, scoped, tag = 'scoped memory for tpu_custom_call.1']
    #allocation14 [shape = 'u8[65536]{0}', space=vmem, size = 0x10000, scoped, tag = 'input window, operand 10, single buffered']
    #allocation15 [shape = 'u8[65536]{0}', space=vmem, size = 0x10000, scoped, tag = 'output window, operand 0']
    %21 = vsyncpa [#allocation4], 0
    %s22 = scalar_lea.sflag [#allocation4], 1
    %23 = vsyncpa %s22, 0
    %24 = vsyncpa [#allocation7], 0
    %s25 = scalar_lea.sflag [#allocation7], 1
    %26 = vsyncpa %s25, 0
    %27 = vsyncpa [#allocation10], 0
    %28 = vsyncpa [#allocation13], 0
    %29 = vsyncpa [#allocation5], 0
    %s30 = scalar_lea.sflag [#allocation5], 1
    %31 = vsyncpa %s30, 0
    loop: start=0, step=1, limit=6
    $region2: #{tpu_custom_call.1} parent=1 // loop_pre_header
      _
    $region3: #{tpu_custom_call.1} parent=1 // loop_header
      %s33 = sphi 0, %s37
      %p34 = scmp.ge.s32.totalorder %s33, 6
      %s40 = sphi 0, %s52
      %s41 = sphi 0, %s48
      %s42 = sphi 0, %s40
      %s43 = sphi 0, %s41
      %s44 = sphi 0, %s42
      %s45 = sphi 0, %s43
      %s55 = sphi 0, %s57
      %s58 = sphi 0, %s55
      %s59 = sphi 0, %s58
      %s75 = sphi 0, %s59
      %s83 = sphi 0, %s85
      %s86 = sphi 0, %s83
      %s87 = sphi 0, %s86
      %s103 = sphi 0, %s87
      %s107 = sphi 0, %s107
      %s109 = sphi 0, %s107
      %s110 = sphi 0, %s109
      %s124 = sphi 0, %s110
      %s128 = sphi 0, %s128
      %s130 = sphi 0, %s128
      %s131 = sphi 0, %s130
      %s145 = sphi 0, %s131
      %s149 = sphi 0, %s149
      %s151 = sphi 0, %s149
      %s152 = sphi 0, %s151
      %s166 = sphi 0, %s152
      %s170 = sphi 0, %s170
      %s172 = sphi 0, %s170
      %s173 = sphi 0, %s172
      %s187 = sphi 0, %s173
      %s191 = sphi 0, %s191
      %s193 = sphi 0, %s191
      %s194 = sphi 0, %s193
      %s208 = sphi 0, %s194
      %s212 = sphi 0, %s212
      %s214 = sphi 0, %s212
      %s215 = sphi 0, %s214
      %s229 = sphi 0, %s215
      %s233 = sphi 0, %s233
      %s235 = sphi 0, %s233
      %s236 = sphi 0, %s235
      %s250 = sphi 0, %s236
      %s254 = sphi 0, %s254
      %s256 = sphi 0, %s254
      %s257 = sphi 0, %s256
      %s271 = sphi 0, %s257
      %s275 = sphi 0, %s275
      %s277 = sphi 0, %s275
      %s278 = sphi 0, %s277
      %s292 = sphi 0, %s278
      %s296 = sphi 0, %s296
      %s298 = sphi 0, %s296
      %s299 = sphi 0, %s298
      %s313 = sphi 0, %s299
      %s317 = sphi 0, %s317
      %s319 = sphi 0, %s317
      %s320 = sphi 0, %s319
      %s334 = sphi 0, %s320
      %s338 = sphi 0, %s338
      %s340 = sphi 0, %s338
      %s341 = sphi 0, %s340
      %s355 = sphi 0, %s341
      %s359 = sphi 0, %s359
      %s361 = sphi 0, %s359
      %s362 = sphi 0, %s361
      %s376 = sphi 0, %s362
      %s380 = sphi 0, %s380
      %s382 = sphi 0, %s380
      %s383 = sphi 0, %s382
      %s397 = sphi 0, %s383
      %s405 = sphi 0, %s407
      %s408 = sphi 0, %s405
      %s409 = sphi 0, %s408
      %s425 = sphi 0, %s409
    $region4: #{tpu_custom_call.1} parent=1 // loop_header_branch
      %36 = sbr.rel (%p34) target = $region8
    $region5: #{tpu_custom_call.1} parent=1 // loop_body
      %s38 = ssub.s32 %s33, 1
      %s39 = ssub.s32 %s33, 2
      %s46 = sadd.s32 1, %s41
      %p47 = scmp.ge.s32.totalorder %s46, 2
      %s48 = scalar_select %p47, 0, %s46
      %s49 = sadd.s32 1, %s40
      %s50 = scalar_select %p47, %s49, %s40
      %p51 = scmp.ge.s32.totalorder %s50, 2
      %s52 = scalar_select %p51, 0, %s50
      %s53 = ssub.s32 %s40, %s52
      %p54 = scmp.eq.s32.totalorder %s53, 0
      %s56 = sadd.s32 %s55, 1
      %s57 = scalar_select %p54, %s55, %s56
      %p60 = pneg %p54
      %p61 = scmp.eq.s32.totalorder %s33, 3
      %p62 = por %p60, %p61
      %p63 = scmp.ne.s32.totalorder %s55, %s58
      %p64 = scmp.eq.s32.totalorder %s33, 0
      %p65 = por %p63, %p64
      %p66 = scmp.ne.s32.totalorder %s55, %s58
      %p67 = scmp.eq.s32.totalorder %s38, 3
      %p68 = por %p66, %p67
      %p69 = scmp.ne.s32.totalorder %s58, %s59
      %p70 = scmp.eq.s32.totalorder %s38, 0
      %p71 = por %p69, %p70
      %p72 = scmp.ne.s32.totalorder %s58, %s59
      %p73 = scmp.eq.s32.totalorder %s39, 3
      %p74 = por %p72, %p73
      %p76 = scmp.ne.s32.totalorder %s59, %s75
      %p77 = scmp.eq.s32.totalorder %s39, 0
      %p78 = por %p76, %p77
      %s79 = ssub.s32 %s40, %s52
      %s80 = ssub.s32 %s41, %s48
      %s81 = sor.u32 %s79, %s80
      %p82 = scmp.eq.s32.totalorder %s81, 0
      %s84 = sadd.s32 %s83, 1
      %s85 = scalar_select %p82, %s83, %s84
      %p88 = pneg %p82
      %p89 = scmp.eq.s32.totalorder %s33, 3
      %p90 = por %p88, %p89
      %p91 = scmp.ne.s32.totalorder %s83, %s86
      %p92 = scmp.eq.s32.totalorder %s33, 0
      %p93 = por %p91, %p92
      %p94 = scmp.ne.s32.totalorder %s83, %s86
      %p95 = scmp.eq.s32.totalorder %s38, 3
      %p96 = por %p94, %p95
      %p97 = scmp.ne.s32.totalorder %s86, %s87
      %p98 = scmp.eq.s32.totalorder %s38, 0
      %p99 = por %p97, %p98
      %p100 = scmp.ne.s32.totalorder %s86, %s87
      %p101 = scmp.eq.s32.totalorder %s39, 3
      %p102 = por %p100, %p101
      %p104 = scmp.ne.s32.totalorder %s87, %s103
      %p105 = scmp.eq.s32.totalorder %s39, 0
      %p106 = por %p104, %p105
      %s108 = sadd.s32 %s107, 1
      %p111 = scmp.eq.s32.totalorder %s33, 3
      %p112 = scmp.ne.s32.totalorder %s107, %s109
      %p113 = scmp.eq.s32.totalorder %s33, 0
      %p114 = por %p112, %p113
      %p115 = scmp.ne.s32.totalorder %s107, %s109
      %p116 = scmp.eq.s32.totalorder %s38, 3
      %p117 = por %p115, %p116
      %p118 = scmp.ne.s32.totalorder %s109, %s110
      %p119 = scmp.eq.s32.totalorder %s38, 0
      %p120 = por %p118, %p119
      %p121 = scmp.ne.s32.totalorder %s109, %s110
      %p122 = scmp.eq.s32.totalorder %s39, 3
      %p123 = por %p121, %p122
      %p125 = scmp.ne.s32.totalorder %s110, %s124
      %p126 = scmp.eq.s32.totalorder %s39, 0
      %p127 = por %p125, %p126
      %s129 = sadd.s32 %s128, 1
      %p132 = scmp.eq.s32.totalorder %s33, 3
      %p133 = scmp.ne.s32.totalorder %s128, %s130
      %p134 = scmp.eq.s32.totalorder %s33, 0
      %p135 = por %p133, %p134
      %p136 = scmp.ne.s32.totalorder %s128, %s130
      %p137 = scmp.eq.s32.totalorder %s38, 3
      %p138 = por %p136, %p137
      %p139 = scmp.ne.s32.totalorder %s130, %s131
      %p140 = scmp.eq.s32.totalorder %s38, 0
      %p141 = por %p139, %p140
      %p142 = scmp.ne.s32.totalorder %s130, %s131
      %p143 = scmp.eq.s32.totalorder %s39, 3
      %p144 = por %p142, %p143
      %p146 = scmp.ne.s32.totalorder %s131, %s145
      %p147 = scmp.eq.s32.totalorder %s39, 0
      %p148 = por %p146, %p147
      %s150 = sadd.s32 %s149, 1
      %p153 = scmp.eq.s32.totalorder %s33, 3
      %p154 = scmp.ne.s32.totalorder %s149, %s151
      %p155 = scmp.eq.s32.totalorder %s33, 0
      %p156 = por %p154, %p155
      %p157 = scmp.ne.s32.totalorder %s149, %s151
      %p158 = scmp.eq.s32.totalorder %s38, 3
      %p159 = por %p157, %p158
      %p160 = scmp.ne.s32.totalorder %s151, %s152
      %p161 = scmp.eq.s32.totalorder %s38, 0
      %p162 = por %p160, %p161
      %p163 = scmp.ne.s32.totalorder %s151, %s152
      %p164 = scmp.eq.s32.totalorder %s39, 3
      %p165 = por %p163, %p164
      %p167 = scmp.ne.s32.totalorder %s152, %s166
      %p168 = scmp.eq.s32.totalorder %s39, 0
      %p169 = por %p167, %p168
      %s171 = sadd.s32 %s170, 1
      %p174 = scmp.eq.s32.totalorder %s33, 3
      %p175 = scmp.ne.s32.totalorder %s170, %s172
      %p176 = scmp.eq.s32.totalorder %s33, 0
      %p177 = por %p175, %p176
      %p178 = scmp.ne.s32.totalorder %s170, %s172
      %p179 = scmp.eq.s32.totalorder %s38, 3
      %p180 = por %p178, %p179
      %p181 = scmp.ne.s32.totalorder %s172, %s173
      %p182 = scmp.eq.s32.totalorder %s38, 0
      %p183 = por %p181, %p182
      %p184 = scmp.ne.s32.totalorder %s172, %s173
      %p185 = scmp.eq.s32.totalorder %s39, 3
      %p186 = por %p184, %p185
      %p188 = scmp.ne.s32.totalorder %s173, %s187
      %p189 = scmp.eq.s32.totalorder %s39, 0
      %p190 = por %p188, %p189
      %s192 = sadd.s32 %s191, 1
      %p195 = scmp.eq.s32.totalorder %s33, 3
      %p196 = scmp.ne.s32.totalorder %s191, %s193
      %p197 = scmp.eq.s32.totalorder %s33, 0
      %p198 = por %p196, %p197
      %p199 = scmp.ne.s32.totalorder %s191, %s193
      %p200 = scmp.eq.s32.totalorder %s38, 3
      %p201 = por %p199, %p200
      %p202 = scmp.ne.s32.totalorder %s193, %s194
      %p203 = scmp.eq.s32.totalorder %s38, 0
      %p204 = por %p202, %p203
      %p205 = scmp.ne.s32.totalorder %s193, %s194
      %p206 = scmp.eq.s32.totalorder %s39, 3
      %p207 = por %p205, %p206
      %p209 = scmp.ne.s32.totalorder %s194, %s208
      %p210 = scmp.eq.s32.totalorder %s39, 0
      %p211 = por %p209, %p210
      %s213 = sadd.s32 %s212, 1
      %p216 = scmp.eq.s32.totalorder %s33, 3
      %p217 = scmp.ne.s32.totalorder %s212, %s214
      %p218 = scmp.eq.s32.totalorder %s33, 0
      %p219 = por %p217, %p218
      %p220 = scmp.ne.s32.totalorder %s212, %s214
      %p221 = scmp.eq.s32.totalorder %s38, 3
      %p222 = por %p220, %p221
      %p223 = scmp.ne.s32.totalorder %s214, %s215
      %p224 = scmp.eq.s32.totalorder %s38, 0
      %p225 = por %p223, %p224
      %p226 = scmp.ne.s32.totalorder %s214, %s215
      %p227 = scmp.eq.s32.totalorder %s39, 3
      %p228 = por %p226, %p227
      %p230 = scmp.ne.s32.totalorder %s215, %s229
      %p231 = scmp.eq.s32.totalorder %s39, 0
      %p232 = por %p230, %p231
      %s234 = sadd.s32 %s233, 1
      %p237 = scmp.eq.s32.totalorder %s33, 3
      %p238 = scmp.ne.s32.totalorder %s233, %s235
      %p239 = scmp.eq.s32.totalorder %s33, 0
      %p240 = por %p238, %p239
      %p241 = scmp.ne.s32.totalorder %s233, %s235
      %p242 = scmp.eq.s32.totalorder %s38, 3
      %p243 = por %p241, %p242
      %p244 = scmp.ne.s32.totalorder %s235, %s236
      %p245 = scmp.eq.s32.totalorder %s38, 0
      %p246 = por %p244, %p245
      %p247 = scmp.ne.s32.totalorder %s235, %s236
      %p248 = scmp.eq.s32.totalorder %s39, 3
      %p249 = por %p247, %p248
      %p251 = scmp.ne.s32.totalorder %s236, %s250
      %p252 = scmp.eq.s32.totalorder %s39, 0
      %p253 = por %p251, %p252
      %s255 = sadd.s32 %s254, 1
      %p258 = scmp.eq.s32.totalorder %s33, 3
      %p259 = scmp.ne.s32.totalorder %s254, %s256
      %p260 = scmp.eq.s32.totalorder %s33, 0
      %p261 = por %p259, %p260
      %p262 = scmp.ne.s32.totalorder %s254, %s256
      %p263 = scmp.eq.s32.totalorder %s38, 3
      %p264 = por %p262, %p263
      %p265 = scmp.ne.s32.totalorder %s256, %s257
      %p266 = scmp.eq.s32.totalorder %s38, 0
      %p267 = por %p265, %p266
      %p268 = scmp.ne.s32.totalorder %s256, %s257
      %p269 = scmp.eq.s32.totalorder %s39, 3
      %p270 = por %p268, %p269
      %p272 = scmp.ne.s32.totalorder %s257, %s271
      %p273 = scmp.eq.s32.totalorder %s39, 0
      %p274 = por %p272, %p273
      %s276 = sadd.s32 %s275, 1
      %p279 = scmp.eq.s32.totalorder %s33, 3
      %p280 = scmp.ne.s32.totalorder %s275, %s277
      %p281 = scmp.eq.s32.totalorder %s33, 0
      %p282 = por %p280, %p281
      %p283 = scmp.ne.s32.totalorder %s275, %s277
      %p284 = scmp.eq.s32.totalorder %s38, 3
      %p285 = por %p283, %p284
      %p286 = scmp.ne.s32.totalorder %s277, %s278
      %p287 = scmp.eq.s32.totalorder %s38, 0
      %p288 = por %p286, %p287
      %p289 = scmp.ne.s32.totalorder %s277, %s278
      %p290 = scmp.eq.s32.totalorder %s39, 3
      %p291 = por %p289, %p290
      %p293 = scmp.ne.s32.totalorder %s278, %s292
      %p294 = scmp.eq.s32.totalorder %s39, 0
      %p295 = por %p293, %p294
      %s297 = sadd.s32 %s296, 1
      %p300 = scmp.eq.s32.totalorder %s33, 3
      %p301 = scmp.ne.s32.totalorder %s296, %s298
      %p302 = scmp.eq.s32.totalorder %s33, 0
      %p303 = por %p301, %p302
      %p304 = scmp.ne.s32.totalorder %s296, %s298
      %p305 = scmp.eq.s32.totalorder %s38, 3
      %p306 = por %p304, %p305
      %p307 = scmp.ne.s32.totalorder %s298, %s299
      %p308 = scmp.eq.s32.totalorder %s38, 0
      %p309 = por %p307, %p308
      %p310 = scmp.ne.s32.totalorder %s298, %s299
      %p311 = scmp.eq.s32.totalorder %s39, 3
      %p312 = por %p310, %p311
      %p314 = scmp.ne.s32.totalorder %s299, %s313
      %p315 = scmp.eq.s32.totalorder %s39, 0
      %p316 = por %p314, %p315
      %s318 = sadd.s32 %s317, 1
      %p321 = scmp.eq.s32.totalorder %s33, 3
      %p322 = scmp.ne.s32.totalorder %s317, %s319
      %p323 = scmp.eq.s32.totalorder %s33, 0
      %p324 = por %p322, %p323
      %p325 = scmp.ne.s32.totalorder %s317, %s319
      %p326 = scmp.eq.s32.totalorder %s38, 3
      %p327 = por %p325, %p326
      %p328 = scmp.ne.s32.totalorder %s319, %s320
      %p329 = scmp.eq.s32.totalorder %s38, 0
      %p330 = por %p328, %p329
      %p331 = scmp.ne.s32.totalorder %s319, %s320
      %p332 = scmp.eq.s32.totalorder %s39, 3
      %p333 = por %p331, %p332
      %p335 = scmp.ne.s32.totalorder %s320, %s334
      %p336 = scmp.eq.s32.totalorder %s39, 0
      %p337 = por %p335, %p336
      %s339 = sadd.s32 %s338, 1
      %p342 = scmp.eq.s32.totalorder %s33, 3
      %p343 = scmp.ne.s32.totalorder %s338, %s340
      %p344 = scmp.eq.s32.totalorder %s33, 0
      %p345 = por %p343, %p344
      %p346 = scmp.ne.s32.totalorder %s338, %s340
      %p347 = scmp.eq.s32.totalorder %s38, 3
      %p348 = por %p346, %p347
      %p349 = scmp.ne.s32.totalorder %s340, %s341
      %p350 = scmp.eq.s32.totalorder %s38, 0
      %p351 = por %p349, %p350
      %p352 = scmp.ne.s32.totalorder %s340, %s341
      %p353 = scmp.eq.s32.totalorder %s39, 3
      %p354 = por %p352, %p353
      %p356 = scmp.ne.s32.totalorder %s341, %s355
      %p357 = scmp.eq.s32.totalorder %s39, 0
      %p358 = por %p356, %p357
      %s360 = sadd.s32 %s359, 1
      %p363 = scmp.eq.s32.totalorder %s33, 3
      %p364 = scmp.ne.s32.totalorder %s359, %s361
      %p365 = scmp.eq.s32.totalorder %s33, 0
      %p366 = por %p364, %p365
      %p367 = scmp.ne.s32.totalorder %s359, %s361
      %p368 = scmp.eq.s32.totalorder %s38, 3
      %p369 = por %p367, %p368
      %p370 = scmp.ne.s32.totalorder %s361, %s362
      %p371 = scmp.eq.s32.totalorder %s38, 0
      %p372 = por %p370, %p371
      %p373 = scmp.ne.s32.totalorder %s361, %s362
      %p374 = scmp.eq.s32.totalorder %s39, 3
      %p375 = por %p373, %p374
      %p377 = scmp.ne.s32.totalorder %s362, %s376
      %p378 = scmp.eq.s32.totalorder %s39, 0
      %p379 = por %p377, %p378
      %s381 = sadd.s32 %s380, 1
      %p384 = scmp.eq.s32.totalorder %s33, 3
      %p385 = scmp.ne.s32.totalorder %s380, %s382
      %p386 = scmp.eq.s32.totalorder %s33, 0
      %p387 = por %p385, %p386
      %p388 = scmp.ne.s32.totalorder %s380, %s382
      %p389 = scmp.eq.s32.totalorder %s38, 3
      %p390 = por %p388, %p389
      %p391 = scmp.ne.s32.totalorder %s382, %s383
      %p392 = scmp.eq.s32.totalorder %s38, 0
      %p393 = por %p391, %p392
      %p394 = scmp.ne.s32.totalorder %s382, %s383
      %p395 = scmp.eq.s32.totalorder %s39, 3
      %p396 = por %p394, %p395
      %p398 = scmp.ne.s32.totalorder %s383, %s397
      %p399 = scmp.eq.s32.totalorder %s39, 0
      %p400 = por %p398, %p399
      %s401 = ssub.s32 %s40, %s52
      %s402 = ssub.s32 %s41, %s48
      %s403 = sor.u32 %s401, %s402
      %p404 = scmp.eq.s32.totalorder %s403, 0
      %s406 = sadd.s32 %s405, 1
      %s407 = scalar_select %p404, %s405, %s406
      %p410 = pneg %p404
      %p411 = scmp.eq.s32.totalorder %s33, 3
      %p412 = por %p410, %p411
      %p413 = scmp.ne.s32.totalorder %s405, %s408
      %p414 = scmp.eq.s32.totalorder %s33, 0
      %p415 = por %p413, %p414
      %p416 = scmp.ne.s32.totalorder %s405, %s408
      %p417 = scmp.eq.s32.totalorder %s38, 3
      %p418 = por %p416, %p417
      %p419 = scmp.ne.s32.totalorder %s408, %s409
      %p420 = scmp.eq.s32.totalorder %s38, 0
      %p421 = por %p419, %p420
      %p422 = scmp.ne.s32.totalorder %s408, %s409
      %p423 = scmp.eq.s32.totalorder %s39, 3
      %p424 = por %p422, %p423
      %p426 = scmp.ne.s32.totalorder %s409, %s425
      %p427 = scmp.eq.s32.totalorder %s39, 0
      %p428 = por %p426, %p427
      %p429 = scmp.le.s32.totalorder 1, %s33
      %p430 = scmp.lt.s32.totalorder %s33, 5
      %p431 = pnand %p429, %p430
      %p432 = pneg %p431
      // Predicated region
      $region9: #{tpu_custom_call.1} parent=5 // pred_check
        _
      $region10: #{tpu_custom_call.1} parent=5 // pred_check_branch
        %434 = sbr.rel (%p431) target = $region12
      $region11: #{tpu_custom_call.1} parent=5 // pred_region
        %s435 = ssub.s32 %s33, 1
        // Predicated region
        $region13: #{tpu_custom_call.1} parent=11 // pred_check
          %p436 = pneg %p120
        $region14: #{tpu_custom_call.1} parent=11 // pred_check_branch
          %438 = sbr.rel (%p436) target = $region16
        $region15: #{tpu_custom_call.1} parent=11 // pred_region
          %s440 = ssub.s32 1024, 1024
          %441 = vsyncadd [#allocation7], %s440
          %s442 = sshll.u32 [#allocation8], 4
          %s443 = int_to_ptr.vmem [resolvable:$true] %s442
          %448 = dma.hbm_to_vmem [thread:$0]  %s2, 1024, %s443, [#allocation7], 64, 64, 4
        $region16: #{tpu_custom_call.1} parent=11 // pred_fallthru
          _
        // Predicated region
        $region17: #{tpu_custom_call.1} parent=11 // pred_check
          %p449 = pneg %p141
        $region18: #{tpu_custom_call.1} parent=11 // pred_check_branch
          %451 = sbr.rel (%p449) target = $region20
        $region19: #{tpu_custom_call.1} parent=11 // pred_region
          _
        $region20: #{tpu_custom_call.1} parent=11 // pred_fallthru
          _
        // Predicated region
        $region21: #{tpu_custom_call.1} parent=11 // pred_check
          %p452 = pneg %p162
        $region22: #{tpu_custom_call.1} parent=11 // pred_check_branch
          %454 = sbr.rel (%p452) target = $region24
        $region23: #{tpu_custom_call.1} parent=11 // pred_region
          %s456 = ssub.s32 2048, 2048
          %457 = vsyncadd [#allocation10], %s456
          %s458 = sshll.u32 [#allocation9], 4
          %s459 = int_to_ptr.vmem [resolvable:$true] %s458
          %464 = dma.hbm_to_vmem [thread:$0]  %s4, 2048, %s459, [#allocation10], 128, 128, 8
        $region24: #{tpu_custom_call.1} parent=11 // pred_fallthru
          _
        // Predicated region
        $region25: #{tpu_custom_call.1} parent=11 // pred_check
          %p465 = pneg %p183
        $region26: #{tpu_custom_call.1} parent=11 // pred_check_branch
          %467 = sbr.rel (%p465) target = $region28
        $region27: #{tpu_custom_call.1} parent=11 // pred_region
          _
        $region28: #{tpu_custom_call.1} parent=11 // pred_fallthru
          _
        // Predicated region
        $region29: #{tpu_custom_call.1} parent=11 // pred_check
          %p468 = pneg %p204
        $region30: #{tpu_custom_call.1} parent=11 // pred_check_branch
          %470 = sbr.rel (%p468) target = $region32
        $region31: #{tpu_custom_call.1} parent=11 // pred_region
          %s472 = ssub.s32 1024, 1024
          %473 = vsyncadd [#allocation10], %s472
          %s474 = sshll.u32 [#allocation11], 4
          %s475 = int_to_ptr.vmem [resolvable:$true] %s474
          %480 = dma.hbm_to_vmem [thread:$0]  %s6, 1024, %s475, [#allocation10], 64, 64, 4
        $region32: #{tpu_custom_call.1} parent=11 // pred_fallthru
          _
        // Predicated region
        $region33: #{tpu_custom_call.1} parent=11 // pred_check
          %p481 = pneg %p225
        $region34: #{tpu_custom_call.1} parent=11 // pred_check_branch
          %483 = sbr.rel (%p481) target = $region36
        $region35: #{tpu_custom_call.1} parent=11 // pred_region
          _
        $region36: #{tpu_custom_call.1} parent=11 // pred_fallthru
          _
        // Predicated region
        $region37: #{tpu_custom_call.1} parent=11 // pred_check
          %p484 = pneg %p246
        $region38: #{tpu_custom_call.1} parent=11 // pred_check_branch
          %486 = sbr.rel (%p484) target = $region40
        $region39: #{tpu_custom_call.1} parent=11 // pred_region
          %s488 = ssub.s32 2048, 2048
          %489 = vsyncadd [#allocation13], %s488
          %s490 = sshll.u32 [#allocation12], 4
          %s491 = int_to_ptr.vmem [resolvable:$true] %s490
          %496 = dma.hbm_to_vmem [thread:$0]  %s8, 2048, %s491, [#allocation13], 128, 128, 8
        $region40: #{tpu_custom_call.1} parent=11 // pred_fallthru
          _
        // Predicated region
        $region41: #{tpu_custom_call.1} parent=11 // pred_check
          %p497 = pneg %p267
        $region42: #{tpu_custom_call.1} parent=11 // pred_check_branch
          %499 = sbr.rel (%p497) target = $region44
        $region43: #{tpu_custom_call.1} parent=11 // pred_region
          _
        $region44: #{tpu_custom_call.1} parent=11 // pred_fallthru
          _
        // Predicated region
        $region45: #{tpu_custom_call.1} parent=11 // pred_check
          %p500 = pneg %p288
        $region46: #{tpu_custom_call.1} parent=11 // pred_check_branch
          %502 = sbr.rel (%p500) target = $region48
        $region47: #{tpu_custom_call.1} parent=11 // pred_region
          %s504 = ssub.s32 2048, 2048
          %505 = vsyncadd [#allocation13], %s504
          %s506 = sshll.u32 [#allocation14], 4
          %s507 = int_to_ptr.vmem [resolvable:$true] %s506
          %512 = dma.hbm_to_vmem [thread:$0]  %s10, 2048, %s507, [#allocation13], 64, 64, 4
        $region48: #{tpu_custom_call.1} parent=11 // pred_fallthru
          _
        // Predicated region
        $region49: #{tpu_custom_call.1} parent=11 // pred_check
          %p513 = pneg %p309
        $region50: #{tpu_custom_call.1} parent=11 // pred_check_branch
          %515 = sbr.rel (%p513) target = $region52
        $region51: #{tpu_custom_call.1} parent=11 // pred_region
          _
        $region52: #{tpu_custom_call.1} parent=11 // pred_fallthru
          _
        // Predicated region
        $region53: #{tpu_custom_call.1} parent=11 // pred_check
          %p516 = pneg %p330
        $region54: #{tpu_custom_call.1} parent=11 // pred_check_branch
          %518 = sbr.rel (%p516) target = $region56
        $region55: #{tpu_custom_call.1} parent=11 // pred_region
          _
        $region56: #{tpu_custom_call.1} parent=11 // pred_fallthru
          _
        // Predicated region
        $region57: #{tpu_custom_call.1} parent=11 // pred_check
          %p519 = pneg %p351
        $region58: #{tpu_custom_call.1} parent=11 // pred_check_branch
          %521 = sbr.rel (%p519) target = $region60
        $region59: #{tpu_custom_call.1} parent=11 // pred_region
          _
        $region60: #{tpu_custom_call.1} parent=11 // pred_fallthru
          _
        // Predicated region
        $region61: #{tpu_custom_call.1} parent=11 // pred_check
          %p522 = pneg %p372
        $region62: #{tpu_custom_call.1} parent=11 // pred_check_branch
          %524 = sbr.rel (%p522) target = $region64
        $region63: #{tpu_custom_call.1} parent=11 // pred_region
          _
        $region64: #{tpu_custom_call.1} parent=11 // pred_fallthru
          _
        // Predicated region
        $region65: #{tpu_custom_call.1} parent=11 // pred_check
          %p525 = pneg %p393
        $region66: #{tpu_custom_call.1} parent=11 // pred_check_branch
          %527 = sbr.rel (%p525) target = $region68
        $region67: #{tpu_custom_call.1} parent=11 // pred_region
          _
        $region68: #{tpu_custom_call.1} parent=11 // pred_fallthru
          _
      $region12: #{tpu_custom_call.1} parent=5 // pred_fallthru
        _
      %p528 = scmp.lt.s32.totalorder %s33, 4
      // Predicated region
      $region69: #{tpu_custom_call.1} parent=5 // pred_check
        %p529 = pneg %p528
      $region70: #{tpu_custom_call.1} parent=5 // pred_check_branch
        %531 = sbr.rel (%p529) target = $region72
      $region71: #{tpu_custom_call.1} parent=5 // pred_region
        // Predicated region
        $region73: #{tpu_custom_call.1} parent=71 // pred_check
          %p532 = pneg %p65
        $region74: #{tpu_custom_call.1} parent=71 // pred_check_branch
          %534 = sbr.rel (%p532) target = $region76
        $region75: #{tpu_custom_call.1} parent=71 // pred_region
          %s535 = sand.u32 %s55, 1
          %s536 = scalar_lea.sflag [#allocation4], %s535
          %s537 = sand.u32 %s55, 1
          %s538 = smul.addr %s537, 64
          %s539 = scalar_lea.vmem [#allocation3], %s538
          %s541 = ssub.s32 1024, 1024
          %542 = vsyncadd %s536, %s541
          %s543 = smul.addr %s40, 16
          %s544 = smul.addr %s543, 64
          %s545 = scalar_lea.hbm %s0, %s544
          %s546 = sshll.u32 %s539, 4
          %s547 = int_to_ptr.vmem [resolvable:$true] %s546
          %552 = dma.hbm_to_vmem [thread:$0]  %s545, 1024, %s547, %s536, 64, 64, 4
        $region76: #{tpu_custom_call.1} parent=71 // pred_fallthru
          _
        // Predicated region
        $region77: #{tpu_custom_call.1} parent=71 // pred_check
          %p553 = pneg %p93
        $region78: #{tpu_custom_call.1} parent=71 // pred_check_branch
          %555 = sbr.rel (%p553) target = $region80
        $region79: #{tpu_custom_call.1} parent=71 // pred_region
          %s556 = sand.u32 %s33, 1
          %s557 = scalar_lea.sflag [#allocation7], %s556
          %s558 = sand.u32 %s83, 1
          %s559 = smul.addr %s558, 64
          %s560 = scalar_lea.vmem [#allocation6], %s559
          %s561 = smul.u32 8, %s41
          %s563 = ssub.s32 1024, 1024
          %564 = vsyncadd %s557, %s563
          %s565 = smul.addr %s40, 16
          %s566 = sadd.s32 %s561, %s565
          %s567 = smul.addr %s566, 128
          %s568 = scalar_lea.hbm %s1, %s567
          %s569 = sshll.u32 %s560, 4
          %s570 = int_to_ptr.vmem [resolvable:$true] %s569
          %575 = dma.hbm_to_vmem [thread:$0]  %s568, 1024, %s570, %s557, 128, 128, 8
        $region80: #{tpu_custom_call.1} parent=71 // pred_fallthru
          _
      $region72: #{tpu_custom_call.1} parent=5 // pred_fallthru
        _
      %p576 = scmp.le.s32.totalorder 1, %s33
      %p577 = scmp.lt.s32.totalorder %s33, 5
      %p578 = pnand %p576, %p577
      %p579 = pneg %p578
      // Predicated region
      $region81: #{tpu_custom_call.1} parent=5 // pred_check
        _
      $region82: #{tpu_custom_call.1} parent=5 // pred_check_branch
        %581 = sbr.rel (%p578) target = $region84
      $region83: #{tpu_custom_call.1} parent=5 // pred_region
        %s582 = ssub.s32 %s33, 1
        %s583 = sand.u32 %s58, 1
        %s584 = scalar_lea.sflag [#allocation4], %s583
        %s585 = sand.u32 %s58, 1
        %s586 = smul.addr %s585, 64
        %s587 = scalar_lea.vmem [#allocation3], %s586
        // Predicated region
        $region85: #{tpu_custom_call.1} parent=83 // pred_check
          %p588 = pneg %p71
        $region86: #{tpu_custom_call.1} parent=83 // pred_check_branch
          %590 = sbr.rel (%p588) target = $region88
        $region87: #{tpu_custom_call.1} parent=83 // pred_region
          %591 = dma.done %s584, 1024
        $region88: #{tpu_custom_call.1} parent=83 // pred_fallthru
          _
        %s592 = sand.u32 %s38, 1
        %s593 = scalar_lea.sflag [#allocation7], %s592
        %s594 = sand.u32 %s86, 1
        %s595 = smul.addr %s594, 64
        %s596 = scalar_lea.vmem [#allocation6], %s595
        // Predicated region
        $region89: #{tpu_custom_call.1} parent=83 // pred_check
          %p597 = pneg %p99
        $region90: #{tpu_custom_call.1} parent=83 // pred_check_branch
          %599 = sbr.rel (%p597) target = $region92
        $region91: #{tpu_custom_call.1} parent=83 // pred_region
          %600 = dma.done %s593, 1024
        $region92: #{tpu_custom_call.1} parent=83 // pred_fallthru
          _
        // Predicated region
        $region93: #{tpu_custom_call.1} parent=83 // pred_check
          %p601 = pneg %p120
        $region94: #{tpu_custom_call.1} parent=83 // pred_check_branch
          %603 = sbr.rel (%p601) target = $region96
        $region95: #{tpu_custom_call.1} parent=83 // pred_region
          %604 = dma.done [#allocation7], 1024
        $region96: #{tpu_custom_call.1} parent=83 // pred_fallthru
          _
        // Predicated region
        $region97: #{tpu_custom_call.1} parent=83 // pred_check
          %p605 = pneg %p162
        $region98: #{tpu_custom_call.1} parent=83 // pred_check_branch
          %607 = sbr.rel (%p605) target = $region100
        $region99: #{tpu_custom_call.1} parent=83 // pred_region
          %608 = dma.done [#allocation10], 2048
        $region100: #{tpu_custom_call.1} parent=83 // pred_fallthru
          _
        // Predicated region
        $region101: #{tpu_custom_call.1} parent=83 // pred_check
          %p609 = pneg %p204
        $region102: #{tpu_custom_call.1} parent=83 // pred_check_branch
          %611 = sbr.rel (%p609) target = $region104
        $region103: #{tpu_custom_call.1} parent=83 // pred_region
          %612 = dma.done [#allocation10], 1024
        $region104: #{tpu_custom_call.1} parent=83 // pred_fallthru
          _
        // Predicated region
        $region105: #{tpu_custom_call.1} parent=83 // pred_check
          %p613 = pneg %p246
        $region106: #{tpu_custom_call.1} parent=83 // pred_check_branch
          %615 = sbr.rel (%p613) target = $region108
        $region107: #{tpu_custom_call.1} parent=83 // pred_region
          %616 = dma.done [#allocation13], 2048
        $region108: #{tpu_custom_call.1} parent=83 // pred_fallthru
          _
        // Predicated region
        $region109: #{tpu_custom_call.1} parent=83 // pred_check
          %p617 = pneg %p288
        $region110: #{tpu_custom_call.1} parent=83 // pred_check_branch
          %619 = sbr.rel (%p617) target = $region112
        $region111: #{tpu_custom_call.1} parent=83 // pred_region
          %620 = dma.done [#allocation13], 2048
        $region112: #{tpu_custom_call.1} parent=83 // pred_fallthru
          _
        %s621 = sand.u32 %s58, 1
        %s622 = scalar_lea.sflag [#allocation4], %s621
        %s623 = sand.u32 %s58, 1
        %s624 = smul.addr %s623, 64
        %s625 = scalar_lea.vmem [#allocation3], %s624
        %p626 = pneg %p71
        %p627 = pneg %p68
        %s628 = sand.u32 %s38, 1
        %s629 = scalar_lea.sflag [#allocation7], %s628
        %s630 = sand.u32 %s86, 1
        %s631 = smul.addr %s630, 64
        %s632 = scalar_lea.vmem [#allocation6], %s631
        %p633 = pneg %p99
        %p634 = pneg %p96
        %p635 = pneg %p120
        %p636 = pneg %p117
        %p637 = pneg %p141
        %p638 = pneg %p138
        %p639 = pneg %p162
        %p640 = pneg %p159
        %p641 = pneg %p183
        %p642 = pneg %p180
        %p643 = pneg %p204
        %p644 = pneg %p201
        %p645 = pneg %p225
        %p646 = pneg %p222
        %p647 = pneg %p246
        %p648 = pneg %p243
        %p649 = pneg %p267
        %p650 = pneg %p264
        %p651 = pneg %p288
        %p652 = pneg %p285
        %p653 = pneg %p309
        %p654 = pneg %p306
        %p655 = pneg %p330
        %p656 = pneg %p327
        %p657 = pneg %p351
        %p658 = pneg %p348
        %p659 = pneg %p372
        %p660 = pneg %p369
        %p661 = pneg %p393
        %p662 = pneg %p390
        %p663 = pneg %p421
        %p664 = pneg %p418
        %s665 = sand.u32 %s408, 1
        %s666 = scalar_lea.sflag [#allocation5], %s665
        %s667 = sand.u32 %s408, 1
        %s668 = smul.addr %s667, 64
        %s669 = scalar_lea.vmem [#allocation15], %s668
        %s670 = smul.u32 8, %s43
        %s671 = smul.u32 8, %s43
        %p673 = scmp.eq.s32.totalorder %s43, 0
        // Predicated region
        $region113: #{tpu_custom_call.1} parent=83 // pred_check
          %p674 = pneg %p673
        $region114: #{tpu_custom_call.1} parent=83 // pred_check_branch
          %676 = sbr.rel (%p674) target = $region116
        $region115: #{tpu_custom_call.1} parent=83 // pred_region
          %v677 = vld [vmem:[%s587] sm:$0xf]
          %v678 = vld [vmem:[%s587 + $0x4] sm:$0xf]
          %v679 = vld [vmem:[%s587 + $0x8] sm:$0xf]
          %v680 = vld [vmem:[%s587 + $0xc] sm:$0xf]
          %v681 = vld [vmem:[%s587 + $0x10] sm:$0xf]
          %v682 = vld [vmem:[%s587 + $0x14] sm:$0xf]
          %v683 = vld [vmem:[%s587 + $0x18] sm:$0xf]
          %v684 = vld [vmem:[%s587 + $0x1c] sm:$0xf]
          %v685 = vld [vmem:[%s587 + $0x20] sm:$0xf]
          %v686 = vld [vmem:[%s587 + $0x24] sm:$0xf]
          %v687 = vld [vmem:[%s587 + $0x28] sm:$0xf]
          %v688 = vld [vmem:[%s587 + $0x2c] sm:$0xf]
          %v689 = vld [vmem:[%s587 + $0x30] sm:$0xf]
          %v690 = vld [vmem:[%s587 + $0x34] sm:$0xf]
          %v691 = vld [vmem:[%s587 + $0x38] sm:$0xf]
          %v692 = vld [vmem:[%s587 + $0x3c] sm:$0xf]
          %v693 = vld [vmem:[#allocation9] sm:$0xff]
          %v694 = vld [vmem:[#allocation9 + $0x8] sm:$0xff]
          %v695 = vld [vmem:[#allocation9 + $0x10] sm:$0xff]
          %v696 = vld [vmem:[#allocation9 + $0x18] sm:$0xff]
          %v697 = vld [vmem:[#allocation9 + $0x20] sm:$0xff]
          %v698 = vld [vmem:[#allocation9 + $0x28] sm:$0xff]
          %v699 = vld [vmem:[#allocation9 + $0x30] sm:$0xff]
          %v700 = vld [vmem:[#allocation9 + $0x38] sm:$0xff]
          %v701 = vld [vmem:[#allocation9 + $0x40] sm:$0xff]
          %v702 = vld [vmem:[#allocation9 + $0x48] sm:$0xff]
          %v703 = vld [vmem:[#allocation9 + $0x50] sm:$0xff]
          %v704 = vld [vmem:[#allocation9 + $0x58] sm:$0xff]
          %v705 = vld [vmem:[#allocation9 + $0x60] sm:$0xff]
          %v706 = vld [vmem:[#allocation9 + $0x68] sm:$0xff]
          %v707 = vld [vmem:[#allocation9 + $0x70] sm:$0xff]
          %v708 = vld [vmem:[#allocation9 + $0x78] sm:$0xff]
          %v709 = vld [vmem:[%s5] sm:$0x3]
          %v711 = vlaneseq
          %v712 = vshrl.u32 %v711, 7
          %v713 = vsub.s32 0, %v712
          %v714 = vrot.slane %v709, %v713
          %v715 = vlaneseq
          %v716 = vshrl.u32 %v715, 7
          %v717 = vsub.s32 1, %v716
          %v718 = vrot.slane %v709, %v717
          %v737 = vunpack.c.l.b16 %v677
          %v738 = vunpack.c.l.b16 %v678
          %v739 = vunpack.c.l.b16 %v679
          %v740 = vunpack.c.l.b16 %v680
          %v741 = vunpack.c.l.b16 %v681
          %v742 = vunpack.c.l.b16 %v682
          %v743 = vunpack.c.l.b16 %v683
          %v744 = vunpack.c.l.b16 %v684
          %v745 = vunpack.c.l.b16 %v685
          %v746 = vunpack.c.l.b16 %v686
          %v747 = vunpack.c.l.b16 %v687
          %v748 = vunpack.c.l.b16 %v688
          %v749 = vunpack.c.l.b16 %v689
          %v750 = vunpack.c.l.b16 %v690
          %v751 = vunpack.c.l.b16 %v691
          %v752 = vunpack.c.l.b16 %v692
          %v753 = vpack.c.b16 %v738, %v737
          %v754 = vpack.c.b16 %v740, %v739
          %v755 = vpack.c.b16 %v742, %v741
          %v756 = vpack.c.b16 %v744, %v743
          %v757 = vpack.c.b16 %v746, %v745
          %v758 = vpack.c.b16 %v748, %v747
          %v759 = vpack.c.b16 %v750, %v749
          %v760 = vpack.c.b16 %v752, %v751
          %v785 = vunpack.c.l.b16 %v693
          %v786 = vunpack.c.h.b16 %v693
          %v787 = vunpack.c.l.b16 %v694
          %v788 = vunpack.c.h.b16 %v694
          %v789 = vunpack.c.l.b16 %v695
          %v790 = vunpack.c.h.b16 %v695
          %v791 = vunpack.c.l.b16 %v696
          %v792 = vunpack.c.h.b16 %v696
          %v793 = vunpack.c.l.b16 %v697
          %v794 = vunpack.c.h.b16 %v697
          %v795 = vunpack.c.l.b16 %v698
          %v796 = vunpack.c.h.b16 %v698
          %v797 = vunpack.c.l.b16 %v699
          %v798 = vunpack.c.h.b16 %v699
          %v799 = vunpack.c.l.b16 %v700
          %v800 = vunpack.c.h.b16 %v700
          %v801 = vunpack.c.l.b16 %v701
          %v802 = vunpack.c.h.b16 %v701
          %v803 = vunpack.c.l.b16 %v702
          %v804 = vunpack.c.h.b16 %v702
          %v805 = vunpack.c.l.b16 %v703
          %v806 = vunpack.c.h.b16 %v703
          %v807 = vunpack.c.l.b16 %v704
          %v808 = vunpack.c.h.b16 %v704
          %v809 = vunpack.c.l.b16 %v705
          %v810 = vunpack.c.h.b16 %v705
          %v811 = vunpack.c.l.b16 %v706
          %v812 = vunpack.c.h.b16 %v706
          %v813 = vunpack.c.l.b16 %v707
          %v814 = vunpack.c.h.b16 %v707
          %v815 = vunpack.c.l.b16 %v708
          %v816 = vunpack.c.h.b16 %v708
          %v817 = vpack.c.b16 %v787, %v785
          %v818 = vpack.c.b16 %v788, %v786
          %v819 = vpack.c.b16 %v791, %v789
          %v820 = vpack.c.b16 %v792, %v790
          %v821 = vpack.c.b16 %v795, %v793
          %v822 = vpack.c.b16 %v796, %v794
          %v823 = vpack.c.b16 %v799, %v797
          %v824 = vpack.c.b16 %v800, %v798
          %v825 = vpack.c.b16 %v803, %v801
          %v826 = vpack.c.b16 %v804, %v802
          %v827 = vpack.c.b16 %v807, %v805
          %v828 = vpack.c.b16 %v808, %v806
          %v829 = vpack.c.b16 %v811, %v809
          %v830 = vpack.c.b16 %v812, %v810
          %v831 = vpack.c.b16 %v815, %v813
          %v832 = vpack.c.b16 %v816, %v814
          %849 = vmatprep.subr.bf16.mxu0 %v832
          %850 = vmatpush1.bf16.msra.mxu0 %v831
          %851 = vmatprep.subr.bf16.mxu0 %v830
          %852 = vmatpush1.bf16.msra.mxu0 %v829
          %853 = vmatprep.subr.bf16.mxu0 %v828
          %854 = vmatpush1.bf16.msra.mxu0 %v827
          %855 = vmatprep.subr.bf16.mxu0 %v826
          %856 = vmatpush1.bf16.msra.mxu0 %v825
          %857 = vmatprep.subr.bf16.mxu0 %v824
          %858 = vmatpush1.bf16.msra.mxu0 %v823
          %859 = vmatprep.subr.bf16.mxu0 %v822
          %860 = vmatpush1.bf16.msra.mxu0 %v821
          %861 = vmatprep.subr.bf16.mxu0 %v820
          %862 = vmatpush1.bf16.msra.mxu0 %v819
          %863 = vmatprep.subr.bf16.mxu0 %v818
          %864 = vmatpush1.bf16.msra.mxu0 %v817
          %865 = vmatprep.subr.bf16.mxu0 0
          %866 = vmatpush2.bf16.msra.mxu0 0
          %867 = vmatprep.subr.bf16.mxu0 0
          %868 = vmatpush2.bf16.msra.mxu0 0
          %869 = vmatprep.subr.bf16.mxu0 0
          %870 = vmatpush2.bf16.msra.mxu0 0
          %871 = vmatprep.subr.bf16.mxu0 0
          %872 = vmatpush2.bf16.msra.mxu0 0
          %873 = vmatprep.subr.bf16.mxu0 0
          %874 = vmatpush2.bf16.msra.mxu0 0
          %875 = vmatprep.subr.bf16.mxu0 0
          %876 = vmatpush2.bf16.msra.mxu0 0
          %877 = vmatprep.subr.bf16.mxu0 0
          %878 = vmatpush2.bf16.msra.mxu0 0
          %879 = vmatprep.subr.bf16.mxu0 0
          %880 = vmatpush2.bf16.msra.mxu0 0
          %881 = vmatprep.mubr.bf16.mxu0 0
          %882 = vmatmul.mubr.bf16.gmra.mxu0 %v753
          %v883 = vpop.f32.mrf.mxu0
          %v884 = vadd.f32 %v714, %v883
          %v885 = vpop.f32.mrf.mxu0
          %v886 = vadd.f32 %v718, %v885
          %v887 = vpop.f32.mrf.mxu0
          %v888 = vadd.f32 %v714, %v887
          %v889 = vpop.f32.mrf.mxu0
          %v890 = vadd.f32 %v718, %v889
          %891 = vmatprep.mubr.bf16.mxu0 0
          %892 = vmatmul.mubr.bf16.gmra.mxu0 %v754
          %v893 = vpop.f32.mrf.mxu0
          %v894 = vadd.f32 %v714, %v893
          %v895 = vpop.f32.mrf.mxu0
          %v896 = vadd.f32 %v718, %v895
          %v897 = vpop.f32.mrf.mxu0
          %v898 = vadd.f32 %v714, %v897
          %v899 = vpop.f32.mrf.mxu0
          %v900 = vadd.f32 %v718, %v899
          %901 = vmatprep.mubr.bf16.mxu0 0
          %902 = vmatmul.mubr.bf16.gmra.mxu0 %v755
          %v903 = vpop.f32.mrf.mxu0
          %v904 = vadd.f32 %v714, %v903
          %v905 = vpop.f32.mrf.mxu0
          %v906 = vadd.f32 %v718, %v905
          %v907 = vpop.f32.mrf.mxu0
          %v908 = vadd.f32 %v714, %v907
          %v909 = vpop.f32.mrf.mxu0
          %v910 = vadd.f32 %v718, %v909
          %911 = vmatprep.mubr.bf16.mxu0 0
          %912 = vmatmul.mubr.bf16.gmra.mxu0 %v756
          %v913 = vpop.f32.mrf.mxu0
          %v914 = vadd.f32 %v714, %v913
          %v915 = vpop.f32.mrf.mxu0
          %v916 = vadd.f32 %v718, %v915
          %v917 = vpop.f32.mrf.mxu0
          %v918 = vadd.f32 %v714, %v917
          %v919 = vpop.f32.mrf.mxu0
          %v920 = vadd.f32 %v718, %v919
          %921 = vmatprep.mubr.bf16.mxu0 0
          %922 = vmatmul.mubr.bf16.gmra.mxu0 %v757
          %v923 = vpop.f32.mrf.mxu0
          %v924 = vadd.f32 %v714, %v923
          %v925 = vpop.f32.mrf.mxu0
          %v926 = vadd.f32 %v718, %v925
          %v927 = vpop.f32.mrf.mxu0
          %v928 = vadd.f32 %v714, %v927
          %v929 = vpop.f32.mrf.mxu0
          %v930 = vadd.f32 %v718, %v929
          %931 = vmatprep.mubr.bf16.mxu0 0
          %932 = vmatmul.mubr.bf16.gmra.mxu0 %v758
          %v933 = vpop.f32.mrf.mxu0
          %v934 = vadd.f32 %v714, %v933
          %v935 = vpop.f32.mrf.mxu0
          %v936 = vadd.f32 %v718, %v935
          %v937 = vpop.f32.mrf.mxu0
          %v938 = vadd.f32 %v714, %v937
          %v939 = vpop.f32.mrf.mxu0
          %v940 = vadd.f32 %v718, %v939
          %941 = vmatprep.mubr.bf16.mxu0 0
          %942 = vmatmul.mubr.bf16.gmra.mxu0 %v759
          %v943 = vpop.f32.mrf.mxu0
          %v944 = vadd.f32 %v714, %v943
          %v945 = vpop.f32.mrf.mxu0
          %v946 = vadd.f32 %v718, %v945
          %v947 = vpop.f32.mrf.mxu0
          %v948 = vadd.f32 %v714, %v947
          %v949 = vpop.f32.mrf.mxu0
          %v950 = vadd.f32 %v718, %v949
          %951 = vmatprep.mubr.bf16.mxu0 0
          %952 = vmatmul.mubr.bf16.gmra.mxu0 %v760
          %v953 = vpop.f32.mrf.mxu0
          %v954 = vadd.f32 %v714, %v953
          %v955 = vpop.f32.mrf.mxu0
          %v956 = vadd.f32 %v718, %v955
          %v957 = vpop.f32.mrf.mxu0
          %v958 = vadd.f32 %v714, %v957
          %v959 = vpop.f32.mrf.mxu0
          %v960 = vadd.f32 %v718, %v959
          %961 = vdwg.mxu0
          %v962 = vpack.c.bf16 %v888, %v884
          %v963 = vpack.c.bf16 %v890, %v886
          %v964 = vpack.c.bf16 %v898, %v894
          %v965 = vpack.c.bf16 %v900, %v896
          %v966 = vpack.c.bf16 %v908, %v904
          %v967 = vpack.c.bf16 %v910, %v906
          %v968 = vpack.c.bf16 %v918, %v914
          %v969 = vpack.c.bf16 %v920, %v916
          %v970 = vpack.c.bf16 %v928, %v924
          %v971 = vpack.c.bf16 %v930, %v926
          %v972 = vpack.c.bf16 %v938, %v934
          %v973 = vpack.c.bf16 %v940, %v936
          %v974 = vpack.c.bf16 %v948, %v944
          %v975 = vpack.c.bf16 %v950, %v946
          %v976 = vpack.c.bf16 %v958, %v954
          %v977 = vpack.c.bf16 %v960, %v956
          %v994 = vunpack.c.l.b16 %v962
          %v995 = vunpack.c.l.b16 %v963
          %v996 = vunpack.c.h.b16 %v962
          %v997 = vunpack.c.h.b16 %v963
          %v998 = vunpack.c.l.b16 %v964
          %v999 = vunpack.c.l.b16 %v965
          %v1000 = vunpack.c.h.b16 %v964
          %v1001 = vunpack.c.h.b16 %v965
          %v1002 = vunpack.c.l.b16 %v966
          %v1003 = vunpack.c.l.b16 %v967
          %v1004 = vunpack.c.h.b16 %v966
          %v1005 = vunpack.c.h.b16 %v967
          %v1006 = vunpack.c.l.b16 %v968
          %v1007 = vunpack.c.l.b16 %v969
          %v1008 = vunpack.c.h.b16 %v968
          %v1009 = vunpack.c.h.b16 %v969
          %v1010 = vunpack.c.l.b16 %v970
          %v1011 = vunpack.c.l.b16 %v971
          %v1012 = vunpack.c.h.b16 %v970
          %v1013 = vunpack.c.h.b16 %v971
          %v1014 = vunpack.c.l.b16 %v972
          %v1015 = vunpack.c.l.b16 %v973
          %v1016 = vunpack.c.h.b16 %v972
          %v1017 = vunpack.c.h.b16 %v973
          %v1018 = vunpack.c.l.b16 %v974
          %v1019 = vunpack.c.l.b16 %v975
          %v1020 = vunpack.c.h.b16 %v974
          %v1021 = vunpack.c.h.b16 %v975
          %v1022 = vunpack.c.l.b16 %v976
          %v1023 = vunpack.c.l.b16 %v977
          %v1024 = vunpack.c.h.b16 %v976
          %v1025 = vunpack.c.h.b16 %v977
          %v1026 = vpack.c.b16 %v995, %v994
          %v1027 = vpack.c.b16 %v997, %v996
          %v1028 = vpack.c.b16 %v999, %v998
          %v1029 = vpack.c.b16 %v1001, %v1000
          %v1030 = vpack.c.b16 %v1003, %v1002
          %v1031 = vpack.c.b16 %v1005, %v1004
          %v1032 = vpack.c.b16 %v1007, %v1006
          %v1033 = vpack.c.b16 %v1009, %v1008
          %v1034 = vpack.c.b16 %v1011, %v1010
          %v1035 = vpack.c.b16 %v1013, %v1012
          %v1036 = vpack.c.b16 %v1015, %v1014
          %v1037 = vpack.c.b16 %v1017, %v1016
          %v1038 = vpack.c.b16 %v1019, %v1018
          %v1039 = vpack.c.b16 %v1021, %v1020
          %v1040 = vpack.c.b16 %v1023, %v1022
          %v1041 = vpack.c.b16 %v1025, %v1024
          %1058 = vst [vmem:[#allocation2] sm:$0xff] %v1026
          %1059 = vst [vmem:[#allocation2 + $0x8] sm:$0xff] %v1027
          %1060 = vst [vmem:[#allocation2 + $0x10] sm:$0xff] %v1028
          %1061 = vst [vmem:[#allocation2 + $0x18] sm:$0xff] %v1029
          %1062 = vst [vmem:[#allocation2 + $0x20] sm:$0xff] %v1030
          %1063 = vst [vmem:[#allocation2 + $0x28] sm:$0xff] %v1031
          %1064 = vst [vmem:[#allocation2 + $0x30] sm:$0xff] %v1032
          %1065 = vst [vmem:[#allocation2 + $0x38] sm:$0xff] %v1033
          %1066 = vst [vmem:[#allocation2 + $0x40] sm:$0xff] %v1034
          %1067 = vst [vmem:[#allocation2 + $0x48] sm:$0xff] %v1035
          %1068 = vst [vmem:[#allocation2 + $0x50] sm:$0xff] %v1036
          %1069 = vst [vmem:[#allocation2 + $0x58] sm:$0xff] %v1037
          %1070 = vst [vmem:[#allocation2 + $0x60] sm:$0xff] %v1038
          %1071 = vst [vmem:[#allocation2 + $0x68] sm:$0xff] %v1039
          %1072 = vst [vmem:[#allocation2 + $0x70] sm:$0xff] %v1040
          %1073 = vst [vmem:[#allocation2 + $0x78] sm:$0xff] %v1041
        $region116: #{tpu_custom_call.1} parent=83 // pred_fallthru
          _
        %v1074 = vld [vmem:[%s596] sm:$0xff]
        %v1075 = vld [vmem:[%s596 + $0x8] sm:$0xff]
        %v1076 = vld [vmem:[%s596 + $0x10] sm:$0xff]
        %v1077 = vld [vmem:[%s596 + $0x18] sm:$0xff]
        %v1078 = vld [vmem:[%s596 + $0x20] sm:$0xff]
        %v1079 = vld [vmem:[%s596 + $0x28] sm:$0xff]
        %v1080 = vld [vmem:[%s596 + $0x30] sm:$0xff]
        %v1081 = vld [vmem:[%s596 + $0x38] sm:$0xff]
        %v1082 = vpack.c.bf16 %v1075, %v1074
        %v1083 = vpack.c.bf16 %v1077, %v1076
        %v1084 = vpack.c.bf16 %v1079, %v1078
        %v1085 = vpack.c.bf16 %v1081, %v1080
        %v1086 = vld [vmem:[#allocation8] sm:$0xf]
        %v1087 = vld [vmem:[#allocation8 + $0x4] sm:$0xf]
        %v1088 = vld [vmem:[#allocation8 + $0x8] sm:$0xf]
        %v1089 = vld [vmem:[#allocation8 + $0xc] sm:$0xf]
        %v1090 = vld [vmem:[#allocation8 + $0x10] sm:$0xf]
        %v1091 = vld [vmem:[#allocation8 + $0x14] sm:$0xf]
        %v1092 = vld [vmem:[#allocation8 + $0x18] sm:$0xf]
        %v1093 = vld [vmem:[#allocation8 + $0x1c] sm:$0xf]
        %v1094 = vld [vmem:[#allocation8 + $0x20] sm:$0xf]
        %v1095 = vld [vmem:[#allocation8 + $0x24] sm:$0xf]
        %v1096 = vld [vmem:[#allocation8 + $0x28] sm:$0xf]
        %v1097 = vld [vmem:[#allocation8 + $0x2c] sm:$0xf]
        %v1098 = vld [vmem:[#allocation8 + $0x30] sm:$0xf]
        %v1099 = vld [vmem:[#allocation8 + $0x34] sm:$0xf]
        %v1100 = vld [vmem:[#allocation8 + $0x38] sm:$0xf]
        %v1101 = vld [vmem:[#allocation8 + $0x3c] sm:$0xf]
        %v1102 = vld [vmem:[%s3] sm:$0x1]
        %v1104 = vlaneseq
        %v1105 = vshrl.u32 %v1104, 7
        %v1106 = vsub.s32 0, %v1105
        %v1107 = vrot.slane %v1102, %v1106
        %v1125 = vunpack.c.l.b16 %v1086
        %v1126 = vunpack.c.l.b16 %v1087
        %v1127 = vunpack.c.l.b16 %v1088
        %v1128 = vunpack.c.l.b16 %v1089
        %v1129 = vunpack.c.l.b16 %v1090
        %v1130 = vunpack.c.l.b16 %v1091
        %v1131 = vunpack.c.l.b16 %v1092
        %v1132 = vunpack.c.l.b16 %v1093
        %v1133 = vunpack.c.l.b16 %v1094
        %v1134 = vunpack.c.l.b16 %v1095
        %v1135 = vunpack.c.l.b16 %v1096
        %v1136 = vunpack.c.l.b16 %v1097
        %v1137 = vunpack.c.l.b16 %v1098
        %v1138 = vunpack.c.l.b16 %v1099
        %v1139 = vunpack.c.l.b16 %v1100
        %v1140 = vunpack.c.l.b16 %v1101
        %v1141 = vpack.c.b16 %v1126, %v1125
        %v1142 = vpack.c.b16 %v1128, %v1127
        %v1143 = vpack.c.b16 %v1130, %v1129
        %v1144 = vpack.c.b16 %v1132, %v1131
        %v1145 = vpack.c.b16 %v1134, %v1133
        %v1146 = vpack.c.b16 %v1136, %v1135
        %v1147 = vpack.c.b16 %v1138, %v1137
        %v1148 = vpack.c.b16 %v1140, %v1139
        %1157 = vmatprep.subr.bf16.mxu0 0
        %1158 = vmatpush1.bf16.msra.mxu0 %v1148
        %1159 = vmatprep.subr.bf16.mxu0 0
        %1160 = vmatpush1.bf16.msra.mxu0 %v1147
        %1161 = vmatprep.subr.bf16.mxu0 0
        %1162 = vmatpush1.bf16.msra.mxu0 %v1146
        %1163 = vmatprep.subr.bf16.mxu0 0
        %1164 = vmatpush1.bf16.msra.mxu0 %v1145
        %1165 = vmatprep.subr.bf16.mxu0 0
        %1166 = vmatpush1.bf16.msra.mxu0 %v1144
        %1167 = vmatprep.subr.bf16.mxu0 0
        %1168 = vmatpush1.bf16.msra.mxu0 %v1143
        %1169 = vmatprep.subr.bf16.mxu0 0
        %1170 = vmatpush1.bf16.msra.mxu0 %v1142
        %1171 = vmatprep.subr.bf16.mxu0 0
        %1172 = vmatpush1.bf16.msra.mxu0 %v1141
        %1173 = vmatprep.subr.bf16.mxu0 0
        %1174 = vmatpush2.bf16.msra.mxu0 0
        %1175 = vmatprep.subr.bf16.mxu0 0
        %1176 = vmatpush2.bf16.msra.mxu0 0
        %1177 = vmatprep.subr.bf16.mxu0 0
        %1178 = vmatpush2.bf16.msra.mxu0 0
        %1179 = vmatprep.subr.bf16.mxu0 0
        %1180 = vmatpush2.bf16.msra.mxu0 0
        %1181 = vmatprep.subr.bf16.mxu0 0
        %1182 = vmatpush2.bf16.msra.mxu0 0
        %1183 = vmatprep.subr.bf16.mxu0 0
        %1184 = vmatpush2.bf16.msra.mxu0 0
        %1185 = vmatprep.subr.bf16.mxu0 0
        %1186 = vmatpush2.bf16.msra.mxu0 0
        %1187 = vmatprep.subr.bf16.mxu0 0
        %1188 = vmatpush2.bf16.msra.mxu0 0
        %1189 = vmatprep.mubr.bf16.mxu0 0
        %1190 = vmatmul.mubr.bf16.gmra.mxu0 %v1082
        %v1191 = vpop.f32.mrf.mxu0
        %v1192 = vadd.f32 %v1107, %v1191
        %v1193 = vpop.f32.mrf.mxu0
        %v1194 = vpop.f32.mrf.mxu0
        %v1195 = vadd.f32 %v1107, %v1194
        %v1196 = vpop.f32.mrf.mxu0
        %1197 = vmatprep.mubr.bf16.mxu0 0
        %1198 = vmatmul.mubr.bf16.gmra.mxu0 %v1083
        %v1199 = vpop.f32.mrf.mxu0
        %v1200 = vadd.f32 %v1107, %v1199
        %v1201 = vpop.f32.mrf.mxu0
        %v1202 = vpop.f32.mrf.mxu0
        %v1203 = vadd.f32 %v1107, %v1202
        %v1204 = vpop.f32.mrf.mxu0
        %1205 = vmatprep.mubr.bf16.mxu0 0
        %1206 = vmatmul.mubr.bf16.gmra.mxu0 %v1084
        %v1207 = vpop.f32.mrf.mxu0
        %v1208 = vadd.f32 %v1107, %v1207
        %v1209 = vpop.f32.mrf.mxu0
        %v1210 = vpop.f32.mrf.mxu0
        %v1211 = vadd.f32 %v1107, %v1210
        %v1212 = vpop.f32.mrf.mxu0
        %1213 = vmatprep.mubr.bf16.mxu0 0
        %1214 = vmatmul.mubr.bf16.gmra.mxu0 %v1085
        %v1215 = vpop.f32.mrf.mxu0
        %v1216 = vadd.f32 %v1107, %v1215
        %v1217 = vpop.f32.mrf.mxu0
        %v1218 = vpop.f32.mrf.mxu0
        %v1219 = vadd.f32 %v1107, %v1218
        %v1220 = vpop.f32.mrf.mxu0
        %1221 = vdwg.mxu0
        %v1222 = vmul.f32 %v1192, 0.17677669
        %v1223 = vmul.f32 %v1195, 0.17677669
        %v1224 = vmul.f32 %v1200, 0.17677669
        %v1225 = vmul.f32 %v1203, 0.17677669
        %v1226 = vmul.f32 %v1208, 0.17677669
        %v1227 = vmul.f32 %v1211, 0.17677669
        %v1228 = vmul.f32 %v1216, 0.17677669
        %v1229 = vmul.f32 %v1219, 0.17677669
        %v1230 = vpack.c.bf16 %v1223, %v1222
        %v1231 = vpack.c.bf16 %v1225, %v1224
        %v1232 = vpack.c.bf16 %v1227, %v1226
        %v1233 = vpack.c.bf16 %v1229, %v1228
        %v1234 = vld [vmem:[#allocation2] sm:$0xf]
        %v1235 = vld [vmem:[#allocation2 + $0x8] sm:$0xf]
        %v1236 = vld [vmem:[#allocation2 + $0x10] sm:$0xf]
        %v1237 = vld [vmem:[#allocation2 + $0x18] sm:$0xf]
        %v1238 = vld [vmem:[#allocation2 + $0x20] sm:$0xf]
        %v1239 = vld [vmem:[#allocation2 + $0x28] sm:$0xf]
        %v1240 = vld [vmem:[#allocation2 + $0x30] sm:$0xf]
        %v1241 = vld [vmem:[#allocation2 + $0x38] sm:$0xf]
        %v1242 = vld [vmem:[#allocation2 + $0x40] sm:$0xf]
        %v1243 = vld [vmem:[#allocation2 + $0x48] sm:$0xf]
        %v1244 = vld [vmem:[#allocation2 + $0x50] sm:$0xf]
        %v1245 = vld [vmem:[#allocation2 + $0x58] sm:$0xf]
        %v1246 = vld [vmem:[#allocation2 + $0x60] sm:$0xf]
        %v1247 = vld [vmem:[#allocation2 + $0x68] sm:$0xf]
        %v1248 = vld [vmem:[#allocation2 + $0x70] sm:$0xf]
        %v1249 = vld [vmem:[#allocation2 + $0x78] sm:$0xf]
        %v1250 = vld [vmem:[#allocation2 + $0x4] sm:$0xf]
        %v1251 = vld [vmem:[#allocation2 + $0xc] sm:$0xf]
        %v1252 = vld [vmem:[#allocation2 + $0x14] sm:$0xf]
        %v1253 = vld [vmem:[#allocation2 + $0x1c] sm:$0xf]
        %v1254 = vld [vmem:[#allocation2 + $0x24] sm:$0xf]
        %v1255 = vld [vmem:[#allocation2 + $0x2c] sm:$0xf]
        %v1256 = vld [vmem:[#allocation2 + $0x34] sm:$0xf]
        %v1257 = vld [vmem:[#allocation2 + $0x3c] sm:$0xf]
        %v1258 = vld [vmem:[#allocation2 + $0x44] sm:$0xf]
        %v1259 = vld [vmem:[#allocation2 + $0x4c] sm:$0xf]
        %v1260 = vld [vmem:[#allocation2 + $0x54] sm:$0xf]
        %v1261 = vld [vmem:[#allocation2 + $0x5c] sm:$0xf]
        %v1262 = vld [vmem:[#allocation2 + $0x64] sm:$0xf]
        %v1263 = vld [vmem:[#allocation2 + $0x6c] sm:$0xf]
        %v1264 = vld [vmem:[#allocation2 + $0x74] sm:$0xf]
        %v1265 = vld [vmem:[#allocation2 + $0x7c] sm:$0xf]
        %v1282 = vunpack.c.l.b16 %v1234
        %v1283 = vunpack.c.l.b16 %v1235
        %v1284 = vunpack.c.l.b16 %v1236
        %v1285 = vunpack.c.l.b16 %v1237
        %v1286 = vunpack.c.l.b16 %v1238
        %v1287 = vunpack.c.l.b16 %v1239
        %v1288 = vunpack.c.l.b16 %v1240
        %v1289 = vunpack.c.l.b16 %v1241
        %v1290 = vunpack.c.l.b16 %v1242
        %v1291 = vunpack.c.l.b16 %v1243
        %v1292 = vunpack.c.l.b16 %v1244
        %v1293 = vunpack.c.l.b16 %v1245
        %v1294 = vunpack.c.l.b16 %v1246
        %v1295 = vunpack.c.l.b16 %v1247
        %v1296 = vunpack.c.l.b16 %v1248
        %v1297 = vunpack.c.l.b16 %v1249
        %v1298 = vpack.c.b16 %v1283, %v1282
        %v1299 = vpack.c.b16 %v1285, %v1284
        %v1300 = vpack.c.b16 %v1287, %v1286
        %v1301 = vpack.c.b16 %v1289, %v1288
        %v1302 = vpack.c.b16 %v1291, %v1290
        %v1303 = vpack.c.b16 %v1293, %v1292
        %v1304 = vpack.c.b16 %v1295, %v1294
        %v1305 = vpack.c.b16 %v1297, %v1296
        %vm1306 = vcmask 261120
        %v1308 = vsel %vm1306, %v1230, 0
        %v1311 = vsel %vm1306, %v1231, 0
        %v1314 = vsel %vm1306, %v1232, 0
        %v1317 = vsel %vm1306, %v1233, 0
        %v1320 = vsel %vm1306, %v1298, 0
        %v1323 = vsel %vm1306, %v1299, 0
        %v1326 = vsel %vm1306, %v1300, 0
        %v1329 = vsel %vm1306, %v1301, 0
        %v1332 = vsel %vm1306, %v1302, 0
        %v1335 = vsel %vm1306, %v1303, 0
        %v1338 = vsel %vm1306, %v1304, 0
        %v1341 = vsel %vm1306, %v1305, 0
        %1343 = vmatprep.subr.bf16.mxu0 0
        %1344 = vmatpush1.bf16.xpose.msra.mxu0 %v1341
        %1345 = vmatprep.subr.bf16.mxu0 0
        %1346 = vmatpush1.bf16.xpose.msra.mxu0 %v1338
        %1347 = vmatprep.subr.bf16.mxu0 0
        %1348 = vmatpush1.bf16.xpose.msra.mxu0 %v1335
        %1349 = vmatprep.subr.bf16.mxu0 0
        %1350 = vmatpush1.bf16.xpose.msra.mxu0 %v1332
        %1351 = vmatprep.subr.bf16.mxu0 0
        %1352 = vmatpush1.bf16.xpose.msra.mxu0 %v1329
        %1353 = vmatprep.subr.bf16.mxu0 0
        %1354 = vmatpush1.bf16.xpose.msra.mxu0 %v1326
        %1355 = vmatprep.subr.bf16.mxu0 0
        %1356 = vmatpush1.bf16.xpose.msra.mxu0 %v1323
        %1357 = vmatprep.subr.bf16.mxu0 0
        %1358 = vmatpush1.bf16.xpose.msra.mxu0 %v1320
        %1359 = vmatprep.subr.bf16.mxu0 0
        %1360 = vmatpush2.bf16.xpose.msra.mxu0 0
        %1361 = vmatprep.subr.bf16.mxu0 0
        %1362 = vmatpush2.bf16.xpose.msra.mxu0 0
        %1363 = vmatprep.subr.bf16.mxu0 0
        %1364 = vmatpush2.bf16.xpose.msra.mxu0 0
        %1365 = vmatprep.subr.bf16.mxu0 0
        %1366 = vmatpush2.bf16.xpose.msra.mxu0 0
        %1367 = vmatprep.subr.bf16.mxu0 0
        %1368 = vmatpush2.bf16.xpose.msra.mxu0 0
        %1369 = vmatprep.subr.bf16.mxu0 0
        %1370 = vmatpush2.bf16.xpose.msra.mxu0 0
        %1371 = vmatprep.subr.bf16.mxu0 0
        %1372 = vmatpush2.bf16.xpose.msra.mxu0 0
        %1373 = vmatprep.subr.bf16.mxu0 0
        %1374 = vmatpush2.bf16.xpose.msra.mxu0 0
        %1375 = vmatprep.mubr.bf16.mxu0 0
        %1376 = vmatmul.mubr.bf16.gmra.mxu0 %v1308
        %v1377 = vpop.f32.mrf.mxu0
        %v1378 = vadd.f32 0.0, %v1377
        %v1379 = vpop.f32.mrf.mxu0
        %v1380 = vpop.f32.mrf.mxu0
        %v1381 = vadd.f32 0.0, %v1380
        %v1382 = vpop.f32.mrf.mxu0
        %1383 = vmatprep.mubr.bf16.mxu0 0
        %1384 = vmatmul.mubr.bf16.gmra.mxu0 %v1311
        %v1385 = vpop.f32.mrf.mxu0
        %v1386 = vadd.f32 0.0, %v1385
        %v1387 = vpop.f32.mrf.mxu0
        %v1388 = vpop.f32.mrf.mxu0
        %v1389 = vadd.f32 0.0, %v1388
        %v1390 = vpop.f32.mrf.mxu0
        %1391 = vmatprep.mubr.bf16.mxu0 0
        %1392 = vmatmul.mubr.bf16.gmra.mxu0 %v1314
        %v1393 = vpop.f32.mrf.mxu0
        %v1394 = vadd.f32 0.0, %v1393
        %v1395 = vpop.f32.mrf.mxu0
        %v1396 = vpop.f32.mrf.mxu0
        %v1397 = vadd.f32 0.0, %v1396
        %v1398 = vpop.f32.mrf.mxu0
        %1399 = vmatprep.mubr.bf16.mxu0 0
        %1400 = vmatmul.mubr.bf16.gmra.mxu0 %v1317
        %v1401 = vpop.f32.mrf.mxu0
        %v1402 = vadd.f32 0.0, %v1401
        %v1403 = vpop.f32.mrf.mxu0
        %v1404 = vpop.f32.mrf.mxu0
        %v1405 = vadd.f32 0.0, %v1404
        %v1406 = vpop.f32.mrf.mxu0
        %1407 = vdwg.mxu0
        %1408 = vmax.xlane.f32.xlu0 %v1378
        %v1409 = vpop.xlane.xlu0 %1408
        %1410 = vmax.xlane.f32.xlu0 %v1381
        %v1411 = vpop.xlane.xlu0 %1410
        %1412 = vmax.xlane.f32.xlu0 %v1386
        %v1413 = vpop.xlane.xlu0 %1412
        %1414 = vmax.xlane.f32.xlu0 %v1389
        %v1415 = vpop.xlane.xlu0 %1414
        %1416 = vmax.xlane.f32.xlu0 %v1394
        %v1417 = vpop.xlane.xlu0 %1416
        %1418 = vmax.xlane.f32.xlu0 %v1397
        %v1419 = vpop.xlane.xlu0 %1418
        %1420 = vmax.xlane.f32.xlu0 %v1402
        %v1421 = vpop.xlane.xlu0 %1420
        %1422 = vmax.xlane.f32.xlu0 %v1405
        %v1423 = vpop.xlane.xlu0 %1422
        %v1424 = vsub.f32 %v1378, %v1409
        %v1425 = vsub.f32 %v1381, %v1411
        %v1426 = vsub.f32 %v1386, %v1413
        %v1427 = vsub.f32 %v1389, %v1415
        %v1428 = vsub.f32 %v1394, %v1417
        %v1429 = vsub.f32 %v1397, %v1419
        %v1430 = vsub.f32 %v1402, %v1421
        %v1431 = vsub.f32 %v1405, %v1423
        %v1432 = vmul.f32 %v1424, 1.442695
        %v1433 = vpow.pop %v1432
        %v1434 = vmul.f32 %v1425, 1.442695
        %v1435 = vpow.pop %v1434
        %v1436 = vmul.f32 %v1426, 1.442695
        %v1437 = vpow.pop %v1436
        %v1438 = vmul.f32 %v1427, 1.442695
        %v1439 = vpow.pop %v1438
        %v1440 = vmul.f32 %v1428, 1.442695
        %v1441 = vpow.pop %v1440
        %v1442 = vmul.f32 %v1429, 1.442695
        %v1443 = vpow.pop %v1442
        %v1444 = vmul.f32 %v1430, 1.442695
        %v1445 = vpow.pop %v1444
        %v1446 = vmul.f32 %v1431, 1.442695
        %v1447 = vpow.pop %v1446
        %1448 = vadd.xlane.f32.xlu0 %v1433
        %v1449 = vpop.xlane.xlu0 %1448
        %1450 = vadd.xlane.f32.xlu0 %v1435
        %v1451 = vpop.xlane.xlu0 %1450
        %1452 = vadd.xlane.f32.xlu0 %v1437
        %v1453 = vpop.xlane.xlu0 %1452
        %1454 = vadd.xlane.f32.xlu0 %v1439
        %v1455 = vpop.xlane.xlu0 %1454
        %1456 = vadd.xlane.f32.xlu0 %v1441
        %v1457 = vpop.xlane.xlu0 %1456
        %1458 = vadd.xlane.f32.xlu0 %v1443
        %v1459 = vpop.xlane.xlu0 %1458
        %1460 = vadd.xlane.f32.xlu0 %v1445
        %v1461 = vpop.xlane.xlu0 %1460
        %1462 = vadd.xlane.f32.xlu0 %v1447
        %v1463 = vpop.xlane.xlu0 %1462
        %v1464 = vpack.c.bf16 %v1435, %v1433
        %v1465 = vpack.c.bf16 %v1439, %v1437
        %v1466 = vpack.c.bf16 %v1443, %v1441
        %v1467 = vpack.c.bf16 %v1447, %v1445
        %v1484 = vunpack.c.l.b16 %v1250
        %v1485 = vunpack.c.l.b16 %v1251
        %v1486 = vunpack.c.l.b16 %v1252
        %v1487 = vunpack.c.l.b16 %v1253
        %v1488 = vunpack.c.l.b16 %v1254
        %v1489 = vunpack.c.l.b16 %v1255
        %v1490 = vunpack.c.l.b16 %v1256
        %v1491 = vunpack.c.l.b16 %v1257
        %v1492 = vunpack.c.l.b16 %v1258
        %v1493 = vunpack.c.l.b16 %v1259
        %v1494 = vunpack.c.l.b16 %v1260
        %v1495 = vunpack.c.l.b16 %v1261
        %v1496 = vunpack.c.l.b16 %v1262
        %v1497 = vunpack.c.l.b16 %v1263
        %v1498 = vunpack.c.l.b16 %v1264
        %v1499 = vunpack.c.l.b16 %v1265
        %v1500 = vpack.c.b16 %v1485, %v1484
        %v1501 = vpack.c.b16 %v1487, %v1486
        %v1502 = vpack.c.b16 %v1489, %v1488
        %v1503 = vpack.c.b16 %v1491, %v1490
        %v1504 = vpack.c.b16 %v1493, %v1492
        %v1505 = vpack.c.b16 %v1495, %v1494
        %v1506 = vpack.c.b16 %v1497, %v1496
        %v1507 = vpack.c.b16 %v1499, %v1498
        %1516 = vmatprep.subr.bf16.mxu0 0
        %1517 = vmatpush1.bf16.msra.mxu0 %v1507
        %1518 = vmatprep.subr.bf16.mxu0 0
        %1519 = vmatpush1.bf16.msra.mxu0 %v1506
        %1520 = vmatprep.subr.bf16.mxu0 0
        %1521 = vmatpush1.bf16.msra.mxu0 %v1505
        %1522 = vmatprep.subr.bf16.mxu0 0
        %1523 = vmatpush1.bf16.msra.mxu0 %v1504
        %1524 = vmatprep.subr.bf16.mxu0 0
        %1525 = vmatpush1.bf16.msra.mxu0 %v1503
        %1526 = vmatprep.subr.bf16.mxu0 0
        %1527 = vmatpush1.bf16.msra.mxu0 %v1502
        %1528 = vmatprep.subr.bf16.mxu0 0
        %1529 = vmatpush1.bf16.msra.mxu0 %v1501
        %1530 = vmatprep.subr.bf16.mxu0 0
        %1531 = vmatpush1.bf16.msra.mxu0 %v1500
        %1532 = vmatprep.subr.bf16.mxu0 0
        %1533 = vmatpush2.bf16.msra.mxu0 0
        %1534 = vmatprep.subr.bf16.mxu0 0
        %1535 = vmatpush2.bf16.msra.mxu0 0
        %1536 = vmatprep.subr.bf16.mxu0 0
        %1537 = vmatpush2.bf16.msra.mxu0 0
        %1538 = vmatprep.subr.bf16.mxu0 0
        %1539 = vmatpush2.bf16.msra.mxu0 0
        %1540 = vmatprep.subr.bf16.mxu0 0
        %1541 = vmatpush2.bf16.msra.mxu0 0
        %1542 = vmatprep.subr.bf16.mxu0 0
        %1543 = vmatpush2.bf16.msra.mxu0 0
        %1544 = vmatprep.subr.bf16.mxu0 0
        %1545 = vmatpush2.bf16.msra.mxu0 0
        %1546 = vmatprep.subr.bf16.mxu0 0
        %1547 = vmatpush2.bf16.msra.mxu0 0
        %1548 = vmatprep.mubr.bf16.mxu0 0
        %1549 = vmatmul.mubr.bf16.gmra.mxu0 %v1464
        %v1550 = vpop.f32.mrf.mxu0
        %v1551 = vadd.f32 0.0, %v1550
        %v1552 = vpop.f32.mrf.mxu0
        %v1553 = vpop.f32.mrf.mxu0
        %v1554 = vadd.f32 0.0, %v1553
        %v1555 = vpop.f32.mrf.mxu0
        %1556 = vmatprep.mubr.bf16.mxu0 0
        %1557 = vmatmul.mubr.bf16.gmra.mxu0 %v1465
        %v1558 = vpop.f32.mrf.mxu0
        %v1559 = vadd.f32 0.0, %v1558
        %v1560 = vpop.f32.mrf.mxu0
        %v1561 = vpop.f32.mrf.mxu0
        %v1562 = vadd.f32 0.0, %v1561
        %v1563 = vpop.f32.mrf.mxu0
        %1564 = vmatprep.mubr.bf16.mxu0 0
        %1565 = vmatmul.mubr.bf16.gmra.mxu0 %v1466
        %v1566 = vpop.f32.mrf.mxu0
        %v1567 = vadd.f32 0.0, %v1566
        %v1568 = vpop.f32.mrf.mxu0
        %v1569 = vpop.f32.mrf.mxu0
        %v1570 = vadd.f32 0.0, %v1569
        %v1571 = vpop.f32.mrf.mxu0
        %1572 = vmatprep.mubr.bf16.mxu0 0
        %1573 = vmatmul.mubr.bf16.gmra.mxu0 %v1467
        %v1574 = vpop.f32.mrf.mxu0
        %v1575 = vadd.f32 0.0, %v1574
        %v1576 = vpop.f32.mrf.mxu0
        %v1577 = vpop.f32.mrf.mxu0
        %v1578 = vadd.f32 0.0, %v1577
        %v1579 = vpop.f32.mrf.mxu0
        %1580 = vdwg.mxu0
        %v1581 = vrcp.pop %v1449
        %v1582 = vrcp.pop %v1451
        %v1583 = vrcp.pop %v1453
        %v1584 = vrcp.pop %v1455
        %v1585 = vrcp.pop %v1457
        %v1586 = vrcp.pop %v1459
        %v1587 = vrcp.pop %v1461
        %v1588 = vrcp.pop %v1463
        %v1589 = vmul.f32 %v1551, %v1581
        %v1590 = vmul.f32 %v1554, %v1582
        %v1591 = vmul.f32 %v1559, %v1583
        %v1592 = vmul.f32 %v1562, %v1584
        %v1593 = vmul.f32 %v1567, %v1585
        %v1594 = vmul.f32 %v1570, %v1586
        %v1595 = vmul.f32 %v1575, %v1587
        %v1596 = vmul.f32 %v1578, %v1588
        %v1597 = vpack.c.bf16 %v1590, %v1589
        %v1598 = vpack.c.bf16 %v1592, %v1591
        %v1599 = vpack.c.bf16 %v1594, %v1593
        %v1600 = vpack.c.bf16 %v1596, %v1595
        %v1601 = vld [vmem:[#allocation11] sm:$0xf]
        %v1602 = vld [vmem:[#allocation11 + $0x4] sm:$0xf]
        %v1603 = vld [vmem:[#allocation11 + $0x8] sm:$0xf]
        %v1604 = vld [vmem:[#allocation11 + $0xc] sm:$0xf]
        %v1605 = vld [vmem:[#allocation2] sm:$0xf]
        %v1606 = vld [vmem:[#allocation2 + $0x8] sm:$0xf]
        %v1607 = vld [vmem:[#allocation2 + $0x10] sm:$0xf]
        %v1608 = vld [vmem:[#allocation2 + $0x18] sm:$0xf]
        %v1609 = vld [vmem:[#allocation2 + $0x20] sm:$0xf]
        %v1610 = vld [vmem:[#allocation2 + $0x28] sm:$0xf]
        %v1611 = vld [vmem:[#allocation2 + $0x30] sm:$0xf]
        %v1612 = vld [vmem:[#allocation2 + $0x38] sm:$0xf]
        %v1613 = vld [vmem:[#allocation2 + $0x40] sm:$0xf]
        %v1614 = vld [vmem:[#allocation2 + $0x48] sm:$0xf]
        %v1615 = vld [vmem:[#allocation2 + $0x50] sm:$0xf]
        %v1616 = vld [vmem:[#allocation2 + $0x58] sm:$0xf]
        %v1617 = vld [vmem:[#allocation2 + $0x60] sm:$0xf]
        %v1618 = vld [vmem:[#allocation2 + $0x68] sm:$0xf]
        %v1619 = vld [vmem:[#allocation2 + $0x70] sm:$0xf]
        %v1620 = vld [vmem:[#allocation2 + $0x78] sm:$0xf]
        %v1621 = vld [vmem:[#allocation2 + $0x4] sm:$0xf]
        %v1622 = vld [vmem:[#allocation2 + $0xc] sm:$0xf]
        %v1623 = vld [vmem:[#allocation2 + $0x14] sm:$0xf]
        %v1624 = vld [vmem:[#allocation2 + $0x1c] sm:$0xf]
        %v1625 = vld [vmem:[#allocation2 + $0x24] sm:$0xf]
        %v1626 = vld [vmem:[#allocation2 + $0x2c] sm:$0xf]
        %v1627 = vld [vmem:[#allocation2 + $0x34] sm:$0xf]
        %v1628 = vld [vmem:[#allocation2 + $0x3c] sm:$0xf]
        %v1629 = vld [vmem:[#allocation2 + $0x44] sm:$0xf]
        %v1630 = vld [vmem:[#allocation2 + $0x4c] sm:$0xf]
        %v1631 = vld [vmem:[#allocation2 + $0x54] sm:$0xf]
        %v1632 = vld [vmem:[#allocation2 + $0x5c] sm:$0xf]
        %v1633 = vld [vmem:[#allocation2 + $0x64] sm:$0xf]
        %v1634 = vld [vmem:[#allocation2 + $0x6c] sm:$0xf]
        %v1635 = vld [vmem:[#allocation2 + $0x74] sm:$0xf]
        %v1636 = vld [vmem:[#allocation2 + $0x7c] sm:$0xf]
        %1641 = vrot.lane.b32.xlu0 %v1230, 96
        %v1642 = vpop.permute.xlu0 %1641
        %1643 = vrot.lane.b32.xlu0 %v1231, 96
        %v1644 = vpop.permute.xlu0 %1643
        %1645 = vrot.lane.b32.xlu0 %v1232, 96
        %v1646 = vpop.permute.xlu0 %1645
        %1647 = vrot.lane.b32.xlu0 %v1233, 96
        %v1648 = vpop.permute.xlu0 %1647
        %v1665 = vunpack.c.l.b16 %v1605
        %v1666 = vunpack.c.l.b16 %v1606
        %v1667 = vunpack.c.l.b16 %v1607
        %v1668 = vunpack.c.l.b16 %v1608
        %v1669 = vunpack.c.l.b16 %v1609
        %v1670 = vunpack.c.l.b16 %v1610
        %v1671 = vunpack.c.l.b16 %v1611
        %v1672 = vunpack.c.l.b16 %v1612
        %v1673 = vunpack.c.l.b16 %v1613
        %v1674 = vunpack.c.l.b16 %v1614
        %v1675 = vunpack.c.l.b16 %v1615
        %v1676 = vunpack.c.l.b16 %v1616
        %v1677 = vunpack.c.l.b16 %v1617
        %v1678 = vunpack.c.l.b16 %v1618
        %v1679 = vunpack.c.l.b16 %v1619
        %v1680 = vunpack.c.l.b16 %v1620
        %v1681 = vpack.c.b16 %v1666, %v1665
        %v1682 = vpack.c.b16 %v1668, %v1667
        %v1683 = vpack.c.b16 %v1670, %v1669
        %v1684 = vpack.c.b16 %v1672, %v1671
        %v1685 = vpack.c.b16 %v1674, %v1673
        %v1686 = vpack.c.b16 %v1676, %v1675
        %v1687 = vpack.c.b16 %v1678, %v1677
        %v1688 = vpack.c.b16 %v1680, %v1679
        %1689 = vrot.lane.b32.xlu0 %v1681, 96
        %v1690 = vpop.permute.xlu0 %1689
        %1691 = vrot.lane.b32.xlu0 %v1682, 96
        %v1692 = vpop.permute.xlu0 %1691
        %1693 = vrot.lane.b32.xlu0 %v1683, 96
        %v1694 = vpop.permute.xlu0 %1693
        %1695 = vrot.lane.b32.xlu0 %v1684, 96
        %v1696 = vpop.permute.xlu0 %1695
        %1697 = vrot.lane.b32.xlu0 %v1685, 96
        %v1698 = vpop.permute.xlu0 %1697
        %1699 = vrot.lane.b32.xlu0 %v1686, 96
        %v1700 = vpop.permute.xlu0 %1699
        %1701 = vrot.lane.b32.xlu0 %v1687, 96
        %v1702 = vpop.permute.xlu0 %1701
        %1703 = vrot.lane.b32.xlu0 %v1688, 96
        %v1704 = vpop.permute.xlu0 %1703
        %v1706 = vsel %vm1306, %v1642, 0
        %v1709 = vsel %vm1306, %v1644, 0
        %v1712 = vsel %vm1306, %v1646, 0
        %v1715 = vsel %vm1306, %v1648, 0
        %v1718 = vsel %vm1306, %v1690, 0
        %v1721 = vsel %vm1306, %v1692, 0
        %v1724 = vsel %vm1306, %v1694, 0
        %v1727 = vsel %vm1306, %v1696, 0
        %v1730 = vsel %vm1306, %v1698, 0
        %v1733 = vsel %vm1306, %v1700, 0
        %v1736 = vsel %vm1306, %v1702, 0
        %v1739 = vsel %vm1306, %v1704, 0
        %1741 = vmatprep.subr.bf16.mxu0 0
        %1742 = vmatpush1.bf16.xpose.msra.mxu0 %v1739
        %1743 = vmatprep.subr.bf16.mxu0 0
        %1744 = vmatpush1.bf16.xpose.msra.mxu0 %v1736
        %1745 = vmatprep.subr.bf16.mxu0 0
        %1746 = vmatpush1.bf16.xpose.msra.mxu0 %v1733
        %1747 = vmatprep.subr.bf16.mxu0 0
        %1748 = vmatpush1.bf16.xpose.msra.mxu0 %v1730
        %1749 = vmatprep.subr.bf16.mxu0 0
        %1750 = vmatpush1.bf16.xpose.msra.mxu0 %v1727
        %1751 = vmatprep.subr.bf16.mxu0 0
        %1752 = vmatpush1.bf16.xpose.msra.mxu0 %v1724
        %1753 = vmatprep.subr.bf16.mxu0 0
        %1754 = vmatpush1.bf16.xpose.msra.mxu0 %v1721
        %1755 = vmatprep.subr.bf16.mxu0 0
        %1756 = vmatpush1.bf16.xpose.msra.mxu0 %v1718
        %1757 = vmatprep.subr.bf16.mxu0 0
        %1758 = vmatpush2.bf16.xpose.msra.mxu0 0
        %1759 = vmatprep.subr.bf16.mxu0 0
        %1760 = vmatpush2.bf16.xpose.msra.mxu0 0
        %1761 = vmatprep.subr.bf16.mxu0 0
        %1762 = vmatpush2.bf16.xpose.msra.mxu0 0
        %1763 = vmatprep.subr.bf16.mxu0 0
        %1764 = vmatpush2.bf16.xpose.msra.mxu0 0
        %1765 = vmatprep.subr.bf16.mxu0 0
        %1766 = vmatpush2.bf16.xpose.msra.mxu0 0
        %1767 = vmatprep.subr.bf16.mxu0 0
        %1768 = vmatpush2.bf16.xpose.msra.mxu0 0
        %1769 = vmatprep.subr.bf16.mxu0 0
        %1770 = vmatpush2.bf16.xpose.msra.mxu0 0
        %1771 = vmatprep.subr.bf16.mxu0 0
        %1772 = vmatpush2.bf16.xpose.msra.mxu0 0
        %1773 = vmatprep.mubr.bf16.mxu0 0
        %1774 = vmatmul.mubr.bf16.gmra.mxu0 %v1706
        %v1775 = vpop.f32.mrf.mxu0
        %v1776 = vadd.f32 0.0, %v1775
        %v1777 = vpop.f32.mrf.mxu0
        %v1778 = vpop.f32.mrf.mxu0
        %v1779 = vadd.f32 0.0, %v1778
        %v1780 = vpop.f32.mrf.mxu0
        %1781 = vmatprep.mubr.bf16.mxu0 0
        %1782 = vmatmul.mubr.bf16.gmra.mxu0 %v1709
        %v1783 = vpop.f32.mrf.mxu0
        %v1784 = vadd.f32 0.0, %v1783
        %v1785 = vpop.f32.mrf.mxu0
        %v1786 = vpop.f32.mrf.mxu0
        %v1787 = vadd.f32 0.0, %v1786
        %v1788 = vpop.f32.mrf.mxu0
        %1789 = vmatprep.mubr.bf16.mxu0 0
        %1790 = vmatmul.mubr.bf16.gmra.mxu0 %v1712
        %v1791 = vpop.f32.mrf.mxu0
        %v1792 = vadd.f32 0.0, %v1791
        %v1793 = vpop.f32.mrf.mxu0
        %v1794 = vpop.f32.mrf.mxu0
        %v1795 = vadd.f32 0.0, %v1794
        %v1796 = vpop.f32.mrf.mxu0
        %1797 = vmatprep.mubr.bf16.mxu0 0
        %1798 = vmatmul.mubr.bf16.gmra.mxu0 %v1715
        %v1799 = vpop.f32.mrf.mxu0
        %v1800 = vadd.f32 0.0, %v1799
        %v1801 = vpop.f32.mrf.mxu0
        %v1802 = vpop.f32.mrf.mxu0
        %v1803 = vadd.f32 0.0, %v1802
        %v1804 = vpop.f32.mrf.mxu0
        %1805 = vdwg.mxu0
        %1806 = vmax.xlane.f32.xlu0 %v1776
        %v1807 = vpop.xlane.xlu0 %1806
        %1808 = vmax.xlane.f32.xlu0 %v1779
        %v1809 = vpop.xlane.xlu0 %1808
        %1810 = vmax.xlane.f32.xlu0 %v1784
        %v1811 = vpop.xlane.xlu0 %1810
        %1812 = vmax.xlane.f32.xlu0 %v1787
        %v1813 = vpop.xlane.xlu0 %1812
        %1814 = vmax.xlane.f32.xlu0 %v1792
        %v1815 = vpop.xlane.xlu0 %1814
        %1816 = vmax.xlane.f32.xlu0 %v1795
        %v1817 = vpop.xlane.xlu0 %1816
        %1818 = vmax.xlane.f32.xlu0 %v1800
        %v1819 = vpop.xlane.xlu0 %1818
        %1820 = vmax.xlane.f32.xlu0 %v1803
        %v1821 = vpop.xlane.xlu0 %1820
        %v1822 = vsub.f32 %v1776, %v1807
        %v1823 = vsub.f32 %v1779, %v1809
        %v1824 = vsub.f32 %v1784, %v1811
        %v1825 = vsub.f32 %v1787, %v1813
        %v1826 = vsub.f32 %v1792, %v1815
        %v1827 = vsub.f32 %v1795, %v1817
        %v1828 = vsub.f32 %v1800, %v1819
        %v1829 = vsub.f32 %v1803, %v1821
        %v1830 = vmul.f32 %v1822, 1.442695
        %v1831 = vpow.pop %v1830
        %v1832 = vmul.f32 %v1823, 1.442695
        %v1833 = vpow.pop %v1832
        %v1834 = vmul.f32 %v1824, 1.442695
        %v1835 = vpow.pop %v1834
        %v1836 = vmul.f32 %v1825, 1.442695
        %v1837 = vpow.pop %v1836
        %v1838 = vmul.f32 %v1826, 1.442695
        %v1839 = vpow.pop %v1838
        %v1840 = vmul.f32 %v1827, 1.442695
        %v1841 = vpow.pop %v1840
        %v1842 = vmul.f32 %v1828, 1.442695
        %v1843 = vpow.pop %v1842
        %v1844 = vmul.f32 %v1829, 1.442695
        %v1845 = vpow.pop %v1844
        %1846 = vadd.xlane.f32.xlu0 %v1831
        %v1847 = vpop.xlane.xlu0 %1846
        %1848 = vadd.xlane.f32.xlu0 %v1833
        %v1849 = vpop.xlane.xlu0 %1848
        %1850 = vadd.xlane.f32.xlu0 %v1835
        %v1851 = vpop.xlane.xlu0 %1850
        %1852 = vadd.xlane.f32.xlu0 %v1837
        %v1853 = vpop.xlane.xlu0 %1852
        %1854 = vadd.xlane.f32.xlu0 %v1839
        %v1855 = vpop.xlane.xlu0 %1854
        %1856 = vadd.xlane.f32.xlu0 %v1841
        %v1857 = vpop.xlane.xlu0 %1856
        %1858 = vadd.xlane.f32.xlu0 %v1843
        %v1859 = vpop.xlane.xlu0 %1858
        %1860 = vadd.xlane.f32.xlu0 %v1845
        %v1861 = vpop.xlane.xlu0 %1860
        %v1862 = vpack.c.bf16 %v1833, %v1831
        %v1863 = vpack.c.bf16 %v1837, %v1835
        %v1864 = vpack.c.bf16 %v1841, %v1839
        %v1865 = vpack.c.bf16 %v1845, %v1843
        %v1882 = vunpack.c.l.b16 %v1621
        %v1883 = vunpack.c.l.b16 %v1622
        %v1884 = vunpack.c.l.b16 %v1623
        %v1885 = vunpack.c.l.b16 %v1624
        %v1886 = vunpack.c.l.b16 %v1625
        %v1887 = vunpack.c.l.b16 %v1626
        %v1888 = vunpack.c.l.b16 %v1627
        %v1889 = vunpack.c.l.b16 %v1628
        %v1890 = vunpack.c.l.b16 %v1629
        %v1891 = vunpack.c.l.b16 %v1630
        %v1892 = vunpack.c.l.b16 %v1631
        %v1893 = vunpack.c.l.b16 %v1632
        %v1894 = vunpack.c.l.b16 %v1633
        %v1895 = vunpack.c.l.b16 %v1634
        %v1896 = vunpack.c.l.b16 %v1635
        %v1897 = vunpack.c.l.b16 %v1636
        %v1898 = vpack.c.b16 %v1883, %v1882
        %v1899 = vpack.c.b16 %v1885, %v1884
        %v1900 = vpack.c.b16 %v1887, %v1886
        %v1901 = vpack.c.b16 %v1889, %v1888
        %v1902 = vpack.c.b16 %v1891, %v1890
        %v1903 = vpack.c.b16 %v1893, %v1892
        %v1904 = vpack.c.b16 %v1895, %v1894
        %v1905 = vpack.c.b16 %v1897, %v1896
        %1906 = vrot.lane.b32.xlu0 %v1898, 96
        %v1907 = vpop.permute.xlu0 %1906
        %1908 = vrot.lane.b32.xlu0 %v1899, 96
        %v1909 = vpop.permute.xlu0 %1908
        %1910 = vrot.lane.b32.xlu0 %v1900, 96
        %v1911 = vpop.permute.xlu0 %1910
        %1912 = vrot.lane.b32.xlu0 %v1901, 96
        %v1913 = vpop.permute.xlu0 %1912
        %1914 = vrot.lane.b32.xlu0 %v1902, 96
        %v1915 = vpop.permute.xlu0 %1914
        %1916 = vrot.lane.b32.xlu0 %v1903, 96
        %v1917 = vpop.permute.xlu0 %1916
        %1918 = vrot.lane.b32.xlu0 %v1904, 96
        %v1919 = vpop.permute.xlu0 %1918
        %1920 = vrot.lane.b32.xlu0 %v1905, 96
        %v1921 = vpop.permute.xlu0 %1920
        %1930 = vmatprep.subr.bf16.mxu0 0
        %1931 = vmatpush1.bf16.msra.mxu0 %v1921
        %1932 = vmatprep.subr.bf16.mxu0 0
        %1933 = vmatpush1.bf16.msra.mxu0 %v1919
        %1934 = vmatprep.subr.bf16.mxu0 0
        %1935 = vmatpush1.bf16.msra.mxu0 %v1917
        %1936 = vmatprep.subr.bf16.mxu0 0
        %1937 = vmatpush1.bf16.msra.mxu0 %v1915
        %1938 = vmatprep.subr.bf16.mxu0 0
        %1939 = vmatpush1.bf16.msra.mxu0 %v1913
        %1940 = vmatprep.subr.bf16.mxu0 0
        %1941 = vmatpush1.bf16.msra.mxu0 %v1911
        %1942 = vmatprep.subr.bf16.mxu0 0
        %1943 = vmatpush1.bf16.msra.mxu0 %v1909
        %1944 = vmatprep.subr.bf16.mxu0 0
        %1945 = vmatpush1.bf16.msra.mxu0 %v1907
        %1946 = vmatprep.subr.bf16.mxu0 0
        %1947 = vmatpush2.bf16.msra.mxu0 0
        %1948 = vmatprep.subr.bf16.mxu0 0
        %1949 = vmatpush2.bf16.msra.mxu0 0
        %1950 = vmatprep.subr.bf16.mxu0 0
        %1951 = vmatpush2.bf16.msra.mxu0 0
        %1952 = vmatprep.subr.bf16.mxu0 0
        %1953 = vmatpush2.bf16.msra.mxu0 0
        %1954 = vmatprep.subr.bf16.mxu0 0
        %1955 = vmatpush2.bf16.msra.mxu0 0
        %1956 = vmatprep.subr.bf16.mxu0 0
        %1957 = vmatpush2.bf16.msra.mxu0 0
        %1958 = vmatprep.subr.bf16.mxu0 0
        %1959 = vmatpush2.bf16.msra.mxu0 0
        %1960 = vmatprep.subr.bf16.mxu0 0
        %1961 = vmatpush2.bf16.msra.mxu0 0
        %1962 = vmatprep.mubr.bf16.mxu0 0
        %1963 = vmatmul.mubr.bf16.gmra.mxu0 %v1862
        %v1964 = vpop.f32.mrf.mxu0
        %v1965 = vadd.f32 0.0, %v1964
        %v1966 = vpop.f32.mrf.mxu0
        %v1967 = vpop.f32.mrf.mxu0
        %v1968 = vadd.f32 0.0, %v1967
        %v1969 = vpop.f32.mrf.mxu0
        %1970 = vmatprep.mubr.bf16.mxu0 0
        %1971 = vmatmul.mubr.bf16.gmra.mxu0 %v1863
        %v1972 = vpop.f32.mrf.mxu0
        %v1973 = vadd.f32 0.0, %v1972
        %v1974 = vpop.f32.mrf.mxu0
        %v1975 = vpop.f32.mrf.mxu0
        %v1976 = vadd.f32 0.0, %v1975
        %v1977 = vpop.f32.mrf.mxu0
        %1978 = vmatprep.mubr.bf16.mxu0 0
        %1979 = vmatmul.mubr.bf16.gmra.mxu0 %v1864
        %v1980 = vpop.f32.mrf.mxu0
        %v1981 = vadd.f32 0.0, %v1980
        %v1982 = vpop.f32.mrf.mxu0
        %v1983 = vpop.f32.mrf.mxu0
        %v1984 = vadd.f32 0.0, %v1983
        %v1985 = vpop.f32.mrf.mxu0
        %1986 = vmatprep.mubr.bf16.mxu0 0
        %1987 = vmatmul.mubr.bf16.gmra.mxu0 %v1865
        %v1988 = vpop.f32.mrf.mxu0
        %v1989 = vadd.f32 0.0, %v1988
        %v1990 = vpop.f32.mrf.mxu0
        %v1991 = vpop.f32.mrf.mxu0
        %v1992 = vadd.f32 0.0, %v1991
        %v1993 = vpop.f32.mrf.mxu0
        %1994 = vdwg.mxu0
        %v1995 = vrcp.pop %v1847
        %v1996 = vrcp.pop %v1849
        %v1997 = vrcp.pop %v1851
        %v1998 = vrcp.pop %v1853
        %v1999 = vrcp.pop %v1855
        %v2000 = vrcp.pop %v1857
        %v2001 = vrcp.pop %v1859
        %v2002 = vrcp.pop %v1861
        %v2003 = vmul.f32 %v1965, %v1995
        %v2004 = vmul.f32 %v1968, %v1996
        %v2005 = vmul.f32 %v1973, %v1997
        %v2006 = vmul.f32 %v1976, %v1998
        %v2007 = vmul.f32 %v1981, %v1999
        %v2008 = vmul.f32 %v1984, %v2000
        %v2009 = vmul.f32 %v1989, %v2001
        %v2010 = vmul.f32 %v1992, %v2002
        %v2011 = vpack.c.bf16 %v2004, %v2003
        %v2012 = vpack.c.bf16 %v2006, %v2005
        %v2013 = vpack.c.bf16 %v2008, %v2007
        %v2014 = vpack.c.bf16 %v2010, %v2009
        %v2015 = vld [vmem:[#allocation11 + $0x10] sm:$0xf]
        %v2016 = vld [vmem:[#allocation11 + $0x14] sm:$0xf]
        %v2017 = vld [vmem:[#allocation11 + $0x18] sm:$0xf]
        %v2018 = vld [vmem:[#allocation11 + $0x1c] sm:$0xf]
        %v2023 = vunpack.c.l.b16 %v2015
        %v2024 = vunpack.c.l.b16 %v2016
        %v2025 = vunpack.c.l.b16 %v2017
        %v2026 = vunpack.c.l.b16 %v2018
        %v2027 = vpack.c.b16 %v2024, %v2023
        %v2028 = vpack.c.b16 %v2026, %v2025
        %v2032 = vsel %vm1306, %v2011, 0
        %v2035 = vsel %vm1306, %v2012, 0
        %v2038 = vsel %vm1306, %v2013, 0
        %v2041 = vsel %vm1306, %v2014, 0
        %2043 = vmatprep.subr.bf16.mxu0 0
        %2044 = vmatpush1.bf16.msra.mxu0 0
        %2045 = vmatprep.subr.bf16.mxu0 0
        %2046 = vmatpush1.bf16.msra.mxu0 0
        %2047 = vmatprep.subr.bf16.mxu0 0
        %2048 = vmatpush1.bf16.msra.mxu0 0
        %2049 = vmatprep.subr.bf16.mxu0 0
        %2050 = vmatpush1.bf16.msra.mxu0 0
        %2051 = vmatprep.subr.bf16.mxu0 0
        %2052 = vmatpush1.bf16.msra.mxu0 0
        %2053 = vmatprep.subr.bf16.mxu0 0
        %2054 = vmatpush1.bf16.msra.mxu0 0
        %2055 = vmatprep.subr.bf16.mxu0 0
        %2056 = vmatpush1.bf16.msra.mxu0 %v2028
        %2057 = vmatprep.subr.bf16.mxu0 0
        %2058 = vmatpush1.bf16.msra.mxu0 %v2027
        %2059 = vmatprep.subr.bf16.mxu0 0
        %2060 = vmatpush2.bf16.msra.mxu0 0
        %2061 = vmatprep.subr.bf16.mxu0 0
        %2062 = vmatpush2.bf16.msra.mxu0 0
        %2063 = vmatprep.subr.bf16.mxu0 0
        %2064 = vmatpush2.bf16.msra.mxu0 0
        %2065 = vmatprep.subr.bf16.mxu0 0
        %2066 = vmatpush2.bf16.msra.mxu0 0
        %2067 = vmatprep.subr.bf16.mxu0 0
        %2068 = vmatpush2.bf16.msra.mxu0 0
        %2069 = vmatprep.subr.bf16.mxu0 0
        %2070 = vmatpush2.bf16.msra.mxu0 0
        %2071 = vmatprep.subr.bf16.mxu0 0
        %2072 = vmatpush2.bf16.msra.mxu0 0
        %2073 = vmatprep.subr.bf16.mxu0 0
        %2074 = vmatpush2.bf16.msra.mxu0 0
        %2075 = vmatprep.mubr.bf16.mxu0 0
        %2076 = vmatmul.mubr.bf16.gmra.mxu0 %v2032
        %v2077 = vpop.f32.mrf.mxu0
        %v2078 = vadd.f32 0.0, %v2077
        %v2079 = vpop.f32.mrf.mxu0
        %v2080 = vpop.f32.mrf.mxu0
        %v2081 = vadd.f32 0.0, %v2080
        %v2082 = vpop.f32.mrf.mxu0
        %2083 = vmatprep.mubr.bf16.mxu0 0
        %2084 = vmatmul.mubr.bf16.gmra.mxu0 %v2035
        %v2085 = vpop.f32.mrf.mxu0
        %v2086 = vadd.f32 0.0, %v2085
        %v2087 = vpop.f32.mrf.mxu0
        %v2088 = vpop.f32.mrf.mxu0
        %v2089 = vadd.f32 0.0, %v2088
        %v2090 = vpop.f32.mrf.mxu0
        %2091 = vmatprep.mubr.bf16.mxu0 0
        %2092 = vmatmul.mubr.bf16.gmra.mxu0 %v2038
        %v2093 = vpop.f32.mrf.mxu0
        %v2094 = vadd.f32 0.0, %v2093
        %v2095 = vpop.f32.mrf.mxu0
        %v2096 = vpop.f32.mrf.mxu0
        %v2097 = vadd.f32 0.0, %v2096
        %v2098 = vpop.f32.mrf.mxu0
        %2099 = vmatprep.mubr.bf16.mxu0 0
        %2100 = vmatmul.mubr.bf16.gmra.mxu0 %v2041
        %v2101 = vpop.f32.mrf.mxu0
        %v2102 = vadd.f32 0.0, %v2101
        %v2103 = vpop.f32.mrf.mxu0
        %v2104 = vpop.f32.mrf.mxu0
        %v2105 = vadd.f32 0.0, %v2104
        %v2106 = vpop.f32.mrf.mxu0
        %2107 = vdwg.mxu0
        %v2112 = vunpack.c.l.b16 %v1601
        %v2113 = vunpack.c.l.b16 %v1602
        %v2114 = vunpack.c.l.b16 %v1603
        %v2115 = vunpack.c.l.b16 %v1604
        %v2116 = vpack.c.b16 %v2113, %v2112
        %v2117 = vpack.c.b16 %v2115, %v2114
        %v2121 = vsel %vm1306, %v1597, 0
        %v2124 = vsel %vm1306, %v1598, 0
        %v2127 = vsel %vm1306, %v1599, 0
        %v2130 = vsel %vm1306, %v1600, 0
        %2132 = vmatprep.subr.bf16.mxu0 0
        %2133 = vmatpush1.bf16.msra.mxu0 0
        %2134 = vmatprep.subr.bf16.mxu0 0
        %2135 = vmatpush1.bf16.msra.mxu0 0
        %2136 = vmatprep.subr.bf16.mxu0 0
        %2137 = vmatpush1.bf16.msra.mxu0 0
        %2138 = vmatprep.subr.bf16.mxu0 0
        %2139 = vmatpush1.bf16.msra.mxu0 0
        %2140 = vmatprep.subr.bf16.mxu0 0
        %2141 = vmatpush1.bf16.msra.mxu0 0
        %2142 = vmatprep.subr.bf16.mxu0 0
        %2143 = vmatpush1.bf16.msra.mxu0 0
        %2144 = vmatprep.subr.bf16.mxu0 0
        %2145 = vmatpush1.bf16.msra.mxu0 %v2117
        %2146 = vmatprep.subr.bf16.mxu0 0
        %2147 = vmatpush1.bf16.msra.mxu0 %v2116
        %2148 = vmatprep.subr.bf16.mxu0 0
        %2149 = vmatpush2.bf16.msra.mxu0 0
        %2150 = vmatprep.subr.bf16.mxu0 0
        %2151 = vmatpush2.bf16.msra.mxu0 0
        %2152 = vmatprep.subr.bf16.mxu0 0
        %2153 = vmatpush2.bf16.msra.mxu0 0
        %2154 = vmatprep.subr.bf16.mxu0 0
        %2155 = vmatpush2.bf16.msra.mxu0 0
        %2156 = vmatprep.subr.bf16.mxu0 0
        %2157 = vmatpush2.bf16.msra.mxu0 0
        %2158 = vmatprep.subr.bf16.mxu0 0
        %2159 = vmatpush2.bf16.msra.mxu0 0
        %2160 = vmatprep.subr.bf16.mxu0 0
        %2161 = vmatpush2.bf16.msra.mxu0 0
        %2162 = vmatprep.subr.bf16.mxu0 0
        %2163 = vmatpush2.bf16.msra.mxu0 0
        %2164 = vmatprep.mubr.bf16.mxu0 0
        %2165 = vmatmul.mubr.bf16.gmra.mxu0 %v2121
        %v2166 = vpop.f32.mrf.mxu0
        %v2167 = vadd.f32 %v2078, %v2166
        %v2168 = vpop.f32.mrf.mxu0
        %v2169 = vpop.f32.mrf.mxu0
        %v2170 = vadd.f32 %v2081, %v2169
        %v2171 = vpop.f32.mrf.mxu0
        %2172 = vmatprep.mubr.bf16.mxu0 0
        %2173 = vmatmul.mubr.bf16.gmra.mxu0 %v2124
        %v2174 = vpop.f32.mrf.mxu0
        %v2175 = vadd.f32 %v2086, %v2174
        %v2176 = vpop.f32.mrf.mxu0
        %v2177 = vpop.f32.mrf.mxu0
        %v2178 = vadd.f32 %v2089, %v2177
        %v2179 = vpop.f32.mrf.mxu0
        %2180 = vmatprep.mubr.bf16.mxu0 0
        %2181 = vmatmul.mubr.bf16.gmra.mxu0 %v2127
        %v2182 = vpop.f32.mrf.mxu0
        %v2183 = vadd.f32 %v2094, %v2182
        %v2184 = vpop.f32.mrf.mxu0
        %v2185 = vpop.f32.mrf.mxu0
        %v2186 = vadd.f32 %v2097, %v2185
        %v2187 = vpop.f32.mrf.mxu0
        %2188 = vmatprep.mubr.bf16.mxu0 0
        %2189 = vmatmul.mubr.bf16.gmra.mxu0 %v2130
        %v2190 = vpop.f32.mrf.mxu0
        %v2191 = vadd.f32 %v2102, %v2190
        %v2192 = vpop.f32.mrf.mxu0
        %v2193 = vpop.f32.mrf.mxu0
        %v2194 = vadd.f32 %v2105, %v2193
        %v2195 = vpop.f32.mrf.mxu0
        %2196 = vdwg.mxu0
        %v2197 = vld [vmem:[#allocation2] sm:$0xf]
        %v2198 = vld [vmem:[#allocation2 + $0x8] sm:$0xf]
        %v2199 = vld [vmem:[#allocation2 + $0x10] sm:$0xf]
        %v2200 = vld [vmem:[#allocation2 + $0x18] sm:$0xf]
        %v2201 = vld [vmem:[#allocation2 + $0x20] sm:$0xf]
        %v2202 = vld [vmem:[#allocation2 + $0x28] sm:$0xf]
        %v2203 = vld [vmem:[#allocation2 + $0x30] sm:$0xf]
        %v2204 = vld [vmem:[#allocation2 + $0x38] sm:$0xf]
        %v2205 = vld [vmem:[#allocation2 + $0x40] sm:$0xf]
        %v2206 = vld [vmem:[#allocation2 + $0x48] sm:$0xf]
        %v2207 = vld [vmem:[#allocation2 + $0x50] sm:$0xf]
        %v2208 = vld [vmem:[#allocation2 + $0x58] sm:$0xf]
        %v2209 = vld [vmem:[#allocation2 + $0x60] sm:$0xf]
        %v2210 = vld [vmem:[#allocation2 + $0x68] sm:$0xf]
        %v2211 = vld [vmem:[#allocation2 + $0x70] sm:$0xf]
        %v2212 = vld [vmem:[#allocation2 + $0x78] sm:$0xf]
        %v2213 = vld [vmem:[#allocation2 + $0x4] sm:$0xf]
        %v2214 = vld [vmem:[#allocation2 + $0xc] sm:$0xf]
        %v2215 = vld [vmem:[#allocation2 + $0x14] sm:$0xf]
        %v2216 = vld [vmem:[#allocation2 + $0x1c] sm:$0xf]
        %v2217 = vld [vmem:[#allocation2 + $0x24] sm:$0xf]
        %v2218 = vld [vmem:[#allocation2 + $0x2c] sm:$0xf]
        %v2219 = vld [vmem:[#allocation2 + $0x34] sm:$0xf]
        %v2220 = vld [vmem:[#allocation2 + $0x3c] sm:$0xf]
        %v2221 = vld [vmem:[#allocation2 + $0x44] sm:$0xf]
        %v2222 = vld [vmem:[#allocation2 + $0x4c] sm:$0xf]
        %v2223 = vld [vmem:[#allocation2 + $0x54] sm:$0xf]
        %v2224 = vld [vmem:[#allocation2 + $0x5c] sm:$0xf]
        %v2225 = vld [vmem:[#allocation2 + $0x64] sm:$0xf]
        %v2226 = vld [vmem:[#allocation2 + $0x6c] sm:$0xf]
        %v2227 = vld [vmem:[#allocation2 + $0x74] sm:$0xf]
        %v2228 = vld [vmem:[#allocation2 + $0x7c] sm:$0xf]
        %2229 = vrot.lane.b32.xlu0 %v1230, 64
        %v2230 = vpop.permute.xlu0 %2229
        %2231 = vrot.lane.b32.xlu0 %v1231, 64
        %v2232 = vpop.permute.xlu0 %2231
        %2233 = vrot.lane.b32.xlu0 %v1232, 64
        %v2234 = vpop.permute.xlu0 %2233
        %2235 = vrot.lane.b32.xlu0 %v1233, 64
        %v2236 = vpop.permute.xlu0 %2235
        %v2253 = vunpack.c.l.b16 %v2197
        %v2254 = vunpack.c.l.b16 %v2198
        %v2255 = vunpack.c.l.b16 %v2199
        %v2256 = vunpack.c.l.b16 %v2200
        %v2257 = vunpack.c.l.b16 %v2201
        %v2258 = vunpack.c.l.b16 %v2202
        %v2259 = vunpack.c.l.b16 %v2203
        %v2260 = vunpack.c.l.b16 %v2204
        %v2261 = vunpack.c.l.b16 %v2205
        %v2262 = vunpack.c.l.b16 %v2206
        %v2263 = vunpack.c.l.b16 %v2207
        %v2264 = vunpack.c.l.b16 %v2208
        %v2265 = vunpack.c.l.b16 %v2209
        %v2266 = vunpack.c.l.b16 %v2210
        %v2267 = vunpack.c.l.b16 %v2211
        %v2268 = vunpack.c.l.b16 %v2212
        %v2269 = vpack.c.b16 %v2254, %v2253
        %v2270 = vpack.c.b16 %v2256, %v2255
        %v2271 = vpack.c.b16 %v2258, %v2257
        %v2272 = vpack.c.b16 %v2260, %v2259
        %v2273 = vpack.c.b16 %v2262, %v2261
        %v2274 = vpack.c.b16 %v2264, %v2263
        %v2275 = vpack.c.b16 %v2266, %v2265
        %v2276 = vpack.c.b16 %v2268, %v2267
        %2277 = vrot.lane.b32.xlu0 %v2269, 64
        %v2278 = vpop.permute.xlu0 %2277
        %2279 = vrot.lane.b32.xlu0 %v2270, 64
        %v2280 = vpop.permute.xlu0 %2279
        %2281 = vrot.lane.b32.xlu0 %v2271, 64
        %v2282 = vpop.permute.xlu0 %2281
        %2283 = vrot.lane.b32.xlu0 %v2272, 64
        %v2284 = vpop.permute.xlu0 %2283
        %2285 = vrot.lane.b32.xlu0 %v2273, 64
        %v2286 = vpop.permute.xlu0 %2285
        %2287 = vrot.lane.b32.xlu0 %v2274, 64
        %v2288 = vpop.permute.xlu0 %2287
        %2289 = vrot.lane.b32.xlu0 %v2275, 64
        %v2290 = vpop.permute.xlu0 %2289
        %2291 = vrot.lane.b32.xlu0 %v2276, 64
        %v2292 = vpop.permute.xlu0 %2291
        %v2294 = vsel %vm1306, %v2230, 0
        %v2297 = vsel %vm1306, %v2232, 0
        %v2300 = vsel %vm1306, %v2234, 0
        %v2303 = vsel %vm1306, %v2236, 0
        %v2306 = vsel %vm1306, %v2278, 0
        %v2309 = vsel %vm1306, %v2280, 0
        %v2312 = vsel %vm1306, %v2282, 0
        %v2315 = vsel %vm1306, %v2284, 0
        %v2318 = vsel %vm1306, %v2286, 0
        %v2321 = vsel %vm1306, %v2288, 0
        %v2324 = vsel %vm1306, %v2290, 0
        %v2327 = vsel %vm1306, %v2292, 0
        %2329 = vmatprep.subr.bf16.mxu0 0
        %2330 = vmatpush1.bf16.xpose.msra.mxu0 %v2327
        %2331 = vmatprep.subr.bf16.mxu0 0
        %2332 = vmatpush1.bf16.xpose.msra.mxu0 %v2324
        %2333 = vmatprep.subr.bf16.mxu0 0
        %2334 = vmatpush1.bf16.xpose.msra.mxu0 %v2321
        %2335 = vmatprep.subr.bf16.mxu0 0
        %2336 = vmatpush1.bf16.xpose.msra.mxu0 %v2318
        %2337 = vmatprep.subr.bf16.mxu0 0
        %2338 = vmatpush1.bf16.xpose.msra.mxu0 %v2315
        %2339 = vmatprep.subr.bf16.mxu0 0
        %2340 = vmatpush1.bf16.xpose.msra.mxu0 %v2312
        %2341 = vmatprep.subr.bf16.mxu0 0
        %2342 = vmatpush1.bf16.xpose.msra.mxu0 %v2309
        %2343 = vmatprep.subr.bf16.mxu0 0
        %2344 = vmatpush1.bf16.xpose.msra.mxu0 %v2306
        %2345 = vmatprep.subr.bf16.mxu0 0
        %2346 = vmatpush2.bf16.xpose.msra.mxu0 0
        %2347 = vmatprep.subr.bf16.mxu0 0
        %2348 = vmatpush2.bf16.xpose.msra.mxu0 0
        %2349 = vmatprep.subr.bf16.mxu0 0
        %2350 = vmatpush2.bf16.xpose.msra.mxu0 0
        %2351 = vmatprep.subr.bf16.mxu0 0
        %2352 = vmatpush2.bf16.xpose.msra.mxu0 0
        %2353 = vmatprep.subr.bf16.mxu0 0
        %2354 = vmatpush2.bf16.xpose.msra.mxu0 0
        %2355 = vmatprep.subr.bf16.mxu0 0
        %2356 = vmatpush2.bf16.xpose.msra.mxu0 0
        %2357 = vmatprep.subr.bf16.mxu0 0
        %2358 = vmatpush2.bf16.xpose.msra.mxu0 0
        %2359 = vmatprep.subr.bf16.mxu0 0
        %2360 = vmatpush2.bf16.xpose.msra.mxu0 0
        %2361 = vmatprep.mubr.bf16.mxu0 0
        %2362 = vmatmul.mubr.bf16.gmra.mxu0 %v2294
        %v2363 = vpop.f32.mrf.mxu0
        %v2364 = vadd.f32 0.0, %v2363
        %v2365 = vpop.f32.mrf.mxu0
        %v2366 = vpop.f32.mrf.mxu0
        %v2367 = vadd.f32 0.0, %v2366
        %v2368 = vpop.f32.mrf.mxu0
        %2369 = vmatprep.mubr.bf16.mxu0 0
        %2370 = vmatmul.mubr.bf16.gmra.mxu0 %v2297
        %v2371 = vpop.f32.mrf.mxu0
        %v2372 = vadd.f32 0.0, %v2371
        %v2373 = vpop.f32.mrf.mxu0
        %v2374 = vpop.f32.mrf.mxu0
        %v2375 = vadd.f32 0.0, %v2374
        %v2376 = vpop.f32.mrf.mxu0
        %2377 = vmatprep.mubr.bf16.mxu0 0
        %2378 = vmatmul.mubr.bf16.gmra.mxu0 %v2300
        %v2379 = vpop.f32.mrf.mxu0
        %v2380 = vadd.f32 0.0, %v2379
        %v2381 = vpop.f32.mrf.mxu0
        %v2382 = vpop.f32.mrf.mxu0
        %v2383 = vadd.f32 0.0, %v2382
        %v2384 = vpop.f32.mrf.mxu0
        %2385 = vmatprep.mubr.bf16.mxu0 0
        %2386 = vmatmul.mubr.bf16.gmra.mxu0 %v2303
        %v2387 = vpop.f32.mrf.mxu0
        %v2388 = vadd.f32 0.0, %v2387
        %v2389 = vpop.f32.mrf.mxu0
        %v2390 = vpop.f32.mrf.mxu0
        %v2391 = vadd.f32 0.0, %v2390
        %v2392 = vpop.f32.mrf.mxu0
        %2393 = vdwg.mxu0
        %2394 = vmax.xlane.f32.xlu0 %v2364
        %v2395 = vpop.xlane.xlu0 %2394
        %2396 = vmax.xlane.f32.xlu0 %v2367
        %v2397 = vpop.xlane.xlu0 %2396
        %2398 = vmax.xlane.f32.xlu0 %v2372
        %v2399 = vpop.xlane.xlu0 %2398
        %2400 = vmax.xlane.f32.xlu0 %v2375
        %v2401 = vpop.xlane.xlu0 %2400
        %2402 = vmax.xlane.f32.xlu0 %v2380
        %v2403 = vpop.xlane.xlu0 %2402
        %2404 = vmax.xlane.f32.xlu0 %v2383
        %v2405 = vpop.xlane.xlu0 %2404
        %2406 = vmax.xlane.f32.xlu0 %v2388
        %v2407 = vpop.xlane.xlu0 %2406
        %2408 = vmax.xlane.f32.xlu0 %v2391
        %v2409 = vpop.xlane.xlu0 %2408
        %v2410 = vsub.f32 %v2364, %v2395
        %v2411 = vsub.f32 %v2367, %v2397
        %v2412 = vsub.f32 %v2372, %v2399
        %v2413 = vsub.f32 %v2375, %v2401
        %v2414 = vsub.f32 %v2380, %v2403
        %v2415 = vsub.f32 %v2383, %v2405
        %v2416 = vsub.f32 %v2388, %v2407
        %v2417 = vsub.f32 %v2391, %v2409
        %v2418 = vmul.f32 %v2410, 1.442695
        %v2419 = vpow.pop %v2418
        %v2420 = vmul.f32 %v2411, 1.442695
        %v2421 = vpow.pop %v2420
        %v2422 = vmul.f32 %v2412, 1.442695
        %v2423 = vpow.pop %v2422
        %v2424 = vmul.f32 %v2413, 1.442695
        %v2425 = vpow.pop %v2424
        %v2426 = vmul.f32 %v2414, 1.442695
        %v2427 = vpow.pop %v2426
        %v2428 = vmul.f32 %v2415, 1.442695
        %v2429 = vpow.pop %v2428
        %v2430 = vmul.f32 %v2416, 1.442695
        %v2431 = vpow.pop %v2430
        %v2432 = vmul.f32 %v2417, 1.442695
        %v2433 = vpow.pop %v2432
        %2434 = vadd.xlane.f32.xlu0 %v2419
        %v2435 = vpop.xlane.xlu0 %2434
        %2436 = vadd.xlane.f32.xlu0 %v2421
        %v2437 = vpop.xlane.xlu0 %2436
        %2438 = vadd.xlane.f32.xlu0 %v2423
        %v2439 = vpop.xlane.xlu0 %2438
        %2440 = vadd.xlane.f32.xlu0 %v2425
        %v2441 = vpop.xlane.xlu0 %2440
        %2442 = vadd.xlane.f32.xlu0 %v2427
        %v2443 = vpop.xlane.xlu0 %2442
        %2444 = vadd.xlane.f32.xlu0 %v2429
        %v2445 = vpop.xlane.xlu0 %2444
        %2446 = vadd.xlane.f32.xlu0 %v2431
        %v2447 = vpop.xlane.xlu0 %2446
        %2448 = vadd.xlane.f32.xlu0 %v2433
        %v2449 = vpop.xlane.xlu0 %2448
        %v2450 = vpack.c.bf16 %v2421, %v2419
        %v2451 = vpack.c.bf16 %v2425, %v2423
        %v2452 = vpack.c.bf16 %v2429, %v2427
        %v2453 = vpack.c.bf16 %v2433, %v2431
        %v2470 = vunpack.c.l.b16 %v2213
        %v2471 = vunpack.c.l.b16 %v2214
        %v2472 = vunpack.c.l.b16 %v2215
        %v2473 = vunpack.c.l.b16 %v2216
        %v2474 = vunpack.c.l.b16 %v2217
        %v2475 = vunpack.c.l.b16 %v2218
        %v2476 = vunpack.c.l.b16 %v2219
        %v2477 = vunpack.c.l.b16 %v2220
        %v2478 = vunpack.c.l.b16 %v2221
        %v2479 = vunpack.c.l.b16 %v2222
        %v2480 = vunpack.c.l.b16 %v2223
        %v2481 = vunpack.c.l.b16 %v2224
        %v2482 = vunpack.c.l.b16 %v2225
        %v2483 = vunpack.c.l.b16 %v2226
        %v2484 = vunpack.c.l.b16 %v2227
        %v2485 = vunpack.c.l.b16 %v2228
        %v2486 = vpack.c.b16 %v2471, %v2470
        %v2487 = vpack.c.b16 %v2473, %v2472
        %v2488 = vpack.c.b16 %v2475, %v2474
        %v2489 = vpack.c.b16 %v2477, %v2476
        %v2490 = vpack.c.b16 %v2479, %v2478
        %v2491 = vpack.c.b16 %v2481, %v2480
        %v2492 = vpack.c.b16 %v2483, %v2482
        %v2493 = vpack.c.b16 %v2485, %v2484
        %2494 = vrot.lane.b32.xlu0 %v2486, 64
        %v2495 = vpop.permute.xlu0 %2494
        %2496 = vrot.lane.b32.xlu0 %v2487, 64
        %v2497 = vpop.permute.xlu0 %2496
        %2498 = vrot.lane.b32.xlu0 %v2488, 64
        %v2499 = vpop.permute.xlu0 %2498
        %2500 = vrot.lane.b32.xlu0 %v2489, 64
        %v2501 = vpop.permute.xlu0 %2500
        %2502 = vrot.lane.b32.xlu0 %v2490, 64
        %v2503 = vpop.permute.xlu0 %2502
        %2504 = vrot.lane.b32.xlu0 %v2491, 64
        %v2505 = vpop.permute.xlu0 %2504
        %2506 = vrot.lane.b32.xlu0 %v2492, 64
        %v2507 = vpop.permute.xlu0 %2506
        %2508 = vrot.lane.b32.xlu0 %v2493, 64
        %v2509 = vpop.permute.xlu0 %2508
        %2518 = vmatprep.subr.bf16.mxu0 0
        %2519 = vmatpush1.bf16.msra.mxu0 %v2509
        %2520 = vmatprep.subr.bf16.mxu0 0
        %2521 = vmatpush1.bf16.msra.mxu0 %v2507
        %2522 = vmatprep.subr.bf16.mxu0 0
        %2523 = vmatpush1.bf16.msra.mxu0 %v2505
        %2524 = vmatprep.subr.bf16.mxu0 0
        %2525 = vmatpush1.bf16.msra.mxu0 %v2503
        %2526 = vmatprep.subr.bf16.mxu0 0
        %2527 = vmatpush1.bf16.msra.mxu0 %v2501
        %2528 = vmatprep.subr.bf16.mxu0 0
        %2529 = vmatpush1.bf16.msra.mxu0 %v2499
        %2530 = vmatprep.subr.bf16.mxu0 0
        %2531 = vmatpush1.bf16.msra.mxu0 %v2497
        %2532 = vmatprep.subr.bf16.mxu0 0
        %2533 = vmatpush1.bf16.msra.mxu0 %v2495
        %2534 = vmatprep.subr.bf16.mxu0 0
        %2535 = vmatpush2.bf16.msra.mxu0 0
        %2536 = vmatprep.subr.bf16.mxu0 0
        %2537 = vmatpush2.bf16.msra.mxu0 0
        %2538 = vmatprep.subr.bf16.mxu0 0
        %2539 = vmatpush2.bf16.msra.mxu0 0
        %2540 = vmatprep.subr.bf16.mxu0 0
        %2541 = vmatpush2.bf16.msra.mxu0 0
        %2542 = vmatprep.subr.bf16.mxu0 0
        %2543 = vmatpush2.bf16.msra.mxu0 0
        %2544 = vmatprep.subr.bf16.mxu0 0
        %2545 = vmatpush2.bf16.msra.mxu0 0
        %2546 = vmatprep.subr.bf16.mxu0 0
        %2547 = vmatpush2.bf16.msra.mxu0 0
        %2548 = vmatprep.subr.bf16.mxu0 0
        %2549 = vmatpush2.bf16.msra.mxu0 0
        %2550 = vmatprep.mubr.bf16.mxu0 0
        %2551 = vmatmul.mubr.bf16.gmra.mxu0 %v2450
        %v2552 = vpop.f32.mrf.mxu0
        %v2553 = vadd.f32 0.0, %v2552
        %v2554 = vpop.f32.mrf.mxu0
        %v2555 = vpop.f32.mrf.mxu0
        %v2556 = vadd.f32 0.0, %v2555
        %v2557 = vpop.f32.mrf.mxu0
        %2558 = vmatprep.mubr.bf16.mxu0 0
        %2559 = vmatmul.mubr.bf16.gmra.mxu0 %v2451
        %v2560 = vpop.f32.mrf.mxu0
        %v2561 = vadd.f32 0.0, %v2560
        %v2562 = vpop.f32.mrf.mxu0
        %v2563 = vpop.f32.mrf.mxu0
        %v2564 = vadd.f32 0.0, %v2563
        %v2565 = vpop.f32.mrf.mxu0
        %2566 = vmatprep.mubr.bf16.mxu0 0
        %2567 = vmatmul.mubr.bf16.gmra.mxu0 %v2452
        %v2568 = vpop.f32.mrf.mxu0
        %v2569 = vadd.f32 0.0, %v2568
        %v2570 = vpop.f32.mrf.mxu0
        %v2571 = vpop.f32.mrf.mxu0
        %v2572 = vadd.f32 0.0, %v2571
        %v2573 = vpop.f32.mrf.mxu0
        %2574 = vmatprep.mubr.bf16.mxu0 0
        %2575 = vmatmul.mubr.bf16.gmra.mxu0 %v2453
        %v2576 = vpop.f32.mrf.mxu0
        %v2577 = vadd.f32 0.0, %v2576
        %v2578 = vpop.f32.mrf.mxu0
        %v2579 = vpop.f32.mrf.mxu0
        %v2580 = vadd.f32 0.0, %v2579
        %v2581 = vpop.f32.mrf.mxu0
        %2582 = vdwg.mxu0
        %v2583 = vrcp.pop %v2435
        %v2584 = vrcp.pop %v2437
        %v2585 = vrcp.pop %v2439
        %v2586 = vrcp.pop %v2441
        %v2587 = vrcp.pop %v2443
        %v2588 = vrcp.pop %v2445
        %v2589 = vrcp.pop %v2447
        %v2590 = vrcp.pop %v2449
        %v2591 = vmul.f32 %v2553, %v2583
        %v2592 = vmul.f32 %v2556, %v2584
        %v2593 = vmul.f32 %v2561, %v2585
        %v2594 = vmul.f32 %v2564, %v2586
        %v2595 = vmul.f32 %v2569, %v2587
        %v2596 = vmul.f32 %v2572, %v2588
        %v2597 = vmul.f32 %v2577, %v2589
        %v2598 = vmul.f32 %v2580, %v2590
        %v2599 = vpack.c.bf16 %v2592, %v2591
        %v2600 = vpack.c.bf16 %v2594, %v2593
        %v2601 = vpack.c.bf16 %v2596, %v2595
        %v2602 = vpack.c.bf16 %v2598, %v2597
        %v2603 = vld [vmem:[#allocation11 + $0x20] sm:$0xf]
        %v2604 = vld [vmem:[#allocation11 + $0x24] sm:$0xf]
        %v2605 = vld [vmem:[#allocation11 + $0x28] sm:$0xf]
        %v2606 = vld [vmem:[#allocation11 + $0x2c] sm:$0xf]
        %v2611 = vunpack.c.l.b16 %v2603
        %v2612 = vunpack.c.l.b16 %v2604
        %v2613 = vunpack.c.l.b16 %v2605
        %v2614 = vunpack.c.l.b16 %v2606
        %v2615 = vpack.c.b16 %v2612, %v2611
        %v2616 = vpack.c.b16 %v2614, %v2613
        %v2620 = vsel %vm1306, %v2599, 0
        %v2623 = vsel %vm1306, %v2600, 0
        %v2626 = vsel %vm1306, %v2601, 0
        %v2629 = vsel %vm1306, %v2602, 0
        %2631 = vmatprep.subr.bf16.mxu0 0
        %2632 = vmatpush1.bf16.msra.mxu0 0
        %2633 = vmatprep.subr.bf16.mxu0 0
        %2634 = vmatpush1.bf16.msra.mxu0 0
        %2635 = vmatprep.subr.bf16.mxu0 0
        %2636 = vmatpush1.bf16.msra.mxu0 0
        %2637 = vmatprep.subr.bf16.mxu0 0
        %2638 = vmatpush1.bf16.msra.mxu0 0
        %2639 = vmatprep.subr.bf16.mxu0 0
        %2640 = vmatpush1.bf16.msra.mxu0 0
        %2641 = vmatprep.subr.bf16.mxu0 0
        %2642 = vmatpush1.bf16.msra.mxu0 0
        %2643 = vmatprep.subr.bf16.mxu0 0
        %2644 = vmatpush1.bf16.msra.mxu0 %v2616
        %2645 = vmatprep.subr.bf16.mxu0 0
        %2646 = vmatpush1.bf16.msra.mxu0 %v2615
        %2647 = vmatprep.subr.bf16.mxu0 0
        %2648 = vmatpush2.bf16.msra.mxu0 0
        %2649 = vmatprep.subr.bf16.mxu0 0
        %2650 = vmatpush2.bf16.msra.mxu0 0
        %2651 = vmatprep.subr.bf16.mxu0 0
        %2652 = vmatpush2.bf16.msra.mxu0 0
        %2653 = vmatprep.subr.bf16.mxu0 0
        %2654 = vmatpush2.bf16.msra.mxu0 0
        %2655 = vmatprep.subr.bf16.mxu0 0
        %2656 = vmatpush2.bf16.msra.mxu0 0
        %2657 = vmatprep.subr.bf16.mxu0 0
        %2658 = vmatpush2.bf16.msra.mxu0 0
        %2659 = vmatprep.subr.bf16.mxu0 0
        %2660 = vmatpush2.bf16.msra.mxu0 0
        %2661 = vmatprep.subr.bf16.mxu0 0
        %2662 = vmatpush2.bf16.msra.mxu0 0
        %2663 = vmatprep.mubr.bf16.mxu0 0
        %2664 = vmatmul.mubr.bf16.gmra.mxu0 %v2620
        %v2665 = vpop.f32.mrf.mxu0
        %v2666 = vadd.f32 0.0, %v2665
        %v2667 = vpop.f32.mrf.mxu0
        %v2668 = vpop.f32.mrf.mxu0
        %v2669 = vadd.f32 0.0, %v2668
        %v2670 = vpop.f32.mrf.mxu0
        %2671 = vmatprep.mubr.bf16.mxu0 0
        %2672 = vmatmul.mubr.bf16.gmra.mxu0 %v2623
        %v2673 = vpop.f32.mrf.mxu0
        %v2674 = vadd.f32 0.0, %v2673
        %v2675 = vpop.f32.mrf.mxu0
        %v2676 = vpop.f32.mrf.mxu0
        %v2677 = vadd.f32 0.0, %v2676
        %v2678 = vpop.f32.mrf.mxu0
        %2679 = vmatprep.mubr.bf16.mxu0 0
        %2680 = vmatmul.mubr.bf16.gmra.mxu0 %v2626
        %v2681 = vpop.f32.mrf.mxu0
        %v2682 = vadd.f32 0.0, %v2681
        %v2683 = vpop.f32.mrf.mxu0
        %v2684 = vpop.f32.mrf.mxu0
        %v2685 = vadd.f32 0.0, %v2684
        %v2686 = vpop.f32.mrf.mxu0
        %2687 = vmatprep.mubr.bf16.mxu0 0
        %2688 = vmatmul.mubr.bf16.gmra.mxu0 %v2629
        %v2689 = vpop.f32.mrf.mxu0
        %v2690 = vadd.f32 0.0, %v2689
        %v2691 = vpop.f32.mrf.mxu0
        %v2692 = vpop.f32.mrf.mxu0
        %v2693 = vadd.f32 0.0, %v2692
        %v2694 = vpop.f32.mrf.mxu0
        %2695 = vdwg.mxu0
        %v2696 = vadd.f32 %v2167, %v2666
        %v2697 = vadd.f32 %v2170, %v2669
        %v2698 = vadd.f32 %v2175, %v2674
        %v2699 = vadd.f32 %v2178, %v2677
        %v2700 = vadd.f32 %v2183, %v2682
        %v2701 = vadd.f32 %v2186, %v2685
        %v2702 = vadd.f32 %v2191, %v2690
        %v2703 = vadd.f32 %v2194, %v2693
        %v2704 = vld [vmem:[#allocation2] sm:$0xf]
        %v2705 = vld [vmem:[#allocation2 + $0x8] sm:$0xf]
        %v2706 = vld [vmem:[#allocation2 + $0x10] sm:$0xf]
        %v2707 = vld [vmem:[#allocation2 + $0x18] sm:$0xf]
        %v2708 = vld [vmem:[#allocation2 + $0x20] sm:$0xf]
        %v2709 = vld [vmem:[#allocation2 + $0x28] sm:$0xf]
        %v2710 = vld [vmem:[#allocation2 + $0x30] sm:$0xf]
        %v2711 = vld [vmem:[#allocation2 + $0x38] sm:$0xf]
        %v2712 = vld [vmem:[#allocation2 + $0x40] sm:$0xf]
        %v2713 = vld [vmem:[#allocation2 + $0x48] sm:$0xf]
        %v2714 = vld [vmem:[#allocation2 + $0x50] sm:$0xf]
        %v2715 = vld [vmem:[#allocation2 + $0x58] sm:$0xf]
        %v2716 = vld [vmem:[#allocation2 + $0x60] sm:$0xf]
        %v2717 = vld [vmem:[#allocation2 + $0x68] sm:$0xf]
        %v2718 = vld [vmem:[#allocation2 + $0x70] sm:$0xf]
        %v2719 = vld [vmem:[#allocation2 + $0x78] sm:$0xf]
        %v2720 = vld [vmem:[#allocation2 + $0x4] sm:$0xf]
        %v2721 = vld [vmem:[#allocation2 + $0xc] sm:$0xf]
        %v2722 = vld [vmem:[#allocation2 + $0x14] sm:$0xf]
        %v2723 = vld [vmem:[#allocation2 + $0x1c] sm:$0xf]
        %v2724 = vld [vmem:[#allocation2 + $0x24] sm:$0xf]
        %v2725 = vld [vmem:[#allocation2 + $0x2c] sm:$0xf]
        %v2726 = vld [vmem:[#allocation2 + $0x34] sm:$0xf]
        %v2727 = vld [vmem:[#allocation2 + $0x3c] sm:$0xf]
        %v2728 = vld [vmem:[#allocation2 + $0x44] sm:$0xf]
        %v2729 = vld [vmem:[#allocation2 + $0x4c] sm:$0xf]
        %v2730 = vld [vmem:[#allocation2 + $0x54] sm:$0xf]
        %v2731 = vld [vmem:[#allocation2 + $0x5c] sm:$0xf]
        %v2732 = vld [vmem:[#allocation2 + $0x64] sm:$0xf]
        %v2733 = vld [vmem:[#allocation2 + $0x6c] sm:$0xf]
        %v2734 = vld [vmem:[#allocation2 + $0x74] sm:$0xf]
        %v2735 = vld [vmem:[#allocation2 + $0x7c] sm:$0xf]
        %2736 = vrot.lane.b32.xlu0 %v1230, 32
        %v2737 = vpop.permute.xlu0 %2736
        %2738 = vrot.lane.b32.xlu0 %v1231, 32
        %v2739 = vpop.permute.xlu0 %2738
        %2740 = vrot.lane.b32.xlu0 %v1232, 32
        %v2741 = vpop.permute.xlu0 %2740
        %2742 = vrot.lane.b32.xlu0 %v1233, 32
        %v2743 = vpop.permute.xlu0 %2742
        %v2760 = vunpack.c.l.b16 %v2704
        %v2761 = vunpack.c.l.b16 %v2705
        %v2762 = vunpack.c.l.b16 %v2706
        %v2763 = vunpack.c.l.b16 %v2707
        %v2764 = vunpack.c.l.b16 %v2708
        %v2765 = vunpack.c.l.b16 %v2709
        %v2766 = vunpack.c.l.b16 %v2710
        %v2767 = vunpack.c.l.b16 %v2711
        %v2768 = vunpack.c.l.b16 %v2712
        %v2769 = vunpack.c.l.b16 %v2713
        %v2770 = vunpack.c.l.b16 %v2714
        %v2771 = vunpack.c.l.b16 %v2715
        %v2772 = vunpack.c.l.b16 %v2716
        %v2773 = vunpack.c.l.b16 %v2717
        %v2774 = vunpack.c.l.b16 %v2718
        %v2775 = vunpack.c.l.b16 %v2719
        %v2776 = vpack.c.b16 %v2761, %v2760
        %v2777 = vpack.c.b16 %v2763, %v2762
        %v2778 = vpack.c.b16 %v2765, %v2764
        %v2779 = vpack.c.b16 %v2767, %v2766
        %v2780 = vpack.c.b16 %v2769, %v2768
        %v2781 = vpack.c.b16 %v2771, %v2770
        %v2782 = vpack.c.b16 %v2773, %v2772
        %v2783 = vpack.c.b16 %v2775, %v2774
        %2784 = vrot.lane.b32.xlu0 %v2776, 32
        %v2785 = vpop.permute.xlu0 %2784
        %2786 = vrot.lane.b32.xlu0 %v2777, 32
        %v2787 = vpop.permute.xlu0 %2786
        %2788 = vrot.lane.b32.xlu0 %v2778, 32
        %v2789 = vpop.permute.xlu0 %2788
        %2790 = vrot.lane.b32.xlu0 %v2779, 32
        %v2791 = vpop.permute.xlu0 %2790
        %2792 = vrot.lane.b32.xlu0 %v2780, 32
        %v2793 = vpop.permute.xlu0 %2792
        %2794 = vrot.lane.b32.xlu0 %v2781, 32
        %v2795 = vpop.permute.xlu0 %2794
        %2796 = vrot.lane.b32.xlu0 %v2782, 32
        %v2797 = vpop.permute.xlu0 %2796
        %2798 = vrot.lane.b32.xlu0 %v2783, 32
        %v2799 = vpop.permute.xlu0 %2798
        %v2801 = vsel %vm1306, %v2737, 0
        %v2804 = vsel %vm1306, %v2739, 0
        %v2807 = vsel %vm1306, %v2741, 0
        %v2810 = vsel %vm1306, %v2743, 0
        %v2813 = vsel %vm1306, %v2785, 0
        %v2816 = vsel %vm1306, %v2787, 0
        %v2819 = vsel %vm1306, %v2789, 0
        %v2822 = vsel %vm1306, %v2791, 0
        %v2825 = vsel %vm1306, %v2793, 0
        %v2828 = vsel %vm1306, %v2795, 0
        %v2831 = vsel %vm1306, %v2797, 0
        %v2834 = vsel %vm1306, %v2799, 0
        %2836 = vmatprep.subr.bf16.mxu0 0
        %2837 = vmatpush1.bf16.xpose.msra.mxu0 %v2834
        %2838 = vmatprep.subr.bf16.mxu0 0
        %2839 = vmatpush1.bf16.xpose.msra.mxu0 %v2831
        %2840 = vmatprep.subr.bf16.mxu0 0
        %2841 = vmatpush1.bf16.xpose.msra.mxu0 %v2828
        %2842 = vmatprep.subr.bf16.mxu0 0
        %2843 = vmatpush1.bf16.xpose.msra.mxu0 %v2825
        %2844 = vmatprep.subr.bf16.mxu0 0
        %2845 = vmatpush1.bf16.xpose.msra.mxu0 %v2822
        %2846 = vmatprep.subr.bf16.mxu0 0
        %2847 = vmatpush1.bf16.xpose.msra.mxu0 %v2819
        %2848 = vmatprep.subr.bf16.mxu0 0
        %2849 = vmatpush1.bf16.xpose.msra.mxu0 %v2816
        %2850 = vmatprep.subr.bf16.mxu0 0
        %2851 = vmatpush1.bf16.xpose.msra.mxu0 %v2813
        %2852 = vmatprep.subr.bf16.mxu0 0
        %2853 = vmatpush2.bf16.xpose.msra.mxu0 0
        %2854 = vmatprep.subr.bf16.mxu0 0
        %2855 = vmatpush2.bf16.xpose.msra.mxu0 0
        %2856 = vmatprep.subr.bf16.mxu0 0
        %2857 = vmatpush2.bf16.xpose.msra.mxu0 0
        %2858 = vmatprep.subr.bf16.mxu0 0
        %2859 = vmatpush2.bf16.xpose.msra.mxu0 0
        %2860 = vmatprep.subr.bf16.mxu0 0
        %2861 = vmatpush2.bf16.xpose.msra.mxu0 0
        %2862 = vmatprep.subr.bf16.mxu0 0
        %2863 = vmatpush2.bf16.xpose.msra.mxu0 0
        %2864 = vmatprep.subr.bf16.mxu0 0
        %2865 = vmatpush2.bf16.xpose.msra.mxu0 0
        %2866 = vmatprep.subr.bf16.mxu0 0
        %2867 = vmatpush2.bf16.xpose.msra.mxu0 0
        %2868 = vmatprep.mubr.bf16.mxu0 0
        %2869 = vmatmul.mubr.bf16.gmra.mxu0 %v2801
        %v2870 = vpop.f32.mrf.mxu0
        %v2871 = vadd.f32 0.0, %v2870
        %v2872 = vpop.f32.mrf.mxu0
        %v2873 = vpop.f32.mrf.mxu0
        %v2874 = vadd.f32 0.0, %v2873
        %v2875 = vpop.f32.mrf.mxu0
        %2876 = vmatprep.mubr.bf16.mxu0 0
        %2877 = vmatmul.mubr.bf16.gmra.mxu0 %v2804
        %v2878 = vpop.f32.mrf.mxu0
        %v2879 = vadd.f32 0.0, %v2878
        %v2880 = vpop.f32.mrf.mxu0
        %v2881 = vpop.f32.mrf.mxu0
        %v2882 = vadd.f32 0.0, %v2881
        %v2883 = vpop.f32.mrf.mxu0
        %2884 = vmatprep.mubr.bf16.mxu0 0
        %2885 = vmatmul.mubr.bf16.gmra.mxu0 %v2807
        %v2886 = vpop.f32.mrf.mxu0
        %v2887 = vadd.f32 0.0, %v2886
        %v2888 = vpop.f32.mrf.mxu0
        %v2889 = vpop.f32.mrf.mxu0
        %v2890 = vadd.f32 0.0, %v2889
        %v2891 = vpop.f32.mrf.mxu0
        %2892 = vmatprep.mubr.bf16.mxu0 0
        %2893 = vmatmul.mubr.bf16.gmra.mxu0 %v2810
        %v2894 = vpop.f32.mrf.mxu0
        %v2895 = vadd.f32 0.0, %v2894
        %v2896 = vpop.f32.mrf.mxu0
        %v2897 = vpop.f32.mrf.mxu0
        %v2898 = vadd.f32 0.0, %v2897
        %v2899 = vpop.f32.mrf.mxu0
        %2900 = vdwg.mxu0
        %2901 = vmax.xlane.f32.xlu0 %v2871
        %v2902 = vpop.xlane.xlu0 %2901
        %2903 = vmax.xlane.f32.xlu0 %v2874
        %v2904 = vpop.xlane.xlu0 %2903
        %2905 = vmax.xlane.f32.xlu0 %v2879
        %v2906 = vpop.xlane.xlu0 %2905
        %2907 = vmax.xlane.f32.xlu0 %v2882
        %v2908 = vpop.xlane.xlu0 %2907
        %2909 = vmax.xlane.f32.xlu0 %v2887
        %v2910 = vpop.xlane.xlu0 %2909
        %2911 = vmax.xlane.f32.xlu0 %v2890
        %v2912 = vpop.xlane.xlu0 %2911
        %2913 = vmax.xlane.f32.xlu0 %v2895
        %v2914 = vpop.xlane.xlu0 %2913
        %2915 = vmax.xlane.f32.xlu0 %v2898
        %v2916 = vpop.xlane.xlu0 %2915
        %v2917 = vsub.f32 %v2871, %v2902
        %v2918 = vsub.f32 %v2874, %v2904
        %v2919 = vsub.f32 %v2879, %v2906
        %v2920 = vsub.f32 %v2882, %v2908
        %v2921 = vsub.f32 %v2887, %v2910
        %v2922 = vsub.f32 %v2890, %v2912
        %v2923 = vsub.f32 %v2895, %v2914
        %v2924 = vsub.f32 %v2898, %v2916
        %v2925 = vmul.f32 %v2917, 1.442695
        %v2926 = vpow.pop %v2925
        %v2927 = vmul.f32 %v2918, 1.442695
        %v2928 = vpow.pop %v2927
        %v2929 = vmul.f32 %v2919, 1.442695
        %v2930 = vpow.pop %v2929
        %v2931 = vmul.f32 %v2920, 1.442695
        %v2932 = vpow.pop %v2931
        %v2933 = vmul.f32 %v2921, 1.442695
        %v2934 = vpow.pop %v2933
        %v2935 = vmul.f32 %v2922, 1.442695
        %v2936 = vpow.pop %v2935
        %v2937 = vmul.f32 %v2923, 1.442695
        %v2938 = vpow.pop %v2937
        %v2939 = vmul.f32 %v2924, 1.442695
        %v2940 = vpow.pop %v2939
        %2941 = vadd.xlane.f32.xlu0 %v2926
        %v2942 = vpop.xlane.xlu0 %2941
        %2943 = vadd.xlane.f32.xlu0 %v2928
        %v2944 = vpop.xlane.xlu0 %2943
        %2945 = vadd.xlane.f32.xlu0 %v2930
        %v2946 = vpop.xlane.xlu0 %2945
        %2947 = vadd.xlane.f32.xlu0 %v2932
        %v2948 = vpop.xlane.xlu0 %2947
        %2949 = vadd.xlane.f32.xlu0 %v2934
        %v2950 = vpop.xlane.xlu0 %2949
        %2951 = vadd.xlane.f32.xlu0 %v2936
        %v2952 = vpop.xlane.xlu0 %2951
        %2953 = vadd.xlane.f32.xlu0 %v2938
        %v2954 = vpop.xlane.xlu0 %2953
        %2955 = vadd.xlane.f32.xlu0 %v2940
        %v2956 = vpop.xlane.xlu0 %2955
        %v2957 = vpack.c.bf16 %v2928, %v2926
        %v2958 = vpack.c.bf16 %v2932, %v2930
        %v2959 = vpack.c.bf16 %v2936, %v2934
        %v2960 = vpack.c.bf16 %v2940, %v2938
        %v2977 = vunpack.c.l.b16 %v2720
        %v2978 = vunpack.c.l.b16 %v2721
        %v2979 = vunpack.c.l.b16 %v2722
        %v2980 = vunpack.c.l.b16 %v2723
        %v2981 = vunpack.c.l.b16 %v2724
        %v2982 = vunpack.c.l.b16 %v2725
        %v2983 = vunpack.c.l.b16 %v2726
        %v2984 = vunpack.c.l.b16 %v2727
        %v2985 = vunpack.c.l.b16 %v2728
        %v2986 = vunpack.c.l.b16 %v2729
        %v2987 = vunpack.c.l.b16 %v2730
        %v2988 = vunpack.c.l.b16 %v2731
        %v2989 = vunpack.c.l.b16 %v2732
        %v2990 = vunpack.c.l.b16 %v2733
        %v2991 = vunpack.c.l.b16 %v2734
        %v2992 = vunpack.c.l.b16 %v2735
        %v2993 = vpack.c.b16 %v2978, %v2977
        %v2994 = vpack.c.b16 %v2980, %v2979
        %v2995 = vpack.c.b16 %v2982, %v2981
        %v2996 = vpack.c.b16 %v2984, %v2983
        %v2997 = vpack.c.b16 %v2986, %v2985
        %v2998 = vpack.c.b16 %v2988, %v2987
        %v2999 = vpack.c.b16 %v2990, %v2989
        %v3000 = vpack.c.b16 %v2992, %v2991
        %3001 = vrot.lane.b32.xlu0 %v2993, 32
        %v3002 = vpop.permute.xlu0 %3001
        %3003 = vrot.lane.b32.xlu0 %v2994, 32
        %v3004 = vpop.permute.xlu0 %3003
        %3005 = vrot.lane.b32.xlu0 %v2995, 32
        %v3006 = vpop.permute.xlu0 %3005
        %3007 = vrot.lane.b32.xlu0 %v2996, 32
        %v3008 = vpop.permute.xlu0 %3007
        %3009 = vrot.lane.b32.xlu0 %v2997, 32
        %v3010 = vpop.permute.xlu0 %3009
        %3011 = vrot.lane.b32.xlu0 %v2998, 32
        %v3012 = vpop.permute.xlu0 %3011
        %3013 = vrot.lane.b32.xlu0 %v2999, 32
        %v3014 = vpop.permute.xlu0 %3013
        %3015 = vrot.lane.b32.xlu0 %v3000, 32
        %v3016 = vpop.permute.xlu0 %3015
        %3025 = vmatprep.subr.bf16.mxu0 0
        %3026 = vmatpush1.bf16.msra.mxu0 %v3016
        %3027 = vmatprep.subr.bf16.mxu0 0
        %3028 = vmatpush1.bf16.msra.mxu0 %v3014
        %3029 = vmatprep.subr.bf16.mxu0 0
        %3030 = vmatpush1.bf16.msra.mxu0 %v3012
        %3031 = vmatprep.subr.bf16.mxu0 0
        %3032 = vmatpush1.bf16.msra.mxu0 %v3010
        %3033 = vmatprep.subr.bf16.mxu0 0
        %3034 = vmatpush1.bf16.msra.mxu0 %v3008
        %3035 = vmatprep.subr.bf16.mxu0 0
        %3036 = vmatpush1.bf16.msra.mxu0 %v3006
        %3037 = vmatprep.subr.bf16.mxu0 0
        %3038 = vmatpush1.bf16.msra.mxu0 %v3004
        %3039 = vmatprep.subr.bf16.mxu0 0
        %3040 = vmatpush1.bf16.msra.mxu0 %v3002
        %3041 = vmatprep.subr.bf16.mxu0 0
        %3042 = vmatpush2.bf16.msra.mxu0 0
        %3043 = vmatprep.subr.bf16.mxu0 0
        %3044 = vmatpush2.bf16.msra.mxu0 0
        %3045 = vmatprep.subr.bf16.mxu0 0
        %3046 = vmatpush2.bf16.msra.mxu0 0
        %3047 = vmatprep.subr.bf16.mxu0 0
        %3048 = vmatpush2.bf16.msra.mxu0 0
        %3049 = vmatprep.subr.bf16.mxu0 0
        %3050 = vmatpush2.bf16.msra.mxu0 0
        %3051 = vmatprep.subr.bf16.mxu0 0
        %3052 = vmatpush2.bf16.msra.mxu0 0
        %3053 = vmatprep.subr.bf16.mxu0 0
        %3054 = vmatpush2.bf16.msra.mxu0 0
        %3055 = vmatprep.subr.bf16.mxu0 0
        %3056 = vmatpush2.bf16.msra.mxu0 0
        %3057 = vmatprep.mubr.bf16.mxu0 0
        %3058 = vmatmul.mubr.bf16.gmra.mxu0 %v2957
        %v3059 = vpop.f32.mrf.mxu0
        %v3060 = vadd.f32 0.0, %v3059
        %v3061 = vpop.f32.mrf.mxu0
        %v3062 = vpop.f32.mrf.mxu0
        %v3063 = vadd.f32 0.0, %v3062
        %v3064 = vpop.f32.mrf.mxu0
        %3065 = vmatprep.mubr.bf16.mxu0 0
        %3066 = vmatmul.mubr.bf16.gmra.mxu0 %v2958
        %v3067 = vpop.f32.mrf.mxu0
        %v3068 = vadd.f32 0.0, %v3067
        %v3069 = vpop.f32.mrf.mxu0
        %v3070 = vpop.f32.mrf.mxu0
        %v3071 = vadd.f32 0.0, %v3070
        %v3072 = vpop.f32.mrf.mxu0
        %3073 = vmatprep.mubr.bf16.mxu0 0
        %3074 = vmatmul.mubr.bf16.gmra.mxu0 %v2959
        %v3075 = vpop.f32.mrf.mxu0
        %v3076 = vadd.f32 0.0, %v3075
        %v3077 = vpop.f32.mrf.mxu0
        %v3078 = vpop.f32.mrf.mxu0
        %v3079 = vadd.f32 0.0, %v3078
        %v3080 = vpop.f32.mrf.mxu0
        %3081 = vmatprep.mubr.bf16.mxu0 0
        %3082 = vmatmul.mubr.bf16.gmra.mxu0 %v2960
        %v3083 = vpop.f32.mrf.mxu0
        %v3084 = vadd.f32 0.0, %v3083
        %v3085 = vpop.f32.mrf.mxu0
        %v3086 = vpop.f32.mrf.mxu0
        %v3087 = vadd.f32 0.0, %v3086
        %v3088 = vpop.f32.mrf.mxu0
        %3089 = vdwg.mxu0
        %v3090 = vrcp.pop %v2942
        %v3091 = vrcp.pop %v2944
        %v3092 = vrcp.pop %v2946
        %v3093 = vrcp.pop %v2948
        %v3094 = vrcp.pop %v2950
        %v3095 = vrcp.pop %v2952
        %v3096 = vrcp.pop %v2954
        %v3097 = vrcp.pop %v2956
        %v3098 = vmul.f32 %v3060, %v3090
        %v3099 = vmul.f32 %v3063, %v3091
        %v3100 = vmul.f32 %v3068, %v3092
        %v3101 = vmul.f32 %v3071, %v3093
        %v3102 = vmul.f32 %v3076, %v3094
        %v3103 = vmul.f32 %v3079, %v3095
        %v3104 = vmul.f32 %v3084, %v3096
        %v3105 = vmul.f32 %v3087, %v3097
        %v3106 = vpack.c.bf16 %v3099, %v3098
        %v3107 = vpack.c.bf16 %v3101, %v3100
        %v3108 = vpack.c.bf16 %v3103, %v3102
        %v3109 = vpack.c.bf16 %v3105, %v3104
        %v3110 = vld [vmem:[#allocation11 + $0x30] sm:$0xf]
        %v3111 = vld [vmem:[#allocation11 + $0x34] sm:$0xf]
        %v3112 = vld [vmem:[#allocation11 + $0x38] sm:$0xf]
        %v3113 = vld [vmem:[#allocation11 + $0x3c] sm:$0xf]
        %v3118 = vunpack.c.l.b16 %v3110
        %v3119 = vunpack.c.l.b16 %v3111
        %v3120 = vunpack.c.l.b16 %v3112
        %v3121 = vunpack.c.l.b16 %v3113
        %v3122 = vpack.c.b16 %v3119, %v3118
        %v3123 = vpack.c.b16 %v3121, %v3120
        %v3127 = vsel %vm1306, %v3106, 0
        %v3130 = vsel %vm1306, %v3107, 0
        %v3133 = vsel %vm1306, %v3108, 0
        %v3136 = vsel %vm1306, %v3109, 0
        %3138 = vmatprep.subr.bf16.mxu0 0
        %3139 = vmatpush1.bf16.msra.mxu0 0
        %3140 = vmatprep.subr.bf16.mxu0 0
        %3141 = vmatpush1.bf16.msra.mxu0 0
        %3142 = vmatprep.subr.bf16.mxu0 0
        %3143 = vmatpush1.bf16.msra.mxu0 0
        %3144 = vmatprep.subr.bf16.mxu0 0
        %3145 = vmatpush1.bf16.msra.mxu0 0
        %3146 = vmatprep.subr.bf16.mxu0 0
        %3147 = vmatpush1.bf16.msra.mxu0 0
        %3148 = vmatprep.subr.bf16.mxu0 0
        %3149 = vmatpush1.bf16.msra.mxu0 0
        %3150 = vmatprep.subr.bf16.mxu0 0
        %3151 = vmatpush1.bf16.msra.mxu0 %v3123
        %3152 = vmatprep.subr.bf16.mxu0 0
        %3153 = vmatpush1.bf16.msra.mxu0 %v3122
        %3154 = vmatprep.subr.bf16.mxu0 0
        %3155 = vmatpush2.bf16.msra.mxu0 0
        %3156 = vmatprep.subr.bf16.mxu0 0
        %3157 = vmatpush2.bf16.msra.mxu0 0
        %3158 = vmatprep.subr.bf16.mxu0 0
        %3159 = vmatpush2.bf16.msra.mxu0 0
        %3160 = vmatprep.subr.bf16.mxu0 0
        %3161 = vmatpush2.bf16.msra.mxu0 0
        %3162 = vmatprep.subr.bf16.mxu0 0
        %3163 = vmatpush2.bf16.msra.mxu0 0
        %3164 = vmatprep.subr.bf16.mxu0 0
        %3165 = vmatpush2.bf16.msra.mxu0 0
        %3166 = vmatprep.subr.bf16.mxu0 0
        %3167 = vmatpush2.bf16.msra.mxu0 0
        %3168 = vmatprep.subr.bf16.mxu0 0
        %3169 = vmatpush2.bf16.msra.mxu0 0
        %3170 = vmatprep.mubr.bf16.mxu0 0
        %3171 = vmatmul.mubr.bf16.gmra.mxu0 %v3127
        %v3172 = vpop.f32.mrf.mxu0
        %v3173 = vadd.f32 0.0, %v3172
        %v3174 = vpop.f32.mrf.mxu0
        %v3175 = vpop.f32.mrf.mxu0
        %v3176 = vadd.f32 0.0, %v3175
        %v3177 = vpop.f32.mrf.mxu0
        %3178 = vmatprep.mubr.bf16.mxu0 0
        %3179 = vmatmul.mubr.bf16.gmra.mxu0 %v3130
        %v3180 = vpop.f32.mrf.mxu0
        %v3181 = vadd.f32 0.0, %v3180
        %v3182 = vpop.f32.mrf.mxu0
        %v3183 = vpop.f32.mrf.mxu0
        %v3184 = vadd.f32 0.0, %v3183
        %v3185 = vpop.f32.mrf.mxu0
        %3186 = vmatprep.mubr.bf16.mxu0 0
        %3187 = vmatmul.mubr.bf16.gmra.mxu0 %v3133
        %v3188 = vpop.f32.mrf.mxu0
        %v3189 = vadd.f32 0.0, %v3188
        %v3190 = vpop.f32.mrf.mxu0
        %v3191 = vpop.f32.mrf.mxu0
        %v3192 = vadd.f32 0.0, %v3191
        %v3193 = vpop.f32.mrf.mxu0
        %3194 = vmatprep.mubr.bf16.mxu0 0
        %3195 = vmatmul.mubr.bf16.gmra.mxu0 %v3136
        %v3196 = vpop.f32.mrf.mxu0
        %v3197 = vadd.f32 0.0, %v3196
        %v3198 = vpop.f32.mrf.mxu0
        %v3199 = vpop.f32.mrf.mxu0
        %v3200 = vadd.f32 0.0, %v3199
        %v3201 = vpop.f32.mrf.mxu0
        %3202 = vdwg.mxu0
        %v3203 = vadd.f32 %v2696, %v3173
        %v3204 = vadd.f32 %v2697, %v3176
        %v3205 = vadd.f32 %v2698, %v3181
        %v3206 = vadd.f32 %v2699, %v3184
        %v3207 = vadd.f32 %v2700, %v3189
        %v3208 = vadd.f32 %v2701, %v3192
        %v3209 = vadd.f32 %v2702, %v3197
        %v3210 = vadd.f32 %v2703, %v3200
        %v3211 = vld [vmem:[%s7] sm:$0x1]
        %v3213 = vlaneseq
        %v3214 = vshrl.u32 %v3213, 7
        %v3215 = vsub.s32 0, %v3214
        %v3216 = vrot.slane %v3211, %v3215
        %v3218 = vadd.f32 %v3203, %v3216
        %v3219 = vadd.f32 %v3204, %v3216
        %v3220 = vadd.f32 %v3205, %v3216
        %v3221 = vadd.f32 %v3206, %v3216
        %v3222 = vadd.f32 %v3207, %v3216
        %v3223 = vadd.f32 %v3208, %v3216
        %v3224 = vadd.f32 %v3209, %v3216
        %v3225 = vadd.f32 %v3210, %v3216
        %v3226 = vadd.f32 %v1074, %v3218
        %v3227 = vadd.f32 %v1075, %v3219
        %v3228 = vadd.f32 %v1076, %v3220
        %v3229 = vadd.f32 %v1077, %v3221
        %v3230 = vadd.f32 %v1078, %v3222
        %v3231 = vadd.f32 %v1079, %v3223
        %v3232 = vadd.f32 %v1080, %v3224
        %v3233 = vadd.f32 %v1081, %v3225
        %v3234 = vld [vmem:[%s12] sm:$0x1]
        %v3235 = vld [vmem:[%s13] sm:$0x1]
        %3236 = vadd.xlane.f32.xlu0 %v3226
        %v3237 = vpop.xlane.xlu0 %3236
        %3238 = vadd.xlane.f32.xlu0 %v3227
        %v3239 = vpop.xlane.xlu0 %3238
        %3240 = vadd.xlane.f32.xlu0 %v3228
        %v3241 = vpop.xlane.xlu0 %3240
        %3242 = vadd.xlane.f32.xlu0 %v3229
        %v3243 = vpop.xlane.xlu0 %3242
        %3244 = vadd.xlane.f32.xlu0 %v3230
        %v3245 = vpop.xlane.xlu0 %3244
        %3246 = vadd.xlane.f32.xlu0 %v3231
        %v3247 = vpop.xlane.xlu0 %3246
        %3248 = vadd.xlane.f32.xlu0 %v3232
        %v3249 = vpop.xlane.xlu0 %3248
        %3250 = vadd.xlane.f32.xlu0 %v3233
        %v3251 = vpop.xlane.xlu0 %3250
        %v3252 = vrcp.pop 128.0
        %v3253 = vmul.f32 %v3237, %v3252
        %v3254 = vmul.f32 %v3239, %v3252
        %v3255 = vmul.f32 %v3241, %v3252
        %v3256 = vmul.f32 %v3243, %v3252
        %v3257 = vmul.f32 %v3245, %v3252
        %v3258 = vmul.f32 %v3247, %v3252
        %v3259 = vmul.f32 %v3249, %v3252
        %v3260 = vmul.f32 %v3251, %v3252
        %v3261 = vsub.f32 %v3226, %v3253
        %v3262 = vsub.f32 %v3227, %v3254
        %v3263 = vsub.f32 %v3228, %v3255
        %v3264 = vsub.f32 %v3229, %v3256
        %v3265 = vsub.f32 %v3230, %v3257
        %v3266 = vsub.f32 %v3231, %v3258
        %v3267 = vsub.f32 %v3232, %v3259
        %v3268 = vsub.f32 %v3233, %v3260
        %v3269 = vmul.f32 %v3261, %v3261
        %v3270 = vmul.f32 %v3262, %v3262
        %v3271 = vmul.f32 %v3263, %v3263
        %v3272 = vmul.f32 %v3264, %v3264
        %v3273 = vmul.f32 %v3265, %v3265
        %v3274 = vmul.f32 %v3266, %v3266
        %v3275 = vmul.f32 %v3267, %v3267
        %v3276 = vmul.f32 %v3268, %v3268
        %3277 = vadd.xlane.f32.xlu0 %v3269
        %v3278 = vpop.xlane.xlu0 %3277
        %3279 = vadd.xlane.f32.xlu0 %v3270
        %v3280 = vpop.xlane.xlu0 %3279
        %3281 = vadd.xlane.f32.xlu0 %v3271
        %v3282 = vpop.xlane.xlu0 %3281
        %3283 = vadd.xlane.f32.xlu0 %v3272
        %v3284 = vpop.xlane.xlu0 %3283
        %3285 = vadd.xlane.f32.xlu0 %v3273
        %v3286 = vpop.xlane.xlu0 %3285
        %3287 = vadd.xlane.f32.xlu0 %v3274
        %v3288 = vpop.xlane.xlu0 %3287
        %3289 = vadd.xlane.f32.xlu0 %v3275
        %v3290 = vpop.xlane.xlu0 %3289
        %3291 = vadd.xlane.f32.xlu0 %v3276
        %v3292 = vpop.xlane.xlu0 %3291
        %v3293 = vmul.f32 %v3278, %v3252
        %v3294 = vmul.f32 %v3280, %v3252
        %v3295 = vmul.f32 %v3282, %v3252
        %v3296 = vmul.f32 %v3284, %v3252
        %v3297 = vmul.f32 %v3286, %v3252
        %v3298 = vmul.f32 %v3288, %v3252
        %v3299 = vmul.f32 %v3290, %v3252
        %v3300 = vmul.f32 %v3292, %v3252
        %v3301 = vadd.f32 %v3293, 1e-05
        %v3302 = vadd.f32 %v3294, 1e-05
        %v3303 = vadd.f32 %v3295, 1e-05
        %v3304 = vadd.f32 %v3296, 1e-05
        %v3305 = vadd.f32 %v3297, 1e-05
        %v3306 = vadd.f32 %v3298, 1e-05
        %v3307 = vadd.f32 %v3299, 1e-05
        %v3308 = vadd.f32 %v3300, 1e-05
        %v3309 = vrsqrt.pop %v3301
        %v3310 = vrsqrt.pop %v3302
        %v3311 = vrsqrt.pop %v3303
        %v3312 = vrsqrt.pop %v3304
        %v3313 = vrsqrt.pop %v3305
        %v3314 = vrsqrt.pop %v3306
        %v3315 = vrsqrt.pop %v3307
        %v3316 = vrsqrt.pop %v3308
        %v3317 = vmul.f32 %v3261, %v3309
        %v3318 = vmul.f32 %v3262, %v3310
        %v3319 = vmul.f32 %v3263, %v3311
        %v3320 = vmul.f32 %v3264, %v3312
        %v3321 = vmul.f32 %v3265, %v3313
        %v3322 = vmul.f32 %v3266, %v3314
        %v3323 = vmul.f32 %v3267, %v3315
        %v3324 = vmul.f32 %v3268, %v3316
        %v3326 = vlaneseq
        %v3327 = vshrl.u32 %v3326, 7
        %v3328 = vsub.s32 0, %v3327
        %v3329 = vrot.slane %v3234, %v3328
        %v3331 = vmul.f32 %v3317, %v3329
        %v3332 = vmul.f32 %v3318, %v3329
        %v3333 = vmul.f32 %v3319, %v3329
        %v3334 = vmul.f32 %v3320, %v3329
        %v3335 = vmul.f32 %v3321, %v3329
        %v3336 = vmul.f32 %v3322, %v3329
        %v3337 = vmul.f32 %v3323, %v3329
        %v3338 = vmul.f32 %v3324, %v3329
        %v3340 = vlaneseq
        %v3341 = vshrl.u32 %v3340, 7
        %v3342 = vsub.s32 0, %v3341
        %v3343 = vrot.slane %v3235, %v3342
        %v3345 = vadd.f32 %v3331, %v3343
        %v3346 = vadd.f32 %v3332, %v3343
        %v3347 = vadd.f32 %v3333, %v3343
        %v3348 = vadd.f32 %v3334, %v3343
        %v3349 = vadd.f32 %v3335, %v3343
        %v3350 = vadd.f32 %v3336, %v3343
        %v3351 = vadd.f32 %v3337, %v3343
        %v3352 = vadd.f32 %v3338, %v3343
        %v3353 = vpack.c.bf16 %v3346, %v3345
        %v3354 = vpack.c.bf16 %v3348, %v3347
        %v3355 = vpack.c.bf16 %v3350, %v3349
        %v3356 = vpack.c.bf16 %v3352, %v3351
        %v3357 = vld [vmem:[#allocation12] sm:$0xff]
        %v3358 = vld [vmem:[#allocation12 + $0x8] sm:$0xff]
        %v3359 = vld [vmem:[#allocation12 + $0x10] sm:$0xff]
        %v3360 = vld [vmem:[#allocation12 + $0x18] sm:$0xff]
        %v3361 = vld [vmem:[#allocation12 + $0x20] sm:$0xff]
        %v3362 = vld [vmem:[#allocation12 + $0x28] sm:$0xff]
        %v3363 = vld [vmem:[#allocation12 + $0x30] sm:$0xff]
        %v3364 = vld [vmem:[#allocation12 + $0x38] sm:$0xff]
        %v3365 = vld [vmem:[#allocation12 + $0x40] sm:$0xff]
        %v3366 = vld [vmem:[#allocation12 + $0x48] sm:$0xff]
        %v3367 = vld [vmem:[#allocation12 + $0x50] sm:$0xff]
        %v3368 = vld [vmem:[#allocation12 + $0x58] sm:$0xff]
        %v3369 = vld [vmem:[#allocation12 + $0x60] sm:$0xff]
        %v3370 = vld [vmem:[#allocation12 + $0x68] sm:$0xff]
        %v3371 = vld [vmem:[#allocation12 + $0x70] sm:$0xff]
        %v3372 = vld [vmem:[#allocation12 + $0x78] sm:$0xff]
        %v3373 = vld [vmem:[%s9] sm:$0x3]
        %v3375 = vlaneseq
        %v3376 = vshrl.u32 %v3375, 7
        %v3377 = vsub.s32 0, %v3376
        %v3378 = vrot.slane %v3373, %v3377
        %v3379 = vlaneseq
        %v3380 = vshrl.u32 %v3379, 7
        %v3381 = vsub.s32 1, %v3380
        %v3382 = vrot.slane %v3373, %v3381
        %v3401 = vunpack.c.l.b16 %v3357
        %v3402 = vunpack.c.h.b16 %v3357
        %v3403 = vunpack.c.l.b16 %v3358
        %v3404 = vunpack.c.h.b16 %v3358
        %v3405 = vunpack.c.l.b16 %v3359
        %v3406 = vunpack.c.h.b16 %v3359
        %v3407 = vunpack.c.l.b16 %v3360
        %v3408 = vunpack.c.h.b16 %v3360
        %v3409 = vunpack.c.l.b16 %v3361
        %v3410 = vunpack.c.h.b16 %v3361
        %v3411 = vunpack.c.l.b16 %v3362
        %v3412 = vunpack.c.h.b16 %v3362
        %v3413 = vunpack.c.l.b16 %v3363
        %v3414 = vunpack.c.h.b16 %v3363
        %v3415 = vunpack.c.l.b16 %v3364
        %v3416 = vunpack.c.h.b16 %v3364
        %v3417 = vunpack.c.l.b16 %v3365
        %v3418 = vunpack.c.h.b16 %v3365
        %v3419 = vunpack.c.l.b16 %v3366
        %v3420 = vunpack.c.h.b16 %v3366
        %v3421 = vunpack.c.l.b16 %v3367
        %v3422 = vunpack.c.h.b16 %v3367
        %v3423 = vunpack.c.l.b16 %v3368
        %v3424 = vunpack.c.h.b16 %v3368
        %v3425 = vunpack.c.l.b16 %v3369
        %v3426 = vunpack.c.h.b16 %v3369
        %v3427 = vunpack.c.l.b16 %v3370
        %v3428 = vunpack.c.h.b16 %v3370
        %v3429 = vunpack.c.l.b16 %v3371
        %v3430 = vunpack.c.h.b16 %v3371
        %v3431 = vunpack.c.l.b16 %v3372
        %v3432 = vunpack.c.h.b16 %v3372
        %v3433 = vpack.c.b16 %v3403, %v3401
        %v3434 = vpack.c.b16 %v3404, %v3402
        %v3435 = vpack.c.b16 %v3407, %v3405
        %v3436 = vpack.c.b16 %v3408, %v3406
        %v3437 = vpack.c.b16 %v3411, %v3409
        %v3438 = vpack.c.b16 %v3412, %v3410
        %v3439 = vpack.c.b16 %v3415, %v3413
        %v3440 = vpack.c.b16 %v3416, %v3414
        %v3441 = vpack.c.b16 %v3419, %v3417
        %v3442 = vpack.c.b16 %v3420, %v3418
        %v3443 = vpack.c.b16 %v3423, %v3421
        %v3444 = vpack.c.b16 %v3424, %v3422
        %v3445 = vpack.c.b16 %v3427, %v3425
        %v3446 = vpack.c.b16 %v3428, %v3426
        %v3447 = vpack.c.b16 %v3431, %v3429
        %v3448 = vpack.c.b16 %v3432, %v3430
        %3465 = vmatprep.subr.bf16.mxu0 %v3448
        %3466 = vmatpush1.bf16.msra.mxu0 %v3447
        %3467 = vmatprep.subr.bf16.mxu0 %v3446
        %3468 = vmatpush1.bf16.msra.mxu0 %v3445
        %3469 = vmatprep.subr.bf16.mxu0 %v3444
        %3470 = vmatpush1.bf16.msra.mxu0 %v3443
        %3471 = vmatprep.subr.bf16.mxu0 %v3442
        %3472 = vmatpush1.bf16.msra.mxu0 %v3441
        %3473 = vmatprep.subr.bf16.mxu0 %v3440
        %3474 = vmatpush1.bf16.msra.mxu0 %v3439
        %3475 = vmatprep.subr.bf16.mxu0 %v3438
        %3476 = vmatpush1.bf16.msra.mxu0 %v3437
        %3477 = vmatprep.subr.bf16.mxu0 %v3436
        %3478 = vmatpush1.bf16.msra.mxu0 %v3435
        %3479 = vmatprep.subr.bf16.mxu0 %v3434
        %3480 = vmatpush1.bf16.msra.mxu0 %v3433
        %3481 = vmatprep.subr.bf16.mxu0 0
        %3482 = vmatpush2.bf16.msra.mxu0 0
        %3483 = vmatprep.subr.bf16.mxu0 0
        %3484 = vmatpush2.bf16.msra.mxu0 0
        %3485 = vmatprep.subr.bf16.mxu0 0
        %3486 = vmatpush2.bf16.msra.mxu0 0
        %3487 = vmatprep.subr.bf16.mxu0 0
        %3488 = vmatpush2.bf16.msra.mxu0 0
        %3489 = vmatprep.subr.bf16.mxu0 0
        %3490 = vmatpush2.bf16.msra.mxu0 0
        %3491 = vmatprep.subr.bf16.mxu0 0
        %3492 = vmatpush2.bf16.msra.mxu0 0
        %3493 = vmatprep.subr.bf16.mxu0 0
        %3494 = vmatpush2.bf16.msra.mxu0 0
        %3495 = vmatprep.subr.bf16.mxu0 0
        %3496 = vmatpush2.bf16.msra.mxu0 0
        %3497 = vmatprep.mubr.bf16.mxu0 0
        %3498 = vmatmul.mubr.bf16.gmra.mxu0 %v3353
        %v3499 = vpop.f32.mrf.mxu0
        %v3500 = vadd.f32 %v3378, %v3499
        %v3501 = vpop.f32.mrf.mxu0
        %v3502 = vadd.f32 %v3382, %v3501
        %v3503 = vpop.f32.mrf.mxu0
        %v3504 = vadd.f32 %v3378, %v3503
        %v3505 = vpop.f32.mrf.mxu0
        %v3506 = vadd.f32 %v3382, %v3505
        %3507 = vmatprep.mubr.bf16.mxu0 0
        %3508 = vmatmul.mubr.bf16.gmra.mxu0 %v3354
        %v3509 = vpop.f32.mrf.mxu0
        %v3510 = vadd.f32 %v3378, %v3509
        %v3511 = vpop.f32.mrf.mxu0
        %v3512 = vadd.f32 %v3382, %v3511
        %v3513 = vpop.f32.mrf.mxu0
        %v3514 = vadd.f32 %v3378, %v3513
        %v3515 = vpop.f32.mrf.mxu0
        %v3516 = vadd.f32 %v3382, %v3515
        %3517 = vmatprep.mubr.bf16.mxu0 0
        %3518 = vmatmul.mubr.bf16.gmra.mxu0 %v3355
        %v3519 = vpop.f32.mrf.mxu0
        %v3520 = vadd.f32 %v3378, %v3519
        %v3521 = vpop.f32.mrf.mxu0
        %v3522 = vadd.f32 %v3382, %v3521
        %v3523 = vpop.f32.mrf.mxu0
        %v3524 = vadd.f32 %v3378, %v3523
        %v3525 = vpop.f32.mrf.mxu0
        %v3526 = vadd.f32 %v3382, %v3525
        %3527 = vmatprep.mubr.bf16.mxu0 0
        %3528 = vmatmul.mubr.bf16.gmra.mxu0 %v3356
        %v3529 = vpop.f32.mrf.mxu0
        %v3530 = vadd.f32 %v3378, %v3529
        %v3531 = vpop.f32.mrf.mxu0
        %v3532 = vadd.f32 %v3382, %v3531
        %v3533 = vpop.f32.mrf.mxu0
        %v3534 = vadd.f32 %v3378, %v3533
        %v3535 = vpop.f32.mrf.mxu0
        %v3536 = vadd.f32 %v3382, %v3535
        %3537 = vdwg.mxu0
        %v3538 = vmul.f32 %v3500, 0.5
        %v3539 = vmul.f32 %v3502, 0.5
        %v3540 = vmul.f32 %v3504, 0.5
        %v3541 = vmul.f32 %v3506, 0.5
        %v3542 = vmul.f32 %v3510, 0.5
        %v3543 = vmul.f32 %v3512, 0.5
        %v3544 = vmul.f32 %v3514, 0.5
        %v3545 = vmul.f32 %v3516, 0.5
        %v3546 = vmul.f32 %v3520, 0.5
        %v3547 = vmul.f32 %v3522, 0.5
        %v3548 = vmul.f32 %v3524, 0.5
        %v3549 = vmul.f32 %v3526, 0.5
        %v3550 = vmul.f32 %v3530, 0.5
        %v3551 = vmul.f32 %v3532, 0.5
        %v3552 = vmul.f32 %v3534, 0.5
        %v3553 = vmul.f32 %v3536, 0.5
        %v3554 = vmul.f32 %v3500, 0.70710677
        %v3555 = vmul.f32 %v3502, 0.70710677
        %v3556 = vmul.f32 %v3504, 0.70710677
        %v3557 = vmul.f32 %v3506, 0.70710677
        %v3558 = vmul.f32 %v3510, 0.70710677
        %v3559 = vmul.f32 %v3512, 0.70710677
        %v3560 = vmul.f32 %v3514, 0.70710677
        %v3561 = vmul.f32 %v3516, 0.70710677
        %v3562 = vmul.f32 %v3520, 0.70710677
        %v3563 = vmul.f32 %v3522, 0.70710677
        %v3564 = vmul.f32 %v3524, 0.70710677
        %v3565 = vmul.f32 %v3526, 0.70710677
        %v3566 = vmul.f32 %v3530, 0.70710677
        %v3567 = vmul.f32 %v3532, 0.70710677
        %v3568 = vmul.f32 %v3534, 0.70710677
        %v3569 = vmul.f32 %v3536, 0.70710677
        %v3570 = verf.f32.pop %v3554
        %v3571 = verf.f32.pop %v3555
        %v3572 = verf.f32.pop %v3556
        %v3573 = verf.f32.pop %v3557
        %v3574 = verf.f32.pop %v3558
        %v3575 = verf.f32.pop %v3559
        %v3576 = verf.f32.pop %v3560
        %v3577 = verf.f32.pop %v3561
        %v3578 = verf.f32.pop %v3562
        %v3579 = verf.f32.pop %v3563
        %v3580 = verf.f32.pop %v3564
        %v3581 = verf.f32.pop %v3565
        %v3582 = verf.f32.pop %v3566
        %v3583 = verf.f32.pop %v3567
        %v3584 = verf.f32.pop %v3568
        %v3585 = verf.f32.pop %v3569
        %v3586 = vadd.f32 %v3570, 1.0
        %v3587 = vadd.f32 %v3571, 1.0
        %v3588 = vadd.f32 %v3572, 1.0
        %v3589 = vadd.f32 %v3573, 1.0
        %v3590 = vadd.f32 %v3574, 1.0
        %v3591 = vadd.f32 %v3575, 1.0
        %v3592 = vadd.f32 %v3576, 1.0
        %v3593 = vadd.f32 %v3577, 1.0
        %v3594 = vadd.f32 %v3578, 1.0
        %v3595 = vadd.f32 %v3579, 1.0
        %v3596 = vadd.f32 %v3580, 1.0
        %v3597 = vadd.f32 %v3581, 1.0
        %v3598 = vadd.f32 %v3582, 1.0
        %v3599 = vadd.f32 %v3583, 1.0
        %v3600 = vadd.f32 %v3584, 1.0
        %v3601 = vadd.f32 %v3585, 1.0
        %v3602 = vmul.f32 %v3538, %v3586
        %v3603 = vmul.f32 %v3539, %v3587
        %v3604 = vmul.f32 %v3540, %v3588
        %v3605 = vmul.f32 %v3541, %v3589
        %v3606 = vmul.f32 %v3542, %v3590
        %v3607 = vmul.f32 %v3543, %v3591
        %v3608 = vmul.f32 %v3544, %v3592
        %v3609 = vmul.f32 %v3545, %v3593
        %v3610 = vmul.f32 %v3546, %v3594
        %v3611 = vmul.f32 %v3547, %v3595
        %v3612 = vmul.f32 %v3548, %v3596
        %v3613 = vmul.f32 %v3549, %v3597
        %v3614 = vmul.f32 %v3550, %v3598
        %v3615 = vmul.f32 %v3551, %v3599
        %v3616 = vmul.f32 %v3552, %v3600
        %v3617 = vmul.f32 %v3553, %v3601
        %v3618 = vpack.c.bf16 %v3604, %v3602
        %v3619 = vpack.c.bf16 %v3605, %v3603
        %v3620 = vpack.c.bf16 %v3608, %v3606
        %v3621 = vpack.c.bf16 %v3609, %v3607
        %v3622 = vpack.c.bf16 %v3612, %v3610
        %v3623 = vpack.c.bf16 %v3613, %v3611
        %v3624 = vpack.c.bf16 %v3616, %v3614
        %v3625 = vpack.c.bf16 %v3617, %v3615
        %v3626 = vld [vmem:[#allocation14] sm:$0xf]
        %v3627 = vld [vmem:[#allocation14 + $0x4] sm:$0xf]
        %v3628 = vld [vmem:[#allocation14 + $0x8] sm:$0xf]
        %v3629 = vld [vmem:[#allocation14 + $0xc] sm:$0xf]
        %v3630 = vld [vmem:[#allocation14 + $0x10] sm:$0xf]
        %v3631 = vld [vmem:[#allocation14 + $0x14] sm:$0xf]
        %v3632 = vld [vmem:[#allocation14 + $0x18] sm:$0xf]
        %v3633 = vld [vmem:[#allocation14 + $0x1c] sm:$0xf]
        %v3634 = vld [vmem:[#allocation14 + $0x20] sm:$0xf]
        %v3635 = vld [vmem:[#allocation14 + $0x24] sm:$0xf]
        %v3636 = vld [vmem:[#allocation14 + $0x28] sm:$0xf]
        %v3637 = vld [vmem:[#allocation14 + $0x2c] sm:$0xf]
        %v3638 = vld [vmem:[#allocation14 + $0x30] sm:$0xf]
        %v3639 = vld [vmem:[#allocation14 + $0x34] sm:$0xf]
        %v3640 = vld [vmem:[#allocation14 + $0x38] sm:$0xf]
        %v3641 = vld [vmem:[#allocation14 + $0x3c] sm:$0xf]
        %v3642 = vld [vmem:[#allocation14 + $0x40] sm:$0xf]
        %v3643 = vld [vmem:[#allocation14 + $0x44] sm:$0xf]
        %v3644 = vld [vmem:[#allocation14 + $0x48] sm:$0xf]
        %v3645 = vld [vmem:[#allocation14 + $0x4c] sm:$0xf]
        %v3646 = vld [vmem:[#allocation14 + $0x50] sm:$0xf]
        %v3647 = vld [vmem:[#allocation14 + $0x54] sm:$0xf]
        %v3648 = vld [vmem:[#allocation14 + $0x58] sm:$0xf]
        %v3649 = vld [vmem:[#allocation14 + $0x5c] sm:$0xf]
        %v3650 = vld [vmem:[#allocation14 + $0x60] sm:$0xf]
        %v3651 = vld [vmem:[#allocation14 + $0x64] sm:$0xf]
        %v3652 = vld [vmem:[#allocation14 + $0x68] sm:$0xf]
        %v3653 = vld [vmem:[#allocation14 + $0x6c] sm:$0xf]
        %v3654 = vld [vmem:[#allocation14 + $0x70] sm:$0xf]
        %v3655 = vld [vmem:[#allocation14 + $0x74] sm:$0xf]
        %v3656 = vld [vmem:[#allocation14 + $0x78] sm:$0xf]
        %v3657 = vld [vmem:[#allocation14 + $0x7c] sm:$0xf]
        %v3658 = vld [vmem:[%s11] sm:$0x1]
        %v3660 = vlaneseq
        %v3661 = vshrl.u32 %v3660, 7
        %v3662 = vsub.s32 0, %v3661
        %v3663 = vrot.slane %v3658, %v3662
        %v3697 = vunpack.c.l.b16 %v3626
        %v3698 = vunpack.c.l.b16 %v3627
        %v3699 = vunpack.c.l.b16 %v3628
        %v3700 = vunpack.c.l.b16 %v3629
        %v3701 = vunpack.c.l.b16 %v3630
        %v3702 = vunpack.c.l.b16 %v3631
        %v3703 = vunpack.c.l.b16 %v3632
        %v3704 = vunpack.c.l.b16 %v3633
        %v3705 = vunpack.c.l.b16 %v3634
        %v3706 = vunpack.c.l.b16 %v3635
        %v3707 = vunpack.c.l.b16 %v3636
        %v3708 = vunpack.c.l.b16 %v3637
        %v3709 = vunpack.c.l.b16 %v3638
        %v3710 = vunpack.c.l.b16 %v3639
        %v3711 = vunpack.c.l.b16 %v3640
        %v3712 = vunpack.c.l.b16 %v3641
        %v3713 = vunpack.c.l.b16 %v3642
        %v3714 = vunpack.c.l.b16 %v3643
        %v3715 = vunpack.c.l.b16 %v3644
        %v3716 = vunpack.c.l.b16 %v3645
        %v3717 = vunpack.c.l.b16 %v3646
        %v3718 = vunpack.c.l.b16 %v3647
        %v3719 = vunpack.c.l.b16 %v3648
        %v3720 = vunpack.c.l.b16 %v3649
        %v3721 = vunpack.c.l.b16 %v3650
        %v3722 = vunpack.c.l.b16 %v3651
        %v3723 = vunpack.c.l.b16 %v3652
        %v3724 = vunpack.c.l.b16 %v3653
        %v3725 = vunpack.c.l.b16 %v3654
        %v3726 = vunpack.c.l.b16 %v3655
        %v3727 = vunpack.c.l.b16 %v3656
        %v3728 = vunpack.c.l.b16 %v3657
        %v3729 = vpack.c.b16 %v3698, %v3697
        %v3730 = vpack.c.b16 %v3700, %v3699
        %v3731 = vpack.c.b16 %v3702, %v3701
        %v3732 = vpack.c.b16 %v3704, %v3703
        %v3733 = vpack.c.b16 %v3706, %v3705
        %v3734 = vpack.c.b16 %v3708, %v3707
        %v3735 = vpack.c.b16 %v3710, %v3709
        %v3736 = vpack.c.b16 %v3712, %v3711
        %v3737 = vpack.c.b16 %v3714, %v3713
        %v3738 = vpack.c.b16 %v3716, %v3715
        %v3739 = vpack.c.b16 %v3718, %v3717
        %v3740 = vpack.c.b16 %v3720, %v3719
        %v3741 = vpack.c.b16 %v3722, %v3721
        %v3742 = vpack.c.b16 %v3724, %v3723
        %v3743 = vpack.c.b16 %v3726, %v3725
        %v3744 = vpack.c.b16 %v3728, %v3727
        %3761 = vmatprep.subr.bf16.mxu0 0
        %3762 = vmatpush1.bf16.msra.mxu0 %v3736
        %3763 = vmatprep.subr.bf16.mxu0 0
        %3764 = vmatpush1.bf16.msra.mxu0 %v3735
        %3765 = vmatprep.subr.bf16.mxu0 0
        %3766 = vmatpush1.bf16.msra.mxu0 %v3734
        %3767 = vmatprep.subr.bf16.mxu0 0
        %3768 = vmatpush1.bf16.msra.mxu0 %v3733
        %3769 = vmatprep.subr.bf16.mxu0 0
        %3770 = vmatpush1.bf16.msra.mxu0 %v3732
        %3771 = vmatprep.subr.bf16.mxu0 0
        %3772 = vmatpush1.bf16.msra.mxu0 %v3731
        %3773 = vmatprep.subr.bf16.mxu0 0
        %3774 = vmatpush1.bf16.msra.mxu0 %v3730
        %3775 = vmatprep.subr.bf16.mxu0 0
        %3776 = vmatpush1.bf16.msra.mxu0 %v3729
        %3777 = vmatprep.subr.bf16.mxu0 0
        %3778 = vmatpush2.bf16.msra.mxu0 %v3744
        %3779 = vmatprep.subr.bf16.mxu0 0
        %3780 = vmatpush2.bf16.msra.mxu0 %v3743
        %3781 = vmatprep.subr.bf16.mxu0 0
        %3782 = vmatpush2.bf16.msra.mxu0 %v3742
        %3783 = vmatprep.subr.bf16.mxu0 0
        %3784 = vmatpush2.bf16.msra.mxu0 %v3741
        %3785 = vmatprep.subr.bf16.mxu0 0
        %3786 = vmatpush2.bf16.msra.mxu0 %v3740
        %3787 = vmatprep.subr.bf16.mxu0 0
        %3788 = vmatpush2.bf16.msra.mxu0 %v3739
        %3789 = vmatprep.subr.bf16.mxu0 0
        %3790 = vmatpush2.bf16.msra.mxu0 %v3738
        %3791 = vmatprep.subr.bf16.mxu0 0
        %3792 = vmatpush2.bf16.msra.mxu0 %v3737
        %3793 = vmatprep.mubr.bf16.mxu0 %v3619
        %3794 = vmatmul.mubr.bf16.gmra.mxu0 %v3618
        %v3795 = vpop.f32.mrf.mxu0
        %v3796 = vadd.f32 %v3663, %v3795
        %v3797 = vpop.f32.mrf.mxu0
        %v3798 = vpop.f32.mrf.mxu0
        %v3799 = vadd.f32 %v3663, %v3798
        %v3800 = vpop.f32.mrf.mxu0
        %3801 = vmatprep.mubr.bf16.mxu0 %v3621
        %3802 = vmatmul.mubr.bf16.gmra.mxu0 %v3620
        %v3803 = vpop.f32.mrf.mxu0
        %v3804 = vadd.f32 %v3663, %v3803
        %v3805 = vpop.f32.mrf.mxu0
        %v3806 = vpop.f32.mrf.mxu0
        %v3807 = vadd.f32 %v3663, %v3806
        %v3808 = vpop.f32.mrf.mxu0
        %3809 = vmatprep.mubr.bf16.mxu0 %v3623
        %3810 = vmatmul.mubr.bf16.gmra.mxu0 %v3622
        %v3811 = vpop.f32.mrf.mxu0
        %v3812 = vadd.f32 %v3663, %v3811
        %v3813 = vpop.f32.mrf.mxu0
        %v3814 = vpop.f32.mrf.mxu0
        %v3815 = vadd.f32 %v3663, %v3814
        %v3816 = vpop.f32.mrf.mxu0
        %3817 = vmatprep.mubr.bf16.mxu0 %v3625
        %3818 = vmatmul.mubr.bf16.gmra.mxu0 %v3624
        %v3819 = vpop.f32.mrf.mxu0
        %v3820 = vadd.f32 %v3663, %v3819
        %v3821 = vpop.f32.mrf.mxu0
        %v3822 = vpop.f32.mrf.mxu0
        %v3823 = vadd.f32 %v3663, %v3822
        %v3824 = vpop.f32.mrf.mxu0
        %3825 = vdwg.mxu0
        %v3826 = vadd.f32 %v3345, %v3796
        %v3827 = vadd.f32 %v3346, %v3799
        %v3828 = vadd.f32 %v3347, %v3804
        %v3829 = vadd.f32 %v3348, %v3807
        %v3830 = vadd.f32 %v3349, %v3812
        %v3831 = vadd.f32 %v3350, %v3815
        %v3832 = vadd.f32 %v3351, %v3820
        %v3833 = vadd.f32 %v3352, %v3823
        %v3834 = vld [vmem:[%s14] sm:$0x1]
        %v3835 = vld [vmem:[%s15] sm:$0x1]
        %3836 = vadd.xlane.f32.xlu0 %v3826
        %v3837 = vpop.xlane.xlu0 %3836
        %3838 = vadd.xlane.f32.xlu0 %v3827
        %v3839 = vpop.xlane.xlu0 %3838
        %3840 = vadd.xlane.f32.xlu0 %v3828
        %v3841 = vpop.xlane.xlu0 %3840
        %3842 = vadd.xlane.f32.xlu0 %v3829
        %v3843 = vpop.xlane.xlu0 %3842
        %3844 = vadd.xlane.f32.xlu0 %v3830
        %v3845 = vpop.xlane.xlu0 %3844
        %3846 = vadd.xlane.f32.xlu0 %v3831
        %v3847 = vpop.xlane.xlu0 %3846
        %3848 = vadd.xlane.f32.xlu0 %v3832
        %v3849 = vpop.xlane.xlu0 %3848
        %3850 = vadd.xlane.f32.xlu0 %v3833
        %v3851 = vpop.xlane.xlu0 %3850
        %v3852 = vmul.f32 %v3837, %v3252
        %v3853 = vmul.f32 %v3839, %v3252
        %v3854 = vmul.f32 %v3841, %v3252
        %v3855 = vmul.f32 %v3843, %v3252
        %v3856 = vmul.f32 %v3845, %v3252
        %v3857 = vmul.f32 %v3847, %v3252
        %v3858 = vmul.f32 %v3849, %v3252
        %v3859 = vmul.f32 %v3851, %v3252
        %v3860 = vsub.f32 %v3826, %v3852
        %v3861 = vsub.f32 %v3827, %v3853
        %v3862 = vsub.f32 %v3828, %v3854
        %v3863 = vsub.f32 %v3829, %v3855
        %v3864 = vsub.f32 %v3830, %v3856
        %v3865 = vsub.f32 %v3831, %v3857
        %v3866 = vsub.f32 %v3832, %v3858
        %v3867 = vsub.f32 %v3833, %v3859
        %v3868 = vmul.f32 %v3860, %v3860
        %v3869 = vmul.f32 %v3861, %v3861
        %v3870 = vmul.f32 %v3862, %v3862
        %v3871 = vmul.f32 %v3863, %v3863
        %v3872 = vmul.f32 %v3864, %v3864
        %v3873 = vmul.f32 %v3865, %v3865
        %v3874 = vmul.f32 %v3866, %v3866
        %v3875 = vmul.f32 %v3867, %v3867
        %3876 = vadd.xlane.f32.xlu0 %v3868
        %v3877 = vpop.xlane.xlu0 %3876
        %3878 = vadd.xlane.f32.xlu0 %v3869
        %v3879 = vpop.xlane.xlu0 %3878
        %3880 = vadd.xlane.f32.xlu0 %v3870
        %v3881 = vpop.xlane.xlu0 %3880
        %3882 = vadd.xlane.f32.xlu0 %v3871
        %v3883 = vpop.xlane.xlu0 %3882
        %3884 = vadd.xlane.f32.xlu0 %v3872
        %v3885 = vpop.xlane.xlu0 %3884
        %3886 = vadd.xlane.f32.xlu0 %v3873
        %v3887 = vpop.xlane.xlu0 %3886
        %3888 = vadd.xlane.f32.xlu0 %v3874
        %v3889 = vpop.xlane.xlu0 %3888
        %3890 = vadd.xlane.f32.xlu0 %v3875
        %v3891 = vpop.xlane.xlu0 %3890
        %v3892 = vmul.f32 %v3877, %v3252
        %v3893 = vmul.f32 %v3879, %v3252
        %v3894 = vmul.f32 %v3881, %v3252
        %v3895 = vmul.f32 %v3883, %v3252
        %v3896 = vmul.f32 %v3885, %v3252
        %v3897 = vmul.f32 %v3887, %v3252
        %v3898 = vmul.f32 %v3889, %v3252
        %v3899 = vmul.f32 %v3891, %v3252
        %v3900 = vadd.f32 %v3892, 1e-05
        %v3901 = vadd.f32 %v3893, 1e-05
        %v3902 = vadd.f32 %v3894, 1e-05
        %v3903 = vadd.f32 %v3895, 1e-05
        %v3904 = vadd.f32 %v3896, 1e-05
        %v3905 = vadd.f32 %v3897, 1e-05
        %v3906 = vadd.f32 %v3898, 1e-05
        %v3907 = vadd.f32 %v3899, 1e-05
        %v3908 = vrsqrt.pop %v3900
        %v3909 = vrsqrt.pop %v3901
        %v3910 = vrsqrt.pop %v3902
        %v3911 = vrsqrt.pop %v3903
        %v3912 = vrsqrt.pop %v3904
        %v3913 = vrsqrt.pop %v3905
        %v3914 = vrsqrt.pop %v3906
        %v3915 = vrsqrt.pop %v3907
        %v3916 = vmul.f32 %v3860, %v3908
        %v3917 = vmul.f32 %v3861, %v3909
        %v3918 = vmul.f32 %v3862, %v3910
        %v3919 = vmul.f32 %v3863, %v3911
        %v3920 = vmul.f32 %v3864, %v3912
        %v3921 = vmul.f32 %v3865, %v3913
        %v3922 = vmul.f32 %v3866, %v3914
        %v3923 = vmul.f32 %v3867, %v3915
        %v3925 = vlaneseq
        %v3926 = vshrl.u32 %v3925, 7
        %v3927 = vsub.s32 0, %v3926
        %v3928 = vrot.slane %v3834, %v3927
        %v3930 = vmul.f32 %v3916, %v3928
        %v3931 = vmul.f32 %v3917, %v3928
        %v3932 = vmul.f32 %v3918, %v3928
        %v3933 = vmul.f32 %v3919, %v3928
        %v3934 = vmul.f32 %v3920, %v3928
        %v3935 = vmul.f32 %v3921, %v3928
        %v3936 = vmul.f32 %v3922, %v3928
        %v3937 = vmul.f32 %v3923, %v3928
        %v3939 = vlaneseq
        %v3940 = vshrl.u32 %v3939, 7
        %v3941 = vsub.s32 0, %v3940
        %v3942 = vrot.slane %v3835, %v3941
        %v3944 = vadd.f32 %v3930, %v3942
        %v3945 = vadd.f32 %v3931, %v3942
        %v3946 = vadd.f32 %v3932, %v3942
        %v3947 = vadd.f32 %v3933, %v3942
        %v3948 = vadd.f32 %v3934, %v3942
        %v3949 = vadd.f32 %v3935, %v3942
        %v3950 = vadd.f32 %v3936, %v3942
        %v3951 = vadd.f32 %v3937, %v3942
        %3952 = vst [vmem:[%s669] sm:$0xff] %v3944
        %3953 = vst [vmem:[%s669 + $0x8] sm:$0xff] %v3945
        %3954 = vst [vmem:[%s669 + $0x10] sm:$0xff] %v3946
        %3955 = vst [vmem:[%s669 + $0x18] sm:$0xff] %v3947
        %3956 = vst [vmem:[%s669 + $0x20] sm:$0xff] %v3948
        %3957 = vst [vmem:[%s669 + $0x28] sm:$0xff] %v3949
        %3958 = vst [vmem:[%s669 + $0x30] sm:$0xff] %v3950
        %3959 = vst [vmem:[%s669 + $0x38] sm:$0xff] %v3951
        %s3960 = sand.u32 %s408, 1
        %s3961 = scalar_lea.sflag [#allocation5], %s3960
        %s3962 = sand.u32 %s408, 1
        %s3963 = smul.addr %s3962, 64
        %s3964 = scalar_lea.vmem [#allocation15], %s3963
        // Predicated region
        $region117: #{tpu_custom_call.1} parent=83 // pred_check
          %p3965 = pneg %p418
        $region118: #{tpu_custom_call.1} parent=83 // pred_check_branch
          %3967 = sbr.rel (%p3965) target = $region120
        $region119: #{tpu_custom_call.1} parent=83 // pred_region
          %s3968 = smul.u32 8, %s43
          %s3970 = ssub.s32 1024, 1024
          %3971 = vsyncadd %s3961, %s3970
          %s3972 = smul.addr %s42, 16
          %s3973 = sadd.s32 %s3968, %s3972
          %s3974 = smul.addr %s3973, 128
          %s3975 = scalar_lea.hbm %s16, %s3974
          %s3976 = sshll.u32 %s3964, 4
          %s3977 = int_to_ptr.vmem [resolvable:$true] %s3976
          %3982 = dma.vmem_to_hbm [thread:$0]  %s3977, 1024, %s3975, %s3961, 128, 128, 8
        $region120: #{tpu_custom_call.1} parent=83 // pred_fallthru
          _
      $region84: #{tpu_custom_call.1} parent=5 // pred_fallthru
        _
      %p3983 = scmp.le.s32.totalorder 2, %s33
      // Predicated region
      $region121: #{tpu_custom_call.1} parent=5 // pred_check
        %p3984 = pneg %p3983
      $region122: #{tpu_custom_call.1} parent=5 // pred_check_branch
        %3986 = sbr.rel (%p3984) target = $region124
      $region123: #{tpu_custom_call.1} parent=5 // pred_region
        %s3987 = ssub.s32 %s33, 2
        // Predicated region
        $region125: #{tpu_custom_call.1} parent=123 // pred_check
          %p3988 = pneg %p424
        $region126: #{tpu_custom_call.1} parent=123 // pred_check_branch
          %3990 = sbr.rel (%p3988) target = $region128
        $region127: #{tpu_custom_call.1} parent=123 // pred_region
          %s3991 = sand.u32 %s409, 1
          %s3992 = scalar_lea.sflag [#allocation5], %s3991
          %s3993 = sand.u32 %s409, 1
          %s3994 = smul.addr %s3993, 64
          %s3995 = scalar_lea.vmem [#allocation15], %s3994
          %3996 = dma.done %s3992, 1024
        $region128: #{tpu_custom_call.1} parent=123 // pred_fallthru
          _
      $region124: #{tpu_custom_call.1} parent=5 // pred_fallthru
        _
    $region6: #{tpu_custom_call.1} parent=1 // loop_footer
      %s37 = sadd.s32 1, %s33
    $region7: #{tpu_custom_call.1} parent=1 // loop_footer_branch
      %32 = sbr.rel target = $region3
    $region8: #{tpu_custom_call.1} parent=1 // loop_exit
      _
    %3997 = vsyncpa [#allocation4], 1
    %s3998 = scalar_lea.sflag [#allocation4], 1
    %3999 = vsyncpa %s3998, 1
    %4000 = vsyncpa [#allocation7], 1
    %s4001 = scalar_lea.sflag [#allocation7], 1
    %4002 = vsyncpa %s4001, 1
    %4003 = vsyncpa [#allocation10], 1
    %4004 = vsyncpa [#allocation13], 1
    %4005 = vsyncpa [#allocation5], 1
    %s4006 = scalar_lea.sflag [#allocation5], 1
    %4007 = vsyncpa %s4006, 1

</llo_original>
